<compile_context>
chip_gen: v5e
topology: v5e:2x2
jax: 0.10.0
libtpu: 0.0.40
codegen_flags: <defaults>
</compile_context>

<pallas_src>
import math
import numpy as np
import jax
import jax.numpy as jnp
from jax.experimental import pallas as pl
from jax.experimental.pallas import tpu as pltpu

SPN_IN = 20     # fc1 output features == SPNNeuron in_features
SPN_OUT = 5     # SPNLayer out_features (number of SPN neurons)
LOG_2PI = math.log(2.0 * math.pi)


def _round_up(x, m):
    return ((x + m - 1) // m) * m


def _logaddexp(t0, t1):
    m = jnp.maximum(t0, t1)
    return m + jnp.log(jnp.exp(t0 - m) + jnp.exp(t1 - m))


# ----------------------------------------------------------------------------------------
# Pass 1 kernel: fc1 + ReLU + 5 SPN neurons, batch tiled on the lane axis.
# ----------------------------------------------------------------------------------------
def spn_pass1_kernel(xT_ref, w1_ref, b1_ref, p_ref, q_ref, c_ref, dlw_ref, y_ref):
    tn = xT_ref.shape[1]

    # fc1 + ReLU directly in the transposed layout: h^T = W1 @ x^T -> (20, TN).
    hT = jnp.dot(w1_ref[...], xT_ref[...], preferred_element_type=jnp.float32)
    hT = jnp.maximum(hT + b1_ref[...], 0.0)

    # Replicate across the 5 neurons (leading dim only -> cheap tile replication).
    h3 = jnp.broadcast_to(hT[None, :, :], (SPN_OUT, SPN_IN, tn))        # (5, 20, TN)

    # Gaussian leaf log-densities of both mixture components for all 5 neurons at once,
    # with folded constants: p = 1/(sigma*sqrt(2)), q = mu*p,
    # c = -log(sigma) - 0.5*log(2*pi) (+ LW1S fold, see wrapper):   g = c - (h*p - q)^2.
    z0 = h3 * p_ref[0] - q_ref[0]
    g0 = c_ref[0] - z0 * z0                                             # (5, 20, TN)
    z1 = h3 * p_ref[1] - q_ref[1]
    g1 = c_ref[1] - z1 * z1                                             # (5, 20, TN)
    dg = g0 - g1                                                        # (5, 20, TN)

    # ll[j] = sum_{a,b} logaddexp(lw0+g0a+g0b, lw1+g1a+g1b)
    #       = sum_{a,b} lw1[j,a,b] + 40*sum_b g1[j,b] + sum_{a,b} softplus(dlw + dg_a + dg_b)
    # The first (constant) term is folded into c in the wrapper, so only two terms remain.
    acc = (2.0 * SPN_IN) * jnp.sum(g1, axis=1)                          # (5, TN)
    for a in range(SPN_IN):                                             # 20 static iterations
        d = (dlw_ref[a] + dg) + dg[:, a:a + 1, :]                       # (5, 20, TN)
        # numerically-stable softplus(d): 1 exp + 1 log per sum node (EUP floor).
        f = jnp.maximum(d, 0.0) + jnp.log(1.0 + jnp.exp(-jnp.abs(d)))
        acc = acc + jnp.sum(f, axis=1)                                  # per-step b-reduce (XLU)

    y_ref[...] = jnp.log(-acc)                                          # (5, TN), lane-dense


# ----------------------------------------------------------------------------------------
# Wrapper: tile selection, parameter relayout, epilogue (global max + fc2 + sigmoid).
# ----------------------------------------------------------------------------------------
def _choose_tile(n, tile_n):
    n128 = _round_up(max(n, 1), 128)
    tn = min(_round_up(tile_n, 128), n128)
    # Guarantee >= 2 grid steps whenever the batch allows it so the "parallel" batch axis
    # can actually split across the 2 TensorCores on v7x (no-op on single-TC v5e/v6e).
    if n128 >= 2 * 128:
        tn = min(tn, _round_up(n128 // 2, 128))
    return tn


def spnnet_forward(x, p, tile_n=1024):
    n, in_f = x.shape
    tn = _choose_tile(n, tile_n)
    n_pad = _round_up(n, tn)

    # Batch on lanes: pad + transpose to (in_features, N_pad).
    xT = jnp.pad(x.astype(jnp.float32), ((0, n_pad - n), (0, 0))).T

    # --- parameter relayout (once, in the wrapper) ---------------------------------------
    # Fold -0.5 into the scale:  g = c - (h*p - q)^2 with p = 1/(sigma*sqrt(2)), q = mu*p.
    p0 = 1.0 / (p["sig0"] * np.sqrt(2.0))                               # (5, 20)
    p1 = 1.0 / (p["sig1"] * np.sqrt(2.0))
    q0 = p["mu0"] * p0
    q1 = p["mu1"] * p1
    # Fold LW1S[j] = sum_{a,b} lw1[j,a,b] into BOTH c's:  c' = c + LW1S/(2*20*20).
    # dg = g0 - g1 is unchanged while 40*sum_b g1'[j,b] = 40*sum_b g1[j,b] + LW1S[j].
    lw1s = jnp.sum(p["lw1"].reshape(SPN_OUT, SPN_IN, SPN_IN), axis=(1, 2))   # (5,)
    delta = (lw1s / (2.0 * SPN_IN * SPN_IN))[:, None]                   # (5, 1)
    c0 = -jnp.log(p["sig0"]) - 0.5 * LOG_2PI + delta
    c1 = -jnp.log(p["sig1"]) - 0.5 * LOG_2PI + delta

    pc = jnp.stack([p0, p1])[..., None]                                 # (2, 5, 20, 1)
    qc = jnp.stack([q0, q1])[..., None]
    cc = jnp.stack([c0, c1])[..., None]
    # dlw[a, j, b] = lw0[j,a,b] - lw1[j,a,b]  (single table, half the previous lw footprint).
    dlw = (p["lw0"] - p["lw1"]).reshape(SPN_OUT, SPN_IN, SPN_IN).transpose(1, 0, 2)[..., None]
    b1 = p["b1"].reshape(SPN_IN, 1)

    const4 = lambda i: (0, 0, 0, 0)
    y_pad = pl.pallas_call(
        spn_pass1_kernel,
        out_shape=jax.ShapeDtypeStruct((SPN_OUT, n_pad), jnp.float32),
        grid_spec=pltpu.PrefetchScalarGridSpec(
            num_scalar_prefetch=0,
            grid=(n_pad // tn,),
            in_specs=[
                pl.BlockSpec((in_f, tn), lambda i: (0, i)),             # x^T batch tile
                pl.BlockSpec((SPN_IN, in_f), lambda i: (0, 0)),         # w1
                pl.BlockSpec((SPN_IN, 1), lambda i: (0, 0)),            # b1
                pl.BlockSpec((2, SPN_OUT, SPN_IN, 1), const4),          # p = 1/(sigma*sqrt(2))
                pl.BlockSpec((2, SPN_OUT, SPN_IN, 1), const4),          # q = mu*p
                pl.BlockSpec((2, SPN_OUT, SPN_IN, 1), const4),          # c (log-norm + LW1S fold)
                pl.BlockSpec((SPN_IN, SPN_OUT, SPN_IN, 1), const4),     # dlw = lw0 - lw1
            ],
            out_specs=pl.BlockSpec((SPN_OUT, tn), lambda i: (0, i)),
        ),
        compiler_params=pltpu.CompilerParams(
            dimension_semantics=("parallel",),                          # megacore split on v7x
            vmem_limit_bytes=40 * 1024 * 1024,                          # safe on v7x's 64 MiB
        ),
    )(xT, p["w1"], b1, pc, qc, cc, dlw)

    # --- epilogue (needs the whole batch; trivial, plain XLA) -----------------------------
    y = y_pad[:, :n]                                                    # (5, N): drop padding
    ymax = jnp.max(y)                                                   # BEFORE max (NaN-safe)
    z = (ymax - y).T @ p["w2"].T + p["b2"]                              # fc2: (N, 5) -> (N, 1)
    return jax.nn.sigmoid(z)


# ----------------------------------------------------------------------------------------
# Parameter construction + pure-JAX reference (mirrors the PyTorch forward semantics).
# ----------------------------------------------------------------------------------------
def make_params(key, in_features):
    ks = jax.random.split(key, 7)
    w1 = jax.random.normal(ks[0], (SPN_IN, in_features), jnp.float32) * np.sqrt(2.0 / in_features)
    b1 = (jax.random.uniform(ks[1], (SPN_IN,), jnp.float32) - 0.5) * (2.0 / np.sqrt(in_features))
    w2 = jax.random.normal(ks[2], (1, SPN_OUT), jnp.float32) * np.sqrt(2.0 / SPN_OUT)
    b2 = (jax.random.uniform(ks[3], (1,), jnp.float32) - 0.5) * (2.0 / np.sqrt(SPN_OUT))

    means = jax.random.normal(ks[4], (SPN_OUT, SPN_IN, 3), jnp.float32)
    stdevs = jax.random.uniform(ks[5], (SPN_OUT, SPN_IN, 3), jnp.float32, minval=0.3, maxval=1.0)
    w = jax.random.uniform(ks[6], (SPN_OUT, SPN_IN * SPN_IN, 2), jnp.float32, minval=0.1, maxval=1.0)
    w = w / jnp.sum(w, axis=2, keepdims=True)

    mu0, mu1 = means[..., 0], means[..., 1]                             # (5, 20)
    sig0, sig1 = stdevs[..., 0], stdevs[..., 1]                         # (5, 20)
    lw0 = jnp.log(w[..., 0]).reshape(SPN_OUT * SPN_IN, SPN_IN)          # (100, 20): row j*20+a, col b
    lw1 = jnp.log(w[..., 1]).reshape(SPN_OUT * SPN_IN, SPN_IN)
    return dict(w1=w1, b1=b1, w2=w2, b2=b2,
                mu0=mu0, mu1=mu1, sig0=sig0, sig1=sig1, lw0=lw0, lw1=lw1)


def spnnet_reference(x, p):
    h = jax.nn.relu(x @ p["w1"].T + p["b1"])
    cols = []
    for j in range(SPN_OUT):
        g0 = -0.5 * ((h - p["mu0"][j]) / p["sig0"][j]) ** 2 - jnp.log(p["sig0"][j]) - 0.5 * LOG_2PI
        g1 = -0.5 * ((h - p["mu1"][j]) / p["sig1"][j]) ** 2 - jnp.log(p["sig1"][j]) - 0.5 * LOG_2PI
        p0 = g0[:, :, None] + g0[:, None, :]                            # (N, 20, 20) product nodes
        p1 = g1[:, :, None] + g1[:, None, :]
        lw0 = p["lw0"][j * SPN_IN:(j + 1) * SPN_IN]                     # (20, 20)
        lw1 = p["lw1"][j * SPN_IN:(j + 1) * SPN_IN]
        s = _logaddexp(lw0[None] + p0, lw1[None] + p1)                  # sum nodes
        cols.append(jnp.sum(s, axis=(1, 2)))                            # root product node
    spn = jnp.stack(cols, axis=1)                                       # (N, 5)
    y = jnp.log(-spn)
    y = jnp.max(y) - y
    return jax.nn.sigmoid(y @ p["w2"].T + p["b2"])


if __name__ == "__main__":
    key = jax.random.PRNGKey(0)
    k_x, k_p = jax.random.split(key)

    batch, in_features = 8, 16
    x = jax.random.normal(k_x, (batch, in_features), jnp.float32)
    params = make_params(k_p, in_features)

    fwd = jax.jit(spnnet_forward)
    out = jax.block_until_ready(fwd(x, params))

    ref = spnnet_reference(x, params)
    assert out.shape == (batch, 1)
    assert bool(jnp.all(jnp.isfinite(out)))
    assert bool(jnp.allclose(out, ref, rtol=1e-4, atol=1e-5)), (out, ref)
    print("KERNEL_OK")
</pallas_src>

<mosaic_0001>
module attributes {stable_mosaic.version = 11 : i64} {
  func.func @spn_pass1_kernel(%arg0: i32, %arg1: memref<16x128xf32, #tpu.memory_space<vmem>>, %arg2: memref<20x16xf32, #tpu.memory_space<vmem>>, %arg3: memref<20x1xf32, #tpu.memory_space<vmem>>, %arg4: memref<2x5x20x1xf32, #tpu.memory_space<vmem>>, %arg5: memref<2x5x20x1xf32, #tpu.memory_space<vmem>>, %arg6: memref<2x5x20x1xf32, #tpu.memory_space<vmem>>, %arg7: memref<20x5x20x1xf32, #tpu.memory_space<vmem>>, %arg8: memref<5x128xf32, #tpu.memory_space<vmem>>) attributes {dimension_semantics = [#tpu.dimension_semantics<parallel>], iteration_bounds = array<i64: 1>, scalar_prefetch = 0 : i64, scratch_operands = 0 : i64, tpu.core_type = #tpu.core_type<tc>, window_params = [{transform_indices = @transform_0, window_bounds = array<i64: 16, 128>}, {pipeline_mode = #tpu.pipeline_mode<synchronous>, transform_indices = @transform_1, window_bounds = array<i64: 20, 16>}, {pipeline_mode = #tpu.pipeline_mode<synchronous>, transform_indices = @transform_2, window_bounds = array<i64: 20, 1>}, {pipeline_mode = #tpu.pipeline_mode<synchronous>, transform_indices = @transform_3, window_bounds = array<i64: 2, 5, 20, 1>}, {pipeline_mode = #tpu.pipeline_mode<synchronous>, transform_indices = @transform_4, window_bounds = array<i64: 2, 5, 20, 1>}, {pipeline_mode = #tpu.pipeline_mode<synchronous>, transform_indices = @transform_5, window_bounds = array<i64: 2, 5, 20, 1>}, {pipeline_mode = #tpu.pipeline_mode<synchronous>, transform_indices = @transform_6, window_bounds = array<i64: 20, 5, 20, 1>}, {transform_indices = @transform_7, window_bounds = array<i64: 5, 128>}]} {
    %c0 = arith.constant 0 : index
    %c0_0 = arith.constant 0 : index
    %0 = vector.load %arg2[%c0, %c0_0] : memref<20x16xf32, #tpu.memory_space<vmem>>, vector<20x16xf32>
    %c0_1 = arith.constant 0 : index
    %c0_2 = arith.constant 0 : index
    %1 = vector.load %arg1[%c0_1, %c0_2] : memref<16x128xf32, #tpu.memory_space<vmem>>, vector<16x128xf32>
    %cst = arith.constant dense<0.000000e+00> : vector<20x128xf32>
    %2 = tpu.matmul %0, %1, %cst {dimension_numbers = #tpu.dot_dimension_numbers<[1], [0], [0], [1], [0, 0, 1, 1], [], []>} : vector<20x16xf32>, vector<16x128xf32>, vector<20x128xf32> -> vector<20x128xf32>
    %c0_3 = arith.constant 0 : index
    %c0_4 = arith.constant 0 : index
    %3 = vector.load %arg3[%c0_3, %c0_4] : memref<20x1xf32, #tpu.memory_space<vmem>>, vector<20x1xf32>
    %4 = vector.broadcast %3 : vector<20x1xf32> to vector<20x128xf32>
    %5 = arith.addf %2, %4 : vector<20x128xf32>
    %cst_5 = arith.constant 0.000000e+00 : f32
    %6 = vector.broadcast %cst_5 : f32 to vector<20x128xf32>
    %7 = arith.maximumf %5, %6 : vector<20x128xf32>
    %8 = vector.shape_cast %7 : vector<20x128xf32> to vector<1x20x128xf32>
    %9 = vector.shape_cast %8 : vector<1x20x128xf32> to vector<1x20x128xf32>
    %10 = vector.broadcast %9 : vector<1x20x128xf32> to vector<5x20x128xf32>
    %c0_6 = arith.constant 0 : index
    %c0_7 = arith.constant 0 : index
    %c0_8 = arith.constant 0 : index
    %c0_9 = arith.constant 0 : index
    %11 = vector.load %arg4[%c0_6, %c0_7, %c0_8, %c0_9] : memref<2x5x20x1xf32, #tpu.memory_space<vmem>>, vector<1x5x20x1xf32>
    %12 = vector.shape_cast %11 : vector<1x5x20x1xf32> to vector<5x20x1xf32>
    %13 = vector.broadcast %12 : vector<5x20x1xf32> to vector<5x20x128xf32>
    %14 = arith.mulf %10, %13 : vector<5x20x128xf32>
    %c0_10 = arith.constant 0 : index
    %c0_11 = arith.constant 0 : index
    %c0_12 = arith.constant 0 : index
    %c0_13 = arith.constant 0 : index
    %15 = vector.load %arg5[%c0_10, %c0_11, %c0_12, %c0_13] : memref<2x5x20x1xf32, #tpu.memory_space<vmem>>, vector<1x5x20x1xf32>
    %16 = vector.shape_cast %15 : vector<1x5x20x1xf32> to vector<5x20x1xf32>
    %17 = vector.broadcast %16 : vector<5x20x1xf32> to vector<5x20x128xf32>
    %18 = arith.subf %14, %17 : vector<5x20x128xf32>
    %c0_14 = arith.constant 0 : index
    %c0_15 = arith.constant 0 : index
    %c0_16 = arith.constant 0 : index
    %c0_17 = arith.constant 0 : index
    %19 = vector.load %arg6[%c0_14, %c0_15, %c0_16, %c0_17] : memref<2x5x20x1xf32, #tpu.memory_space<vmem>>, vector<1x5x20x1xf32>
    %20 = vector.shape_cast %19 : vector<1x5x20x1xf32> to vector<5x20x1xf32>
    %21 = arith.mulf %18, %18 : vector<5x20x128xf32>
    %22 = vector.broadcast %20 : vector<5x20x1xf32> to vector<5x20x128xf32>
    %23 = arith.subf %22, %21 : vector<5x20x128xf32>
    %c1 = arith.constant 1 : index
    %c0_18 = arith.constant 0 : index
    %c0_19 = arith.constant 0 : index
    %c0_20 = arith.constant 0 : index
    %24 = vector.load %arg4[%c1, %c0_18, %c0_19, %c0_20] : memref<2x5x20x1xf32, #tpu.memory_space<vmem>>, vector<1x5x20x1xf32>
    %25 = vector.shape_cast %24 : vector<1x5x20x1xf32> to vector<5x20x1xf32>
    %26 = vector.broadcast %25 : vector<5x20x1xf32> to vector<5x20x128xf32>
    %27 = arith.mulf %10, %26 : vector<5x20x128xf32>
    %c1_21 = arith.constant 1 : index
    %c0_22 = arith.constant 0 : index
    %c0_23 = arith.constant 0 : index
    %c0_24 = arith.constant 0 : index
    %28 = vector.load %arg5[%c1_21, %c0_22, %c0_23, %c0_24] : memref<2x5x20x1xf32, #tpu.memory_space<vmem>>, vector<1x5x20x1xf32>
    %29 = vector.shape_cast %28 : vector<1x5x20x1xf32> to vector<5x20x1xf32>
    %30 = vector.broadcast %29 : vector<5x20x1xf32> to vector<5x20x128xf32>
    %31 = arith.subf %27, %30 : vector<5x20x128xf32>
    %c1_25 = arith.constant 1 : index
    %c0_26 = arith.constant 0 : index
    %c0_27 = arith.constant 0 : index
    %c0_28 = arith.constant 0 : index
    %32 = vector.load %arg6[%c1_25, %c0_26, %c0_27, %c0_28] : memref<2x5x20x1xf32, #tpu.memory_space<vmem>>, vector<1x5x20x1xf32>
    %33 = vector.shape_cast %32 : vector<1x5x20x1xf32> to vector<5x20x1xf32>
    %34 = arith.mulf %31, %31 : vector<5x20x128xf32>
    %35 = vector.broadcast %33 : vector<5x20x1xf32> to vector<5x20x128xf32>
    %36 = arith.subf %35, %34 : vector<5x20x128xf32>
    %37 = arith.subf %23, %36 : vector<5x20x128xf32>
    %cst_29 = arith.constant dense<0.000000e+00> : vector<5x128xf32>
    %38 = vector.multi_reduction <add>, %36, %cst_29 [1] : vector<5x20x128xf32> to vector<5x128xf32>
    %cst_30 = arith.constant 4.000000e+01 : f32
    %39 = vector.broadcast %cst_30 : f32 to vector<5x128xf32>
    %40 = arith.mulf %39, %38 : vector<5x128xf32>
    %c0_31 = arith.constant 0 : index
    %c0_32 = arith.constant 0 : index
    %c0_33 = arith.constant 0 : index
    %c0_34 = arith.constant 0 : index
    %41 = vector.load %arg7[%c0_31, %c0_32, %c0_33, %c0_34] : memref<20x5x20x1xf32, #tpu.memory_space<vmem>>, vector<1x5x20x1xf32>
    %42 = vector.shape_cast %41 : vector<1x5x20x1xf32> to vector<5x20x1xf32>
    %43 = vector.broadcast %42 : vector<5x20x1xf32> to vector<5x20x128xf32>
    %44 = arith.addf %43, %37 : vector<5x20x128xf32>
    %45 = vector.extract_strided_slice %37 {offsets = [0, 0, 0], sizes = [5, 1, 128], strides = [1, 1, 1]} : vector<5x20x128xf32> to vector<5x1x128xf32>
    %46 = vector.broadcast %45 : vector<5x1x128xf32> to vector<5x20x128xf32>
    %47 = arith.addf %44, %46 : vector<5x20x128xf32>
    %cst_35 = arith.constant 0.000000e+00 : f32
    %48 = vector.broadcast %cst_35 : f32 to vector<5x20x128xf32>
    %49 = arith.maximumf %47, %48 : vector<5x20x128xf32>
    %50 = math.absf %47 : vector<5x20x128xf32>
    %cst_36 = arith.constant 0.000000e+00 : f32
    %51 = vector.broadcast %cst_36 : f32 to vector<5x20x128xf32>
    %52 = arith.subf %51, %50 : vector<5x20x128xf32>
    %53 = math.exp %52 : vector<5x20x128xf32>
    %cst_37 = arith.constant 1.000000e+00 : f32
    %54 = vector.broadcast %cst_37 : f32 to vector<5x20x128xf32>
    %55 = arith.addf %54, %53 : vector<5x20x128xf32>
    %56 = math.log %55 : vector<5x20x128xf32>
    %57 = arith.addf %49, %56 : vector<5x20x128xf32>
    %cst_38 = arith.constant dense<0.000000e+00> : vector<5x128xf32>
    %58 = vector.multi_reduction <add>, %57, %cst_38 [1] : vector<5x20x128xf32> to vector<5x128xf32>
    %59 = arith.addf %40, %58 : vector<5x128xf32>
    %c1_39 = arith.constant 1 : index
    %c0_40 = arith.constant 0 : index
    %c0_41 = arith.constant 0 : index
    %c0_42 = arith.constant 0 : index
    %60 = vector.load %arg7[%c1_39, %c0_40, %c0_41, %c0_42] : memref<20x5x20x1xf32, #tpu.memory_space<vmem>>, vector<1x5x20x1xf32>
    %61 = vector.shape_cast %60 : vector<1x5x20x1xf32> to vector<5x20x1xf32>
    %62 = vector.broadcast %61 : vector<5x20x1xf32> to vector<5x20x128xf32>
    %63 = arith.addf %62, %37 : vector<5x20x128xf32>
    %64 = vector.extract_strided_slice %37 {offsets = [0, 1, 0], sizes = [5, 1, 128], strides = [1, 1, 1]} : vector<5x20x128xf32> to vector<5x1x128xf32>
    %65 = vector.broadcast %64 : vector<5x1x128xf32> to vector<5x20x128xf32>
    %66 = arith.addf %63, %65 : vector<5x20x128xf32>
    %cst_43 = arith.constant 0.000000e+00 : f32
    %67 = vector.broadcast %cst_43 : f32 to vector<5x20x128xf32>
    %68 = arith.maximumf %66, %67 : vector<5x20x128xf32>
    %69 = math.absf %66 : vector<5x20x128xf32>
    %cst_44 = arith.constant 0.000000e+00 : f32
    %70 = vector.broadcast %cst_44 : f32 to vector<5x20x128xf32>
    %71 = arith.subf %70, %69 : vector<5x20x128xf32>
    %72 = math.exp %71 : vector<5x20x128xf32>
    %cst_45 = arith.constant 1.000000e+00 : f32
    %73 = vector.broadcast %cst_45 : f32 to vector<5x20x128xf32>
    %74 = arith.addf %73, %72 : vector<5x20x128xf32>
    %75 = math.log %74 : vector<5x20x128xf32>
    %76 = arith.addf %68, %75 : vector<5x20x128xf32>
    %cst_46 = arith.constant dense<0.000000e+00> : vector<5x128xf32>
    %77 = vector.multi_reduction <add>, %76, %cst_46 [1] : vector<5x20x128xf32> to vector<5x128xf32>
    %78 = arith.addf %59, %77 : vector<5x128xf32>
    %c2 = arith.constant 2 : index
    %c0_47 = arith.constant 0 : index
    %c0_48 = arith.constant 0 : index
    %c0_49 = arith.constant 0 : index
    %79 = vector.load %arg7[%c2, %c0_47, %c0_48, %c0_49] : memref<20x5x20x1xf32, #tpu.memory_space<vmem>>, vector<1x5x20x1xf32>
    %80 = vector.shape_cast %79 : vector<1x5x20x1xf32> to vector<5x20x1xf32>
    %81 = vector.broadcast %80 : vector<5x20x1xf32> to vector<5x20x128xf32>
    %82 = arith.addf %81, %37 : vector<5x20x128xf32>
    %83 = vector.extract_strided_slice %37 {offsets = [0, 2, 0], sizes = [5, 1, 128], strides = [1, 1, 1]} : vector<5x20x128xf32> to vector<5x1x128xf32>
    %84 = vector.broadcast %83 : vector<5x1x128xf32> to vector<5x20x128xf32>
    %85 = arith.addf %82, %84 : vector<5x20x128xf32>
    %cst_50 = arith.constant 0.000000e+00 : f32
    %86 = vector.broadcast %cst_50 : f32 to vector<5x20x128xf32>
    %87 = arith.maximumf %85, %86 : vector<5x20x128xf32>
    %88 = math.absf %85 : vector<5x20x128xf32>
    %cst_51 = arith.constant 0.000000e+00 : f32
    %89 = vector.broadcast %cst_51 : f32 to vector<5x20x128xf32>
    %90 = arith.subf %89, %88 : vector<5x20x128xf32>
    %91 = math.exp %90 : vector<5x20x128xf32>
    %cst_52 = arith.constant 1.000000e+00 : f32
    %92 = vector.broadcast %cst_52 : f32 to vector<5x20x128xf32>
    %93 = arith.addf %92, %91 : vector<5x20x128xf32>
    %94 = math.log %93 : vector<5x20x128xf32>
    %95 = arith.addf %87, %94 : vector<5x20x128xf32>
    %cst_53 = arith.constant dense<0.000000e+00> : vector<5x128xf32>
    %96 = vector.multi_reduction <add>, %95, %cst_53 [1] : vector<5x20x128xf32> to vector<5x128xf32>
    %97 = arith.addf %78, %96 : vector<5x128xf32>
    %c3 = arith.constant 3 : index
    %c0_54 = arith.constant 0 : index
    %c0_55 = arith.constant 0 : index
    %c0_56 = arith.constant 0 : index
    %98 = vector.load %arg7[%c3, %c0_54, %c0_55, %c0_56] : memref<20x5x20x1xf32, #tpu.memory_space<vmem>>, vector<1x5x20x1xf32>
    %99 = vector.shape_cast %98 : vector<1x5x20x1xf32> to vector<5x20x1xf32>
    %100 = vector.broadcast %99 : vector<5x20x1xf32> to vector<5x20x128xf32>
    %101 = arith.addf %100, %37 : vector<5x20x128xf32>
    %102 = vector.extract_strided_slice %37 {offsets = [0, 3, 0], sizes = [5, 1, 128], strides = [1, 1, 1]} : vector<5x20x128xf32> to vector<5x1x128xf32>
    %103 = vector.broadcast %102 : vector<5x1x128xf32> to vector<5x20x128xf32>
    %104 = arith.addf %101, %103 : vector<5x20x128xf32>
    %cst_57 = arith.constant 0.000000e+00 : f32
    %105 = vector.broadcast %cst_57 : f32 to vector<5x20x128xf32>
    %106 = arith.maximumf %104, %105 : vector<5x20x128xf32>
    %107 = math.absf %104 : vector<5x20x128xf32>
    %cst_58 = arith.constant 0.000000e+00 : f32
    %108 = vector.broadcast %cst_58 : f32 to vector<5x20x128xf32>
    %109 = arith.subf %108, %107 : vector<5x20x128xf32>
    %110 = math.exp %109 : vector<5x20x128xf32>
    %cst_59 = arith.constant 1.000000e+00 : f32
    %111 = vector.broadcast %cst_59 : f32 to vector<5x20x128xf32>
    %112 = arith.addf %111, %110 : vector<5x20x128xf32>
    %113 = math.log %112 : vector<5x20x128xf32>
    %114 = arith.addf %106, %113 : vector<5x20x128xf32>
    %cst_60 = arith.constant dense<0.000000e+00> : vector<5x128xf32>
    %115 = vector.multi_reduction <add>, %114, %cst_60 [1] : vector<5x20x128xf32> to vector<5x128xf32>
    %116 = arith.addf %97, %115 : vector<5x128xf32>
    %c4 = arith.constant 4 : index
    %c0_61 = arith.constant 0 : index
    %c0_62 = arith.constant 0 : index
    %c0_63 = arith.constant 0 : index
    %117 = vector.load %arg7[%c4, %c0_61, %c0_62, %c0_63] : memref<20x5x20x1xf32, #tpu.memory_space<vmem>>, vector<1x5x20x1xf32>
    %118 = vector.shape_cast %117 : vector<1x5x20x1xf32> to vector<5x20x1xf32>
    %119 = vector.broadcast %118 : vector<5x20x1xf32> to vector<5x20x128xf32>
    %120 = arith.addf %119, %37 : vector<5x20x128xf32>
    %121 = vector.extract_strided_slice %37 {offsets = [0, 4, 0], sizes = [5, 1, 128], strides = [1, 1, 1]} : vector<5x20x128xf32> to vector<5x1x128xf32>
    %122 = vector.broadcast %121 : vector<5x1x128xf32> to vector<5x20x128xf32>
    %123 = arith.addf %120, %122 : vector<5x20x128xf32>
    %cst_64 = arith.constant 0.000000e+00 : f32
    %124 = vector.broadcast %cst_64 : f32 to vector<5x20x128xf32>
    %125 = arith.maximumf %123, %124 : vector<5x20x128xf32>
    %126 = math.absf %123 : vector<5x20x128xf32>
    %cst_65 = arith.constant 0.000000e+00 : f32
    %127 = vector.broadcast %cst_65 : f32 to vector<5x20x128xf32>
    %128 = arith.subf %127, %126 : vector<5x20x128xf32>
    %129 = math.exp %128 : vector<5x20x128xf32>
    %cst_66 = arith.constant 1.000000e+00 : f32
    %130 = vector.broadcast %cst_66 : f32 to vector<5x20x128xf32>
    %131 = arith.addf %130, %129 : vector<5x20x128xf32>
    %132 = math.log %131 : vector<5x20x128xf32>
    %133 = arith.addf %125, %132 : vector<5x20x128xf32>
    %cst_67 = arith.constant dense<0.000000e+00> : vector<5x128xf32>
    %134 = vector.multi_reduction <add>, %133, %cst_67 [1] : vector<5x20x128xf32> to vector<5x128xf32>
    %135 = arith.addf %116, %134 : vector<5x128xf32>
    %c5 = arith.constant 5 : index
    %c0_68 = arith.constant 0 : index
    %c0_69 = arith.constant 0 : index
    %c0_70 = arith.constant 0 : index
    %136 = vector.load %arg7[%c5, %c0_68, %c0_69, %c0_70] : memref<20x5x20x1xf32, #tpu.memory_space<vmem>>, vector<1x5x20x1xf32>
    %137 = vector.shape_cast %136 : vector<1x5x20x1xf32> to vector<5x20x1xf32>
    %138 = vector.broadcast %137 : vector<5x20x1xf32> to vector<5x20x128xf32>
    %139 = arith.addf %138, %37 : vector<5x20x128xf32>
    %140 = vector.extract_strided_slice %37 {offsets = [0, 5, 0], sizes = [5, 1, 128], strides = [1, 1, 1]} : vector<5x20x128xf32> to vector<5x1x128xf32>
    %141 = vector.broadcast %140 : vector<5x1x128xf32> to vector<5x20x128xf32>
    %142 = arith.addf %139, %141 : vector<5x20x128xf32>
    %cst_71 = arith.constant 0.000000e+00 : f32
    %143 = vector.broadcast %cst_71 : f32 to vector<5x20x128xf32>
    %144 = arith.maximumf %142, %143 : vector<5x20x128xf32>
    %145 = math.absf %142 : vector<5x20x128xf32>
    %cst_72 = arith.constant 0.000000e+00 : f32
    %146 = vector.broadcast %cst_72 : f32 to vector<5x20x128xf32>
    %147 = arith.subf %146, %145 : vector<5x20x128xf32>
    %148 = math.exp %147 : vector<5x20x128xf32>
    %cst_73 = arith.constant 1.000000e+00 : f32
    %149 = vector.broadcast %cst_73 : f32 to vector<5x20x128xf32>
    %150 = arith.addf %149, %148 : vector<5x20x128xf32>
    %151 = math.log %150 : vector<5x20x128xf32>
    %152 = arith.addf %144, %151 : vector<5x20x128xf32>
    %cst_74 = arith.constant dense<0.000000e+00> : vector<5x128xf32>
    %153 = vector.multi_reduction <add>, %152, %cst_74 [1] : vector<5x20x128xf32> to vector<5x128xf32>
    %154 = arith.addf %135, %153 : vector<5x128xf32>
    %c6 = arith.constant 6 : index
    %c0_75 = arith.constant 0 : index
    %c0_76 = arith.constant 0 : index
    %c0_77 = arith.constant 0 : index
    %155 = vector.load %arg7[%c6, %c0_75, %c0_76, %c0_77] : memref<20x5x20x1xf32, #tpu.memory_space<vmem>>, vector<1x5x20x1xf32>
    %156 = vector.shape_cast %155 : vector<1x5x20x1xf32> to vector<5x20x1xf32>
    %157 = vector.broadcast %156 : vector<5x20x1xf32> to vector<5x20x128xf32>
    %158 = arith.addf %157, %37 : vector<5x20x128xf32>
    %159 = vector.extract_strided_slice %37 {offsets = [0, 6, 0], sizes = [5, 1, 128], strides = [1, 1, 1]} : vector<5x20x128xf32> to vector<5x1x128xf32>
    %160 = vector.broadcast %159 : vector<5x1x128xf32> to vector<5x20x128xf32>
    %161 = arith.addf %158, %160 : vector<5x20x128xf32>
    %cst_78 = arith.constant 0.000000e+00 : f32
    %162 = vector.broadcast %cst_78 : f32 to vector<5x20x128xf32>
    %163 = arith.maximumf %161, %162 : vector<5x20x128xf32>
    %164 = math.absf %161 : vector<5x20x128xf32>
    %cst_79 = arith.constant 0.000000e+00 : f32
    %165 = vector.broadcast %cst_79 : f32 to vector<5x20x128xf32>
    %166 = arith.subf %165, %164 : vector<5x20x128xf32>
    %167 = math.exp %166 : vector<5x20x128xf32>
    %cst_80 = arith.constant 1.000000e+00 : f32
    %168 = vector.broadcast %cst_80 : f32 to vector<5x20x128xf32>
    %169 = arith.addf %168, %167 : vector<5x20x128xf32>
    %170 = math.log %169 : vector<5x20x128xf32>
    %171 = arith.addf %163, %170 : vector<5x20x128xf32>
    %cst_81 = arith.constant dense<0.000000e+00> : vector<5x128xf32>
    %172 = vector.multi_reduction <add>, %171, %cst_81 [1] : vector<5x20x128xf32> to vector<5x128xf32>
    %173 = arith.addf %154, %172 : vector<5x128xf32>
    %c7 = arith.constant 7 : index
    %c0_82 = arith.constant 0 : index
    %c0_83 = arith.constant 0 : index
    %c0_84 = arith.constant 0 : index
    %174 = vector.load %arg7[%c7, %c0_82, %c0_83, %c0_84] : memref<20x5x20x1xf32, #tpu.memory_space<vmem>>, vector<1x5x20x1xf32>
    %175 = vector.shape_cast %174 : vector<1x5x20x1xf32> to vector<5x20x1xf32>
    %176 = vector.broadcast %175 : vector<5x20x1xf32> to vector<5x20x128xf32>
    %177 = arith.addf %176, %37 : vector<5x20x128xf32>
    %178 = vector.extract_strided_slice %37 {offsets = [0, 7, 0], sizes = [5, 1, 128], strides = [1, 1, 1]} : vector<5x20x128xf32> to vector<5x1x128xf32>
    %179 = vector.broadcast %178 : vector<5x1x128xf32> to vector<5x20x128xf32>
    %180 = arith.addf %177, %179 : vector<5x20x128xf32>
    %cst_85 = arith.constant 0.000000e+00 : f32
    %181 = vector.broadcast %cst_85 : f32 to vector<5x20x128xf32>
    %182 = arith.maximumf %180, %181 : vector<5x20x128xf32>
    %183 = math.absf %180 : vector<5x20x128xf32>
    %cst_86 = arith.constant 0.000000e+00 : f32
    %184 = vector.broadcast %cst_86 : f32 to vector<5x20x128xf32>
    %185 = arith.subf %184, %183 : vector<5x20x128xf32>
    %186 = math.exp %185 : vector<5x20x128xf32>
    %cst_87 = arith.constant 1.000000e+00 : f32
    %187 = vector.broadcast %cst_87 : f32 to vector<5x20x128xf32>
    %188 = arith.addf %187, %186 : vector<5x20x128xf32>
    %189 = math.log %188 : vector<5x20x128xf32>
    %190 = arith.addf %182, %189 : vector<5x20x128xf32>
    %cst_88 = arith.constant dense<0.000000e+00> : vector<5x128xf32>
    %191 = vector.multi_reduction <add>, %190, %cst_88 [1] : vector<5x20x128xf32> to vector<5x128xf32>
    %192 = arith.addf %173, %191 : vector<5x128xf32>
    %c8 = arith.constant 8 : index
    %c0_89 = arith.constant 0 : index
    %c0_90 = arith.constant 0 : index
    %c0_91 = arith.constant 0 : index
    %193 = vector.load %arg7[%c8, %c0_89, %c0_90, %c0_91] : memref<20x5x20x1xf32, #tpu.memory_space<vmem>>, vector<1x5x20x1xf32>
    %194 = vector.shape_cast %193 : vector<1x5x20x1xf32> to vector<5x20x1xf32>
    %195 = vector.broadcast %194 : vector<5x20x1xf32> to vector<5x20x128xf32>
    %196 = arith.addf %195, %37 : vector<5x20x128xf32>
    %197 = vector.extract_strided_slice %37 {offsets = [0, 8, 0], sizes = [5, 1, 128], strides = [1, 1, 1]} : vector<5x20x128xf32> to vector<5x1x128xf32>
    %198 = vector.broadcast %197 : vector<5x1x128xf32> to vector<5x20x128xf32>
    %199 = arith.addf %196, %198 : vector<5x20x128xf32>
    %cst_92 = arith.constant 0.000000e+00 : f32
    %200 = vector.broadcast %cst_92 : f32 to vector<5x20x128xf32>
    %201 = arith.maximumf %199, %200 : vector<5x20x128xf32>
    %202 = math.absf %199 : vector<5x20x128xf32>
    %cst_93 = arith.constant 0.000000e+00 : f32
    %203 = vector.broadcast %cst_93 : f32 to vector<5x20x128xf32>
    %204 = arith.subf %203, %202 : vector<5x20x128xf32>
    %205 = math.exp %204 : vector<5x20x128xf32>
    %cst_94 = arith.constant 1.000000e+00 : f32
    %206 = vector.broadcast %cst_94 : f32 to vector<5x20x128xf32>
    %207 = arith.addf %206, %205 : vector<5x20x128xf32>
    %208 = math.log %207 : vector<5x20x128xf32>
    %209 = arith.addf %201, %208 : vector<5x20x128xf32>
    %cst_95 = arith.constant dense<0.000000e+00> : vector<5x128xf32>
    %210 = vector.multi_reduction <add>, %209, %cst_95 [1] : vector<5x20x128xf32> to vector<5x128xf32>
    %211 = arith.addf %192, %210 : vector<5x128xf32>
    %c9 = arith.constant 9 : index
    %c0_96 = arith.constant 0 : index
    %c0_97 = arith.constant 0 : index
    %c0_98 = arith.constant 0 : index
    %212 = vector.load %arg7[%c9, %c0_96, %c0_97, %c0_98] : memref<20x5x20x1xf32, #tpu.memory_space<vmem>>, vector<1x5x20x1xf32>
    %213 = vector.shape_cast %212 : vector<1x5x20x1xf32> to vector<5x20x1xf32>
    %214 = vector.broadcast %213 : vector<5x20x1xf32> to vector<5x20x128xf32>
    %215 = arith.addf %214, %37 : vector<5x20x128xf32>
    %216 = vector.extract_strided_slice %37 {offsets = [0, 9, 0], sizes = [5, 1, 128], strides = [1, 1, 1]} : vector<5x20x128xf32> to vector<5x1x128xf32>
    %217 = vector.broadcast %216 : vector<5x1x128xf32> to vector<5x20x128xf32>
    %218 = arith.addf %215, %217 : vector<5x20x128xf32>
    %cst_99 = arith.constant 0.000000e+00 : f32
    %219 = vector.broadcast %cst_99 : f32 to vector<5x20x128xf32>
    %220 = arith.maximumf %218, %219 : vector<5x20x128xf32>
    %221 = math.absf %218 : vector<5x20x128xf32>
    %cst_100 = arith.constant 0.000000e+00 : f32
    %222 = vector.broadcast %cst_100 : f32 to vector<5x20x128xf32>
    %223 = arith.subf %222, %221 : vector<5x20x128xf32>
    %224 = math.exp %223 : vector<5x20x128xf32>
    %cst_101 = arith.constant 1.000000e+00 : f32
    %225 = vector.broadcast %cst_101 : f32 to vector<5x20x128xf32>
    %226 = arith.addf %225, %224 : vector<5x20x128xf32>
    %227 = math.log %226 : vector<5x20x128xf32>
    %228 = arith.addf %220, %227 : vector<5x20x128xf32>
    %cst_102 = arith.constant dense<0.000000e+00> : vector<5x128xf32>
    %229 = vector.multi_reduction <add>, %228, %cst_102 [1] : vector<5x20x128xf32> to vector<5x128xf32>
    %230 = arith.addf %211, %229 : vector<5x128xf32>
    %c10 = arith.constant 10 : index
    %c0_103 = arith.constant 0 : index
    %c0_104 = arith.constant 0 : index
    %c0_105 = arith.constant 0 : index
    %231 = vector.load %arg7[%c10, %c0_103, %c0_104, %c0_105] : memref<20x5x20x1xf32, #tpu.memory_space<vmem>>, vector<1x5x20x1xf32>
    %232 = vector.shape_cast %231 : vector<1x5x20x1xf32> to vector<5x20x1xf32>
    %233 = vector.broadcast %232 : vector<5x20x1xf32> to vector<5x20x128xf32>
    %234 = arith.addf %233, %37 : vector<5x20x128xf32>
    %235 = vector.extract_strided_slice %37 {offsets = [0, 10, 0], sizes = [5, 1, 128], strides = [1, 1, 1]} : vector<5x20x128xf32> to vector<5x1x128xf32>
    %236 = vector.broadcast %235 : vector<5x1x128xf32> to vector<5x20x128xf32>
    %237 = arith.addf %234, %236 : vector<5x20x128xf32>
    %cst_106 = arith.constant 0.000000e+00 : f32
    %238 = vector.broadcast %cst_106 : f32 to vector<5x20x128xf32>
    %239 = arith.maximumf %237, %238 : vector<5x20x128xf32>
    %240 = math.absf %237 : vector<5x20x128xf32>
    %cst_107 = arith.constant 0.000000e+00 : f32
    %241 = vector.broadcast %cst_107 : f32 to vector<5x20x128xf32>
    %242 = arith.subf %241, %240 : vector<5x20x128xf32>
    %243 = math.exp %242 : vector<5x20x128xf32>
    %cst_108 = arith.constant 1.000000e+00 : f32
    %244 = vector.broadcast %cst_108 : f32 to vector<5x20x128xf32>
    %245 = arith.addf %244, %243 : vector<5x20x128xf32>
    %246 = math.log %245 : vector<5x20x128xf32>
    %247 = arith.addf %239, %246 : vector<5x20x128xf32>
    %cst_109 = arith.constant dense<0.000000e+00> : vector<5x128xf32>
    %248 = vector.multi_reduction <add>, %247, %cst_109 [1] : vector<5x20x128xf32> to vector<5x128xf32>
    %249 = arith.addf %230, %248 : vector<5x128xf32>
    %c11 = arith.constant 11 : index
    %c0_110 = arith.constant 0 : index
    %c0_111 = arith.constant 0 : index
    %c0_112 = arith.constant 0 : index
    %250 = vector.load %arg7[%c11, %c0_110, %c0_111, %c0_112] : memref<20x5x20x1xf32, #tpu.memory_space<vmem>>, vector<1x5x20x1xf32>
    %251 = vector.shape_cast %250 : vector<1x5x20x1xf32> to vector<5x20x1xf32>
    %252 = vector.broadcast %251 : vector<5x20x1xf32> to vector<5x20x128xf32>
    %253 = arith.addf %252, %37 : vector<5x20x128xf32>
    %254 = vector.extract_strided_slice %37 {offsets = [0, 11, 0], sizes = [5, 1, 128], strides = [1, 1, 1]} : vector<5x20x128xf32> to vector<5x1x128xf32>
    %255 = vector.broadcast %254 : vector<5x1x128xf32> to vector<5x20x128xf32>
    %256 = arith.addf %253, %255 : vector<5x20x128xf32>
    %cst_113 = arith.constant 0.000000e+00 : f32
    %257 = vector.broadcast %cst_113 : f32 to vector<5x20x128xf32>
    %258 = arith.maximumf %256, %257 : vector<5x20x128xf32>
    %259 = math.absf %256 : vector<5x20x128xf32>
    %cst_114 = arith.constant 0.000000e+00 : f32
    %260 = vector.broadcast %cst_114 : f32 to vector<5x20x128xf32>
    %261 = arith.subf %260, %259 : vector<5x20x128xf32>
    %262 = math.exp %261 : vector<5x20x128xf32>
    %cst_115 = arith.constant 1.000000e+00 : f32
    %263 = vector.broadcast %cst_115 : f32 to vector<5x20x128xf32>
    %264 = arith.addf %263, %262 : vector<5x20x128xf32>
    %265 = math.log %264 : vector<5x20x128xf32>
    %266 = arith.addf %258, %265 : vector<5x20x128xf32>
    %cst_116 = arith.constant dense<0.000000e+00> : vector<5x128xf32>
    %267 = vector.multi_reduction <add>, %266, %cst_116 [1] : vector<5x20x128xf32> to vector<5x128xf32>
    %268 = arith.addf %249, %267 : vector<5x128xf32>
    %c12 = arith.constant 12 : index
    %c0_117 = arith.constant 0 : index
    %c0_118 = arith.constant 0 : index
    %c0_119 = arith.constant 0 : index
    %269 = vector.load %arg7[%c12, %c0_117, %c0_118, %c0_119] : memref<20x5x20x1xf32, #tpu.memory_space<vmem>>, vector<1x5x20x1xf32>
    %270 = vector.shape_cast %269 : vector<1x5x20x1xf32> to vector<5x20x1xf32>
    %271 = vector.broadcast %270 : vector<5x20x1xf32> to vector<5x20x128xf32>
    %272 = arith.addf %271, %37 : vector<5x20x128xf32>
    %273 = vector.extract_strided_slice %37 {offsets = [0, 12, 0], sizes = [5, 1, 128], strides = [1, 1, 1]} : vector<5x20x128xf32> to vector<5x1x128xf32>
    %274 = vector.broadcast %273 : vector<5x1x128xf32> to vector<5x20x128xf32>
    %275 = arith.addf %272, %274 : vector<5x20x128xf32>
    %cst_120 = arith.constant 0.000000e+00 : f32
    %276 = vector.broadcast %cst_120 : f32 to vector<5x20x128xf32>
    %277 = arith.maximumf %275, %276 : vector<5x20x128xf32>
    %278 = math.absf %275 : vector<5x20x128xf32>
    %cst_121 = arith.constant 0.000000e+00 : f32
    %279 = vector.broadcast %cst_121 : f32 to vector<5x20x128xf32>
    %280 = arith.subf %279, %278 : vector<5x20x128xf32>
    %281 = math.exp %280 : vector<5x20x128xf32>
    %cst_122 = arith.constant 1.000000e+00 : f32
    %282 = vector.broadcast %cst_122 : f32 to vector<5x20x128xf32>
    %283 = arith.addf %282, %281 : vector<5x20x128xf32>
    %284 = math.log %283 : vector<5x20x128xf32>
    %285 = arith.addf %277, %284 : vector<5x20x128xf32>
    %cst_123 = arith.constant dense<0.000000e+00> : vector<5x128xf32>
    %286 = vector.multi_reduction <add>, %285, %cst_123 [1] : vector<5x20x128xf32> to vector<5x128xf32>
    %287 = arith.addf %268, %286 : vector<5x128xf32>
    %c13 = arith.constant 13 : index
    %c0_124 = arith.constant 0 : index
    %c0_125 = arith.constant 0 : index
    %c0_126 = arith.constant 0 : index
    %288 = vector.load %arg7[%c13, %c0_124, %c0_125, %c0_126] : memref<20x5x20x1xf32, #tpu.memory_space<vmem>>, vector<1x5x20x1xf32>
    %289 = vector.shape_cast %288 : vector<1x5x20x1xf32> to vector<5x20x1xf32>
    %290 = vector.broadcast %289 : vector<5x20x1xf32> to vector<5x20x128xf32>
    %291 = arith.addf %290, %37 : vector<5x20x128xf32>
    %292 = vector.extract_strided_slice %37 {offsets = [0, 13, 0], sizes = [5, 1, 128], strides = [1, 1, 1]} : vector<5x20x128xf32> to vector<5x1x128xf32>
    %293 = vector.broadcast %292 : vector<5x1x128xf32> to vector<5x20x128xf32>
    %294 = arith.addf %291, %293 : vector<5x20x128xf32>
    %cst_127 = arith.constant 0.000000e+00 : f32
    %295 = vector.broadcast %cst_127 : f32 to vector<5x20x128xf32>
    %296 = arith.maximumf %294, %295 : vector<5x20x128xf32>
    %297 = math.absf %294 : vector<5x20x128xf32>
    %cst_128 = arith.constant 0.000000e+00 : f32
    %298 = vector.broadcast %cst_128 : f32 to vector<5x20x128xf32>
    %299 = arith.subf %298, %297 : vector<5x20x128xf32>
    %300 = math.exp %299 : vector<5x20x128xf32>
    %cst_129 = arith.constant 1.000000e+00 : f32
    %301 = vector.broadcast %cst_129 : f32 to vector<5x20x128xf32>
    %302 = arith.addf %301, %300 : vector<5x20x128xf32>
    %303 = math.log %302 : vector<5x20x128xf32>
    %304 = arith.addf %296, %303 : vector<5x20x128xf32>
    %cst_130 = arith.constant dense<0.000000e+00> : vector<5x128xf32>
    %305 = vector.multi_reduction <add>, %304, %cst_130 [1] : vector<5x20x128xf32> to vector<5x128xf32>
    %306 = arith.addf %287, %305 : vector<5x128xf32>
    %c14 = arith.constant 14 : index
    %c0_131 = arith.constant 0 : index
    %c0_132 = arith.constant 0 : index
    %c0_133 = arith.constant 0 : index
    %307 = vector.load %arg7[%c14, %c0_131, %c0_132, %c0_133] : memref<20x5x20x1xf32, #tpu.memory_space<vmem>>, vector<1x5x20x1xf32>
    %308 = vector.shape_cast %307 : vector<1x5x20x1xf32> to vector<5x20x1xf32>
    %309 = vector.broadcast %308 : vector<5x20x1xf32> to vector<5x20x128xf32>
    %310 = arith.addf %309, %37 : vector<5x20x128xf32>
    %311 = vector.extract_strided_slice %37 {offsets = [0, 14, 0], sizes = [5, 1, 128], strides = [1, 1, 1]} : vector<5x20x128xf32> to vector<5x1x128xf32>
    %312 = vector.broadcast %311 : vector<5x1x128xf32> to vector<5x20x128xf32>
    %313 = arith.addf %310, %312 : vector<5x20x128xf32>
    %cst_134 = arith.constant 0.000000e+00 : f32
    %314 = vector.broadcast %cst_134 : f32 to vector<5x20x128xf32>
    %315 = arith.maximumf %313, %314 : vector<5x20x128xf32>
    %316 = math.absf %313 : vector<5x20x128xf32>
    %cst_135 = arith.constant 0.000000e+00 : f32
    %317 = vector.broadcast %cst_135 : f32 to vector<5x20x128xf32>
    %318 = arith.subf %317, %316 : vector<5x20x128xf32>
    %319 = math.exp %318 : vector<5x20x128xf32>
    %cst_136 = arith.constant 1.000000e+00 : f32
    %320 = vector.broadcast %cst_136 : f32 to vector<5x20x128xf32>
    %321 = arith.addf %320, %319 : vector<5x20x128xf32>
    %322 = math.log %321 : vector<5x20x128xf32>
    %323 = arith.addf %315, %322 : vector<5x20x128xf32>
    %cst_137 = arith.constant dense<0.000000e+00> : vector<5x128xf32>
    %324 = vector.multi_reduction <add>, %323, %cst_137 [1] : vector<5x20x128xf32> to vector<5x128xf32>
    %325 = arith.addf %306, %324 : vector<5x128xf32>
    %c15 = arith.constant 15 : index
    %c0_138 = arith.constant 0 : index
    %c0_139 = arith.constant 0 : index
    %c0_140 = arith.constant 0 : index
    %326 = vector.load %arg7[%c15, %c0_138, %c0_139, %c0_140] : memref<20x5x20x1xf32, #tpu.memory_space<vmem>>, vector<1x5x20x1xf32>
    %327 = vector.shape_cast %326 : vector<1x5x20x1xf32> to vector<5x20x1xf32>
    %328 = vector.broadcast %327 : vector<5x20x1xf32> to vector<5x20x128xf32>
    %329 = arith.addf %328, %37 : vector<5x20x128xf32>
    %330 = vector.extract_strided_slice %37 {offsets = [0, 15, 0], sizes = [5, 1, 128], strides = [1, 1, 1]} : vector<5x20x128xf32> to vector<5x1x128xf32>
    %331 = vector.broadcast %330 : vector<5x1x128xf32> to vector<5x20x128xf32>
    %332 = arith.addf %329, %331 : vector<5x20x128xf32>
    %cst_141 = arith.constant 0.000000e+00 : f32
    %333 = vector.broadcast %cst_141 : f32 to vector<5x20x128xf32>
    %334 = arith.maximumf %332, %333 : vector<5x20x128xf32>
    %335 = math.absf %332 : vector<5x20x128xf32>
    %cst_142 = arith.constant 0.000000e+00 : f32
    %336 = vector.broadcast %cst_142 : f32 to vector<5x20x128xf32>
    %337 = arith.subf %336, %335 : vector<5x20x128xf32>
    %338 = math.exp %337 : vector<5x20x128xf32>
    %cst_143 = arith.constant 1.000000e+00 : f32
    %339 = vector.broadcast %cst_143 : f32 to vector<5x20x128xf32>
    %340 = arith.addf %339, %338 : vector<5x20x128xf32>
    %341 = math.log %340 : vector<5x20x128xf32>
    %342 = arith.addf %334, %341 : vector<5x20x128xf32>
    %cst_144 = arith.constant dense<0.000000e+00> : vector<5x128xf32>
    %343 = vector.multi_reduction <add>, %342, %cst_144 [1] : vector<5x20x128xf32> to vector<5x128xf32>
    %344 = arith.addf %325, %343 : vector<5x128xf32>
    %c16 = arith.constant 16 : index
    %c0_145 = arith.constant 0 : index
    %c0_146 = arith.constant 0 : index
    %c0_147 = arith.constant 0 : index
    %345 = vector.load %arg7[%c16, %c0_145, %c0_146, %c0_147] : memref<20x5x20x1xf32, #tpu.memory_space<vmem>>, vector<1x5x20x1xf32>
    %346 = vector.shape_cast %345 : vector<1x5x20x1xf32> to vector<5x20x1xf32>
    %347 = vector.broadcast %346 : vector<5x20x1xf32> to vector<5x20x128xf32>
    %348 = arith.addf %347, %37 : vector<5x20x128xf32>
    %349 = vector.extract_strided_slice %37 {offsets = [0, 16, 0], sizes = [5, 1, 128], strides = [1, 1, 1]} : vector<5x20x128xf32> to vector<5x1x128xf32>
    %350 = vector.broadcast %349 : vector<5x1x128xf32> to vector<5x20x128xf32>
    %351 = arith.addf %348, %350 : vector<5x20x128xf32>
    %cst_148 = arith.constant 0.000000e+00 : f32
    %352 = vector.broadcast %cst_148 : f32 to vector<5x20x128xf32>
    %353 = arith.maximumf %351, %352 : vector<5x20x128xf32>
    %354 = math.absf %351 : vector<5x20x128xf32>
    %cst_149 = arith.constant 0.000000e+00 : f32
    %355 = vector.broadcast %cst_149 : f32 to vector<5x20x128xf32>
    %356 = arith.subf %355, %354 : vector<5x20x128xf32>
    %357 = math.exp %356 : vector<5x20x128xf32>
    %cst_150 = arith.constant 1.000000e+00 : f32
    %358 = vector.broadcast %cst_150 : f32 to vector<5x20x128xf32>
    %359 = arith.addf %358, %357 : vector<5x20x128xf32>
    %360 = math.log %359 : vector<5x20x128xf32>
    %361 = arith.addf %353, %360 : vector<5x20x128xf32>
    %cst_151 = arith.constant dense<0.000000e+00> : vector<5x128xf32>
    %362 = vector.multi_reduction <add>, %361, %cst_151 [1] : vector<5x20x128xf32> to vector<5x128xf32>
    %363 = arith.addf %344, %362 : vector<5x128xf32>
    %c17 = arith.constant 17 : index
    %c0_152 = arith.constant 0 : index
    %c0_153 = arith.constant 0 : index
    %c0_154 = arith.constant 0 : index
    %364 = vector.load %arg7[%c17, %c0_152, %c0_153, %c0_154] : memref<20x5x20x1xf32, #tpu.memory_space<vmem>>, vector<1x5x20x1xf32>
    %365 = vector.shape_cast %364 : vector<1x5x20x1xf32> to vector<5x20x1xf32>
    %366 = vector.broadcast %365 : vector<5x20x1xf32> to vector<5x20x128xf32>
    %367 = arith.addf %366, %37 : vector<5x20x128xf32>
    %368 = vector.extract_strided_slice %37 {offsets = [0, 17, 0], sizes = [5, 1, 128], strides = [1, 1, 1]} : vector<5x20x128xf32> to vector<5x1x128xf32>
    %369 = vector.broadcast %368 : vector<5x1x128xf32> to vector<5x20x128xf32>
    %370 = arith.addf %367, %369 : vector<5x20x128xf32>
    %cst_155 = arith.constant 0.000000e+00 : f32
    %371 = vector.broadcast %cst_155 : f32 to vector<5x20x128xf32>
    %372 = arith.maximumf %370, %371 : vector<5x20x128xf32>
    %373 = math.absf %370 : vector<5x20x128xf32>
    %cst_156 = arith.constant 0.000000e+00 : f32
    %374 = vector.broadcast %cst_156 : f32 to vector<5x20x128xf32>
    %375 = arith.subf %374, %373 : vector<5x20x128xf32>
    %376 = math.exp %375 : vector<5x20x128xf32>
    %cst_157 = arith.constant 1.000000e+00 : f32
    %377 = vector.broadcast %cst_157 : f32 to vector<5x20x128xf32>
    %378 = arith.addf %377, %376 : vector<5x20x128xf32>
    %379 = math.log %378 : vector<5x20x128xf32>
    %380 = arith.addf %372, %379 : vector<5x20x128xf32>
    %cst_158 = arith.constant dense<0.000000e+00> : vector<5x128xf32>
    %381 = vector.multi_reduction <add>, %380, %cst_158 [1] : vector<5x20x128xf32> to vector<5x128xf32>
    %382 = arith.addf %363, %381 : vector<5x128xf32>
    %c18 = arith.constant 18 : index
    %c0_159 = arith.constant 0 : index
    %c0_160 = arith.constant 0 : index
    %c0_161 = arith.constant 0 : index
    %383 = vector.load %arg7[%c18, %c0_159, %c0_160, %c0_161] : memref<20x5x20x1xf32, #tpu.memory_space<vmem>>, vector<1x5x20x1xf32>
    %384 = vector.shape_cast %383 : vector<1x5x20x1xf32> to vector<5x20x1xf32>
    %385 = vector.broadcast %384 : vector<5x20x1xf32> to vector<5x20x128xf32>
    %386 = arith.addf %385, %37 : vector<5x20x128xf32>
    %387 = vector.extract_strided_slice %37 {offsets = [0, 18, 0], sizes = [5, 1, 128], strides = [1, 1, 1]} : vector<5x20x128xf32> to vector<5x1x128xf32>
    %388 = vector.broadcast %387 : vector<5x1x128xf32> to vector<5x20x128xf32>
    %389 = arith.addf %386, %388 : vector<5x20x128xf32>
    %cst_162 = arith.constant 0.000000e+00 : f32
    %390 = vector.broadcast %cst_162 : f32 to vector<5x20x128xf32>
    %391 = arith.maximumf %389, %390 : vector<5x20x128xf32>
    %392 = math.absf %389 : vector<5x20x128xf32>
    %cst_163 = arith.constant 0.000000e+00 : f32
    %393 = vector.broadcast %cst_163 : f32 to vector<5x20x128xf32>
    %394 = arith.subf %393, %392 : vector<5x20x128xf32>
    %395 = math.exp %394 : vector<5x20x128xf32>
    %cst_164 = arith.constant 1.000000e+00 : f32
    %396 = vector.broadcast %cst_164 : f32 to vector<5x20x128xf32>
    %397 = arith.addf %396, %395 : vector<5x20x128xf32>
    %398 = math.log %397 : vector<5x20x128xf32>
    %399 = arith.addf %391, %398 : vector<5x20x128xf32>
    %cst_165 = arith.constant dense<0.000000e+00> : vector<5x128xf32>
    %400 = vector.multi_reduction <add>, %399, %cst_165 [1] : vector<5x20x128xf32> to vector<5x128xf32>
    %401 = arith.addf %382, %400 : vector<5x128xf32>
    %c19 = arith.constant 19 : index
    %c0_166 = arith.constant 0 : index
    %c0_167 = arith.constant 0 : index
    %c0_168 = arith.constant 0 : index
    %402 = vector.load %arg7[%c19, %c0_166, %c0_167, %c0_168] : memref<20x5x20x1xf32, #tpu.memory_space<vmem>>, vector<1x5x20x1xf32>
    %403 = vector.shape_cast %402 : vector<1x5x20x1xf32> to vector<5x20x1xf32>
    %404 = vector.broadcast %403 : vector<5x20x1xf32> to vector<5x20x128xf32>
    %405 = arith.addf %404, %37 : vector<5x20x128xf32>
    %406 = vector.extract_strided_slice %37 {offsets = [0, 19, 0], sizes = [5, 1, 128], strides = [1, 1, 1]} : vector<5x20x128xf32> to vector<5x1x128xf32>
    %407 = vector.broadcast %406 : vector<5x1x128xf32> to vector<5x20x128xf32>
    %408 = arith.addf %405, %407 : vector<5x20x128xf32>
    %cst_169 = arith.constant 0.000000e+00 : f32
    %409 = vector.broadcast %cst_169 : f32 to vector<5x20x128xf32>
    %410 = arith.maximumf %408, %409 : vector<5x20x128xf32>
    %411 = math.absf %408 : vector<5x20x128xf32>
    %cst_170 = arith.constant 0.000000e+00 : f32
    %412 = vector.broadcast %cst_170 : f32 to vector<5x20x128xf32>
    %413 = arith.subf %412, %411 : vector<5x20x128xf32>
    %414 = math.exp %413 : vector<5x20x128xf32>
    %cst_171 = arith.constant 1.000000e+00 : f32
    %415 = vector.broadcast %cst_171 : f32 to vector<5x20x128xf32>
    %416 = arith.addf %415, %414 : vector<5x20x128xf32>
    %417 = math.log %416 : vector<5x20x128xf32>
    %418 = arith.addf %410, %417 : vector<5x20x128xf32>
    %cst_172 = arith.constant dense<0.000000e+00> : vector<5x128xf32>
    %419 = vector.multi_reduction <add>, %418, %cst_172 [1] : vector<5x20x128xf32> to vector<5x128xf32>
    %420 = arith.addf %401, %419 : vector<5x128xf32>
    %cst_173 = arith.constant 0.000000e+00 : f32
    %421 = vector.broadcast %cst_173 : f32 to vector<5x128xf32>
    %422 = arith.subf %421, %420 : vector<5x128xf32>
    %423 = math.log %422 : vector<5x128xf32>
    %c0_174 = arith.constant 0 : index
    %c0_175 = arith.constant 0 : index
    %424 = vector.load %arg8[%c0_174, %c0_175] : memref<5x128xf32, #tpu.memory_space<vmem>>, vector<5x128xf32>
    tpu.vector_store %arg8[%c0_174, %c0_175], %423 {strides = array<i32>} : memref<5x128xf32, #tpu.memory_space<vmem>>, vector<5x128xf32>,
    return
  }
  func.func @transform_0(%arg0: i32) -> (i32, i32) {
    %c0_i32 = arith.constant 0 : i32
    %c0_i32_0 = arith.constant 0 : i32
    return %c0_i32, %arg0 : i32, i32
  }
  func.func @transform_1(%arg0: i32) -> (i32, i32) {
    %c0_i32 = arith.constant 0 : i32
    %c0_i32_0 = arith.constant 0 : i32
    %c0_i32_1 = arith.constant 0 : i32
    return %c0_i32, %c0_i32_0 : i32, i32
  }
  func.func @transform_2(%arg0: i32) -> (i32, i32) {
    %c0_i32 = arith.constant 0 : i32
    %c0_i32_0 = arith.constant 0 : i32
    %c0_i32_1 = arith.constant 0 : i32
    return %c0_i32, %c0_i32_0 : i32, i32
  }
  func.func @transform_3(%arg0: i32) -> (i32, i32, i32, i32) {
    %c0_i32 = arith.constant 0 : i32
    %c0_i32_0 = arith.constant 0 : i32
    %c0_i32_1 = arith.constant 0 : i32
    %c0_i32_2 = arith.constant 0 : i32
    %c0_i32_3 = arith.constant 0 : i32
    return %c0_i32, %c0_i32_0, %c0_i32_1, %c0_i32_2 : i32, i32, i32, i32
  }
  func.func @transform_4(%arg0: i32) -> (i32, i32, i32, i32) {
    %c0_i32 = arith.constant 0 : i32
    %c0_i32_0 = arith.constant 0 : i32
    %c0_i32_1 = arith.constant 0 : i32
    %c0_i32_2 = arith.constant 0 : i32
    %c0_i32_3 = arith.constant 0 : i32
    return %c0_i32, %c0_i32_0, %c0_i32_1, %c0_i32_2 : i32, i32, i32, i32
  }
  func.func @transform_5(%arg0: i32) -> (i32, i32, i32, i32) {
    %c0_i32 = arith.constant 0 : i32
    %c0_i32_0 = arith.constant 0 : i32
    %c0_i32_1 = arith.constant 0 : i32
    %c0_i32_2 = arith.constant 0 : i32
    %c0_i32_3 = arith.constant 0 : i32
    return %c0_i32, %c0_i32_0, %c0_i32_1, %c0_i32_2 : i32, i32, i32, i32
  }
  func.func @transform_6(%arg0: i32) -> (i32, i32, i32, i32) {
    %c0_i32 = arith.constant 0 : i32
    %c0_i32_0 = arith.constant 0 : i32
    %c0_i32_1 = arith.constant 0 : i32
    %c0_i32_2 = arith.constant 0 : i32
    %c0_i32_3 = arith.constant 0 : i32
    return %c0_i32, %c0_i32_0, %c0_i32_1, %c0_i32_2 : i32, i32, i32, i32
  }
  func.func @transform_7(%arg0: i32) -> (i32, i32) {
    %c0_i32 = arith.constant 0 : i32
    %c0_i32_0 = arith.constant 0 : i32
    return %c0_i32, %arg0 : i32, i32
  }
}

</mosaic_0001>

<llo_original>
// kernel: spnnet_forward.1
$region0: #{spnnet_forward.1}
  #allocation0 [shape = 'u32[]', space=smem, size = 0x4, offset = 0x4, fixed_abs, tag = 'smem constant byte address 0x4 - core index']
  #allocation1 [shape = 'u32[72,128]{1,0:T(1,128)}', space=vmem, size = 0x9000, scoped, tag = 'internal scratch']
  %s0 = inlined_call_operand.vmem [shape: f32[16,128], index: 0, kind: input, shape index: {}]
  %s1 = inlined_call_operand.vmem [shape: f32[20,16], index: 1, kind: input, shape index: {}]
  %s2 = inlined_call_operand.vmem [shape: f32[20,1], index: 2, kind: input, shape index: {}]
  %s3 = inlined_call_operand.vmem [shape: f32[2,5,20,1], index: 3, kind: input, shape index: {}]
  %s4 = inlined_call_operand.vmem [shape: f32[2,5,20,1], index: 4, kind: input, shape index: {}]
  %s5 = inlined_call_operand.vmem [shape: f32[2,5,20,1], index: 5, kind: input, shape index: {}]
  %s6 = inlined_call_operand.vmem [shape: f32[20,5,20,1], index: 6, kind: input, shape index: {}]
  %s7 = inlined_call_operand.vmem [shape: f32[5,128], index: 7, kind: output, shape index: {}]
  %s8 = sld [smem:[#allocation0]]
  $region38: #{spnnet_forward.1} parent=0
    _
  %s10 = ssub.s32 1, %s8
  %s11 = scalar_select 0, %s10, %s8
  // Predicated region
  $region2: #{spnnet_forward.1} parent=0 // pred_check
    _
  $region3: #{spnnet_forward.1} parent=0 // pred_check_branch
    %13 = sbr.rel (0) target = $region5
  $region4: #{spnnet_forward.1} parent=0 // pred_region
    _
  $region5: #{spnnet_forward.1} parent=0 // pred_fallthru
    _
  // Predicated region
  $region6: #{spnnet_forward.1} parent=0 // pred_check
    _
  $region7: #{spnnet_forward.1} parent=0 // pred_check_branch
    %15 = sbr.rel (0) target = $region9
  $region8: #{spnnet_forward.1} parent=0 // pred_region
    _
  $region9: #{spnnet_forward.1} parent=0 // pred_fallthru
    _
  // Predicated region
  $region10: #{spnnet_forward.1} parent=0 // pred_check
    _
  $region11: #{spnnet_forward.1} parent=0 // pred_check_branch
    %17 = sbr.rel (0) target = $region13
  $region12: #{spnnet_forward.1} parent=0 // pred_region
    _
  $region13: #{spnnet_forward.1} parent=0 // pred_fallthru
    _
  // Predicated region
  $region14: #{spnnet_forward.1} parent=0 // pred_check
    _
  $region15: #{spnnet_forward.1} parent=0 // pred_check_branch
    %19 = sbr.rel (0) target = $region17
  $region16: #{spnnet_forward.1} parent=0 // pred_region
    _
  $region17: #{spnnet_forward.1} parent=0 // pred_fallthru
    _
  // Predicated region
  $region18: #{spnnet_forward.1} parent=0 // pred_check
    _
  $region19: #{spnnet_forward.1} parent=0 // pred_check_branch
    %21 = sbr.rel (0) target = $region21
  $region20: #{spnnet_forward.1} parent=0 // pred_region
    _
  $region21: #{spnnet_forward.1} parent=0 // pred_fallthru
    _
  // Predicated region
  $region22: #{spnnet_forward.1} parent=0 // pred_check
    _
  $region23: #{spnnet_forward.1} parent=0 // pred_check_branch
    %23 = sbr.rel (0) target = $region25
  $region24: #{spnnet_forward.1} parent=0 // pred_region
    _
  $region25: #{spnnet_forward.1} parent=0 // pred_fallthru
    _
  // Predicated region
  $region26: #{spnnet_forward.1} parent=0 // pred_check
    _
  $region27: #{spnnet_forward.1} parent=0 // pred_check_branch
    %25 = sbr.rel (0) target = $region29
  $region28: #{spnnet_forward.1} parent=0 // pred_region
    _
  $region29: #{spnnet_forward.1} parent=0 // pred_fallthru
    _
  %v26 = vld [vmem:[%s1] sm:$0xff]
  %v27 = vld [vmem:[%s1 + $0x8] sm:$0xff]
  %v28 = vld [vmem:[%s1 + $0x10] sm:$0xf]
  %v29 = vld [vmem:[%s0] sm:$0xff]
  %v30 = vld [vmem:[%s0 + $0x8] sm:$0xff]
  %v31 = vld [vmem:[%s2] sm:$0xff]
  %v32 = vld [vmem:[%s2 + $0x8] sm:$0xff]
  %v33 = vld [vmem:[%s2 + $0x10] sm:$0xf]
  %35 = vset.pattern.permute.xlu0 0
  %36 = vperm.xlu0 %35, %v31
  %v37 = vpop.permute.xlu0 %36
  %40 = vset.pattern.permute.xlu0 0
  %41 = vperm.xlu0 %40, %v32
  %v42 = vpop.permute.xlu0 %41
  %45 = vset.pattern.permute.xlu0 0
  %46 = vperm.xlu0 %45, %v33
  %v47 = vpop.permute.xlu0 %46
  %vm49 = vcmask 130048
  %v51 = vsel %vm49, %v26, 0
  %v54 = vsel %vm49, %v27, 0
  %v57 = vsel %vm49, %v28, 0
  %59 = vmatpush.msra.mxu0 0.0
  %60 = vmatpush.msra.mxu0 0.0
  %61 = vmatpush.msra.mxu0 0.0
  %62 = vmatpush.msra.mxu0 0.0
  %63 = vmatpush.msra.mxu0 0.0
  %64 = vmatpush.msra.mxu0 0.0
  %65 = vmatpush.msra.mxu0 0.0
  %66 = vmatpush.msra.mxu0 0.0
  %67 = vmatpush.msra.mxu0 0.0
  %68 = vmatpush.msra.mxu0 0.0
  %69 = vmatpush.msra.mxu0 0.0
  %70 = vmatpush.msra.mxu0 0.0
  %71 = vmatpush.msra.mxu0 0.0
  %72 = vmatpush.msra.mxu0 0.0
  %73 = vmatpush.msra.mxu0 %v30
  %74 = vmatpush.msra.mxu0 %v29
  %75 = vmatmul.f32.gmra.mxu0 %v51
  %v76 = vpop.f32.mrf.mxu0
  %v77 = vadd.f32 %v37, %v76
  %78 = vmatmul.f32.gmra.mxu0 %v54
  %v79 = vpop.f32.mrf.mxu0
  %v80 = vadd.f32 %v42, %v79
  %81 = vmatmul.f32.gmra.mxu0 %v57
  %v82 = vpop.f32.mrf.mxu0
  %v83 = vadd.f32 %v47, %v82
  %84 = vdwg.mxu0
  %v85 = vmax.f32 %v77, 0.0
  %v86 = vmax.f32 %v80, 0.0
  %v87 = vmax.f32 %v83, 0.0
  %v88 = vld [vmem:[%s3] sm:$0xff]
  %v89 = vld [vmem:[%s3 + $0x8] sm:$0xff]
  %v90 = vld [vmem:[%s3 + $0x10] sm:$0xf]
  %v91 = vld [vmem:[%s3 + $0x18] sm:$0xff]
  %v92 = vld [vmem:[%s3 + $0x20] sm:$0xff]
  %v93 = vld [vmem:[%s3 + $0x28] sm:$0xf]
  %v94 = vld [vmem:[%s3 + $0x30] sm:$0xff]
  %v95 = vld [vmem:[%s3 + $0x38] sm:$0xff]
  %v96 = vld [vmem:[%s3 + $0x40] sm:$0xf]
  %v97 = vld [vmem:[%s3 + $0x48] sm:$0xff]
  %v98 = vld [vmem:[%s3 + $0x50] sm:$0xff]
  %v99 = vld [vmem:[%s3 + $0x58] sm:$0xf]
  %v100 = vld [vmem:[%s3 + $0x60] sm:$0xff]
  %v101 = vld [vmem:[%s3 + $0x68] sm:$0xff]
  %v102 = vld [vmem:[%s3 + $0x70] sm:$0xf]
  %104 = vset.pattern.permute.xlu0 0
  %105 = vperm.xlu0 %104, %v88
  %v106 = vpop.permute.xlu0 %105
  %109 = vset.pattern.permute.xlu0 0
  %110 = vperm.xlu0 %109, %v89
  %v111 = vpop.permute.xlu0 %110
  %114 = vset.pattern.permute.xlu0 0
  %115 = vperm.xlu0 %114, %v90
  %v116 = vpop.permute.xlu0 %115
  %119 = vset.pattern.permute.xlu0 0
  %120 = vperm.xlu0 %119, %v91
  %v121 = vpop.permute.xlu0 %120
  %124 = vset.pattern.permute.xlu0 0
  %125 = vperm.xlu0 %124, %v92
  %v126 = vpop.permute.xlu0 %125
  %129 = vset.pattern.permute.xlu0 0
  %130 = vperm.xlu0 %129, %v93
  %v131 = vpop.permute.xlu0 %130
  %134 = vset.pattern.permute.xlu0 0
  %135 = vperm.xlu0 %134, %v94
  %v136 = vpop.permute.xlu0 %135
  %139 = vset.pattern.permute.xlu0 0
  %140 = vperm.xlu0 %139, %v95
  %v141 = vpop.permute.xlu0 %140
  %144 = vset.pattern.permute.xlu0 0
  %145 = vperm.xlu0 %144, %v96
  %v146 = vpop.permute.xlu0 %145
  %149 = vset.pattern.permute.xlu0 0
  %150 = vperm.xlu0 %149, %v97
  %v151 = vpop.permute.xlu0 %150
  %154 = vset.pattern.permute.xlu0 0
  %155 = vperm.xlu0 %154, %v98
  %v156 = vpop.permute.xlu0 %155
  %159 = vset.pattern.permute.xlu0 0
  %160 = vperm.xlu0 %159, %v99
  %v161 = vpop.permute.xlu0 %160
  %164 = vset.pattern.permute.xlu0 0
  %165 = vperm.xlu0 %164, %v100
  %v166 = vpop.permute.xlu0 %165
  %169 = vset.pattern.permute.xlu0 0
  %170 = vperm.xlu0 %169, %v101
  %v171 = vpop.permute.xlu0 %170
  %174 = vset.pattern.permute.xlu0 0
  %175 = vperm.xlu0 %174, %v102
  %v176 = vpop.permute.xlu0 %175
  %v178 = vmul.f32 %v85, %v106
  %v179 = vmul.f32 %v86, %v111
  %v180 = vmul.f32 %v87, %v116
  %v181 = vmul.f32 %v85, %v121
  %v182 = vmul.f32 %v86, %v126
  %v183 = vmul.f32 %v87, %v131
  %v184 = vmul.f32 %v85, %v136
  %v185 = vmul.f32 %v86, %v141
  %v186 = vmul.f32 %v87, %v146
  %v187 = vmul.f32 %v85, %v151
  %v188 = vmul.f32 %v86, %v156
  %v189 = vmul.f32 %v87, %v161
  %v190 = vmul.f32 %v85, %v166
  %v191 = vmul.f32 %v86, %v171
  %v192 = vmul.f32 %v87, %v176
  %v193 = vld [vmem:[%s4] sm:$0xff]
  %v194 = vld [vmem:[%s4 + $0x8] sm:$0xff]
  %v195 = vld [vmem:[%s4 + $0x10] sm:$0xf]
  %v196 = vld [vmem:[%s4 + $0x18] sm:$0xff]
  %v197 = vld [vmem:[%s4 + $0x20] sm:$0xff]
  %v198 = vld [vmem:[%s4 + $0x28] sm:$0xf]
  %v199 = vld [vmem:[%s4 + $0x30] sm:$0xff]
  %v200 = vld [vmem:[%s4 + $0x38] sm:$0xff]
  %v201 = vld [vmem:[%s4 + $0x40] sm:$0xf]
  %v202 = vld [vmem:[%s4 + $0x48] sm:$0xff]
  %v203 = vld [vmem:[%s4 + $0x50] sm:$0xff]
  %v204 = vld [vmem:[%s4 + $0x58] sm:$0xf]
  %v205 = vld [vmem:[%s4 + $0x60] sm:$0xff]
  %v206 = vld [vmem:[%s4 + $0x68] sm:$0xff]
  %v207 = vld [vmem:[%s4 + $0x70] sm:$0xf]
  %209 = vset.pattern.permute.xlu0 0
  %210 = vperm.xlu0 %209, %v193
  %v211 = vpop.permute.xlu0 %210
  %214 = vset.pattern.permute.xlu0 0
  %215 = vperm.xlu0 %214, %v194
  %v216 = vpop.permute.xlu0 %215
  %219 = vset.pattern.permute.xlu0 0
  %220 = vperm.xlu0 %219, %v195
  %v221 = vpop.permute.xlu0 %220
  %224 = vset.pattern.permute.xlu0 0
  %225 = vperm.xlu0 %224, %v196
  %v226 = vpop.permute.xlu0 %225
  %229 = vset.pattern.permute.xlu0 0
  %230 = vperm.xlu0 %229, %v197
  %v231 = vpop.permute.xlu0 %230
  %234 = vset.pattern.permute.xlu0 0
  %235 = vperm.xlu0 %234, %v198
  %v236 = vpop.permute.xlu0 %235
  %239 = vset.pattern.permute.xlu0 0
  %240 = vperm.xlu0 %239, %v199
  %v241 = vpop.permute.xlu0 %240
  %244 = vset.pattern.permute.xlu0 0
  %245 = vperm.xlu0 %244, %v200
  %v246 = vpop.permute.xlu0 %245
  %249 = vset.pattern.permute.xlu0 0
  %250 = vperm.xlu0 %249, %v201
  %v251 = vpop.permute.xlu0 %250
  %254 = vset.pattern.permute.xlu0 0
  %255 = vperm.xlu0 %254, %v202
  %v256 = vpop.permute.xlu0 %255
  %259 = vset.pattern.permute.xlu0 0
  %260 = vperm.xlu0 %259, %v203
  %v261 = vpop.permute.xlu0 %260
  %264 = vset.pattern.permute.xlu0 0
  %265 = vperm.xlu0 %264, %v204
  %v266 = vpop.permute.xlu0 %265
  %269 = vset.pattern.permute.xlu0 0
  %270 = vperm.xlu0 %269, %v205
  %v271 = vpop.permute.xlu0 %270
  %274 = vset.pattern.permute.xlu0 0
  %275 = vperm.xlu0 %274, %v206
  %v276 = vpop.permute.xlu0 %275
  %279 = vset.pattern.permute.xlu0 0
  %280 = vperm.xlu0 %279, %v207
  %v281 = vpop.permute.xlu0 %280
  %v283 = vsub.f32 %v178, %v211
  %v284 = vsub.f32 %v179, %v216
  %v285 = vsub.f32 %v180, %v221
  %v286 = vsub.f32 %v181, %v226
  %v287 = vsub.f32 %v182, %v231
  %v288 = vsub.f32 %v183, %v236
  %v289 = vsub.f32 %v184, %v241
  %v290 = vsub.f32 %v185, %v246
  %v291 = vsub.f32 %v186, %v251
  %v292 = vsub.f32 %v187, %v256
  %v293 = vsub.f32 %v188, %v261
  %v294 = vsub.f32 %v189, %v266
  %v295 = vsub.f32 %v190, %v271
  %v296 = vsub.f32 %v191, %v276
  %v297 = vsub.f32 %v192, %v281
  %v298 = vld [vmem:[%s5] sm:$0xff]
  %v299 = vld [vmem:[%s5 + $0x8] sm:$0xff]
  %v300 = vld [vmem:[%s5 + $0x10] sm:$0xf]
  %v301 = vld [vmem:[%s5 + $0x18] sm:$0xff]
  %v302 = vld [vmem:[%s5 + $0x20] sm:$0xff]
  %v303 = vld [vmem:[%s5 + $0x28] sm:$0xf]
  %v304 = vld [vmem:[%s5 + $0x30] sm:$0xff]
  %v305 = vld [vmem:[%s5 + $0x38] sm:$0xff]
  %v306 = vld [vmem:[%s5 + $0x40] sm:$0xf]
  %v307 = vld [vmem:[%s5 + $0x48] sm:$0xff]
  %v308 = vld [vmem:[%s5 + $0x50] sm:$0xff]
  %v309 = vld [vmem:[%s5 + $0x58] sm:$0xf]
  %v310 = vld [vmem:[%s5 + $0x60] sm:$0xff]
  %v311 = vld [vmem:[%s5 + $0x68] sm:$0xff]
  %v312 = vld [vmem:[%s5 + $0x70] sm:$0xf]
  %v313 = vmul.f32 %v283, %v283
  %v314 = vmul.f32 %v284, %v284
  %v315 = vmul.f32 %v285, %v285
  %v316 = vmul.f32 %v286, %v286
  %v317 = vmul.f32 %v287, %v287
  %v318 = vmul.f32 %v288, %v288
  %v319 = vmul.f32 %v289, %v289
  %v320 = vmul.f32 %v290, %v290
  %v321 = vmul.f32 %v291, %v291
  %v322 = vmul.f32 %v292, %v292
  %v323 = vmul.f32 %v293, %v293
  %v324 = vmul.f32 %v294, %v294
  %v325 = vmul.f32 %v295, %v295
  %v326 = vmul.f32 %v296, %v296
  %v327 = vmul.f32 %v297, %v297
  %329 = vset.pattern.permute.xlu0 0
  %330 = vperm.xlu0 %329, %v298
  %v331 = vpop.permute.xlu0 %330
  %334 = vset.pattern.permute.xlu0 0
  %335 = vperm.xlu0 %334, %v299
  %v336 = vpop.permute.xlu0 %335
  %339 = vset.pattern.permute.xlu0 0
  %340 = vperm.xlu0 %339, %v300
  %v341 = vpop.permute.xlu0 %340
  %344 = vset.pattern.permute.xlu0 0
  %345 = vperm.xlu0 %344, %v301
  %v346 = vpop.permute.xlu0 %345
  %349 = vset.pattern.permute.xlu0 0
  %350 = vperm.xlu0 %349, %v302
  %v351 = vpop.permute.xlu0 %350
  %354 = vset.pattern.permute.xlu0 0
  %355 = vperm.xlu0 %354, %v303
  %v356 = vpop.permute.xlu0 %355
  %359 = vset.pattern.permute.xlu0 0
  %360 = vperm.xlu0 %359, %v304
  %v361 = vpop.permute.xlu0 %360
  %364 = vset.pattern.permute.xlu0 0
  %365 = vperm.xlu0 %364, %v305
  %v366 = vpop.permute.xlu0 %365
  %369 = vset.pattern.permute.xlu0 0
  %370 = vperm.xlu0 %369, %v306
  %v371 = vpop.permute.xlu0 %370
  %374 = vset.pattern.permute.xlu0 0
  %375 = vperm.xlu0 %374, %v307
  %v376 = vpop.permute.xlu0 %375
  %379 = vset.pattern.permute.xlu0 0
  %380 = vperm.xlu0 %379, %v308
  %v381 = vpop.permute.xlu0 %380
  %384 = vset.pattern.permute.xlu0 0
  %385 = vperm.xlu0 %384, %v309
  %v386 = vpop.permute.xlu0 %385
  %389 = vset.pattern.permute.xlu0 0
  %390 = vperm.xlu0 %389, %v310
  %v391 = vpop.permute.xlu0 %390
  %394 = vset.pattern.permute.xlu0 0
  %395 = vperm.xlu0 %394, %v311
  %v396 = vpop.permute.xlu0 %395
  %399 = vset.pattern.permute.xlu0 0
  %400 = vperm.xlu0 %399, %v312
  %v401 = vpop.permute.xlu0 %400
  %v403 = vsub.f32 %v331, %v313
  %v404 = vsub.f32 %v336, %v314
  %v405 = vsub.f32 %v341, %v315
  %v406 = vsub.f32 %v346, %v316
  %v407 = vsub.f32 %v351, %v317
  %v408 = vsub.f32 %v356, %v318
  %v409 = vsub.f32 %v361, %v319
  %v410 = vsub.f32 %v366, %v320
  %v411 = vsub.f32 %v371, %v321
  %v412 = vsub.f32 %v376, %v322
  %v413 = vsub.f32 %v381, %v323
  %v414 = vsub.f32 %v386, %v324
  %v415 = vsub.f32 %v391, %v325
  %v416 = vsub.f32 %v396, %v326
  %v417 = vsub.f32 %v401, %v327
  %s418 = scalar_lea.vmem %s3, 120
  %v419 = vld [vmem:[%s418] sm:$0xff]
  %v420 = vld [vmem:[%s418 + $0x8] sm:$0xff]
  %v421 = vld [vmem:[%s418 + $0x10] sm:$0xf]
  %v422 = vld [vmem:[%s418 + $0x18] sm:$0xff]
  %v423 = vld [vmem:[%s418 + $0x20] sm:$0xff]
  %v424 = vld [vmem:[%s418 + $0x28] sm:$0xf]
  %v425 = vld [vmem:[%s418 + $0x30] sm:$0xff]
  %v426 = vld [vmem:[%s418 + $0x38] sm:$0xff]
  %v427 = vld [vmem:[%s418 + $0x40] sm:$0xf]
  %v428 = vld [vmem:[%s418 + $0x48] sm:$0xff]
  %v429 = vld [vmem:[%s418 + $0x50] sm:$0xff]
  %v430 = vld [vmem:[%s418 + $0x58] sm:$0xf]
  %v431 = vld [vmem:[%s418 + $0x60] sm:$0xff]
  %v432 = vld [vmem:[%s418 + $0x68] sm:$0xff]
  %v433 = vld [vmem:[%s418 + $0x70] sm:$0xf]
  %435 = vset.pattern.permute.xlu0 0
  %436 = vperm.xlu0 %435, %v419
  %v437 = vpop.permute.xlu0 %436
  %440 = vset.pattern.permute.xlu0 0
  %441 = vperm.xlu0 %440, %v420
  %v442 = vpop.permute.xlu0 %441
  %445 = vset.pattern.permute.xlu0 0
  %446 = vperm.xlu0 %445, %v421
  %v447 = vpop.permute.xlu0 %446
  %450 = vset.pattern.permute.xlu0 0
  %451 = vperm.xlu0 %450, %v422
  %v452 = vpop.permute.xlu0 %451
  %455 = vset.pattern.permute.xlu0 0
  %456 = vperm.xlu0 %455, %v423
  %v457 = vpop.permute.xlu0 %456
  %460 = vset.pattern.permute.xlu0 0
  %461 = vperm.xlu0 %460, %v424
  %v462 = vpop.permute.xlu0 %461
  %465 = vset.pattern.permute.xlu0 0
  %466 = vperm.xlu0 %465, %v425
  %v467 = vpop.permute.xlu0 %466
  %470 = vset.pattern.permute.xlu0 0
  %471 = vperm.xlu0 %470, %v426
  %v472 = vpop.permute.xlu0 %471
  %475 = vset.pattern.permute.xlu0 0
  %476 = vperm.xlu0 %475, %v427
  %v477 = vpop.permute.xlu0 %476
  %480 = vset.pattern.permute.xlu0 0
  %481 = vperm.xlu0 %480, %v428
  %v482 = vpop.permute.xlu0 %481
  %485 = vset.pattern.permute.xlu0 0
  %486 = vperm.xlu0 %485, %v429
  %v487 = vpop.permute.xlu0 %486
  %490 = vset.pattern.permute.xlu0 0
  %491 = vperm.xlu0 %490, %v430
  %v492 = vpop.permute.xlu0 %491
  %495 = vset.pattern.permute.xlu0 0
  %496 = vperm.xlu0 %495, %v431
  %v497 = vpop.permute.xlu0 %496
  %500 = vset.pattern.permute.xlu0 0
  %501 = vperm.xlu0 %500, %v432
  %v502 = vpop.permute.xlu0 %501
  %505 = vset.pattern.permute.xlu0 0
  %506 = vperm.xlu0 %505, %v433
  %v507 = vpop.permute.xlu0 %506
  %v509 = vmul.f32 %v85, %v437
  %v510 = vmul.f32 %v86, %v442
  %v511 = vmul.f32 %v87, %v447
  %v512 = vmul.f32 %v85, %v452
  %v513 = vmul.f32 %v86, %v457
  %v514 = vmul.f32 %v87, %v462
  %v515 = vmul.f32 %v85, %v467
  %v516 = vmul.f32 %v86, %v472
  %v517 = vmul.f32 %v87, %v477
  %v518 = vmul.f32 %v85, %v482
  %v519 = vmul.f32 %v86, %v487
  %v520 = vmul.f32 %v87, %v492
  %v521 = vmul.f32 %v85, %v497
  %v522 = vmul.f32 %v86, %v502
  %v523 = vmul.f32 %v87, %v507
  %s524 = scalar_lea.vmem %s4, 120
  %v525 = vld [vmem:[%s524] sm:$0xff]
  %v526 = vld [vmem:[%s524 + $0x8] sm:$0xff]
  %v527 = vld [vmem:[%s524 + $0x10] sm:$0xf]
  %v528 = vld [vmem:[%s524 + $0x18] sm:$0xff]
  %v529 = vld [vmem:[%s524 + $0x20] sm:$0xff]
  %v530 = vld [vmem:[%s524 + $0x28] sm:$0xf]
  %v531 = vld [vmem:[%s524 + $0x30] sm:$0xff]
  %v532 = vld [vmem:[%s524 + $0x38] sm:$0xff]
  %v533 = vld [vmem:[%s524 + $0x40] sm:$0xf]
  %v534 = vld [vmem:[%s524 + $0x48] sm:$0xff]
  %v535 = vld [vmem:[%s524 + $0x50] sm:$0xff]
  %v536 = vld [vmem:[%s524 + $0x58] sm:$0xf]
  %v537 = vld [vmem:[%s524 + $0x60] sm:$0xff]
  %v538 = vld [vmem:[%s524 + $0x68] sm:$0xff]
  %v539 = vld [vmem:[%s524 + $0x70] sm:$0xf]
  %541 = vset.pattern.permute.xlu0 0
  %542 = vperm.xlu0 %541, %v525
  %v543 = vpop.permute.xlu0 %542
  %546 = vset.pattern.permute.xlu0 0
  %547 = vperm.xlu0 %546, %v526
  %v548 = vpop.permute.xlu0 %547
  %551 = vset.pattern.permute.xlu0 0
  %552 = vperm.xlu0 %551, %v527
  %v553 = vpop.permute.xlu0 %552
  %556 = vset.pattern.permute.xlu0 0
  %557 = vperm.xlu0 %556, %v528
  %v558 = vpop.permute.xlu0 %557
  %561 = vset.pattern.permute.xlu0 0
  %562 = vperm.xlu0 %561, %v529
  %v563 = vpop.permute.xlu0 %562
  %566 = vset.pattern.permute.xlu0 0
  %567 = vperm.xlu0 %566, %v530
  %v568 = vpop.permute.xlu0 %567
  %571 = vset.pattern.permute.xlu0 0
  %572 = vperm.xlu0 %571, %v531
  %v573 = vpop.permute.xlu0 %572
  %576 = vset.pattern.permute.xlu0 0
  %577 = vperm.xlu0 %576, %v532
  %v578 = vpop.permute.xlu0 %577
  %581 = vset.pattern.permute.xlu0 0
  %582 = vperm.xlu0 %581, %v533
  %v583 = vpop.permute.xlu0 %582
  %586 = vset.pattern.permute.xlu0 0
  %587 = vperm.xlu0 %586, %v534
  %v588 = vpop.permute.xlu0 %587
  %591 = vset.pattern.permute.xlu0 0
  %592 = vperm.xlu0 %591, %v535
  %v593 = vpop.permute.xlu0 %592
  %596 = vset.pattern.permute.xlu0 0
  %597 = vperm.xlu0 %596, %v536
  %v598 = vpop.permute.xlu0 %597
  %601 = vset.pattern.permute.xlu0 0
  %602 = vperm.xlu0 %601, %v537
  %v603 = vpop.permute.xlu0 %602
  %606 = vset.pattern.permute.xlu0 0
  %607 = vperm.xlu0 %606, %v538
  %v608 = vpop.permute.xlu0 %607
  %611 = vset.pattern.permute.xlu0 0
  %612 = vperm.xlu0 %611, %v539
  %v613 = vpop.permute.xlu0 %612
  %v615 = vsub.f32 %v509, %v543
  %v616 = vsub.f32 %v510, %v548
  %v617 = vsub.f32 %v511, %v553
  %v618 = vsub.f32 %v512, %v558
  %v619 = vsub.f32 %v513, %v563
  %v620 = vsub.f32 %v514, %v568
  %v621 = vsub.f32 %v515, %v573
  %v622 = vsub.f32 %v516, %v578
  %v623 = vsub.f32 %v517, %v583
  %v624 = vsub.f32 %v518, %v588
  %v625 = vsub.f32 %v519, %v593
  %v626 = vsub.f32 %v520, %v598
  %v627 = vsub.f32 %v521, %v603
  %v628 = vsub.f32 %v522, %v608
  %v629 = vsub.f32 %v523, %v613
  %s630 = scalar_lea.vmem %s5, 120
  %v631 = vld [vmem:[%s630] sm:$0xff]
  %v632 = vld [vmem:[%s630 + $0x8] sm:$0xff]
  %v633 = vld [vmem:[%s630 + $0x10] sm:$0xf]
  %v634 = vld [vmem:[%s630 + $0x18] sm:$0xff]
  %v635 = vld [vmem:[%s630 + $0x20] sm:$0xff]
  %v636 = vld [vmem:[%s630 + $0x28] sm:$0xf]
  %v637 = vld [vmem:[%s630 + $0x30] sm:$0xff]
  %v638 = vld [vmem:[%s630 + $0x38] sm:$0xff]
  %v639 = vld [vmem:[%s630 + $0x40] sm:$0xf]
  %v640 = vld [vmem:[%s630 + $0x48] sm:$0xff]
  %v641 = vld [vmem:[%s630 + $0x50] sm:$0xff]
  %v642 = vld [vmem:[%s630 + $0x58] sm:$0xf]
  %v643 = vld [vmem:[%s630 + $0x60] sm:$0xff]
  %v644 = vld [vmem:[%s630 + $0x68] sm:$0xff]
  %v645 = vld [vmem:[%s630 + $0x70] sm:$0xf]
  %v646 = vmul.f32 %v615, %v615
  %v647 = vmul.f32 %v616, %v616
  %v648 = vmul.f32 %v617, %v617
  %v649 = vmul.f32 %v618, %v618
  %v650 = vmul.f32 %v619, %v619
  %v651 = vmul.f32 %v620, %v620
  %v652 = vmul.f32 %v621, %v621
  %v653 = vmul.f32 %v622, %v622
  %v654 = vmul.f32 %v623, %v623
  %v655 = vmul.f32 %v624, %v624
  %v656 = vmul.f32 %v625, %v625
  %v657 = vmul.f32 %v626, %v626
  %v658 = vmul.f32 %v627, %v627
  %v659 = vmul.f32 %v628, %v628
  %v660 = vmul.f32 %v629, %v629
  %662 = vset.pattern.permute.xlu0 0
  %663 = vperm.xlu0 %662, %v631
  %v664 = vpop.permute.xlu0 %663
  %667 = vset.pattern.permute.xlu0 0
  %668 = vperm.xlu0 %667, %v632
  %v669 = vpop.permute.xlu0 %668
  %672 = vset.pattern.permute.xlu0 0
  %673 = vperm.xlu0 %672, %v633
  %v674 = vpop.permute.xlu0 %673
  %677 = vset.pattern.permute.xlu0 0
  %678 = vperm.xlu0 %677, %v634
  %v679 = vpop.permute.xlu0 %678
  %682 = vset.pattern.permute.xlu0 0
  %683 = vperm.xlu0 %682, %v635
  %v684 = vpop.permute.xlu0 %683
  %687 = vset.pattern.permute.xlu0 0
  %688 = vperm.xlu0 %687, %v636
  %v689 = vpop.permute.xlu0 %688
  %692 = vset.pattern.permute.xlu0 0
  %693 = vperm.xlu0 %692, %v637
  %v694 = vpop.permute.xlu0 %693
  %697 = vset.pattern.permute.xlu0 0
  %698 = vperm.xlu0 %697, %v638
  %v699 = vpop.permute.xlu0 %698
  %702 = vset.pattern.permute.xlu0 0
  %703 = vperm.xlu0 %702, %v639
  %v704 = vpop.permute.xlu0 %703
  %707 = vset.pattern.permute.xlu0 0
  %708 = vperm.xlu0 %707, %v640
  %v709 = vpop.permute.xlu0 %708
  %712 = vset.pattern.permute.xlu0 0
  %713 = vperm.xlu0 %712, %v641
  %v714 = vpop.permute.xlu0 %713
  %717 = vset.pattern.permute.xlu0 0
  %718 = vperm.xlu0 %717, %v642
  %v719 = vpop.permute.xlu0 %718
  %722 = vset.pattern.permute.xlu0 0
  %723 = vperm.xlu0 %722, %v643
  %v724 = vpop.permute.xlu0 %723
  %727 = vset.pattern.permute.xlu0 0
  %728 = vperm.xlu0 %727, %v644
  %v729 = vpop.permute.xlu0 %728
  %732 = vset.pattern.permute.xlu0 0
  %733 = vperm.xlu0 %732, %v645
  %v734 = vpop.permute.xlu0 %733
  %v736 = vsub.f32 %v664, %v646
  %v737 = vsub.f32 %v669, %v647
  %v738 = vsub.f32 %v674, %v648
  %v739 = vsub.f32 %v679, %v649
  %v740 = vsub.f32 %v684, %v650
  %v741 = vsub.f32 %v689, %v651
  %v742 = vsub.f32 %v694, %v652
  %v743 = vsub.f32 %v699, %v653
  %v744 = vsub.f32 %v704, %v654
  %v745 = vsub.f32 %v709, %v655
  %v746 = vsub.f32 %v714, %v656
  %v747 = vsub.f32 %v719, %v657
  %v748 = vsub.f32 %v724, %v658
  %v749 = vsub.f32 %v729, %v659
  %v750 = vsub.f32 %v734, %v660
  %v751 = vsub.f32 %v403, %v736
  %v752 = vsub.f32 %v404, %v737
  %v753 = vsub.f32 %v405, %v738
  %v754 = vsub.f32 %v406, %v739
  %v755 = vsub.f32 %v407, %v740
  %v756 = vsub.f32 %v408, %v741
  %v757 = vsub.f32 %v409, %v742
  %v758 = vsub.f32 %v410, %v743
  %v759 = vsub.f32 %v411, %v744
  %v760 = vsub.f32 %v412, %v745
  %v761 = vsub.f32 %v413, %v746
  %v762 = vsub.f32 %v414, %v747
  %v763 = vsub.f32 %v415, %v748
  %v764 = vsub.f32 %v416, %v749
  %v765 = vsub.f32 %v417, %v750
  %v766 = vadd.f32 %v736, %v737
  %vm767 = vcmask 1043456
  %v768 = vsel %vm767, %v738, 0.0
  %v769 = vadd.f32 %v766, %v768
  %v770 = vrot.slane %v769, 4
  %v771 = vadd.f32 %v769, %v770
  %v772 = vrot.slane %v771, 2
  %v773 = vadd.f32 %v771, %v772
  %v774 = vrot.slane %v773, 1
  %v775 = vadd.f32 %v773, %v774
  %v776 = vadd.f32 %v739, %v740
  %v777 = vsel %vm767, %v741, 0.0
  %v778 = vadd.f32 %v776, %v777
  %v779 = vrot.slane %v778, 4
  %v780 = vadd.f32 %v778, %v779
  %v781 = vrot.slane %v780, 2
  %v782 = vadd.f32 %v780, %v781
  %v783 = vrot.slane %v782, 1
  %v784 = vadd.f32 %v782, %v783
  %v785 = vadd.f32 %v742, %v743
  %v786 = vsel %vm767, %v744, 0.0
  %v787 = vadd.f32 %v785, %v786
  %v788 = vrot.slane %v787, 4
  %v789 = vadd.f32 %v787, %v788
  %v790 = vrot.slane %v789, 2
  %v791 = vadd.f32 %v789, %v790
  %v792 = vrot.slane %v791, 1
  %v793 = vadd.f32 %v791, %v792
  %v794 = vadd.f32 %v745, %v746
  %v795 = vsel %vm767, %v747, 0.0
  %v796 = vadd.f32 %v794, %v795
  %v797 = vrot.slane %v796, 4
  %v798 = vadd.f32 %v796, %v797
  %v799 = vrot.slane %v798, 2
  %v800 = vadd.f32 %v798, %v799
  %v801 = vrot.slane %v800, 1
  %v802 = vadd.f32 %v800, %v801
  %v803 = vadd.f32 %v748, %v749
  %v804 = vsel %vm767, %v750, 0.0
  %v805 = vadd.f32 %v803, %v804
  %v806 = vrot.slane %v805, 4
  %v807 = vadd.f32 %v805, %v806
  %v808 = vrot.slane %v807, 2
  %v809 = vadd.f32 %v807, %v808
  %v810 = vrot.slane %v809, 1
  %v811 = vadd.f32 %v809, %v810
  %v812 = vmul.f32 %v775, 40.0
  %v813 = vmul.f32 %v784, 40.0
  %v814 = vmul.f32 %v793, 40.0
  %v815 = vmul.f32 %v802, 40.0
  %v816 = vmul.f32 %v811, 40.0
  %v817 = vld [vmem:[%s6] sm:$0xff]
  %v818 = vld [vmem:[%s6 + $0x8] sm:$0xff]
  %v819 = vld [vmem:[%s6 + $0x10] sm:$0xf]
  %v820 = vld [vmem:[%s6 + $0x18] sm:$0xff]
  %v821 = vld [vmem:[%s6 + $0x20] sm:$0xff]
  %v822 = vld [vmem:[%s6 + $0x28] sm:$0xf]
  %v823 = vld [vmem:[%s6 + $0x30] sm:$0xff]
  %v824 = vld [vmem:[%s6 + $0x38] sm:$0xff]
  %v825 = vld [vmem:[%s6 + $0x40] sm:$0xf]
  %v826 = vld [vmem:[%s6 + $0x48] sm:$0xff]
  %v827 = vld [vmem:[%s6 + $0x50] sm:$0xff]
  %v828 = vld [vmem:[%s6 + $0x58] sm:$0xf]
  %v829 = vld [vmem:[%s6 + $0x60] sm:$0xff]
  %v830 = vld [vmem:[%s6 + $0x68] sm:$0xff]
  %v831 = vld [vmem:[%s6 + $0x70] sm:$0xf]
  %833 = vset.pattern.permute.xlu0 0
  %834 = vperm.xlu0 %833, %v817
  %v835 = vpop.permute.xlu0 %834
  %838 = vset.pattern.permute.xlu0 0
  %839 = vperm.xlu0 %838, %v818
  %v840 = vpop.permute.xlu0 %839
  %843 = vset.pattern.permute.xlu0 0
  %844 = vperm.xlu0 %843, %v819
  %v845 = vpop.permute.xlu0 %844
  %848 = vset.pattern.permute.xlu0 0
  %849 = vperm.xlu0 %848, %v820
  %v850 = vpop.permute.xlu0 %849
  %853 = vset.pattern.permute.xlu0 0
  %854 = vperm.xlu0 %853, %v821
  %v855 = vpop.permute.xlu0 %854
  %858 = vset.pattern.permute.xlu0 0
  %859 = vperm.xlu0 %858, %v822
  %v860 = vpop.permute.xlu0 %859
  %863 = vset.pattern.permute.xlu0 0
  %864 = vperm.xlu0 %863, %v823
  %v865 = vpop.permute.xlu0 %864
  %868 = vset.pattern.permute.xlu0 0
  %869 = vperm.xlu0 %868, %v824
  %v870 = vpop.permute.xlu0 %869
  %873 = vset.pattern.permute.xlu0 0
  %874 = vperm.xlu0 %873, %v825
  %v875 = vpop.permute.xlu0 %874
  %878 = vset.pattern.permute.xlu0 0
  %879 = vperm.xlu0 %878, %v826
  %v880 = vpop.permute.xlu0 %879
  %883 = vset.pattern.permute.xlu0 0
  %884 = vperm.xlu0 %883, %v827
  %v885 = vpop.permute.xlu0 %884
  %888 = vset.pattern.permute.xlu0 0
  %889 = vperm.xlu0 %888, %v828
  %v890 = vpop.permute.xlu0 %889
  %893 = vset.pattern.permute.xlu0 0
  %894 = vperm.xlu0 %893, %v829
  %v895 = vpop.permute.xlu0 %894
  %898 = vset.pattern.permute.xlu0 0
  %899 = vperm.xlu0 %898, %v830
  %v900 = vpop.permute.xlu0 %899
  %903 = vset.pattern.permute.xlu0 0
  %904 = vperm.xlu0 %903, %v831
  %v905 = vpop.permute.xlu0 %904
  %v907 = vadd.f32 %v835, %v751
  %v908 = vadd.f32 %v840, %v752
  %v909 = vadd.f32 %v845, %v753
  %v910 = vadd.f32 %v850, %v754
  %v911 = vadd.f32 %v855, %v755
  %v912 = vadd.f32 %v860, %v756
  %v913 = vadd.f32 %v865, %v757
  %v914 = vadd.f32 %v870, %v758
  %v915 = vadd.f32 %v875, %v759
  %v916 = vadd.f32 %v880, %v760
  %v917 = vadd.f32 %v885, %v761
  %v918 = vadd.f32 %v890, %v762
  %v919 = vadd.f32 %v895, %v763
  %v920 = vadd.f32 %v900, %v764
  %v921 = vadd.f32 %v905, %v765
  %v922 = vperm.slane %v751, 0
  %v923 = vperm.slane %v754, 0
  %v924 = vperm.slane %v757, 0
  %v925 = vperm.slane %v760, 0
  %v926 = vperm.slane %v763, 0
  %v927 = vadd.f32 %v907, %v922
  %v928 = vadd.f32 %v908, %v922
  %v929 = vadd.f32 %v909, %v922
  %v930 = vadd.f32 %v910, %v923
  %v931 = vadd.f32 %v911, %v923
  %v932 = vadd.f32 %v912, %v923
  %v933 = vadd.f32 %v913, %v924
  %v934 = vadd.f32 %v914, %v924
  %v935 = vadd.f32 %v915, %v924
  %v936 = vadd.f32 %v916, %v925
  %v937 = vadd.f32 %v917, %v925
  %v938 = vadd.f32 %v918, %v925
  %v939 = vadd.f32 %v919, %v926
  %v940 = vadd.f32 %v920, %v926
  %v941 = vadd.f32 %v921, %v926
  %v942 = vmax.f32 %v927, 0.0
  %v943 = vmax.f32 %v928, 0.0
  %v944 = vmax.f32 %v929, 0.0
  %v945 = vmax.f32 %v930, 0.0
  %v946 = vmax.f32 %v931, 0.0
  %v947 = vmax.f32 %v932, 0.0
  %v948 = vmax.f32 %v933, 0.0
  %v949 = vmax.f32 %v934, 0.0
  %v950 = vmax.f32 %v935, 0.0
  %v951 = vmax.f32 %v936, 0.0
  %v952 = vmax.f32 %v937, 0.0
  %v953 = vmax.f32 %v938, 0.0
  %v954 = vmax.f32 %v939, 0.0
  %v955 = vmax.f32 %v940, 0.0
  %v956 = vmax.f32 %v941, 0.0
  %v957 = vand.u32 2147483647, %v927
  %v958 = vand.u32 2147483647, %v928
  %v959 = vand.u32 2147483647, %v929
  %v960 = vand.u32 2147483647, %v930
  %v961 = vand.u32 2147483647, %v931
  %v962 = vand.u32 2147483647, %v932
  %v963 = vand.u32 2147483647, %v933
  %v964 = vand.u32 2147483647, %v934
  %v965 = vand.u32 2147483647, %v935
  %v966 = vand.u32 2147483647, %v936
  %v967 = vand.u32 2147483647, %v937
  %v968 = vand.u32 2147483647, %v938
  %v969 = vand.u32 2147483647, %v939
  %v970 = vand.u32 2147483647, %v940
  %v971 = vand.u32 2147483647, %v941
  %v972 = vsub.f32 0.0, %v957
  %v973 = vsub.f32 0.0, %v958
  %v974 = vsub.f32 0.0, %v959
  %v975 = vsub.f32 0.0, %v960
  %v976 = vsub.f32 0.0, %v961
  %v977 = vsub.f32 0.0, %v962
  %v978 = vsub.f32 0.0, %v963
  %v979 = vsub.f32 0.0, %v964
  %v980 = vsub.f32 0.0, %v965
  %v981 = vsub.f32 0.0, %v966
  %v982 = vsub.f32 0.0, %v967
  %v983 = vsub.f32 0.0, %v968
  %v984 = vsub.f32 0.0, %v969
  %v985 = vsub.f32 0.0, %v970
  %v986 = vsub.f32 0.0, %v971
  %v987 = vmul.f32 %v972, 1.442695
  %v988 = vpow.pop %v987
  %v989 = vmul.f32 %v973, 1.442695
  %v990 = vpow.pop %v989
  %v991 = vmul.f32 %v974, 1.442695
  %v992 = vpow.pop %v991
  %v993 = vmul.f32 %v975, 1.442695
  %v994 = vpow.pop %v993
  %v995 = vmul.f32 %v976, 1.442695
  %v996 = vpow.pop %v995
  %v997 = vmul.f32 %v977, 1.442695
  %v998 = vpow.pop %v997
  %v999 = vmul.f32 %v978, 1.442695
  %v1000 = vpow.pop %v999
  %v1001 = vmul.f32 %v979, 1.442695
  %v1002 = vpow.pop %v1001
  %v1003 = vmul.f32 %v980, 1.442695
  %v1004 = vpow.pop %v1003
  %v1005 = vmul.f32 %v981, 1.442695
  %v1006 = vpow.pop %v1005
  %v1007 = vmul.f32 %v982, 1.442695
  %v1008 = vpow.pop %v1007
  %v1009 = vmul.f32 %v983, 1.442695
  %v1010 = vpow.pop %v1009
  %v1011 = vmul.f32 %v984, 1.442695
  %v1012 = vpow.pop %v1011
  %v1013 = vmul.f32 %v985, 1.442695
  %v1014 = vpow.pop %v1013
  %v1015 = vmul.f32 %v986, 1.442695
  %v1016 = vpow.pop %v1015
  %v1017 = vadd.f32 %v988, 1.0
  %v1018 = vadd.f32 %v990, 1.0
  %v1019 = vadd.f32 %v992, 1.0
  %v1020 = vadd.f32 %v994, 1.0
  %v1021 = vadd.f32 %v996, 1.0
  %v1022 = vadd.f32 %v998, 1.0
  %v1023 = vadd.f32 %v1000, 1.0
  %v1024 = vadd.f32 %v1002, 1.0
  %v1025 = vadd.f32 %v1004, 1.0
  %v1026 = vadd.f32 %v1006, 1.0
  %v1027 = vadd.f32 %v1008, 1.0
  %v1028 = vadd.f32 %v1010, 1.0
  %v1029 = vadd.f32 %v1012, 1.0
  %v1030 = vadd.f32 %v1014, 1.0
  %v1031 = vadd.f32 %v1016, 1.0
  %v1032 = vlog2.pop %v1017
  %v1033 = vmul.f32 %v1032, 0.6931472
  %v1034 = vlog2.pop %v1018
  %v1035 = vmul.f32 %v1034, 0.6931472
  %v1036 = vlog2.pop %v1019
  %v1037 = vmul.f32 %v1036, 0.6931472
  %v1038 = vlog2.pop %v1020
  %v1039 = vmul.f32 %v1038, 0.6931472
  %v1040 = vlog2.pop %v1021
  %v1041 = vmul.f32 %v1040, 0.6931472
  %v1042 = vlog2.pop %v1022
  %v1043 = vmul.f32 %v1042, 0.6931472
  %v1044 = vlog2.pop %v1023
  %v1045 = vmul.f32 %v1044, 0.6931472
  %v1046 = vlog2.pop %v1024
  %v1047 = vmul.f32 %v1046, 0.6931472
  %v1048 = vlog2.pop %v1025
  %v1049 = vmul.f32 %v1048, 0.6931472
  %v1050 = vlog2.pop %v1026
  %v1051 = vmul.f32 %v1050, 0.6931472
  %v1052 = vlog2.pop %v1027
  %v1053 = vmul.f32 %v1052, 0.6931472
  %v1054 = vlog2.pop %v1028
  %v1055 = vmul.f32 %v1054, 0.6931472
  %v1056 = vlog2.pop %v1029
  %v1057 = vmul.f32 %v1056, 0.6931472
  %v1058 = vlog2.pop %v1030
  %v1059 = vmul.f32 %v1058, 0.6931472
  %v1060 = vlog2.pop %v1031
  %v1061 = vmul.f32 %v1060, 0.6931472
  %v1062 = vadd.f32 %v942, %v1033
  %v1063 = vadd.f32 %v943, %v1035
  %v1064 = vadd.f32 %v944, %v1037
  %v1065 = vadd.f32 %v945, %v1039
  %v1066 = vadd.f32 %v946, %v1041
  %v1067 = vadd.f32 %v947, %v1043
  %v1068 = vadd.f32 %v948, %v1045
  %v1069 = vadd.f32 %v949, %v1047
  %v1070 = vadd.f32 %v950, %v1049
  %v1071 = vadd.f32 %v951, %v1051
  %v1072 = vadd.f32 %v952, %v1053
  %v1073 = vadd.f32 %v953, %v1055
  %v1074 = vadd.f32 %v954, %v1057
  %v1075 = vadd.f32 %v955, %v1059
  %v1076 = vadd.f32 %v956, %v1061
  %v1077 = vadd.f32 %v1062, %v1063
  %v1078 = vsel %vm767, %v1064, 0.0
  %v1079 = vadd.f32 %v1077, %v1078
  %v1080 = vrot.slane %v1079, 4
  %v1081 = vadd.f32 %v1079, %v1080
  %v1082 = vrot.slane %v1081, 2
  %v1083 = vadd.f32 %v1081, %v1082
  %v1084 = vrot.slane %v1083, 1
  %v1085 = vadd.f32 %v1083, %v1084
  %v1086 = vadd.f32 %v1065, %v1066
  %v1087 = vsel %vm767, %v1067, 0.0
  %v1088 = vadd.f32 %v1086, %v1087
  %v1089 = vrot.slane %v1088, 4
  %v1090 = vadd.f32 %v1088, %v1089
  %v1091 = vrot.slane %v1090, 2
  %v1092 = vadd.f32 %v1090, %v1091
  %v1093 = vrot.slane %v1092, 1
  %v1094 = vadd.f32 %v1092, %v1093
  %v1095 = vadd.f32 %v1068, %v1069
  %v1096 = vsel %vm767, %v1070, 0.0
  %v1097 = vadd.f32 %v1095, %v1096
  %v1098 = vrot.slane %v1097, 4
  %v1099 = vadd.f32 %v1097, %v1098
  %v1100 = vrot.slane %v1099, 2
  %v1101 = vadd.f32 %v1099, %v1100
  %v1102 = vrot.slane %v1101, 1
  %v1103 = vadd.f32 %v1101, %v1102
  %v1104 = vadd.f32 %v1071, %v1072
  %v1105 = vsel %vm767, %v1073, 0.0
  %v1106 = vadd.f32 %v1104, %v1105
  %v1107 = vrot.slane %v1106, 4
  %v1108 = vadd.f32 %v1106, %v1107
  %v1109 = vrot.slane %v1108, 2
  %v1110 = vadd.f32 %v1108, %v1109
  %v1111 = vrot.slane %v1110, 1
  %v1112 = vadd.f32 %v1110, %v1111
  %v1113 = vadd.f32 %v1074, %v1075
  %v1114 = vsel %vm767, %v1076, 0.0
  %v1115 = vadd.f32 %v1113, %v1114
  %v1116 = vrot.slane %v1115, 4
  %v1117 = vadd.f32 %v1115, %v1116
  %v1118 = vrot.slane %v1117, 2
  %v1119 = vadd.f32 %v1117, %v1118
  %v1120 = vrot.slane %v1119, 1
  %v1121 = vadd.f32 %v1119, %v1120
  %v1122 = vadd.f32 %v812, %v1085
  %v1123 = vadd.f32 %v813, %v1094
  %v1124 = vadd.f32 %v814, %v1103
  %v1125 = vadd.f32 %v815, %v1112
  %v1126 = vadd.f32 %v816, %v1121
  %s1127 = scalar_lea.vmem %s6, 120
  %v1128 = vld [vmem:[%s1127] sm:$0xff]
  %v1129 = vld [vmem:[%s1127 + $0x8] sm:$0xff]
  %v1130 = vld [vmem:[%s1127 + $0x10] sm:$0xf]
  %v1131 = vld [vmem:[%s1127 + $0x18] sm:$0xff]
  %v1132 = vld [vmem:[%s1127 + $0x20] sm:$0xff]
  %v1133 = vld [vmem:[%s1127 + $0x28] sm:$0xf]
  %v1134 = vld [vmem:[%s1127 + $0x30] sm:$0xff]
  %v1135 = vld [vmem:[%s1127 + $0x38] sm:$0xff]
  %v1136 = vld [vmem:[%s1127 + $0x40] sm:$0xf]
  %v1137 = vld [vmem:[%s1127 + $0x48] sm:$0xff]
  %v1138 = vld [vmem:[%s1127 + $0x50] sm:$0xff]
  %v1139 = vld [vmem:[%s1127 + $0x58] sm:$0xf]
  %v1140 = vld [vmem:[%s1127 + $0x60] sm:$0xff]
  %v1141 = vld [vmem:[%s1127 + $0x68] sm:$0xff]
  %v1142 = vld [vmem:[%s1127 + $0x70] sm:$0xf]
  %1144 = vset.pattern.permute.xlu0 0
  %1145 = vperm.xlu0 %1144, %v1128
  %v1146 = vpop.permute.xlu0 %1145
  %1149 = vset.pattern.permute.xlu0 0
  %1150 = vperm.xlu0 %1149, %v1129
  %v1151 = vpop.permute.xlu0 %1150
  %1154 = vset.pattern.permute.xlu0 0
  %1155 = vperm.xlu0 %1154, %v1130
  %v1156 = vpop.permute.xlu0 %1155
  %1159 = vset.pattern.permute.xlu0 0
  %1160 = vperm.xlu0 %1159, %v1131
  %v1161 = vpop.permute.xlu0 %1160
  %1164 = vset.pattern.permute.xlu0 0
  %1165 = vperm.xlu0 %1164, %v1132
  %v1166 = vpop.permute.xlu0 %1165
  %1169 = vset.pattern.permute.xlu0 0
  %1170 = vperm.xlu0 %1169, %v1133
  %v1171 = vpop.permute.xlu0 %1170
  %1174 = vset.pattern.permute.xlu0 0
  %1175 = vperm.xlu0 %1174, %v1134
  %v1176 = vpop.permute.xlu0 %1175
  %1179 = vset.pattern.permute.xlu0 0
  %1180 = vperm.xlu0 %1179, %v1135
  %v1181 = vpop.permute.xlu0 %1180
  %1184 = vset.pattern.permute.xlu0 0
  %1185 = vperm.xlu0 %1184, %v1136
  %v1186 = vpop.permute.xlu0 %1185
  %1189 = vset.pattern.permute.xlu0 0
  %1190 = vperm.xlu0 %1189, %v1137
  %v1191 = vpop.permute.xlu0 %1190
  %1194 = vset.pattern.permute.xlu0 0
  %1195 = vperm.xlu0 %1194, %v1138
  %v1196 = vpop.permute.xlu0 %1195
  %1199 = vset.pattern.permute.xlu0 0
  %1200 = vperm.xlu0 %1199, %v1139
  %v1201 = vpop.permute.xlu0 %1200
  %1204 = vset.pattern.permute.xlu0 0
  %1205 = vperm.xlu0 %1204, %v1140
  %v1206 = vpop.permute.xlu0 %1205
  %1209 = vset.pattern.permute.xlu0 0
  %1210 = vperm.xlu0 %1209, %v1141
  %v1211 = vpop.permute.xlu0 %1210
  %1214 = vset.pattern.permute.xlu0 0
  %1215 = vperm.xlu0 %1214, %v1142
  %v1216 = vpop.permute.xlu0 %1215
  %v1218 = vadd.f32 %v1146, %v751
  %v1219 = vadd.f32 %v1151, %v752
  %v1220 = vadd.f32 %v1156, %v753
  %v1221 = vadd.f32 %v1161, %v754
  %v1222 = vadd.f32 %v1166, %v755
  %v1223 = vadd.f32 %v1171, %v756
  %v1224 = vadd.f32 %v1176, %v757
  %v1225 = vadd.f32 %v1181, %v758
  %v1226 = vadd.f32 %v1186, %v759
  %v1227 = vadd.f32 %v1191, %v760
  %v1228 = vadd.f32 %v1196, %v761
  %v1229 = vadd.f32 %v1201, %v762
  %v1230 = vadd.f32 %v1206, %v763
  %v1231 = vadd.f32 %v1211, %v764
  %v1232 = vadd.f32 %v1216, %v765
  %v1233 = vperm.slane %v751, 1
  %v1234 = vperm.slane %v754, 1
  %v1235 = vperm.slane %v757, 1
  %v1236 = vperm.slane %v760, 1
  %v1237 = vperm.slane %v763, 1
  %v1238 = vadd.f32 %v1218, %v1233
  %v1239 = vadd.f32 %v1219, %v1233
  %v1240 = vadd.f32 %v1220, %v1233
  %v1241 = vadd.f32 %v1221, %v1234
  %v1242 = vadd.f32 %v1222, %v1234
  %v1243 = vadd.f32 %v1223, %v1234
  %v1244 = vadd.f32 %v1224, %v1235
  %v1245 = vadd.f32 %v1225, %v1235
  %v1246 = vadd.f32 %v1226, %v1235
  %v1247 = vadd.f32 %v1227, %v1236
  %v1248 = vadd.f32 %v1228, %v1236
  %v1249 = vadd.f32 %v1229, %v1236
  %v1250 = vadd.f32 %v1230, %v1237
  %v1251 = vadd.f32 %v1231, %v1237
  %v1252 = vadd.f32 %v1232, %v1237
  %v1253 = vmax.f32 %v1238, 0.0
  %v1254 = vmax.f32 %v1239, 0.0
  %v1255 = vmax.f32 %v1240, 0.0
  %v1256 = vmax.f32 %v1241, 0.0
  %v1257 = vmax.f32 %v1242, 0.0
  %v1258 = vmax.f32 %v1243, 0.0
  %v1259 = vmax.f32 %v1244, 0.0
  %v1260 = vmax.f32 %v1245, 0.0
  %v1261 = vmax.f32 %v1246, 0.0
  %v1262 = vmax.f32 %v1247, 0.0
  %v1263 = vmax.f32 %v1248, 0.0
  %v1264 = vmax.f32 %v1249, 0.0
  %v1265 = vmax.f32 %v1250, 0.0
  %v1266 = vmax.f32 %v1251, 0.0
  %v1267 = vmax.f32 %v1252, 0.0
  %v1268 = vand.u32 2147483647, %v1238
  %v1269 = vand.u32 2147483647, %v1239
  %v1270 = vand.u32 2147483647, %v1240
  %v1271 = vand.u32 2147483647, %v1241
  %v1272 = vand.u32 2147483647, %v1242
  %v1273 = vand.u32 2147483647, %v1243
  %v1274 = vand.u32 2147483647, %v1244
  %v1275 = vand.u32 2147483647, %v1245
  %v1276 = vand.u32 2147483647, %v1246
  %v1277 = vand.u32 2147483647, %v1247
  %v1278 = vand.u32 2147483647, %v1248
  %v1279 = vand.u32 2147483647, %v1249
  %v1280 = vand.u32 2147483647, %v1250
  %v1281 = vand.u32 2147483647, %v1251
  %v1282 = vand.u32 2147483647, %v1252
  %v1283 = vsub.f32 0.0, %v1268
  %v1284 = vsub.f32 0.0, %v1269
  %v1285 = vsub.f32 0.0, %v1270
  %v1286 = vsub.f32 0.0, %v1271
  %v1287 = vsub.f32 0.0, %v1272
  %v1288 = vsub.f32 0.0, %v1273
  %v1289 = vsub.f32 0.0, %v1274
  %v1290 = vsub.f32 0.0, %v1275
  %v1291 = vsub.f32 0.0, %v1276
  %v1292 = vsub.f32 0.0, %v1277
  %v1293 = vsub.f32 0.0, %v1278
  %v1294 = vsub.f32 0.0, %v1279
  %v1295 = vsub.f32 0.0, %v1280
  %v1296 = vsub.f32 0.0, %v1281
  %v1297 = vsub.f32 0.0, %v1282
  %v1298 = vmul.f32 %v1283, 1.442695
  %v1299 = vpow.pop %v1298
  %v1300 = vmul.f32 %v1284, 1.442695
  %v1301 = vpow.pop %v1300
  %v1302 = vmul.f32 %v1285, 1.442695
  %v1303 = vpow.pop %v1302
  %v1304 = vmul.f32 %v1286, 1.442695
  %v1305 = vpow.pop %v1304
  %v1306 = vmul.f32 %v1287, 1.442695
  %v1307 = vpow.pop %v1306
  %v1308 = vmul.f32 %v1288, 1.442695
  %v1309 = vpow.pop %v1308
  %v1310 = vmul.f32 %v1289, 1.442695
  %v1311 = vpow.pop %v1310
  %v1312 = vmul.f32 %v1290, 1.442695
  %v1313 = vpow.pop %v1312
  %v1314 = vmul.f32 %v1291, 1.442695
  %v1315 = vpow.pop %v1314
  %v1316 = vmul.f32 %v1292, 1.442695
  %v1317 = vpow.pop %v1316
  %v1318 = vmul.f32 %v1293, 1.442695
  %v1319 = vpow.pop %v1318
  %v1320 = vmul.f32 %v1294, 1.442695
  %v1321 = vpow.pop %v1320
  %v1322 = vmul.f32 %v1295, 1.442695
  %v1323 = vpow.pop %v1322
  %v1324 = vmul.f32 %v1296, 1.442695
  %v1325 = vpow.pop %v1324
  %v1326 = vmul.f32 %v1297, 1.442695
  %v1327 = vpow.pop %v1326
  %v1328 = vadd.f32 %v1299, 1.0
  %v1329 = vadd.f32 %v1301, 1.0
  %v1330 = vadd.f32 %v1303, 1.0
  %v1331 = vadd.f32 %v1305, 1.0
  %v1332 = vadd.f32 %v1307, 1.0
  %v1333 = vadd.f32 %v1309, 1.0
  %v1334 = vadd.f32 %v1311, 1.0
  %v1335 = vadd.f32 %v1313, 1.0
  %v1336 = vadd.f32 %v1315, 1.0
  %v1337 = vadd.f32 %v1317, 1.0
  %v1338 = vadd.f32 %v1319, 1.0
  %v1339 = vadd.f32 %v1321, 1.0
  %v1340 = vadd.f32 %v1323, 1.0
  %v1341 = vadd.f32 %v1325, 1.0
  %v1342 = vadd.f32 %v1327, 1.0
  %v1343 = vlog2.pop %v1328
  %v1344 = vmul.f32 %v1343, 0.6931472
  %v1345 = vlog2.pop %v1329
  %v1346 = vmul.f32 %v1345, 0.6931472
  %v1347 = vlog2.pop %v1330
  %v1348 = vmul.f32 %v1347, 0.6931472
  %v1349 = vlog2.pop %v1331
  %v1350 = vmul.f32 %v1349, 0.6931472
  %v1351 = vlog2.pop %v1332
  %v1352 = vmul.f32 %v1351, 0.6931472
  %v1353 = vlog2.pop %v1333
  %v1354 = vmul.f32 %v1353, 0.6931472
  %v1355 = vlog2.pop %v1334
  %v1356 = vmul.f32 %v1355, 0.6931472
  %v1357 = vlog2.pop %v1335
  %v1358 = vmul.f32 %v1357, 0.6931472
  %v1359 = vlog2.pop %v1336
  %v1360 = vmul.f32 %v1359, 0.6931472
  %v1361 = vlog2.pop %v1337
  %v1362 = vmul.f32 %v1361, 0.6931472
  %v1363 = vlog2.pop %v1338
  %v1364 = vmul.f32 %v1363, 0.6931472
  %v1365 = vlog2.pop %v1339
  %v1366 = vmul.f32 %v1365, 0.6931472
  %v1367 = vlog2.pop %v1340
  %v1368 = vmul.f32 %v1367, 0.6931472
  %v1369 = vlog2.pop %v1341
  %v1370 = vmul.f32 %v1369, 0.6931472
  %v1371 = vlog2.pop %v1342
  %v1372 = vmul.f32 %v1371, 0.6931472
  %v1373 = vadd.f32 %v1253, %v1344
  %v1374 = vadd.f32 %v1254, %v1346
  %v1375 = vadd.f32 %v1255, %v1348
  %v1376 = vadd.f32 %v1256, %v1350
  %v1377 = vadd.f32 %v1257, %v1352
  %v1378 = vadd.f32 %v1258, %v1354
  %v1379 = vadd.f32 %v1259, %v1356
  %v1380 = vadd.f32 %v1260, %v1358
  %v1381 = vadd.f32 %v1261, %v1360
  %v1382 = vadd.f32 %v1262, %v1362
  %v1383 = vadd.f32 %v1263, %v1364
  %v1384 = vadd.f32 %v1264, %v1366
  %v1385 = vadd.f32 %v1265, %v1368
  %v1386 = vadd.f32 %v1266, %v1370
  %v1387 = vadd.f32 %v1267, %v1372
  %v1388 = vadd.f32 %v1373, %v1374
  %v1389 = vsel %vm767, %v1375, 0.0
  %v1390 = vadd.f32 %v1388, %v1389
  %v1391 = vrot.slane %v1390, 4
  %v1392 = vadd.f32 %v1390, %v1391
  %v1393 = vrot.slane %v1392, 2
  %v1394 = vadd.f32 %v1392, %v1393
  %v1395 = vrot.slane %v1394, 1
  %v1396 = vadd.f32 %v1394, %v1395
  %v1397 = vadd.f32 %v1376, %v1377
  %v1398 = vsel %vm767, %v1378, 0.0
  %v1399 = vadd.f32 %v1397, %v1398
  %v1400 = vrot.slane %v1399, 4
  %v1401 = vadd.f32 %v1399, %v1400
  %v1402 = vrot.slane %v1401, 2
  %v1403 = vadd.f32 %v1401, %v1402
  %v1404 = vrot.slane %v1403, 1
  %v1405 = vadd.f32 %v1403, %v1404
  %v1406 = vadd.f32 %v1379, %v1380
  %v1407 = vsel %vm767, %v1381, 0.0
  %v1408 = vadd.f32 %v1406, %v1407
  %v1409 = vrot.slane %v1408, 4
  %v1410 = vadd.f32 %v1408, %v1409
  %v1411 = vrot.slane %v1410, 2
  %v1412 = vadd.f32 %v1410, %v1411
  %v1413 = vrot.slane %v1412, 1
  %v1414 = vadd.f32 %v1412, %v1413
  %v1415 = vadd.f32 %v1382, %v1383
  %v1416 = vsel %vm767, %v1384, 0.0
  %v1417 = vadd.f32 %v1415, %v1416
  %v1418 = vrot.slane %v1417, 4
  %v1419 = vadd.f32 %v1417, %v1418
  %v1420 = vrot.slane %v1419, 2
  %v1421 = vadd.f32 %v1419, %v1420
  %v1422 = vrot.slane %v1421, 1
  %v1423 = vadd.f32 %v1421, %v1422
  %v1424 = vadd.f32 %v1385, %v1386
  %v1425 = vsel %vm767, %v1387, 0.0
  %v1426 = vadd.f32 %v1424, %v1425
  %v1427 = vrot.slane %v1426, 4
  %v1428 = vadd.f32 %v1426, %v1427
  %v1429 = vrot.slane %v1428, 2
  %v1430 = vadd.f32 %v1428, %v1429
  %v1431 = vrot.slane %v1430, 1
  %v1432 = vadd.f32 %v1430, %v1431
  %v1433 = vadd.f32 %v1122, %v1396
  %v1434 = vadd.f32 %v1123, %v1405
  %v1435 = vadd.f32 %v1124, %v1414
  %v1436 = vadd.f32 %v1125, %v1423
  %v1437 = vadd.f32 %v1126, %v1432
  %s1438 = scalar_lea.vmem %s6, 240
  %v1439 = vld [vmem:[%s1438] sm:$0xff]
  %v1440 = vld [vmem:[%s1438 + $0x8] sm:$0xff]
  %v1441 = vld [vmem:[%s1438 + $0x10] sm:$0xf]
  %v1442 = vld [vmem:[%s1438 + $0x18] sm:$0xff]
  %v1443 = vld [vmem:[%s1438 + $0x20] sm:$0xff]
  %v1444 = vld [vmem:[%s1438 + $0x28] sm:$0xf]
  %v1445 = vld [vmem:[%s1438 + $0x30] sm:$0xff]
  %v1446 = vld [vmem:[%s1438 + $0x38] sm:$0xff]
  %v1447 = vld [vmem:[%s1438 + $0x40] sm:$0xf]
  %v1448 = vld [vmem:[%s1438 + $0x48] sm:$0xff]
  %v1449 = vld [vmem:[%s1438 + $0x50] sm:$0xff]
  %v1450 = vld [vmem:[%s1438 + $0x58] sm:$0xf]
  %v1451 = vld [vmem:[%s1438 + $0x60] sm:$0xff]
  %v1452 = vld [vmem:[%s1438 + $0x68] sm:$0xff]
  %v1453 = vld [vmem:[%s1438 + $0x70] sm:$0xf]
  %1455 = vset.pattern.permute.xlu0 0
  %1456 = vperm.xlu0 %1455, %v1439
  %v1457 = vpop.permute.xlu0 %1456
  %1460 = vset.pattern.permute.xlu0 0
  %1461 = vperm.xlu0 %1460, %v1440
  %v1462 = vpop.permute.xlu0 %1461
  %1465 = vset.pattern.permute.xlu0 0
  %1466 = vperm.xlu0 %1465, %v1441
  %v1467 = vpop.permute.xlu0 %1466
  %1470 = vset.pattern.permute.xlu0 0
  %1471 = vperm.xlu0 %1470, %v1442
  %v1472 = vpop.permute.xlu0 %1471
  %1475 = vset.pattern.permute.xlu0 0
  %1476 = vperm.xlu0 %1475, %v1443
  %v1477 = vpop.permute.xlu0 %1476
  %1480 = vset.pattern.permute.xlu0 0
  %1481 = vperm.xlu0 %1480, %v1444
  %v1482 = vpop.permute.xlu0 %1481
  %1485 = vset.pattern.permute.xlu0 0
  %1486 = vperm.xlu0 %1485, %v1445
  %v1487 = vpop.permute.xlu0 %1486
  %1490 = vset.pattern.permute.xlu0 0
  %1491 = vperm.xlu0 %1490, %v1446
  %v1492 = vpop.permute.xlu0 %1491
  %1495 = vset.pattern.permute.xlu0 0
  %1496 = vperm.xlu0 %1495, %v1447
  %v1497 = vpop.permute.xlu0 %1496
  %1500 = vset.pattern.permute.xlu0 0
  %1501 = vperm.xlu0 %1500, %v1448
  %v1502 = vpop.permute.xlu0 %1501
  %1505 = vset.pattern.permute.xlu0 0
  %1506 = vperm.xlu0 %1505, %v1449
  %v1507 = vpop.permute.xlu0 %1506
  %1510 = vset.pattern.permute.xlu0 0
  %1511 = vperm.xlu0 %1510, %v1450
  %v1512 = vpop.permute.xlu0 %1511
  %1515 = vset.pattern.permute.xlu0 0
  %1516 = vperm.xlu0 %1515, %v1451
  %v1517 = vpop.permute.xlu0 %1516
  %1520 = vset.pattern.permute.xlu0 0
  %1521 = vperm.xlu0 %1520, %v1452
  %v1522 = vpop.permute.xlu0 %1521
  %1525 = vset.pattern.permute.xlu0 0
  %1526 = vperm.xlu0 %1525, %v1453
  %v1527 = vpop.permute.xlu0 %1526
  %v1529 = vadd.f32 %v1457, %v751
  %v1530 = vadd.f32 %v1462, %v752
  %v1531 = vadd.f32 %v1467, %v753
  %v1532 = vadd.f32 %v1472, %v754
  %v1533 = vadd.f32 %v1477, %v755
  %v1534 = vadd.f32 %v1482, %v756
  %v1535 = vadd.f32 %v1487, %v757
  %v1536 = vadd.f32 %v1492, %v758
  %v1537 = vadd.f32 %v1497, %v759
  %v1538 = vadd.f32 %v1502, %v760
  %v1539 = vadd.f32 %v1507, %v761
  %v1540 = vadd.f32 %v1512, %v762
  %v1541 = vadd.f32 %v1517, %v763
  %v1542 = vadd.f32 %v1522, %v764
  %v1543 = vadd.f32 %v1527, %v765
  %v1544 = vperm.slane %v751, 2
  %v1545 = vperm.slane %v754, 2
  %v1546 = vperm.slane %v757, 2
  %v1547 = vperm.slane %v760, 2
  %v1548 = vperm.slane %v763, 2
  %v1549 = vadd.f32 %v1529, %v1544
  %v1550 = vadd.f32 %v1530, %v1544
  %v1551 = vadd.f32 %v1531, %v1544
  %v1552 = vadd.f32 %v1532, %v1545
  %v1553 = vadd.f32 %v1533, %v1545
  %v1554 = vadd.f32 %v1534, %v1545
  %v1555 = vadd.f32 %v1535, %v1546
  %v1556 = vadd.f32 %v1536, %v1546
  %v1557 = vadd.f32 %v1537, %v1546
  %v1558 = vadd.f32 %v1538, %v1547
  %v1559 = vadd.f32 %v1539, %v1547
  %v1560 = vadd.f32 %v1540, %v1547
  %v1561 = vadd.f32 %v1541, %v1548
  %v1562 = vadd.f32 %v1542, %v1548
  %v1563 = vadd.f32 %v1543, %v1548
  %v1564 = vmax.f32 %v1549, 0.0
  %v1565 = vmax.f32 %v1550, 0.0
  %v1566 = vmax.f32 %v1551, 0.0
  %v1567 = vmax.f32 %v1552, 0.0
  %v1568 = vmax.f32 %v1553, 0.0
  %v1569 = vmax.f32 %v1554, 0.0
  %v1570 = vmax.f32 %v1555, 0.0
  %v1571 = vmax.f32 %v1556, 0.0
  %v1572 = vmax.f32 %v1557, 0.0
  %v1573 = vmax.f32 %v1558, 0.0
  %v1574 = vmax.f32 %v1559, 0.0
  %v1575 = vmax.f32 %v1560, 0.0
  %v1576 = vmax.f32 %v1561, 0.0
  %v1577 = vmax.f32 %v1562, 0.0
  %v1578 = vmax.f32 %v1563, 0.0
  %v1579 = vand.u32 2147483647, %v1549
  %v1580 = vand.u32 2147483647, %v1550
  %v1581 = vand.u32 2147483647, %v1551
  %v1582 = vand.u32 2147483647, %v1552
  %v1583 = vand.u32 2147483647, %v1553
  %v1584 = vand.u32 2147483647, %v1554
  %v1585 = vand.u32 2147483647, %v1555
  %v1586 = vand.u32 2147483647, %v1556
  %v1587 = vand.u32 2147483647, %v1557
  %v1588 = vand.u32 2147483647, %v1558
  %v1589 = vand.u32 2147483647, %v1559
  %v1590 = vand.u32 2147483647, %v1560
  %v1591 = vand.u32 2147483647, %v1561
  %v1592 = vand.u32 2147483647, %v1562
  %v1593 = vand.u32 2147483647, %v1563
  %v1594 = vsub.f32 0.0, %v1579
  %v1595 = vsub.f32 0.0, %v1580
  %v1596 = vsub.f32 0.0, %v1581
  %v1597 = vsub.f32 0.0, %v1582
  %v1598 = vsub.f32 0.0, %v1583
  %v1599 = vsub.f32 0.0, %v1584
  %v1600 = vsub.f32 0.0, %v1585
  %v1601 = vsub.f32 0.0, %v1586
  %v1602 = vsub.f32 0.0, %v1587
  %v1603 = vsub.f32 0.0, %v1588
  %v1604 = vsub.f32 0.0, %v1589
  %v1605 = vsub.f32 0.0, %v1590
  %v1606 = vsub.f32 0.0, %v1591
  %v1607 = vsub.f32 0.0, %v1592
  %v1608 = vsub.f32 0.0, %v1593
  %v1609 = vmul.f32 %v1594, 1.442695
  %v1610 = vpow.pop %v1609
  %v1611 = vmul.f32 %v1595, 1.442695
  %v1612 = vpow.pop %v1611
  %v1613 = vmul.f32 %v1596, 1.442695
  %v1614 = vpow.pop %v1613
  %v1615 = vmul.f32 %v1597, 1.442695
  %v1616 = vpow.pop %v1615
  %v1617 = vmul.f32 %v1598, 1.442695
  %v1618 = vpow.pop %v1617
  %v1619 = vmul.f32 %v1599, 1.442695
  %v1620 = vpow.pop %v1619
  %v1621 = vmul.f32 %v1600, 1.442695
  %v1622 = vpow.pop %v1621
  %v1623 = vmul.f32 %v1601, 1.442695
  %v1624 = vpow.pop %v1623
  %v1625 = vmul.f32 %v1602, 1.442695
  %v1626 = vpow.pop %v1625
  %v1627 = vmul.f32 %v1603, 1.442695
  %v1628 = vpow.pop %v1627
  %v1629 = vmul.f32 %v1604, 1.442695
  %v1630 = vpow.pop %v1629
  %v1631 = vmul.f32 %v1605, 1.442695
  %v1632 = vpow.pop %v1631
  %v1633 = vmul.f32 %v1606, 1.442695
  %v1634 = vpow.pop %v1633
  %v1635 = vmul.f32 %v1607, 1.442695
  %v1636 = vpow.pop %v1635
  %v1637 = vmul.f32 %v1608, 1.442695
  %v1638 = vpow.pop %v1637
  %v1639 = vadd.f32 %v1610, 1.0
  %v1640 = vadd.f32 %v1612, 1.0
  %v1641 = vadd.f32 %v1614, 1.0
  %v1642 = vadd.f32 %v1616, 1.0
  %v1643 = vadd.f32 %v1618, 1.0
  %v1644 = vadd.f32 %v1620, 1.0
  %v1645 = vadd.f32 %v1622, 1.0
  %v1646 = vadd.f32 %v1624, 1.0
  %v1647 = vadd.f32 %v1626, 1.0
  %v1648 = vadd.f32 %v1628, 1.0
  %v1649 = vadd.f32 %v1630, 1.0
  %v1650 = vadd.f32 %v1632, 1.0
  %v1651 = vadd.f32 %v1634, 1.0
  %v1652 = vadd.f32 %v1636, 1.0
  %v1653 = vadd.f32 %v1638, 1.0
  %v1654 = vlog2.pop %v1639
  %v1655 = vmul.f32 %v1654, 0.6931472
  %v1656 = vlog2.pop %v1640
  %v1657 = vmul.f32 %v1656, 0.6931472
  %v1658 = vlog2.pop %v1641
  %v1659 = vmul.f32 %v1658, 0.6931472
  %v1660 = vlog2.pop %v1642
  %v1661 = vmul.f32 %v1660, 0.6931472
  %v1662 = vlog2.pop %v1643
  %v1663 = vmul.f32 %v1662, 0.6931472
  %v1664 = vlog2.pop %v1644
  %v1665 = vmul.f32 %v1664, 0.6931472
  %v1666 = vlog2.pop %v1645
  %v1667 = vmul.f32 %v1666, 0.6931472
  %v1668 = vlog2.pop %v1646
  %v1669 = vmul.f32 %v1668, 0.6931472
  %v1670 = vlog2.pop %v1647
  %v1671 = vmul.f32 %v1670, 0.6931472
  %v1672 = vlog2.pop %v1648
  %v1673 = vmul.f32 %v1672, 0.6931472
  %v1674 = vlog2.pop %v1649
  %v1675 = vmul.f32 %v1674, 0.6931472
  %v1676 = vlog2.pop %v1650
  %v1677 = vmul.f32 %v1676, 0.6931472
  %v1678 = vlog2.pop %v1651
  %v1679 = vmul.f32 %v1678, 0.6931472
  %v1680 = vlog2.pop %v1652
  %v1681 = vmul.f32 %v1680, 0.6931472
  %v1682 = vlog2.pop %v1653
  %v1683 = vmul.f32 %v1682, 0.6931472
  %v1684 = vadd.f32 %v1564, %v1655
  %v1685 = vadd.f32 %v1565, %v1657
  %v1686 = vadd.f32 %v1566, %v1659
  %v1687 = vadd.f32 %v1567, %v1661
  %v1688 = vadd.f32 %v1568, %v1663
  %v1689 = vadd.f32 %v1569, %v1665
  %v1690 = vadd.f32 %v1570, %v1667
  %v1691 = vadd.f32 %v1571, %v1669
  %v1692 = vadd.f32 %v1572, %v1671
  %v1693 = vadd.f32 %v1573, %v1673
  %v1694 = vadd.f32 %v1574, %v1675
  %v1695 = vadd.f32 %v1575, %v1677
  %v1696 = vadd.f32 %v1576, %v1679
  %v1697 = vadd.f32 %v1577, %v1681
  %v1698 = vadd.f32 %v1578, %v1683
  %v1699 = vadd.f32 %v1684, %v1685
  %v1700 = vsel %vm767, %v1686, 0.0
  %v1701 = vadd.f32 %v1699, %v1700
  %v1702 = vrot.slane %v1701, 4
  %v1703 = vadd.f32 %v1701, %v1702
  %v1704 = vrot.slane %v1703, 2
  %v1705 = vadd.f32 %v1703, %v1704
  %v1706 = vrot.slane %v1705, 1
  %v1707 = vadd.f32 %v1705, %v1706
  %v1708 = vadd.f32 %v1687, %v1688
  %v1709 = vsel %vm767, %v1689, 0.0
  %v1710 = vadd.f32 %v1708, %v1709
  %v1711 = vrot.slane %v1710, 4
  %v1712 = vadd.f32 %v1710, %v1711
  %v1713 = vrot.slane %v1712, 2
  %v1714 = vadd.f32 %v1712, %v1713
  %v1715 = vrot.slane %v1714, 1
  %v1716 = vadd.f32 %v1714, %v1715
  %v1717 = vadd.f32 %v1690, %v1691
  %v1718 = vsel %vm767, %v1692, 0.0
  %v1719 = vadd.f32 %v1717, %v1718
  %v1720 = vrot.slane %v1719, 4
  %v1721 = vadd.f32 %v1719, %v1720
  %v1722 = vrot.slane %v1721, 2
  %v1723 = vadd.f32 %v1721, %v1722
  %v1724 = vrot.slane %v1723, 1
  %v1725 = vadd.f32 %v1723, %v1724
  %v1726 = vadd.f32 %v1693, %v1694
  %v1727 = vsel %vm767, %v1695, 0.0
  %v1728 = vadd.f32 %v1726, %v1727
  %v1729 = vrot.slane %v1728, 4
  %v1730 = vadd.f32 %v1728, %v1729
  %v1731 = vrot.slane %v1730, 2
  %v1732 = vadd.f32 %v1730, %v1731
  %v1733 = vrot.slane %v1732, 1
  %v1734 = vadd.f32 %v1732, %v1733
  %v1735 = vadd.f32 %v1696, %v1697
  %v1736 = vsel %vm767, %v1698, 0.0
  %v1737 = vadd.f32 %v1735, %v1736
  %v1738 = vrot.slane %v1737, 4
  %v1739 = vadd.f32 %v1737, %v1738
  %v1740 = vrot.slane %v1739, 2
  %v1741 = vadd.f32 %v1739, %v1740
  %v1742 = vrot.slane %v1741, 1
  %v1743 = vadd.f32 %v1741, %v1742
  %v1744 = vadd.f32 %v1433, %v1707
  %v1745 = vadd.f32 %v1434, %v1716
  %v1746 = vadd.f32 %v1435, %v1725
  %v1747 = vadd.f32 %v1436, %v1734
  %v1748 = vadd.f32 %v1437, %v1743
  %s1749 = scalar_lea.vmem %s6, 360
  %v1750 = vld [vmem:[%s1749] sm:$0xff]
  %v1751 = vld [vmem:[%s1749 + $0x8] sm:$0xff]
  %v1752 = vld [vmem:[%s1749 + $0x10] sm:$0xf]
  %v1753 = vld [vmem:[%s1749 + $0x18] sm:$0xff]
  %v1754 = vld [vmem:[%s1749 + $0x20] sm:$0xff]
  %v1755 = vld [vmem:[%s1749 + $0x28] sm:$0xf]
  %v1756 = vld [vmem:[%s1749 + $0x30] sm:$0xff]
  %v1757 = vld [vmem:[%s1749 + $0x38] sm:$0xff]
  %v1758 = vld [vmem:[%s1749 + $0x40] sm:$0xf]
  %v1759 = vld [vmem:[%s1749 + $0x48] sm:$0xff]
  %v1760 = vld [vmem:[%s1749 + $0x50] sm:$0xff]
  %v1761 = vld [vmem:[%s1749 + $0x58] sm:$0xf]
  %v1762 = vld [vmem:[%s1749 + $0x60] sm:$0xff]
  %v1763 = vld [vmem:[%s1749 + $0x68] sm:$0xff]
  %v1764 = vld [vmem:[%s1749 + $0x70] sm:$0xf]
  %1766 = vset.pattern.permute.xlu0 0
  %1767 = vperm.xlu0 %1766, %v1750
  %v1768 = vpop.permute.xlu0 %1767
  %1771 = vset.pattern.permute.xlu0 0
  %1772 = vperm.xlu0 %1771, %v1751
  %v1773 = vpop.permute.xlu0 %1772
  %1776 = vset.pattern.permute.xlu0 0
  %1777 = vperm.xlu0 %1776, %v1752
  %v1778 = vpop.permute.xlu0 %1777
  %1781 = vset.pattern.permute.xlu0 0
  %1782 = vperm.xlu0 %1781, %v1753
  %v1783 = vpop.permute.xlu0 %1782
  %1786 = vset.pattern.permute.xlu0 0
  %1787 = vperm.xlu0 %1786, %v1754
  %v1788 = vpop.permute.xlu0 %1787
  %1791 = vset.pattern.permute.xlu0 0
  %1792 = vperm.xlu0 %1791, %v1755
  %v1793 = vpop.permute.xlu0 %1792
  %1796 = vset.pattern.permute.xlu0 0
  %1797 = vperm.xlu0 %1796, %v1756
  %v1798 = vpop.permute.xlu0 %1797
  %1801 = vset.pattern.permute.xlu0 0
  %1802 = vperm.xlu0 %1801, %v1757
  %v1803 = vpop.permute.xlu0 %1802
  %1806 = vset.pattern.permute.xlu0 0
  %1807 = vperm.xlu0 %1806, %v1758
  %v1808 = vpop.permute.xlu0 %1807
  %1811 = vset.pattern.permute.xlu0 0
  %1812 = vperm.xlu0 %1811, %v1759
  %v1813 = vpop.permute.xlu0 %1812
  %1816 = vset.pattern.permute.xlu0 0
  %1817 = vperm.xlu0 %1816, %v1760
  %v1818 = vpop.permute.xlu0 %1817
  %1821 = vset.pattern.permute.xlu0 0
  %1822 = vperm.xlu0 %1821, %v1761
  %v1823 = vpop.permute.xlu0 %1822
  %1826 = vset.pattern.permute.xlu0 0
  %1827 = vperm.xlu0 %1826, %v1762
  %v1828 = vpop.permute.xlu0 %1827
  %1831 = vset.pattern.permute.xlu0 0
  %1832 = vperm.xlu0 %1831, %v1763
  %v1833 = vpop.permute.xlu0 %1832
  %1836 = vset.pattern.permute.xlu0 0
  %1837 = vperm.xlu0 %1836, %v1764
  %v1838 = vpop.permute.xlu0 %1837
  %v1840 = vadd.f32 %v1768, %v751
  %v1841 = vadd.f32 %v1773, %v752
  %v1842 = vadd.f32 %v1778, %v753
  %v1843 = vadd.f32 %v1783, %v754
  %v1844 = vadd.f32 %v1788, %v755
  %v1845 = vadd.f32 %v1793, %v756
  %v1846 = vadd.f32 %v1798, %v757
  %v1847 = vadd.f32 %v1803, %v758
  %v1848 = vadd.f32 %v1808, %v759
  %v1849 = vadd.f32 %v1813, %v760
  %v1850 = vadd.f32 %v1818, %v761
  %v1851 = vadd.f32 %v1823, %v762
  %v1852 = vadd.f32 %v1828, %v763
  %v1853 = vadd.f32 %v1833, %v764
  %v1854 = vadd.f32 %v1838, %v765
  %v1855 = vperm.slane %v751, 3
  %v1856 = vperm.slane %v754, 3
  %v1857 = vperm.slane %v757, 3
  %v1858 = vperm.slane %v760, 3
  %v1859 = vperm.slane %v763, 3
  %v1860 = vadd.f32 %v1840, %v1855
  %v1861 = vadd.f32 %v1841, %v1855
  %v1862 = vadd.f32 %v1842, %v1855
  %v1863 = vadd.f32 %v1843, %v1856
  %v1864 = vadd.f32 %v1844, %v1856
  %v1865 = vadd.f32 %v1845, %v1856
  %v1866 = vadd.f32 %v1846, %v1857
  %v1867 = vadd.f32 %v1847, %v1857
  %v1868 = vadd.f32 %v1848, %v1857
  %v1869 = vadd.f32 %v1849, %v1858
  %v1870 = vadd.f32 %v1850, %v1858
  %v1871 = vadd.f32 %v1851, %v1858
  %v1872 = vadd.f32 %v1852, %v1859
  %v1873 = vadd.f32 %v1853, %v1859
  %v1874 = vadd.f32 %v1854, %v1859
  %v1875 = vmax.f32 %v1860, 0.0
  %v1876 = vmax.f32 %v1861, 0.0
  %v1877 = vmax.f32 %v1862, 0.0
  %v1878 = vmax.f32 %v1863, 0.0
  %v1879 = vmax.f32 %v1864, 0.0
  %v1880 = vmax.f32 %v1865, 0.0
  %v1881 = vmax.f32 %v1866, 0.0
  %v1882 = vmax.f32 %v1867, 0.0
  %v1883 = vmax.f32 %v1868, 0.0
  %v1884 = vmax.f32 %v1869, 0.0
  %v1885 = vmax.f32 %v1870, 0.0
  %v1886 = vmax.f32 %v1871, 0.0
  %v1887 = vmax.f32 %v1872, 0.0
  %v1888 = vmax.f32 %v1873, 0.0
  %v1889 = vmax.f32 %v1874, 0.0
  %v1890 = vand.u32 2147483647, %v1860
  %v1891 = vand.u32 2147483647, %v1861
  %v1892 = vand.u32 2147483647, %v1862
  %v1893 = vand.u32 2147483647, %v1863
  %v1894 = vand.u32 2147483647, %v1864
  %v1895 = vand.u32 2147483647, %v1865
  %v1896 = vand.u32 2147483647, %v1866
  %v1897 = vand.u32 2147483647, %v1867
  %v1898 = vand.u32 2147483647, %v1868
  %v1899 = vand.u32 2147483647, %v1869
  %v1900 = vand.u32 2147483647, %v1870
  %v1901 = vand.u32 2147483647, %v1871
  %v1902 = vand.u32 2147483647, %v1872
  %v1903 = vand.u32 2147483647, %v1873
  %v1904 = vand.u32 2147483647, %v1874
  %v1905 = vsub.f32 0.0, %v1890
  %v1906 = vsub.f32 0.0, %v1891
  %v1907 = vsub.f32 0.0, %v1892
  %v1908 = vsub.f32 0.0, %v1893
  %v1909 = vsub.f32 0.0, %v1894
  %v1910 = vsub.f32 0.0, %v1895
  %v1911 = vsub.f32 0.0, %v1896
  %v1912 = vsub.f32 0.0, %v1897
  %v1913 = vsub.f32 0.0, %v1898
  %v1914 = vsub.f32 0.0, %v1899
  %v1915 = vsub.f32 0.0, %v1900
  %v1916 = vsub.f32 0.0, %v1901
  %v1917 = vsub.f32 0.0, %v1902
  %v1918 = vsub.f32 0.0, %v1903
  %v1919 = vsub.f32 0.0, %v1904
  %v1920 = vmul.f32 %v1905, 1.442695
  %v1921 = vpow.pop %v1920
  %v1922 = vmul.f32 %v1906, 1.442695
  %v1923 = vpow.pop %v1922
  %v1924 = vmul.f32 %v1907, 1.442695
  %v1925 = vpow.pop %v1924
  %v1926 = vmul.f32 %v1908, 1.442695
  %v1927 = vpow.pop %v1926
  %v1928 = vmul.f32 %v1909, 1.442695
  %v1929 = vpow.pop %v1928
  %v1930 = vmul.f32 %v1910, 1.442695
  %v1931 = vpow.pop %v1930
  %v1932 = vmul.f32 %v1911, 1.442695
  %v1933 = vpow.pop %v1932
  %v1934 = vmul.f32 %v1912, 1.442695
  %v1935 = vpow.pop %v1934
  %v1936 = vmul.f32 %v1913, 1.442695
  %v1937 = vpow.pop %v1936
  %v1938 = vmul.f32 %v1914, 1.442695
  %v1939 = vpow.pop %v1938
  %v1940 = vmul.f32 %v1915, 1.442695
  %v1941 = vpow.pop %v1940
  %v1942 = vmul.f32 %v1916, 1.442695
  %v1943 = vpow.pop %v1942
  %v1944 = vmul.f32 %v1917, 1.442695
  %v1945 = vpow.pop %v1944
  %v1946 = vmul.f32 %v1918, 1.442695
  %v1947 = vpow.pop %v1946
  %v1948 = vmul.f32 %v1919, 1.442695
  %v1949 = vpow.pop %v1948
  %v1950 = vadd.f32 %v1921, 1.0
  %v1951 = vadd.f32 %v1923, 1.0
  %v1952 = vadd.f32 %v1925, 1.0
  %v1953 = vadd.f32 %v1927, 1.0
  %v1954 = vadd.f32 %v1929, 1.0
  %v1955 = vadd.f32 %v1931, 1.0
  %v1956 = vadd.f32 %v1933, 1.0
  %v1957 = vadd.f32 %v1935, 1.0
  %v1958 = vadd.f32 %v1937, 1.0
  %v1959 = vadd.f32 %v1939, 1.0
  %v1960 = vadd.f32 %v1941, 1.0
  %v1961 = vadd.f32 %v1943, 1.0
  %v1962 = vadd.f32 %v1945, 1.0
  %v1963 = vadd.f32 %v1947, 1.0
  %v1964 = vadd.f32 %v1949, 1.0
  %v1965 = vlog2.pop %v1950
  %v1966 = vmul.f32 %v1965, 0.6931472
  %v1967 = vlog2.pop %v1951
  %v1968 = vmul.f32 %v1967, 0.6931472
  %v1969 = vlog2.pop %v1952
  %v1970 = vmul.f32 %v1969, 0.6931472
  %v1971 = vlog2.pop %v1953
  %v1972 = vmul.f32 %v1971, 0.6931472
  %v1973 = vlog2.pop %v1954
  %v1974 = vmul.f32 %v1973, 0.6931472
  %v1975 = vlog2.pop %v1955
  %v1976 = vmul.f32 %v1975, 0.6931472
  %v1977 = vlog2.pop %v1956
  %v1978 = vmul.f32 %v1977, 0.6931472
  %v1979 = vlog2.pop %v1957
  %v1980 = vmul.f32 %v1979, 0.6931472
  %v1981 = vlog2.pop %v1958
  %v1982 = vmul.f32 %v1981, 0.6931472
  %v1983 = vlog2.pop %v1959
  %v1984 = vmul.f32 %v1983, 0.6931472
  %v1985 = vlog2.pop %v1960
  %v1986 = vmul.f32 %v1985, 0.6931472
  %v1987 = vlog2.pop %v1961
  %v1988 = vmul.f32 %v1987, 0.6931472
  %v1989 = vlog2.pop %v1962
  %v1990 = vmul.f32 %v1989, 0.6931472
  %v1991 = vlog2.pop %v1963
  %v1992 = vmul.f32 %v1991, 0.6931472
  %v1993 = vlog2.pop %v1964
  %v1994 = vmul.f32 %v1993, 0.6931472
  %v1995 = vadd.f32 %v1875, %v1966
  %v1996 = vadd.f32 %v1876, %v1968
  %v1997 = vadd.f32 %v1877, %v1970
  %v1998 = vadd.f32 %v1878, %v1972
  %v1999 = vadd.f32 %v1879, %v1974
  %v2000 = vadd.f32 %v1880, %v1976
  %v2001 = vadd.f32 %v1881, %v1978
  %v2002 = vadd.f32 %v1882, %v1980
  %v2003 = vadd.f32 %v1883, %v1982
  %v2004 = vadd.f32 %v1884, %v1984
  %v2005 = vadd.f32 %v1885, %v1986
  %v2006 = vadd.f32 %v1886, %v1988
  %v2007 = vadd.f32 %v1887, %v1990
  %v2008 = vadd.f32 %v1888, %v1992
  %v2009 = vadd.f32 %v1889, %v1994
  %v2010 = vadd.f32 %v1995, %v1996
  %v2011 = vsel %vm767, %v1997, 0.0
  %v2012 = vadd.f32 %v2010, %v2011
  %v2013 = vrot.slane %v2012, 4
  %v2014 = vadd.f32 %v2012, %v2013
  %v2015 = vrot.slane %v2014, 2
  %v2016 = vadd.f32 %v2014, %v2015
  %v2017 = vrot.slane %v2016, 1
  %v2018 = vadd.f32 %v2016, %v2017
  %v2019 = vadd.f32 %v1998, %v1999
  %v2020 = vsel %vm767, %v2000, 0.0
  %v2021 = vadd.f32 %v2019, %v2020
  %v2022 = vrot.slane %v2021, 4
  %v2023 = vadd.f32 %v2021, %v2022
  %v2024 = vrot.slane %v2023, 2
  %v2025 = vadd.f32 %v2023, %v2024
  %v2026 = vrot.slane %v2025, 1
  %v2027 = vadd.f32 %v2025, %v2026
  %v2028 = vadd.f32 %v2001, %v2002
  %v2029 = vsel %vm767, %v2003, 0.0
  %v2030 = vadd.f32 %v2028, %v2029
  %v2031 = vrot.slane %v2030, 4
  %v2032 = vadd.f32 %v2030, %v2031
  %v2033 = vrot.slane %v2032, 2
  %v2034 = vadd.f32 %v2032, %v2033
  %v2035 = vrot.slane %v2034, 1
  %v2036 = vadd.f32 %v2034, %v2035
  %v2037 = vadd.f32 %v2004, %v2005
  %v2038 = vsel %vm767, %v2006, 0.0
  %v2039 = vadd.f32 %v2037, %v2038
  %v2040 = vrot.slane %v2039, 4
  %v2041 = vadd.f32 %v2039, %v2040
  %v2042 = vrot.slane %v2041, 2
  %v2043 = vadd.f32 %v2041, %v2042
  %v2044 = vrot.slane %v2043, 1
  %v2045 = vadd.f32 %v2043, %v2044
  %v2046 = vadd.f32 %v2007, %v2008
  %v2047 = vsel %vm767, %v2009, 0.0
  %v2048 = vadd.f32 %v2046, %v2047
  %v2049 = vrot.slane %v2048, 4
  %v2050 = vadd.f32 %v2048, %v2049
  %v2051 = vrot.slane %v2050, 2
  %v2052 = vadd.f32 %v2050, %v2051
  %v2053 = vrot.slane %v2052, 1
  %v2054 = vadd.f32 %v2052, %v2053
  %v2055 = vadd.f32 %v1744, %v2018
  %v2056 = vadd.f32 %v1745, %v2027
  %v2057 = vadd.f32 %v1746, %v2036
  %v2058 = vadd.f32 %v1747, %v2045
  %v2059 = vadd.f32 %v1748, %v2054
  %s2060 = scalar_lea.vmem %s6, 480
  %v2061 = vld [vmem:[%s2060] sm:$0xff]
  %v2062 = vld [vmem:[%s2060 + $0x8] sm:$0xff]
  %v2063 = vld [vmem:[%s2060 + $0x10] sm:$0xf]
  %v2064 = vld [vmem:[%s2060 + $0x18] sm:$0xff]
  %v2065 = vld [vmem:[%s2060 + $0x20] sm:$0xff]
  %v2066 = vld [vmem:[%s2060 + $0x28] sm:$0xf]
  %v2067 = vld [vmem:[%s2060 + $0x30] sm:$0xff]
  %v2068 = vld [vmem:[%s2060 + $0x38] sm:$0xff]
  %v2069 = vld [vmem:[%s2060 + $0x40] sm:$0xf]
  %v2070 = vld [vmem:[%s2060 + $0x48] sm:$0xff]
  %v2071 = vld [vmem:[%s2060 + $0x50] sm:$0xff]
  %v2072 = vld [vmem:[%s2060 + $0x58] sm:$0xf]
  %v2073 = vld [vmem:[%s2060 + $0x60] sm:$0xff]
  %v2074 = vld [vmem:[%s2060 + $0x68] sm:$0xff]
  %v2075 = vld [vmem:[%s2060 + $0x70] sm:$0xf]
  %2077 = vset.pattern.permute.xlu0 0
  %2078 = vperm.xlu0 %2077, %v2061
  %v2079 = vpop.permute.xlu0 %2078
  %2082 = vset.pattern.permute.xlu0 0
  %2083 = vperm.xlu0 %2082, %v2062
  %v2084 = vpop.permute.xlu0 %2083
  %2087 = vset.pattern.permute.xlu0 0
  %2088 = vperm.xlu0 %2087, %v2063
  %v2089 = vpop.permute.xlu0 %2088
  %2092 = vset.pattern.permute.xlu0 0
  %2093 = vperm.xlu0 %2092, %v2064
  %v2094 = vpop.permute.xlu0 %2093
  %2097 = vset.pattern.permute.xlu0 0
  %2098 = vperm.xlu0 %2097, %v2065
  %v2099 = vpop.permute.xlu0 %2098
  %2102 = vset.pattern.permute.xlu0 0
  %2103 = vperm.xlu0 %2102, %v2066
  %v2104 = vpop.permute.xlu0 %2103
  %2107 = vset.pattern.permute.xlu0 0
  %2108 = vperm.xlu0 %2107, %v2067
  %v2109 = vpop.permute.xlu0 %2108
  %2112 = vset.pattern.permute.xlu0 0
  %2113 = vperm.xlu0 %2112, %v2068
  %v2114 = vpop.permute.xlu0 %2113
  %2117 = vset.pattern.permute.xlu0 0
  %2118 = vperm.xlu0 %2117, %v2069
  %v2119 = vpop.permute.xlu0 %2118
  %2122 = vset.pattern.permute.xlu0 0
  %2123 = vperm.xlu0 %2122, %v2070
  %v2124 = vpop.permute.xlu0 %2123
  %2127 = vset.pattern.permute.xlu0 0
  %2128 = vperm.xlu0 %2127, %v2071
  %v2129 = vpop.permute.xlu0 %2128
  %2132 = vset.pattern.permute.xlu0 0
  %2133 = vperm.xlu0 %2132, %v2072
  %v2134 = vpop.permute.xlu0 %2133
  %2137 = vset.pattern.permute.xlu0 0
  %2138 = vperm.xlu0 %2137, %v2073
  %v2139 = vpop.permute.xlu0 %2138
  %2142 = vset.pattern.permute.xlu0 0
  %2143 = vperm.xlu0 %2142, %v2074
  %v2144 = vpop.permute.xlu0 %2143
  %2147 = vset.pattern.permute.xlu0 0
  %2148 = vperm.xlu0 %2147, %v2075
  %v2149 = vpop.permute.xlu0 %2148
  %v2151 = vadd.f32 %v2079, %v751
  %v2152 = vadd.f32 %v2084, %v752
  %v2153 = vadd.f32 %v2089, %v753
  %v2154 = vadd.f32 %v2094, %v754
  %v2155 = vadd.f32 %v2099, %v755
  %v2156 = vadd.f32 %v2104, %v756
  %v2157 = vadd.f32 %v2109, %v757
  %v2158 = vadd.f32 %v2114, %v758
  %v2159 = vadd.f32 %v2119, %v759
  %v2160 = vadd.f32 %v2124, %v760
  %v2161 = vadd.f32 %v2129, %v761
  %v2162 = vadd.f32 %v2134, %v762
  %v2163 = vadd.f32 %v2139, %v763
  %v2164 = vadd.f32 %v2144, %v764
  %v2165 = vadd.f32 %v2149, %v765
  %v2166 = vperm.slane %v751, 4
  %v2167 = vperm.slane %v754, 4
  %v2168 = vperm.slane %v757, 4
  %v2169 = vperm.slane %v760, 4
  %v2170 = vperm.slane %v763, 4
  %v2171 = vadd.f32 %v2151, %v2166
  %v2172 = vadd.f32 %v2152, %v2166
  %v2173 = vadd.f32 %v2153, %v2166
  %v2174 = vadd.f32 %v2154, %v2167
  %v2175 = vadd.f32 %v2155, %v2167
  %v2176 = vadd.f32 %v2156, %v2167
  %v2177 = vadd.f32 %v2157, %v2168
  %v2178 = vadd.f32 %v2158, %v2168
  %v2179 = vadd.f32 %v2159, %v2168
  %v2180 = vadd.f32 %v2160, %v2169
  %v2181 = vadd.f32 %v2161, %v2169
  %v2182 = vadd.f32 %v2162, %v2169
  %v2183 = vadd.f32 %v2163, %v2170
  %v2184 = vadd.f32 %v2164, %v2170
  %v2185 = vadd.f32 %v2165, %v2170
  %v2186 = vmax.f32 %v2171, 0.0
  %v2187 = vmax.f32 %v2172, 0.0
  %v2188 = vmax.f32 %v2173, 0.0
  %v2189 = vmax.f32 %v2174, 0.0
  %v2190 = vmax.f32 %v2175, 0.0
  %v2191 = vmax.f32 %v2176, 0.0
  %v2192 = vmax.f32 %v2177, 0.0
  %v2193 = vmax.f32 %v2178, 0.0
  %v2194 = vmax.f32 %v2179, 0.0
  %v2195 = vmax.f32 %v2180, 0.0
  %v2196 = vmax.f32 %v2181, 0.0
  %v2197 = vmax.f32 %v2182, 0.0
  %v2198 = vmax.f32 %v2183, 0.0
  %v2199 = vmax.f32 %v2184, 0.0
  %v2200 = vmax.f32 %v2185, 0.0
  %v2201 = vand.u32 2147483647, %v2171
  %v2202 = vand.u32 2147483647, %v2172
  %v2203 = vand.u32 2147483647, %v2173
  %v2204 = vand.u32 2147483647, %v2174
  %v2205 = vand.u32 2147483647, %v2175
  %v2206 = vand.u32 2147483647, %v2176
  %v2207 = vand.u32 2147483647, %v2177
  %v2208 = vand.u32 2147483647, %v2178
  %v2209 = vand.u32 2147483647, %v2179
  %v2210 = vand.u32 2147483647, %v2180
  %v2211 = vand.u32 2147483647, %v2181
  %v2212 = vand.u32 2147483647, %v2182
  %v2213 = vand.u32 2147483647, %v2183
  %v2214 = vand.u32 2147483647, %v2184
  %v2215 = vand.u32 2147483647, %v2185
  %v2216 = vsub.f32 0.0, %v2201
  %v2217 = vsub.f32 0.0, %v2202
  %v2218 = vsub.f32 0.0, %v2203
  %v2219 = vsub.f32 0.0, %v2204
  %v2220 = vsub.f32 0.0, %v2205
  %v2221 = vsub.f32 0.0, %v2206
  %v2222 = vsub.f32 0.0, %v2207
  %v2223 = vsub.f32 0.0, %v2208
  %v2224 = vsub.f32 0.0, %v2209
  %v2225 = vsub.f32 0.0, %v2210
  %v2226 = vsub.f32 0.0, %v2211
  %v2227 = vsub.f32 0.0, %v2212
  %v2228 = vsub.f32 0.0, %v2213
  %v2229 = vsub.f32 0.0, %v2214
  %v2230 = vsub.f32 0.0, %v2215
  %v2231 = vmul.f32 %v2216, 1.442695
  %v2232 = vpow.pop %v2231
  %v2233 = vmul.f32 %v2217, 1.442695
  %v2234 = vpow.pop %v2233
  %v2235 = vmul.f32 %v2218, 1.442695
  %v2236 = vpow.pop %v2235
  %v2237 = vmul.f32 %v2219, 1.442695
  %v2238 = vpow.pop %v2237
  %v2239 = vmul.f32 %v2220, 1.442695
  %v2240 = vpow.pop %v2239
  %v2241 = vmul.f32 %v2221, 1.442695
  %v2242 = vpow.pop %v2241
  %v2243 = vmul.f32 %v2222, 1.442695
  %v2244 = vpow.pop %v2243
  %v2245 = vmul.f32 %v2223, 1.442695
  %v2246 = vpow.pop %v2245
  %v2247 = vmul.f32 %v2224, 1.442695
  %v2248 = vpow.pop %v2247
  %v2249 = vmul.f32 %v2225, 1.442695
  %v2250 = vpow.pop %v2249
  %v2251 = vmul.f32 %v2226, 1.442695
  %v2252 = vpow.pop %v2251
  %v2253 = vmul.f32 %v2227, 1.442695
  %v2254 = vpow.pop %v2253
  %v2255 = vmul.f32 %v2228, 1.442695
  %v2256 = vpow.pop %v2255
  %v2257 = vmul.f32 %v2229, 1.442695
  %v2258 = vpow.pop %v2257
  %v2259 = vmul.f32 %v2230, 1.442695
  %v2260 = vpow.pop %v2259
  %v2261 = vadd.f32 %v2232, 1.0
  %v2262 = vadd.f32 %v2234, 1.0
  %v2263 = vadd.f32 %v2236, 1.0
  %v2264 = vadd.f32 %v2238, 1.0
  %v2265 = vadd.f32 %v2240, 1.0
  %v2266 = vadd.f32 %v2242, 1.0
  %v2267 = vadd.f32 %v2244, 1.0
  %v2268 = vadd.f32 %v2246, 1.0
  %v2269 = vadd.f32 %v2248, 1.0
  %v2270 = vadd.f32 %v2250, 1.0
  %v2271 = vadd.f32 %v2252, 1.0
  %v2272 = vadd.f32 %v2254, 1.0
  %v2273 = vadd.f32 %v2256, 1.0
  %v2274 = vadd.f32 %v2258, 1.0
  %v2275 = vadd.f32 %v2260, 1.0
  %v2276 = vlog2.pop %v2261
  %v2277 = vmul.f32 %v2276, 0.6931472
  %v2278 = vlog2.pop %v2262
  %v2279 = vmul.f32 %v2278, 0.6931472
  %v2280 = vlog2.pop %v2263
  %v2281 = vmul.f32 %v2280, 0.6931472
  %v2282 = vlog2.pop %v2264
  %v2283 = vmul.f32 %v2282, 0.6931472
  %v2284 = vlog2.pop %v2265
  %v2285 = vmul.f32 %v2284, 0.6931472
  %v2286 = vlog2.pop %v2266
  %v2287 = vmul.f32 %v2286, 0.6931472
  %v2288 = vlog2.pop %v2267
  %v2289 = vmul.f32 %v2288, 0.6931472
  %v2290 = vlog2.pop %v2268
  %v2291 = vmul.f32 %v2290, 0.6931472
  %v2292 = vlog2.pop %v2269
  %v2293 = vmul.f32 %v2292, 0.6931472
  %v2294 = vlog2.pop %v2270
  %v2295 = vmul.f32 %v2294, 0.6931472
  %v2296 = vlog2.pop %v2271
  %v2297 = vmul.f32 %v2296, 0.6931472
  %v2298 = vlog2.pop %v2272
  %v2299 = vmul.f32 %v2298, 0.6931472
  %v2300 = vlog2.pop %v2273
  %v2301 = vmul.f32 %v2300, 0.6931472
  %v2302 = vlog2.pop %v2274
  %v2303 = vmul.f32 %v2302, 0.6931472
  %v2304 = vlog2.pop %v2275
  %v2305 = vmul.f32 %v2304, 0.6931472
  %v2306 = vadd.f32 %v2186, %v2277
  %v2307 = vadd.f32 %v2187, %v2279
  %v2308 = vadd.f32 %v2188, %v2281
  %v2309 = vadd.f32 %v2189, %v2283
  %v2310 = vadd.f32 %v2190, %v2285
  %v2311 = vadd.f32 %v2191, %v2287
  %v2312 = vadd.f32 %v2192, %v2289
  %v2313 = vadd.f32 %v2193, %v2291
  %v2314 = vadd.f32 %v2194, %v2293
  %v2315 = vadd.f32 %v2195, %v2295
  %v2316 = vadd.f32 %v2196, %v2297
  %v2317 = vadd.f32 %v2197, %v2299
  %v2318 = vadd.f32 %v2198, %v2301
  %v2319 = vadd.f32 %v2199, %v2303
  %v2320 = vadd.f32 %v2200, %v2305
  %v2321 = vadd.f32 %v2306, %v2307
  %v2322 = vsel %vm767, %v2308, 0.0
  %v2323 = vadd.f32 %v2321, %v2322
  %v2324 = vrot.slane %v2323, 4
  %v2325 = vadd.f32 %v2323, %v2324
  %v2326 = vrot.slane %v2325, 2
  %v2327 = vadd.f32 %v2325, %v2326
  %v2328 = vrot.slane %v2327, 1
  %v2329 = vadd.f32 %v2327, %v2328
  %v2330 = vadd.f32 %v2309, %v2310
  %v2331 = vsel %vm767, %v2311, 0.0
  %v2332 = vadd.f32 %v2330, %v2331
  %v2333 = vrot.slane %v2332, 4
  %v2334 = vadd.f32 %v2332, %v2333
  %v2335 = vrot.slane %v2334, 2
  %v2336 = vadd.f32 %v2334, %v2335
  %v2337 = vrot.slane %v2336, 1
  %v2338 = vadd.f32 %v2336, %v2337
  %v2339 = vadd.f32 %v2312, %v2313
  %v2340 = vsel %vm767, %v2314, 0.0
  %v2341 = vadd.f32 %v2339, %v2340
  %v2342 = vrot.slane %v2341, 4
  %v2343 = vadd.f32 %v2341, %v2342
  %v2344 = vrot.slane %v2343, 2
  %v2345 = vadd.f32 %v2343, %v2344
  %v2346 = vrot.slane %v2345, 1
  %v2347 = vadd.f32 %v2345, %v2346
  %v2348 = vadd.f32 %v2315, %v2316
  %v2349 = vsel %vm767, %v2317, 0.0
  %v2350 = vadd.f32 %v2348, %v2349
  %v2351 = vrot.slane %v2350, 4
  %v2352 = vadd.f32 %v2350, %v2351
  %v2353 = vrot.slane %v2352, 2
  %v2354 = vadd.f32 %v2352, %v2353
  %v2355 = vrot.slane %v2354, 1
  %v2356 = vadd.f32 %v2354, %v2355
  %v2357 = vadd.f32 %v2318, %v2319
  %v2358 = vsel %vm767, %v2320, 0.0
  %v2359 = vadd.f32 %v2357, %v2358
  %v2360 = vrot.slane %v2359, 4
  %v2361 = vadd.f32 %v2359, %v2360
  %v2362 = vrot.slane %v2361, 2
  %v2363 = vadd.f32 %v2361, %v2362
  %v2364 = vrot.slane %v2363, 1
  %v2365 = vadd.f32 %v2363, %v2364
  %v2366 = vadd.f32 %v2055, %v2329
  %v2367 = vadd.f32 %v2056, %v2338
  %v2368 = vadd.f32 %v2057, %v2347
  %v2369 = vadd.f32 %v2058, %v2356
  %v2370 = vadd.f32 %v2059, %v2365
  %s2371 = scalar_lea.vmem %s6, 600
  %v2372 = vld [vmem:[%s2371] sm:$0xff]
  %v2373 = vld [vmem:[%s2371 + $0x8] sm:$0xff]
  %v2374 = vld [vmem:[%s2371 + $0x10] sm:$0xf]
  %v2375 = vld [vmem:[%s2371 + $0x18] sm:$0xff]
  %v2376 = vld [vmem:[%s2371 + $0x20] sm:$0xff]
  %v2377 = vld [vmem:[%s2371 + $0x28] sm:$0xf]
  %v2378 = vld [vmem:[%s2371 + $0x30] sm:$0xff]
  %v2379 = vld [vmem:[%s2371 + $0x38] sm:$0xff]
  %v2380 = vld [vmem:[%s2371 + $0x40] sm:$0xf]
  %v2381 = vld [vmem:[%s2371 + $0x48] sm:$0xff]
  %v2382 = vld [vmem:[%s2371 + $0x50] sm:$0xff]
  %v2383 = vld [vmem:[%s2371 + $0x58] sm:$0xf]
  %v2384 = vld [vmem:[%s2371 + $0x60] sm:$0xff]
  %v2385 = vld [vmem:[%s2371 + $0x68] sm:$0xff]
  %v2386 = vld [vmem:[%s2371 + $0x70] sm:$0xf]
  %2388 = vset.pattern.permute.xlu0 0
  %2389 = vperm.xlu0 %2388, %v2372
  %v2390 = vpop.permute.xlu0 %2389
  %2393 = vset.pattern.permute.xlu0 0
  %2394 = vperm.xlu0 %2393, %v2373
  %v2395 = vpop.permute.xlu0 %2394
  %2398 = vset.pattern.permute.xlu0 0
  %2399 = vperm.xlu0 %2398, %v2374
  %v2400 = vpop.permute.xlu0 %2399
  %2403 = vset.pattern.permute.xlu0 0
  %2404 = vperm.xlu0 %2403, %v2375
  %v2405 = vpop.permute.xlu0 %2404
  %2408 = vset.pattern.permute.xlu0 0
  %2409 = vperm.xlu0 %2408, %v2376
  %v2410 = vpop.permute.xlu0 %2409
  %2413 = vset.pattern.permute.xlu0 0
  %2414 = vperm.xlu0 %2413, %v2377
  %v2415 = vpop.permute.xlu0 %2414
  %2418 = vset.pattern.permute.xlu0 0
  %2419 = vperm.xlu0 %2418, %v2378
  %v2420 = vpop.permute.xlu0 %2419
  %2423 = vset.pattern.permute.xlu0 0
  %2424 = vperm.xlu0 %2423, %v2379
  %v2425 = vpop.permute.xlu0 %2424
  %2428 = vset.pattern.permute.xlu0 0
  %2429 = vperm.xlu0 %2428, %v2380
  %v2430 = vpop.permute.xlu0 %2429
  %2433 = vset.pattern.permute.xlu0 0
  %2434 = vperm.xlu0 %2433, %v2381
  %v2435 = vpop.permute.xlu0 %2434
  %2438 = vset.pattern.permute.xlu0 0
  %2439 = vperm.xlu0 %2438, %v2382
  %v2440 = vpop.permute.xlu0 %2439
  %2443 = vset.pattern.permute.xlu0 0
  %2444 = vperm.xlu0 %2443, %v2383
  %v2445 = vpop.permute.xlu0 %2444
  %2448 = vset.pattern.permute.xlu0 0
  %2449 = vperm.xlu0 %2448, %v2384
  %v2450 = vpop.permute.xlu0 %2449
  %2453 = vset.pattern.permute.xlu0 0
  %2454 = vperm.xlu0 %2453, %v2385
  %v2455 = vpop.permute.xlu0 %2454
  %2458 = vset.pattern.permute.xlu0 0
  %2459 = vperm.xlu0 %2458, %v2386
  %v2460 = vpop.permute.xlu0 %2459
  %v2462 = vadd.f32 %v2390, %v751
  %v2463 = vadd.f32 %v2395, %v752
  %v2464 = vadd.f32 %v2400, %v753
  %v2465 = vadd.f32 %v2405, %v754
  %v2466 = vadd.f32 %v2410, %v755
  %v2467 = vadd.f32 %v2415, %v756
  %v2468 = vadd.f32 %v2420, %v757
  %v2469 = vadd.f32 %v2425, %v758
  %v2470 = vadd.f32 %v2430, %v759
  %v2471 = vadd.f32 %v2435, %v760
  %v2472 = vadd.f32 %v2440, %v761
  %v2473 = vadd.f32 %v2445, %v762
  %v2474 = vadd.f32 %v2450, %v763
  %v2475 = vadd.f32 %v2455, %v764
  %v2476 = vadd.f32 %v2460, %v765
  %v2477 = vperm.slane %v751, 5
  %v2478 = vperm.slane %v754, 5
  %v2479 = vperm.slane %v757, 5
  %v2480 = vperm.slane %v760, 5
  %v2481 = vperm.slane %v763, 5
  %v2482 = vadd.f32 %v2462, %v2477
  %v2483 = vadd.f32 %v2463, %v2477
  %v2484 = vadd.f32 %v2464, %v2477
  %v2485 = vadd.f32 %v2465, %v2478
  %v2486 = vadd.f32 %v2466, %v2478
  %v2487 = vadd.f32 %v2467, %v2478
  %v2488 = vadd.f32 %v2468, %v2479
  %v2489 = vadd.f32 %v2469, %v2479
  %v2490 = vadd.f32 %v2470, %v2479
  %v2491 = vadd.f32 %v2471, %v2480
  %v2492 = vadd.f32 %v2472, %v2480
  %v2493 = vadd.f32 %v2473, %v2480
  %v2494 = vadd.f32 %v2474, %v2481
  %v2495 = vadd.f32 %v2475, %v2481
  %v2496 = vadd.f32 %v2476, %v2481
  %v2497 = vmax.f32 %v2482, 0.0
  %v2498 = vmax.f32 %v2483, 0.0
  %v2499 = vmax.f32 %v2484, 0.0
  %v2500 = vmax.f32 %v2485, 0.0
  %v2501 = vmax.f32 %v2486, 0.0
  %v2502 = vmax.f32 %v2487, 0.0
  %v2503 = vmax.f32 %v2488, 0.0
  %v2504 = vmax.f32 %v2489, 0.0
  %v2505 = vmax.f32 %v2490, 0.0
  %v2506 = vmax.f32 %v2491, 0.0
  %v2507 = vmax.f32 %v2492, 0.0
  %v2508 = vmax.f32 %v2493, 0.0
  %v2509 = vmax.f32 %v2494, 0.0
  %v2510 = vmax.f32 %v2495, 0.0
  %v2511 = vmax.f32 %v2496, 0.0
  %v2512 = vand.u32 2147483647, %v2482
  %v2513 = vand.u32 2147483647, %v2483
  %v2514 = vand.u32 2147483647, %v2484
  %v2515 = vand.u32 2147483647, %v2485
  %v2516 = vand.u32 2147483647, %v2486
  %v2517 = vand.u32 2147483647, %v2487
  %v2518 = vand.u32 2147483647, %v2488
  %v2519 = vand.u32 2147483647, %v2489
  %v2520 = vand.u32 2147483647, %v2490
  %v2521 = vand.u32 2147483647, %v2491
  %v2522 = vand.u32 2147483647, %v2492
  %v2523 = vand.u32 2147483647, %v2493
  %v2524 = vand.u32 2147483647, %v2494
  %v2525 = vand.u32 2147483647, %v2495
  %v2526 = vand.u32 2147483647, %v2496
  %v2527 = vsub.f32 0.0, %v2512
  %v2528 = vsub.f32 0.0, %v2513
  %v2529 = vsub.f32 0.0, %v2514
  %v2530 = vsub.f32 0.0, %v2515
  %v2531 = vsub.f32 0.0, %v2516
  %v2532 = vsub.f32 0.0, %v2517
  %v2533 = vsub.f32 0.0, %v2518
  %v2534 = vsub.f32 0.0, %v2519
  %v2535 = vsub.f32 0.0, %v2520
  %v2536 = vsub.f32 0.0, %v2521
  %v2537 = vsub.f32 0.0, %v2522
  %v2538 = vsub.f32 0.0, %v2523
  %v2539 = vsub.f32 0.0, %v2524
  %v2540 = vsub.f32 0.0, %v2525
  %v2541 = vsub.f32 0.0, %v2526
  %v2542 = vmul.f32 %v2527, 1.442695
  %v2543 = vpow.pop %v2542
  %v2544 = vmul.f32 %v2528, 1.442695
  %v2545 = vpow.pop %v2544
  %v2546 = vmul.f32 %v2529, 1.442695
  %v2547 = vpow.pop %v2546
  %v2548 = vmul.f32 %v2530, 1.442695
  %v2549 = vpow.pop %v2548
  %v2550 = vmul.f32 %v2531, 1.442695
  %v2551 = vpow.pop %v2550
  %v2552 = vmul.f32 %v2532, 1.442695
  %v2553 = vpow.pop %v2552
  %v2554 = vmul.f32 %v2533, 1.442695
  %v2555 = vpow.pop %v2554
  %v2556 = vmul.f32 %v2534, 1.442695
  %v2557 = vpow.pop %v2556
  %v2558 = vmul.f32 %v2535, 1.442695
  %v2559 = vpow.pop %v2558
  %v2560 = vmul.f32 %v2536, 1.442695
  %v2561 = vpow.pop %v2560
  %v2562 = vmul.f32 %v2537, 1.442695
  %v2563 = vpow.pop %v2562
  %v2564 = vmul.f32 %v2538, 1.442695
  %v2565 = vpow.pop %v2564
  %v2566 = vmul.f32 %v2539, 1.442695
  %v2567 = vpow.pop %v2566
  %v2568 = vmul.f32 %v2540, 1.442695
  %v2569 = vpow.pop %v2568
  %v2570 = vmul.f32 %v2541, 1.442695
  %v2571 = vpow.pop %v2570
  %v2572 = vadd.f32 %v2543, 1.0
  %v2573 = vadd.f32 %v2545, 1.0
  %v2574 = vadd.f32 %v2547, 1.0
  %v2575 = vadd.f32 %v2549, 1.0
  %v2576 = vadd.f32 %v2551, 1.0
  %v2577 = vadd.f32 %v2553, 1.0
  %v2578 = vadd.f32 %v2555, 1.0
  %v2579 = vadd.f32 %v2557, 1.0
  %v2580 = vadd.f32 %v2559, 1.0
  %v2581 = vadd.f32 %v2561, 1.0
  %v2582 = vadd.f32 %v2563, 1.0
  %v2583 = vadd.f32 %v2565, 1.0
  %v2584 = vadd.f32 %v2567, 1.0
  %v2585 = vadd.f32 %v2569, 1.0
  %v2586 = vadd.f32 %v2571, 1.0
  %v2587 = vlog2.pop %v2572
  %v2588 = vmul.f32 %v2587, 0.6931472
  %v2589 = vlog2.pop %v2573
  %v2590 = vmul.f32 %v2589, 0.6931472
  %v2591 = vlog2.pop %v2574
  %v2592 = vmul.f32 %v2591, 0.6931472
  %v2593 = vlog2.pop %v2575
  %v2594 = vmul.f32 %v2593, 0.6931472
  %v2595 = vlog2.pop %v2576
  %v2596 = vmul.f32 %v2595, 0.6931472
  %v2597 = vlog2.pop %v2577
  %v2598 = vmul.f32 %v2597, 0.6931472
  %v2599 = vlog2.pop %v2578
  %v2600 = vmul.f32 %v2599, 0.6931472
  %v2601 = vlog2.pop %v2579
  %v2602 = vmul.f32 %v2601, 0.6931472
  %v2603 = vlog2.pop %v2580
  %v2604 = vmul.f32 %v2603, 0.6931472
  %v2605 = vlog2.pop %v2581
  %v2606 = vmul.f32 %v2605, 0.6931472
  %v2607 = vlog2.pop %v2582
  %v2608 = vmul.f32 %v2607, 0.6931472
  %v2609 = vlog2.pop %v2583
  %v2610 = vmul.f32 %v2609, 0.6931472
  %v2611 = vlog2.pop %v2584
  %v2612 = vmul.f32 %v2611, 0.6931472
  %v2613 = vlog2.pop %v2585
  %v2614 = vmul.f32 %v2613, 0.6931472
  %v2615 = vlog2.pop %v2586
  %v2616 = vmul.f32 %v2615, 0.6931472
  %v2617 = vadd.f32 %v2497, %v2588
  %v2618 = vadd.f32 %v2498, %v2590
  %v2619 = vadd.f32 %v2499, %v2592
  %v2620 = vadd.f32 %v2500, %v2594
  %v2621 = vadd.f32 %v2501, %v2596
  %v2622 = vadd.f32 %v2502, %v2598
  %v2623 = vadd.f32 %v2503, %v2600
  %v2624 = vadd.f32 %v2504, %v2602
  %v2625 = vadd.f32 %v2505, %v2604
  %v2626 = vadd.f32 %v2506, %v2606
  %v2627 = vadd.f32 %v2507, %v2608
  %v2628 = vadd.f32 %v2508, %v2610
  %v2629 = vadd.f32 %v2509, %v2612
  %v2630 = vadd.f32 %v2510, %v2614
  %v2631 = vadd.f32 %v2511, %v2616
  %v2632 = vadd.f32 %v2617, %v2618
  %v2633 = vsel %vm767, %v2619, 0.0
  %v2634 = vadd.f32 %v2632, %v2633
  %v2635 = vrot.slane %v2634, 4
  %v2636 = vadd.f32 %v2634, %v2635
  %v2637 = vrot.slane %v2636, 2
  %v2638 = vadd.f32 %v2636, %v2637
  %v2639 = vrot.slane %v2638, 1
  %v2640 = vadd.f32 %v2638, %v2639
  %v2641 = vadd.f32 %v2620, %v2621
  %v2642 = vsel %vm767, %v2622, 0.0
  %v2643 = vadd.f32 %v2641, %v2642
  %v2644 = vrot.slane %v2643, 4
  %v2645 = vadd.f32 %v2643, %v2644
  %v2646 = vrot.slane %v2645, 2
  %v2647 = vadd.f32 %v2645, %v2646
  %v2648 = vrot.slane %v2647, 1
  %v2649 = vadd.f32 %v2647, %v2648
  %v2650 = vadd.f32 %v2623, %v2624
  %v2651 = vsel %vm767, %v2625, 0.0
  %v2652 = vadd.f32 %v2650, %v2651
  %v2653 = vrot.slane %v2652, 4
  %v2654 = vadd.f32 %v2652, %v2653
  %v2655 = vrot.slane %v2654, 2
  %v2656 = vadd.f32 %v2654, %v2655
  %v2657 = vrot.slane %v2656, 1
  %v2658 = vadd.f32 %v2656, %v2657
  %v2659 = vadd.f32 %v2626, %v2627
  %v2660 = vsel %vm767, %v2628, 0.0
  %v2661 = vadd.f32 %v2659, %v2660
  %v2662 = vrot.slane %v2661, 4
  %v2663 = vadd.f32 %v2661, %v2662
  %v2664 = vrot.slane %v2663, 2
  %v2665 = vadd.f32 %v2663, %v2664
  %v2666 = vrot.slane %v2665, 1
  %v2667 = vadd.f32 %v2665, %v2666
  %v2668 = vadd.f32 %v2629, %v2630
  %v2669 = vsel %vm767, %v2631, 0.0
  %v2670 = vadd.f32 %v2668, %v2669
  %v2671 = vrot.slane %v2670, 4
  %v2672 = vadd.f32 %v2670, %v2671
  %v2673 = vrot.slane %v2672, 2
  %v2674 = vadd.f32 %v2672, %v2673
  %v2675 = vrot.slane %v2674, 1
  %v2676 = vadd.f32 %v2674, %v2675
  %v2677 = vadd.f32 %v2366, %v2640
  %v2678 = vadd.f32 %v2367, %v2649
  %v2679 = vadd.f32 %v2368, %v2658
  %v2680 = vadd.f32 %v2369, %v2667
  %v2681 = vadd.f32 %v2370, %v2676
  %s2682 = scalar_lea.vmem %s6, 720
  %v2683 = vld [vmem:[%s2682] sm:$0xff]
  %v2684 = vld [vmem:[%s2682 + $0x8] sm:$0xff]
  %v2685 = vld [vmem:[%s2682 + $0x10] sm:$0xf]
  %v2686 = vld [vmem:[%s2682 + $0x18] sm:$0xff]
  %v2687 = vld [vmem:[%s2682 + $0x20] sm:$0xff]
  %v2688 = vld [vmem:[%s2682 + $0x28] sm:$0xf]
  %v2689 = vld [vmem:[%s2682 + $0x30] sm:$0xff]
  %v2690 = vld [vmem:[%s2682 + $0x38] sm:$0xff]
  %v2691 = vld [vmem:[%s2682 + $0x40] sm:$0xf]
  %v2692 = vld [vmem:[%s2682 + $0x48] sm:$0xff]
  %v2693 = vld [vmem:[%s2682 + $0x50] sm:$0xff]
  %v2694 = vld [vmem:[%s2682 + $0x58] sm:$0xf]
  %v2695 = vld [vmem:[%s2682 + $0x60] sm:$0xff]
  %v2696 = vld [vmem:[%s2682 + $0x68] sm:$0xff]
  %v2697 = vld [vmem:[%s2682 + $0x70] sm:$0xf]
  %2699 = vset.pattern.permute.xlu0 0
  %2700 = vperm.xlu0 %2699, %v2683
  %v2701 = vpop.permute.xlu0 %2700
  %2704 = vset.pattern.permute.xlu0 0
  %2705 = vperm.xlu0 %2704, %v2684
  %v2706 = vpop.permute.xlu0 %2705
  %2709 = vset.pattern.permute.xlu0 0
  %2710 = vperm.xlu0 %2709, %v2685
  %v2711 = vpop.permute.xlu0 %2710
  %2714 = vset.pattern.permute.xlu0 0
  %2715 = vperm.xlu0 %2714, %v2686
  %v2716 = vpop.permute.xlu0 %2715
  %2719 = vset.pattern.permute.xlu0 0
  %2720 = vperm.xlu0 %2719, %v2687
  %v2721 = vpop.permute.xlu0 %2720
  %2724 = vset.pattern.permute.xlu0 0
  %2725 = vperm.xlu0 %2724, %v2688
  %v2726 = vpop.permute.xlu0 %2725
  %2729 = vset.pattern.permute.xlu0 0
  %2730 = vperm.xlu0 %2729, %v2689
  %v2731 = vpop.permute.xlu0 %2730
  %2734 = vset.pattern.permute.xlu0 0
  %2735 = vperm.xlu0 %2734, %v2690
  %v2736 = vpop.permute.xlu0 %2735
  %2739 = vset.pattern.permute.xlu0 0
  %2740 = vperm.xlu0 %2739, %v2691
  %v2741 = vpop.permute.xlu0 %2740
  %2744 = vset.pattern.permute.xlu0 0
  %2745 = vperm.xlu0 %2744, %v2692
  %v2746 = vpop.permute.xlu0 %2745
  %2749 = vset.pattern.permute.xlu0 0
  %2750 = vperm.xlu0 %2749, %v2693
  %v2751 = vpop.permute.xlu0 %2750
  %2754 = vset.pattern.permute.xlu0 0
  %2755 = vperm.xlu0 %2754, %v2694
  %v2756 = vpop.permute.xlu0 %2755
  %2759 = vset.pattern.permute.xlu0 0
  %2760 = vperm.xlu0 %2759, %v2695
  %v2761 = vpop.permute.xlu0 %2760
  %2764 = vset.pattern.permute.xlu0 0
  %2765 = vperm.xlu0 %2764, %v2696
  %v2766 = vpop.permute.xlu0 %2765
  %2769 = vset.pattern.permute.xlu0 0
  %2770 = vperm.xlu0 %2769, %v2697
  %v2771 = vpop.permute.xlu0 %2770
  %v2773 = vadd.f32 %v2701, %v751
  %v2774 = vadd.f32 %v2706, %v752
  %v2775 = vadd.f32 %v2711, %v753
  %v2776 = vadd.f32 %v2716, %v754
  %v2777 = vadd.f32 %v2721, %v755
  %v2778 = vadd.f32 %v2726, %v756
  %v2779 = vadd.f32 %v2731, %v757
  %v2780 = vadd.f32 %v2736, %v758
  %v2781 = vadd.f32 %v2741, %v759
  %v2782 = vadd.f32 %v2746, %v760
  %v2783 = vadd.f32 %v2751, %v761
  %v2784 = vadd.f32 %v2756, %v762
  %v2785 = vadd.f32 %v2761, %v763
  %v2786 = vadd.f32 %v2766, %v764
  %v2787 = vadd.f32 %v2771, %v765
  %v2788 = vperm.slane %v751, 6
  %v2789 = vperm.slane %v754, 6
  %v2790 = vperm.slane %v757, 6
  %v2791 = vperm.slane %v760, 6
  %v2792 = vperm.slane %v763, 6
  %v2793 = vadd.f32 %v2773, %v2788
  %v2794 = vadd.f32 %v2774, %v2788
  %v2795 = vadd.f32 %v2775, %v2788
  %v2796 = vadd.f32 %v2776, %v2789
  %v2797 = vadd.f32 %v2777, %v2789
  %v2798 = vadd.f32 %v2778, %v2789
  %v2799 = vadd.f32 %v2779, %v2790
  %v2800 = vadd.f32 %v2780, %v2790
  %v2801 = vadd.f32 %v2781, %v2790
  %v2802 = vadd.f32 %v2782, %v2791
  %v2803 = vadd.f32 %v2783, %v2791
  %v2804 = vadd.f32 %v2784, %v2791
  %v2805 = vadd.f32 %v2785, %v2792
  %v2806 = vadd.f32 %v2786, %v2792
  %v2807 = vadd.f32 %v2787, %v2792
  %v2808 = vmax.f32 %v2793, 0.0
  %v2809 = vmax.f32 %v2794, 0.0
  %v2810 = vmax.f32 %v2795, 0.0
  %v2811 = vmax.f32 %v2796, 0.0
  %v2812 = vmax.f32 %v2797, 0.0
  %v2813 = vmax.f32 %v2798, 0.0
  %v2814 = vmax.f32 %v2799, 0.0
  %v2815 = vmax.f32 %v2800, 0.0
  %v2816 = vmax.f32 %v2801, 0.0
  %v2817 = vmax.f32 %v2802, 0.0
  %v2818 = vmax.f32 %v2803, 0.0
  %v2819 = vmax.f32 %v2804, 0.0
  %v2820 = vmax.f32 %v2805, 0.0
  %v2821 = vmax.f32 %v2806, 0.0
  %v2822 = vmax.f32 %v2807, 0.0
  %v2823 = vand.u32 2147483647, %v2793
  %v2824 = vand.u32 2147483647, %v2794
  %v2825 = vand.u32 2147483647, %v2795
  %v2826 = vand.u32 2147483647, %v2796
  %v2827 = vand.u32 2147483647, %v2797
  %v2828 = vand.u32 2147483647, %v2798
  %v2829 = vand.u32 2147483647, %v2799
  %v2830 = vand.u32 2147483647, %v2800
  %v2831 = vand.u32 2147483647, %v2801
  %v2832 = vand.u32 2147483647, %v2802
  %v2833 = vand.u32 2147483647, %v2803
  %v2834 = vand.u32 2147483647, %v2804
  %v2835 = vand.u32 2147483647, %v2805
  %v2836 = vand.u32 2147483647, %v2806
  %v2837 = vand.u32 2147483647, %v2807
  %v2838 = vsub.f32 0.0, %v2823
  %v2839 = vsub.f32 0.0, %v2824
  %v2840 = vsub.f32 0.0, %v2825
  %v2841 = vsub.f32 0.0, %v2826
  %v2842 = vsub.f32 0.0, %v2827
  %v2843 = vsub.f32 0.0, %v2828
  %v2844 = vsub.f32 0.0, %v2829
  %v2845 = vsub.f32 0.0, %v2830
  %v2846 = vsub.f32 0.0, %v2831
  %v2847 = vsub.f32 0.0, %v2832
  %v2848 = vsub.f32 0.0, %v2833
  %v2849 = vsub.f32 0.0, %v2834
  %v2850 = vsub.f32 0.0, %v2835
  %v2851 = vsub.f32 0.0, %v2836
  %v2852 = vsub.f32 0.0, %v2837
  %v2853 = vmul.f32 %v2838, 1.442695
  %v2854 = vpow.pop %v2853
  %v2855 = vmul.f32 %v2839, 1.442695
  %v2856 = vpow.pop %v2855
  %v2857 = vmul.f32 %v2840, 1.442695
  %v2858 = vpow.pop %v2857
  %v2859 = vmul.f32 %v2841, 1.442695
  %v2860 = vpow.pop %v2859
  %v2861 = vmul.f32 %v2842, 1.442695
  %v2862 = vpow.pop %v2861
  %v2863 = vmul.f32 %v2843, 1.442695
  %v2864 = vpow.pop %v2863
  %v2865 = vmul.f32 %v2844, 1.442695
  %v2866 = vpow.pop %v2865
  %v2867 = vmul.f32 %v2845, 1.442695
  %v2868 = vpow.pop %v2867
  %v2869 = vmul.f32 %v2846, 1.442695
  %v2870 = vpow.pop %v2869
  %v2871 = vmul.f32 %v2847, 1.442695
  %v2872 = vpow.pop %v2871
  %v2873 = vmul.f32 %v2848, 1.442695
  %v2874 = vpow.pop %v2873
  %v2875 = vmul.f32 %v2849, 1.442695
  %v2876 = vpow.pop %v2875
  %v2877 = vmul.f32 %v2850, 1.442695
  %v2878 = vpow.pop %v2877
  %v2879 = vmul.f32 %v2851, 1.442695
  %v2880 = vpow.pop %v2879
  %v2881 = vmul.f32 %v2852, 1.442695
  %v2882 = vpow.pop %v2881
  %v2883 = vadd.f32 %v2854, 1.0
  %v2884 = vadd.f32 %v2856, 1.0
  %v2885 = vadd.f32 %v2858, 1.0
  %v2886 = vadd.f32 %v2860, 1.0
  %v2887 = vadd.f32 %v2862, 1.0
  %v2888 = vadd.f32 %v2864, 1.0
  %v2889 = vadd.f32 %v2866, 1.0
  %v2890 = vadd.f32 %v2868, 1.0
  %v2891 = vadd.f32 %v2870, 1.0
  %v2892 = vadd.f32 %v2872, 1.0
  %v2893 = vadd.f32 %v2874, 1.0
  %v2894 = vadd.f32 %v2876, 1.0
  %v2895 = vadd.f32 %v2878, 1.0
  %v2896 = vadd.f32 %v2880, 1.0
  %v2897 = vadd.f32 %v2882, 1.0
  %v2898 = vlog2.pop %v2883
  %v2899 = vmul.f32 %v2898, 0.6931472
  %v2900 = vlog2.pop %v2884
  %v2901 = vmul.f32 %v2900, 0.6931472
  %v2902 = vlog2.pop %v2885
  %v2903 = vmul.f32 %v2902, 0.6931472
  %v2904 = vlog2.pop %v2886
  %v2905 = vmul.f32 %v2904, 0.6931472
  %v2906 = vlog2.pop %v2887
  %v2907 = vmul.f32 %v2906, 0.6931472
  %v2908 = vlog2.pop %v2888
  %v2909 = vmul.f32 %v2908, 0.6931472
  %v2910 = vlog2.pop %v2889
  %v2911 = vmul.f32 %v2910, 0.6931472
  %v2912 = vlog2.pop %v2890
  %v2913 = vmul.f32 %v2912, 0.6931472
  %v2914 = vlog2.pop %v2891
  %v2915 = vmul.f32 %v2914, 0.6931472
  %v2916 = vlog2.pop %v2892
  %v2917 = vmul.f32 %v2916, 0.6931472
  %v2918 = vlog2.pop %v2893
  %v2919 = vmul.f32 %v2918, 0.6931472
  %v2920 = vlog2.pop %v2894
  %v2921 = vmul.f32 %v2920, 0.6931472
  %v2922 = vlog2.pop %v2895
  %v2923 = vmul.f32 %v2922, 0.6931472
  %v2924 = vlog2.pop %v2896
  %v2925 = vmul.f32 %v2924, 0.6931472
  %v2926 = vlog2.pop %v2897
  %v2927 = vmul.f32 %v2926, 0.6931472
  %v2928 = vadd.f32 %v2808, %v2899
  %v2929 = vadd.f32 %v2809, %v2901
  %v2930 = vadd.f32 %v2810, %v2903
  %v2931 = vadd.f32 %v2811, %v2905
  %v2932 = vadd.f32 %v2812, %v2907
  %v2933 = vadd.f32 %v2813, %v2909
  %v2934 = vadd.f32 %v2814, %v2911
  %v2935 = vadd.f32 %v2815, %v2913
  %v2936 = vadd.f32 %v2816, %v2915
  %v2937 = vadd.f32 %v2817, %v2917
  %v2938 = vadd.f32 %v2818, %v2919
  %v2939 = vadd.f32 %v2819, %v2921
  %v2940 = vadd.f32 %v2820, %v2923
  %v2941 = vadd.f32 %v2821, %v2925
  %v2942 = vadd.f32 %v2822, %v2927
  %v2943 = vadd.f32 %v2928, %v2929
  %v2944 = vsel %vm767, %v2930, 0.0
  %v2945 = vadd.f32 %v2943, %v2944
  %v2946 = vrot.slane %v2945, 4
  %v2947 = vadd.f32 %v2945, %v2946
  %v2948 = vrot.slane %v2947, 2
  %v2949 = vadd.f32 %v2947, %v2948
  %v2950 = vrot.slane %v2949, 1
  %v2951 = vadd.f32 %v2949, %v2950
  %v2952 = vadd.f32 %v2931, %v2932
  %v2953 = vsel %vm767, %v2933, 0.0
  %v2954 = vadd.f32 %v2952, %v2953
  %v2955 = vrot.slane %v2954, 4
  %v2956 = vadd.f32 %v2954, %v2955
  %v2957 = vrot.slane %v2956, 2
  %v2958 = vadd.f32 %v2956, %v2957
  %v2959 = vrot.slane %v2958, 1
  %v2960 = vadd.f32 %v2958, %v2959
  %v2961 = vadd.f32 %v2934, %v2935
  %v2962 = vsel %vm767, %v2936, 0.0
  %v2963 = vadd.f32 %v2961, %v2962
  %v2964 = vrot.slane %v2963, 4
  %v2965 = vadd.f32 %v2963, %v2964
  %v2966 = vrot.slane %v2965, 2
  %v2967 = vadd.f32 %v2965, %v2966
  %v2968 = vrot.slane %v2967, 1
  %v2969 = vadd.f32 %v2967, %v2968
  %v2970 = vadd.f32 %v2937, %v2938
  %v2971 = vsel %vm767, %v2939, 0.0
  %v2972 = vadd.f32 %v2970, %v2971
  %v2973 = vrot.slane %v2972, 4
  %v2974 = vadd.f32 %v2972, %v2973
  %v2975 = vrot.slane %v2974, 2
  %v2976 = vadd.f32 %v2974, %v2975
  %v2977 = vrot.slane %v2976, 1
  %v2978 = vadd.f32 %v2976, %v2977
  %v2979 = vadd.f32 %v2940, %v2941
  %v2980 = vsel %vm767, %v2942, 0.0
  %v2981 = vadd.f32 %v2979, %v2980
  %v2982 = vrot.slane %v2981, 4
  %v2983 = vadd.f32 %v2981, %v2982
  %v2984 = vrot.slane %v2983, 2
  %v2985 = vadd.f32 %v2983, %v2984
  %v2986 = vrot.slane %v2985, 1
  %v2987 = vadd.f32 %v2985, %v2986
  %v2988 = vadd.f32 %v2677, %v2951
  %v2989 = vadd.f32 %v2678, %v2960
  %v2990 = vadd.f32 %v2679, %v2969
  %v2991 = vadd.f32 %v2680, %v2978
  %v2992 = vadd.f32 %v2681, %v2987
  %s2993 = scalar_lea.vmem %s6, 840
  %v2994 = vld [vmem:[%s2993] sm:$0xff]
  %v2995 = vld [vmem:[%s2993 + $0x8] sm:$0xff]
  %v2996 = vld [vmem:[%s2993 + $0x10] sm:$0xf]
  %v2997 = vld [vmem:[%s2993 + $0x18] sm:$0xff]
  %v2998 = vld [vmem:[%s2993 + $0x20] sm:$0xff]
  %v2999 = vld [vmem:[%s2993 + $0x28] sm:$0xf]
  %v3000 = vld [vmem:[%s2993 + $0x30] sm:$0xff]
  %v3001 = vld [vmem:[%s2993 + $0x38] sm:$0xff]
  %v3002 = vld [vmem:[%s2993 + $0x40] sm:$0xf]
  %v3003 = vld [vmem:[%s2993 + $0x48] sm:$0xff]
  %v3004 = vld [vmem:[%s2993 + $0x50] sm:$0xff]
  %v3005 = vld [vmem:[%s2993 + $0x58] sm:$0xf]
  %v3006 = vld [vmem:[%s2993 + $0x60] sm:$0xff]
  %v3007 = vld [vmem:[%s2993 + $0x68] sm:$0xff]
  %v3008 = vld [vmem:[%s2993 + $0x70] sm:$0xf]
  %3010 = vset.pattern.permute.xlu0 0
  %3011 = vperm.xlu0 %3010, %v2994
  %v3012 = vpop.permute.xlu0 %3011
  %3015 = vset.pattern.permute.xlu0 0
  %3016 = vperm.xlu0 %3015, %v2995
  %v3017 = vpop.permute.xlu0 %3016
  %3020 = vset.pattern.permute.xlu0 0
  %3021 = vperm.xlu0 %3020, %v2996
  %v3022 = vpop.permute.xlu0 %3021
  %3025 = vset.pattern.permute.xlu0 0
  %3026 = vperm.xlu0 %3025, %v2997
  %v3027 = vpop.permute.xlu0 %3026
  %3030 = vset.pattern.permute.xlu0 0
  %3031 = vperm.xlu0 %3030, %v2998
  %v3032 = vpop.permute.xlu0 %3031
  %3035 = vset.pattern.permute.xlu0 0
  %3036 = vperm.xlu0 %3035, %v2999
  %v3037 = vpop.permute.xlu0 %3036
  %3040 = vset.pattern.permute.xlu0 0
  %3041 = vperm.xlu0 %3040, %v3000
  %v3042 = vpop.permute.xlu0 %3041
  %3045 = vset.pattern.permute.xlu0 0
  %3046 = vperm.xlu0 %3045, %v3001
  %v3047 = vpop.permute.xlu0 %3046
  %3050 = vset.pattern.permute.xlu0 0
  %3051 = vperm.xlu0 %3050, %v3002
  %v3052 = vpop.permute.xlu0 %3051
  %3055 = vset.pattern.permute.xlu0 0
  %3056 = vperm.xlu0 %3055, %v3003
  %v3057 = vpop.permute.xlu0 %3056
  %3060 = vset.pattern.permute.xlu0 0
  %3061 = vperm.xlu0 %3060, %v3004
  %v3062 = vpop.permute.xlu0 %3061
  %3065 = vset.pattern.permute.xlu0 0
  %3066 = vperm.xlu0 %3065, %v3005
  %v3067 = vpop.permute.xlu0 %3066
  %3070 = vset.pattern.permute.xlu0 0
  %3071 = vperm.xlu0 %3070, %v3006
  %v3072 = vpop.permute.xlu0 %3071
  %3075 = vset.pattern.permute.xlu0 0
  %3076 = vperm.xlu0 %3075, %v3007
  %v3077 = vpop.permute.xlu0 %3076
  %3080 = vset.pattern.permute.xlu0 0
  %3081 = vperm.xlu0 %3080, %v3008
  %v3082 = vpop.permute.xlu0 %3081
  %v3084 = vadd.f32 %v3012, %v751
  %v3085 = vadd.f32 %v3017, %v752
  %v3086 = vadd.f32 %v3022, %v753
  %v3087 = vadd.f32 %v3027, %v754
  %v3088 = vadd.f32 %v3032, %v755
  %v3089 = vadd.f32 %v3037, %v756
  %v3090 = vadd.f32 %v3042, %v757
  %v3091 = vadd.f32 %v3047, %v758
  %v3092 = vadd.f32 %v3052, %v759
  %v3093 = vadd.f32 %v3057, %v760
  %v3094 = vadd.f32 %v3062, %v761
  %v3095 = vadd.f32 %v3067, %v762
  %v3096 = vadd.f32 %v3072, %v763
  %v3097 = vadd.f32 %v3077, %v764
  %v3098 = vadd.f32 %v3082, %v765
  %v3099 = vperm.slane %v751, 7
  %v3100 = vperm.slane %v754, 7
  %v3101 = vperm.slane %v757, 7
  %v3102 = vperm.slane %v760, 7
  %v3103 = vperm.slane %v763, 7
  %v3104 = vadd.f32 %v3084, %v3099
  %v3105 = vadd.f32 %v3085, %v3099
  %v3106 = vadd.f32 %v3086, %v3099
  %v3107 = vadd.f32 %v3087, %v3100
  %v3108 = vadd.f32 %v3088, %v3100
  %v3109 = vadd.f32 %v3089, %v3100
  %v3110 = vadd.f32 %v3090, %v3101
  %v3111 = vadd.f32 %v3091, %v3101
  %v3112 = vadd.f32 %v3092, %v3101
  %v3113 = vadd.f32 %v3093, %v3102
  %v3114 = vadd.f32 %v3094, %v3102
  %v3115 = vadd.f32 %v3095, %v3102
  %v3116 = vadd.f32 %v3096, %v3103
  %v3117 = vadd.f32 %v3097, %v3103
  %v3118 = vadd.f32 %v3098, %v3103
  %v3119 = vmax.f32 %v3104, 0.0
  %v3120 = vmax.f32 %v3105, 0.0
  %v3121 = vmax.f32 %v3106, 0.0
  %v3122 = vmax.f32 %v3107, 0.0
  %v3123 = vmax.f32 %v3108, 0.0
  %v3124 = vmax.f32 %v3109, 0.0
  %v3125 = vmax.f32 %v3110, 0.0
  %v3126 = vmax.f32 %v3111, 0.0
  %v3127 = vmax.f32 %v3112, 0.0
  %v3128 = vmax.f32 %v3113, 0.0
  %v3129 = vmax.f32 %v3114, 0.0
  %v3130 = vmax.f32 %v3115, 0.0
  %v3131 = vmax.f32 %v3116, 0.0
  %v3132 = vmax.f32 %v3117, 0.0
  %v3133 = vmax.f32 %v3118, 0.0
  %v3134 = vand.u32 2147483647, %v3104
  %v3135 = vand.u32 2147483647, %v3105
  %v3136 = vand.u32 2147483647, %v3106
  %v3137 = vand.u32 2147483647, %v3107
  %v3138 = vand.u32 2147483647, %v3108
  %v3139 = vand.u32 2147483647, %v3109
  %v3140 = vand.u32 2147483647, %v3110
  %v3141 = vand.u32 2147483647, %v3111
  %v3142 = vand.u32 2147483647, %v3112
  %v3143 = vand.u32 2147483647, %v3113
  %v3144 = vand.u32 2147483647, %v3114
  %v3145 = vand.u32 2147483647, %v3115
  %v3146 = vand.u32 2147483647, %v3116
  %v3147 = vand.u32 2147483647, %v3117
  %v3148 = vand.u32 2147483647, %v3118
  %v3149 = vsub.f32 0.0, %v3134
  %v3150 = vsub.f32 0.0, %v3135
  %v3151 = vsub.f32 0.0, %v3136
  %v3152 = vsub.f32 0.0, %v3137
  %v3153 = vsub.f32 0.0, %v3138
  %v3154 = vsub.f32 0.0, %v3139
  %v3155 = vsub.f32 0.0, %v3140
  %v3156 = vsub.f32 0.0, %v3141
  %v3157 = vsub.f32 0.0, %v3142
  %v3158 = vsub.f32 0.0, %v3143
  %v3159 = vsub.f32 0.0, %v3144
  %v3160 = vsub.f32 0.0, %v3145
  %v3161 = vsub.f32 0.0, %v3146
  %v3162 = vsub.f32 0.0, %v3147
  %v3163 = vsub.f32 0.0, %v3148
  %v3164 = vmul.f32 %v3149, 1.442695
  %v3165 = vpow.pop %v3164
  %v3166 = vmul.f32 %v3150, 1.442695
  %v3167 = vpow.pop %v3166
  %v3168 = vmul.f32 %v3151, 1.442695
  %v3169 = vpow.pop %v3168
  %v3170 = vmul.f32 %v3152, 1.442695
  %v3171 = vpow.pop %v3170
  %v3172 = vmul.f32 %v3153, 1.442695
  %v3173 = vpow.pop %v3172
  %v3174 = vmul.f32 %v3154, 1.442695
  %v3175 = vpow.pop %v3174
  %v3176 = vmul.f32 %v3155, 1.442695
  %v3177 = vpow.pop %v3176
  %v3178 = vmul.f32 %v3156, 1.442695
  %v3179 = vpow.pop %v3178
  %v3180 = vmul.f32 %v3157, 1.442695
  %v3181 = vpow.pop %v3180
  %v3182 = vmul.f32 %v3158, 1.442695
  %v3183 = vpow.pop %v3182
  %v3184 = vmul.f32 %v3159, 1.442695
  %v3185 = vpow.pop %v3184
  %v3186 = vmul.f32 %v3160, 1.442695
  %v3187 = vpow.pop %v3186
  %v3188 = vmul.f32 %v3161, 1.442695
  %v3189 = vpow.pop %v3188
  %v3190 = vmul.f32 %v3162, 1.442695
  %v3191 = vpow.pop %v3190
  %v3192 = vmul.f32 %v3163, 1.442695
  %v3193 = vpow.pop %v3192
  %v3194 = vadd.f32 %v3165, 1.0
  %v3195 = vadd.f32 %v3167, 1.0
  %v3196 = vadd.f32 %v3169, 1.0
  %v3197 = vadd.f32 %v3171, 1.0
  %v3198 = vadd.f32 %v3173, 1.0
  %v3199 = vadd.f32 %v3175, 1.0
  %v3200 = vadd.f32 %v3177, 1.0
  %v3201 = vadd.f32 %v3179, 1.0
  %v3202 = vadd.f32 %v3181, 1.0
  %v3203 = vadd.f32 %v3183, 1.0
  %v3204 = vadd.f32 %v3185, 1.0
  %v3205 = vadd.f32 %v3187, 1.0
  %v3206 = vadd.f32 %v3189, 1.0
  %v3207 = vadd.f32 %v3191, 1.0
  %v3208 = vadd.f32 %v3193, 1.0
  %v3209 = vlog2.pop %v3194
  %v3210 = vmul.f32 %v3209, 0.6931472
  %v3211 = vlog2.pop %v3195
  %v3212 = vmul.f32 %v3211, 0.6931472
  %v3213 = vlog2.pop %v3196
  %v3214 = vmul.f32 %v3213, 0.6931472
  %v3215 = vlog2.pop %v3197
  %v3216 = vmul.f32 %v3215, 0.6931472
  %v3217 = vlog2.pop %v3198
  %v3218 = vmul.f32 %v3217, 0.6931472
  %v3219 = vlog2.pop %v3199
  %v3220 = vmul.f32 %v3219, 0.6931472
  %v3221 = vlog2.pop %v3200
  %v3222 = vmul.f32 %v3221, 0.6931472
  %v3223 = vlog2.pop %v3201
  %v3224 = vmul.f32 %v3223, 0.6931472
  %v3225 = vlog2.pop %v3202
  %v3226 = vmul.f32 %v3225, 0.6931472
  %v3227 = vlog2.pop %v3203
  %v3228 = vmul.f32 %v3227, 0.6931472
  %v3229 = vlog2.pop %v3204
  %v3230 = vmul.f32 %v3229, 0.6931472
  %v3231 = vlog2.pop %v3205
  %v3232 = vmul.f32 %v3231, 0.6931472
  %v3233 = vlog2.pop %v3206
  %v3234 = vmul.f32 %v3233, 0.6931472
  %v3235 = vlog2.pop %v3207
  %v3236 = vmul.f32 %v3235, 0.6931472
  %v3237 = vlog2.pop %v3208
  %v3238 = vmul.f32 %v3237, 0.6931472
  %v3239 = vadd.f32 %v3119, %v3210
  %v3240 = vadd.f32 %v3120, %v3212
  %v3241 = vadd.f32 %v3121, %v3214
  %v3242 = vadd.f32 %v3122, %v3216
  %v3243 = vadd.f32 %v3123, %v3218
  %v3244 = vadd.f32 %v3124, %v3220
  %v3245 = vadd.f32 %v3125, %v3222
  %v3246 = vadd.f32 %v3126, %v3224
  %v3247 = vadd.f32 %v3127, %v3226
  %v3248 = vadd.f32 %v3128, %v3228
  %v3249 = vadd.f32 %v3129, %v3230
  %v3250 = vadd.f32 %v3130, %v3232
  %v3251 = vadd.f32 %v3131, %v3234
  %v3252 = vadd.f32 %v3132, %v3236
  %v3253 = vadd.f32 %v3133, %v3238
  %v3254 = vadd.f32 %v3239, %v3240
  %v3255 = vsel %vm767, %v3241, 0.0
  %v3256 = vadd.f32 %v3254, %v3255
  %v3257 = vrot.slane %v3256, 4
  %v3258 = vadd.f32 %v3256, %v3257
  %v3259 = vrot.slane %v3258, 2
  %v3260 = vadd.f32 %v3258, %v3259
  %v3261 = vrot.slane %v3260, 1
  %v3262 = vadd.f32 %v3260, %v3261
  %v3263 = vadd.f32 %v3242, %v3243
  %v3264 = vsel %vm767, %v3244, 0.0
  %v3265 = vadd.f32 %v3263, %v3264
  %v3266 = vrot.slane %v3265, 4
  %v3267 = vadd.f32 %v3265, %v3266
  %v3268 = vrot.slane %v3267, 2
  %v3269 = vadd.f32 %v3267, %v3268
  %v3270 = vrot.slane %v3269, 1
  %v3271 = vadd.f32 %v3269, %v3270
  %v3272 = vadd.f32 %v3245, %v3246
  %v3273 = vsel %vm767, %v3247, 0.0
  %v3274 = vadd.f32 %v3272, %v3273
  %v3275 = vrot.slane %v3274, 4
  %v3276 = vadd.f32 %v3274, %v3275
  %v3277 = vrot.slane %v3276, 2
  %v3278 = vadd.f32 %v3276, %v3277
  %v3279 = vrot.slane %v3278, 1
  %v3280 = vadd.f32 %v3278, %v3279
  %v3281 = vadd.f32 %v3248, %v3249
  %v3282 = vsel %vm767, %v3250, 0.0
  %v3283 = vadd.f32 %v3281, %v3282
  %v3284 = vrot.slane %v3283, 4
  %v3285 = vadd.f32 %v3283, %v3284
  %v3286 = vrot.slane %v3285, 2
  %v3287 = vadd.f32 %v3285, %v3286
  %v3288 = vrot.slane %v3287, 1
  %v3289 = vadd.f32 %v3287, %v3288
  %v3290 = vadd.f32 %v3251, %v3252
  %v3291 = vsel %vm767, %v3253, 0.0
  %v3292 = vadd.f32 %v3290, %v3291
  %v3293 = vrot.slane %v3292, 4
  %v3294 = vadd.f32 %v3292, %v3293
  %v3295 = vrot.slane %v3294, 2
  %v3296 = vadd.f32 %v3294, %v3295
  %v3297 = vrot.slane %v3296, 1
  %v3298 = vadd.f32 %v3296, %v3297
  %v3299 = vadd.f32 %v2988, %v3262
  %v3300 = vadd.f32 %v2989, %v3271
  %v3301 = vadd.f32 %v2990, %v3280
  %v3302 = vadd.f32 %v2991, %v3289
  %v3303 = vadd.f32 %v2992, %v3298
  %s3304 = scalar_lea.vmem %s6, 960
  %v3305 = vld [vmem:[%s3304] sm:$0xff]
  %v3306 = vld [vmem:[%s3304 + $0x8] sm:$0xff]
  %v3307 = vld [vmem:[%s3304 + $0x10] sm:$0xf]
  %v3308 = vld [vmem:[%s3304 + $0x18] sm:$0xff]
  %v3309 = vld [vmem:[%s3304 + $0x20] sm:$0xff]
  %v3310 = vld [vmem:[%s3304 + $0x28] sm:$0xf]
  %v3311 = vld [vmem:[%s3304 + $0x30] sm:$0xff]
  %v3312 = vld [vmem:[%s3304 + $0x38] sm:$0xff]
  %v3313 = vld [vmem:[%s3304 + $0x40] sm:$0xf]
  %v3314 = vld [vmem:[%s3304 + $0x48] sm:$0xff]
  %v3315 = vld [vmem:[%s3304 + $0x50] sm:$0xff]
  %v3316 = vld [vmem:[%s3304 + $0x58] sm:$0xf]
  %v3317 = vld [vmem:[%s3304 + $0x60] sm:$0xff]
  %v3318 = vld [vmem:[%s3304 + $0x68] sm:$0xff]
  %v3319 = vld [vmem:[%s3304 + $0x70] sm:$0xf]
  %3321 = vset.pattern.permute.xlu0 0
  %3322 = vperm.xlu0 %3321, %v3305
  %v3323 = vpop.permute.xlu0 %3322
  %3326 = vset.pattern.permute.xlu0 0
  %3327 = vperm.xlu0 %3326, %v3306
  %v3328 = vpop.permute.xlu0 %3327
  %3331 = vset.pattern.permute.xlu0 0
  %3332 = vperm.xlu0 %3331, %v3307
  %v3333 = vpop.permute.xlu0 %3332
  %3336 = vset.pattern.permute.xlu0 0
  %3337 = vperm.xlu0 %3336, %v3308
  %v3338 = vpop.permute.xlu0 %3337
  %3341 = vset.pattern.permute.xlu0 0
  %3342 = vperm.xlu0 %3341, %v3309
  %v3343 = vpop.permute.xlu0 %3342
  %3346 = vset.pattern.permute.xlu0 0
  %3347 = vperm.xlu0 %3346, %v3310
  %v3348 = vpop.permute.xlu0 %3347
  %3351 = vset.pattern.permute.xlu0 0
  %3352 = vperm.xlu0 %3351, %v3311
  %v3353 = vpop.permute.xlu0 %3352
  %3356 = vset.pattern.permute.xlu0 0
  %3357 = vperm.xlu0 %3356, %v3312
  %v3358 = vpop.permute.xlu0 %3357
  %3361 = vset.pattern.permute.xlu0 0
  %3362 = vperm.xlu0 %3361, %v3313
  %v3363 = vpop.permute.xlu0 %3362
  %3366 = vset.pattern.permute.xlu0 0
  %3367 = vperm.xlu0 %3366, %v3314
  %v3368 = vpop.permute.xlu0 %3367
  %3371 = vset.pattern.permute.xlu0 0
  %3372 = vperm.xlu0 %3371, %v3315
  %v3373 = vpop.permute.xlu0 %3372
  %3376 = vset.pattern.permute.xlu0 0
  %3377 = vperm.xlu0 %3376, %v3316
  %v3378 = vpop.permute.xlu0 %3377
  %3381 = vset.pattern.permute.xlu0 0
  %3382 = vperm.xlu0 %3381, %v3317
  %v3383 = vpop.permute.xlu0 %3382
  %3386 = vset.pattern.permute.xlu0 0
  %3387 = vperm.xlu0 %3386, %v3318
  %v3388 = vpop.permute.xlu0 %3387
  %3391 = vset.pattern.permute.xlu0 0
  %3392 = vperm.xlu0 %3391, %v3319
  %v3393 = vpop.permute.xlu0 %3392
  %v3395 = vadd.f32 %v3323, %v751
  %v3396 = vadd.f32 %v3328, %v752
  %v3397 = vadd.f32 %v3333, %v753
  %v3398 = vadd.f32 %v3338, %v754
  %v3399 = vadd.f32 %v3343, %v755
  %v3400 = vadd.f32 %v3348, %v756
  %v3401 = vadd.f32 %v3353, %v757
  %v3402 = vadd.f32 %v3358, %v758
  %v3403 = vadd.f32 %v3363, %v759
  %v3404 = vadd.f32 %v3368, %v760
  %v3405 = vadd.f32 %v3373, %v761
  %v3406 = vadd.f32 %v3378, %v762
  %v3407 = vadd.f32 %v3383, %v763
  %v3408 = vadd.f32 %v3388, %v764
  %v3409 = vadd.f32 %v3393, %v765
  %v3410 = vperm.slane %v752, 0
  %v3411 = vperm.slane %v755, 0
  %v3412 = vperm.slane %v758, 0
  %v3413 = vperm.slane %v761, 0
  %v3414 = vperm.slane %v764, 0
  %v3415 = vadd.f32 %v3395, %v3410
  %v3416 = vadd.f32 %v3396, %v3410
  %v3417 = vadd.f32 %v3397, %v3410
  %v3418 = vadd.f32 %v3398, %v3411
  %v3419 = vadd.f32 %v3399, %v3411
  %v3420 = vadd.f32 %v3400, %v3411
  %v3421 = vadd.f32 %v3401, %v3412
  %v3422 = vadd.f32 %v3402, %v3412
  %v3423 = vadd.f32 %v3403, %v3412
  %v3424 = vadd.f32 %v3404, %v3413
  %v3425 = vadd.f32 %v3405, %v3413
  %v3426 = vadd.f32 %v3406, %v3413
  %v3427 = vadd.f32 %v3407, %v3414
  %v3428 = vadd.f32 %v3408, %v3414
  %v3429 = vadd.f32 %v3409, %v3414
  %v3430 = vmax.f32 %v3415, 0.0
  %v3431 = vmax.f32 %v3416, 0.0
  %v3432 = vmax.f32 %v3417, 0.0
  %v3433 = vmax.f32 %v3418, 0.0
  %v3434 = vmax.f32 %v3419, 0.0
  %v3435 = vmax.f32 %v3420, 0.0
  %v3436 = vmax.f32 %v3421, 0.0
  %v3437 = vmax.f32 %v3422, 0.0
  %v3438 = vmax.f32 %v3423, 0.0
  %v3439 = vmax.f32 %v3424, 0.0
  %v3440 = vmax.f32 %v3425, 0.0
  %v3441 = vmax.f32 %v3426, 0.0
  %v3442 = vmax.f32 %v3427, 0.0
  %v3443 = vmax.f32 %v3428, 0.0
  %v3444 = vmax.f32 %v3429, 0.0
  %v3445 = vand.u32 2147483647, %v3415
  %v3446 = vand.u32 2147483647, %v3416
  %v3447 = vand.u32 2147483647, %v3417
  %v3448 = vand.u32 2147483647, %v3418
  %v3449 = vand.u32 2147483647, %v3419
  %v3450 = vand.u32 2147483647, %v3420
  %v3451 = vand.u32 2147483647, %v3421
  %v3452 = vand.u32 2147483647, %v3422
  %v3453 = vand.u32 2147483647, %v3423
  %v3454 = vand.u32 2147483647, %v3424
  %v3455 = vand.u32 2147483647, %v3425
  %v3456 = vand.u32 2147483647, %v3426
  %v3457 = vand.u32 2147483647, %v3427
  %v3458 = vand.u32 2147483647, %v3428
  %v3459 = vand.u32 2147483647, %v3429
  %v3460 = vsub.f32 0.0, %v3445
  %v3461 = vsub.f32 0.0, %v3446
  %v3462 = vsub.f32 0.0, %v3447
  %v3463 = vsub.f32 0.0, %v3448
  %v3464 = vsub.f32 0.0, %v3449
  %v3465 = vsub.f32 0.0, %v3450
  %v3466 = vsub.f32 0.0, %v3451
  %v3467 = vsub.f32 0.0, %v3452
  %v3468 = vsub.f32 0.0, %v3453
  %v3469 = vsub.f32 0.0, %v3454
  %v3470 = vsub.f32 0.0, %v3455
  %v3471 = vsub.f32 0.0, %v3456
  %v3472 = vsub.f32 0.0, %v3457
  %v3473 = vsub.f32 0.0, %v3458
  %v3474 = vsub.f32 0.0, %v3459
  %v3475 = vmul.f32 %v3460, 1.442695
  %v3476 = vpow.pop %v3475
  %v3477 = vmul.f32 %v3461, 1.442695
  %v3478 = vpow.pop %v3477
  %v3479 = vmul.f32 %v3462, 1.442695
  %v3480 = vpow.pop %v3479
  %v3481 = vmul.f32 %v3463, 1.442695
  %v3482 = vpow.pop %v3481
  %v3483 = vmul.f32 %v3464, 1.442695
  %v3484 = vpow.pop %v3483
  %v3485 = vmul.f32 %v3465, 1.442695
  %v3486 = vpow.pop %v3485
  %v3487 = vmul.f32 %v3466, 1.442695
  %v3488 = vpow.pop %v3487
  %v3489 = vmul.f32 %v3467, 1.442695
  %v3490 = vpow.pop %v3489
  %v3491 = vmul.f32 %v3468, 1.442695
  %v3492 = vpow.pop %v3491
  %v3493 = vmul.f32 %v3469, 1.442695
  %v3494 = vpow.pop %v3493
  %v3495 = vmul.f32 %v3470, 1.442695
  %v3496 = vpow.pop %v3495
  %v3497 = vmul.f32 %v3471, 1.442695
  %v3498 = vpow.pop %v3497
  %v3499 = vmul.f32 %v3472, 1.442695
  %v3500 = vpow.pop %v3499
  %v3501 = vmul.f32 %v3473, 1.442695
  %v3502 = vpow.pop %v3501
  %v3503 = vmul.f32 %v3474, 1.442695
  %v3504 = vpow.pop %v3503
  %v3505 = vadd.f32 %v3476, 1.0
  %v3506 = vadd.f32 %v3478, 1.0
  %v3507 = vadd.f32 %v3480, 1.0
  %v3508 = vadd.f32 %v3482, 1.0
  %v3509 = vadd.f32 %v3484, 1.0
  %v3510 = vadd.f32 %v3486, 1.0
  %v3511 = vadd.f32 %v3488, 1.0
  %v3512 = vadd.f32 %v3490, 1.0
  %v3513 = vadd.f32 %v3492, 1.0
  %v3514 = vadd.f32 %v3494, 1.0
  %v3515 = vadd.f32 %v3496, 1.0
  %v3516 = vadd.f32 %v3498, 1.0
  %v3517 = vadd.f32 %v3500, 1.0
  %v3518 = vadd.f32 %v3502, 1.0
  %v3519 = vadd.f32 %v3504, 1.0
  %v3520 = vlog2.pop %v3505
  %v3521 = vmul.f32 %v3520, 0.6931472
  %v3522 = vlog2.pop %v3506
  %v3523 = vmul.f32 %v3522, 0.6931472
  %v3524 = vlog2.pop %v3507
  %v3525 = vmul.f32 %v3524, 0.6931472
  %v3526 = vlog2.pop %v3508
  %v3527 = vmul.f32 %v3526, 0.6931472
  %v3528 = vlog2.pop %v3509
  %v3529 = vmul.f32 %v3528, 0.6931472
  %v3530 = vlog2.pop %v3510
  %v3531 = vmul.f32 %v3530, 0.6931472
  %v3532 = vlog2.pop %v3511
  %v3533 = vmul.f32 %v3532, 0.6931472
  %v3534 = vlog2.pop %v3512
  %v3535 = vmul.f32 %v3534, 0.6931472
  %v3536 = vlog2.pop %v3513
  %v3537 = vmul.f32 %v3536, 0.6931472
  %v3538 = vlog2.pop %v3514
  %v3539 = vmul.f32 %v3538, 0.6931472
  %v3540 = vlog2.pop %v3515
  %v3541 = vmul.f32 %v3540, 0.6931472
  %v3542 = vlog2.pop %v3516
  %v3543 = vmul.f32 %v3542, 0.6931472
  %v3544 = vlog2.pop %v3517
  %v3545 = vmul.f32 %v3544, 0.6931472
  %v3546 = vlog2.pop %v3518
  %v3547 = vmul.f32 %v3546, 0.6931472
  %v3548 = vlog2.pop %v3519
  %v3549 = vmul.f32 %v3548, 0.6931472
  %v3550 = vadd.f32 %v3430, %v3521
  %v3551 = vadd.f32 %v3431, %v3523
  %v3552 = vadd.f32 %v3432, %v3525
  %v3553 = vadd.f32 %v3433, %v3527
  %v3554 = vadd.f32 %v3434, %v3529
  %v3555 = vadd.f32 %v3435, %v3531
  %v3556 = vadd.f32 %v3436, %v3533
  %v3557 = vadd.f32 %v3437, %v3535
  %v3558 = vadd.f32 %v3438, %v3537
  %v3559 = vadd.f32 %v3439, %v3539
  %v3560 = vadd.f32 %v3440, %v3541
  %v3561 = vadd.f32 %v3441, %v3543
  %v3562 = vadd.f32 %v3442, %v3545
  %v3563 = vadd.f32 %v3443, %v3547
  %v3564 = vadd.f32 %v3444, %v3549
  %v3565 = vadd.f32 %v3550, %v3551
  %v3566 = vsel %vm767, %v3552, 0.0
  %v3567 = vadd.f32 %v3565, %v3566
  %v3568 = vrot.slane %v3567, 4
  %v3569 = vadd.f32 %v3567, %v3568
  %v3570 = vrot.slane %v3569, 2
  %v3571 = vadd.f32 %v3569, %v3570
  %v3572 = vrot.slane %v3571, 1
  %v3573 = vadd.f32 %v3571, %v3572
  %v3574 = vadd.f32 %v3553, %v3554
  %v3575 = vsel %vm767, %v3555, 0.0
  %v3576 = vadd.f32 %v3574, %v3575
  %v3577 = vrot.slane %v3576, 4
  %v3578 = vadd.f32 %v3576, %v3577
  %v3579 = vrot.slane %v3578, 2
  %v3580 = vadd.f32 %v3578, %v3579
  %v3581 = vrot.slane %v3580, 1
  %v3582 = vadd.f32 %v3580, %v3581
  %v3583 = vadd.f32 %v3556, %v3557
  %v3584 = vsel %vm767, %v3558, 0.0
  %v3585 = vadd.f32 %v3583, %v3584
  %v3586 = vrot.slane %v3585, 4
  %v3587 = vadd.f32 %v3585, %v3586
  %v3588 = vrot.slane %v3587, 2
  %v3589 = vadd.f32 %v3587, %v3588
  %v3590 = vrot.slane %v3589, 1
  %v3591 = vadd.f32 %v3589, %v3590
  %v3592 = vadd.f32 %v3559, %v3560
  %v3593 = vsel %vm767, %v3561, 0.0
  %v3594 = vadd.f32 %v3592, %v3593
  %v3595 = vrot.slane %v3594, 4
  %v3596 = vadd.f32 %v3594, %v3595
  %v3597 = vrot.slane %v3596, 2
  %v3598 = vadd.f32 %v3596, %v3597
  %v3599 = vrot.slane %v3598, 1
  %v3600 = vadd.f32 %v3598, %v3599
  %v3601 = vadd.f32 %v3562, %v3563
  %v3602 = vsel %vm767, %v3564, 0.0
  %v3603 = vadd.f32 %v3601, %v3602
  %v3604 = vrot.slane %v3603, 4
  %v3605 = vadd.f32 %v3603, %v3604
  %v3606 = vrot.slane %v3605, 2
  %v3607 = vadd.f32 %v3605, %v3606
  %v3608 = vrot.slane %v3607, 1
  %v3609 = vadd.f32 %v3607, %v3608
  %v3610 = vadd.f32 %v3299, %v3573
  %v3611 = vadd.f32 %v3300, %v3582
  %v3612 = vadd.f32 %v3301, %v3591
  %v3613 = vadd.f32 %v3302, %v3600
  %v3614 = vadd.f32 %v3303, %v3609
  %s3615 = scalar_lea.vmem %s6, 1080
  %v3616 = vld [vmem:[%s3615] sm:$0xff]
  %v3617 = vld [vmem:[%s3615 + $0x8] sm:$0xff]
  %v3618 = vld [vmem:[%s3615 + $0x10] sm:$0xf]
  %v3619 = vld [vmem:[%s3615 + $0x18] sm:$0xff]
  %v3620 = vld [vmem:[%s3615 + $0x20] sm:$0xff]
  %v3621 = vld [vmem:[%s3615 + $0x28] sm:$0xf]
  %v3622 = vld [vmem:[%s3615 + $0x30] sm:$0xff]
  %v3623 = vld [vmem:[%s3615 + $0x38] sm:$0xff]
  %v3624 = vld [vmem:[%s3615 + $0x40] sm:$0xf]
  %v3625 = vld [vmem:[%s3615 + $0x48] sm:$0xff]
  %v3626 = vld [vmem:[%s3615 + $0x50] sm:$0xff]
  %v3627 = vld [vmem:[%s3615 + $0x58] sm:$0xf]
  %v3628 = vld [vmem:[%s3615 + $0x60] sm:$0xff]
  %v3629 = vld [vmem:[%s3615 + $0x68] sm:$0xff]
  %v3630 = vld [vmem:[%s3615 + $0x70] sm:$0xf]
  %3632 = vset.pattern.permute.xlu0 0
  %3633 = vperm.xlu0 %3632, %v3616
  %v3634 = vpop.permute.xlu0 %3633
  %3637 = vset.pattern.permute.xlu0 0
  %3638 = vperm.xlu0 %3637, %v3617
  %v3639 = vpop.permute.xlu0 %3638
  %3642 = vset.pattern.permute.xlu0 0
  %3643 = vperm.xlu0 %3642, %v3618
  %v3644 = vpop.permute.xlu0 %3643
  %3647 = vset.pattern.permute.xlu0 0
  %3648 = vperm.xlu0 %3647, %v3619
  %v3649 = vpop.permute.xlu0 %3648
  %3652 = vset.pattern.permute.xlu0 0
  %3653 = vperm.xlu0 %3652, %v3620
  %v3654 = vpop.permute.xlu0 %3653
  %3657 = vset.pattern.permute.xlu0 0
  %3658 = vperm.xlu0 %3657, %v3621
  %v3659 = vpop.permute.xlu0 %3658
  %3662 = vset.pattern.permute.xlu0 0
  %3663 = vperm.xlu0 %3662, %v3622
  %v3664 = vpop.permute.xlu0 %3663
  %3667 = vset.pattern.permute.xlu0 0
  %3668 = vperm.xlu0 %3667, %v3623
  %v3669 = vpop.permute.xlu0 %3668
  %3672 = vset.pattern.permute.xlu0 0
  %3673 = vperm.xlu0 %3672, %v3624
  %v3674 = vpop.permute.xlu0 %3673
  %3677 = vset.pattern.permute.xlu0 0
  %3678 = vperm.xlu0 %3677, %v3625
  %v3679 = vpop.permute.xlu0 %3678
  %3682 = vset.pattern.permute.xlu0 0
  %3683 = vperm.xlu0 %3682, %v3626
  %v3684 = vpop.permute.xlu0 %3683
  %3687 = vset.pattern.permute.xlu0 0
  %3688 = vperm.xlu0 %3687, %v3627
  %v3689 = vpop.permute.xlu0 %3688
  %3692 = vset.pattern.permute.xlu0 0
  %3693 = vperm.xlu0 %3692, %v3628
  %v3694 = vpop.permute.xlu0 %3693
  %3697 = vset.pattern.permute.xlu0 0
  %3698 = vperm.xlu0 %3697, %v3629
  %v3699 = vpop.permute.xlu0 %3698
  %3702 = vset.pattern.permute.xlu0 0
  %3703 = vperm.xlu0 %3702, %v3630
  %v3704 = vpop.permute.xlu0 %3703
  %v3706 = vadd.f32 %v3634, %v751
  %v3707 = vadd.f32 %v3639, %v752
  %v3708 = vadd.f32 %v3644, %v753
  %v3709 = vadd.f32 %v3649, %v754
  %v3710 = vadd.f32 %v3654, %v755
  %v3711 = vadd.f32 %v3659, %v756
  %v3712 = vadd.f32 %v3664, %v757
  %v3713 = vadd.f32 %v3669, %v758
  %v3714 = vadd.f32 %v3674, %v759
  %v3715 = vadd.f32 %v3679, %v760
  %v3716 = vadd.f32 %v3684, %v761
  %v3717 = vadd.f32 %v3689, %v762
  %v3718 = vadd.f32 %v3694, %v763
  %v3719 = vadd.f32 %v3699, %v764
  %v3720 = vadd.f32 %v3704, %v765
  %v3721 = vperm.slane %v752, 1
  %v3722 = vperm.slane %v755, 1
  %v3723 = vperm.slane %v758, 1
  %v3724 = vperm.slane %v761, 1
  %v3725 = vperm.slane %v764, 1
  %v3726 = vadd.f32 %v3706, %v3721
  %v3727 = vadd.f32 %v3707, %v3721
  %v3728 = vadd.f32 %v3708, %v3721
  %v3729 = vadd.f32 %v3709, %v3722
  %v3730 = vadd.f32 %v3710, %v3722
  %v3731 = vadd.f32 %v3711, %v3722
  %v3732 = vadd.f32 %v3712, %v3723
  %v3733 = vadd.f32 %v3713, %v3723
  %v3734 = vadd.f32 %v3714, %v3723
  %v3735 = vadd.f32 %v3715, %v3724
  %v3736 = vadd.f32 %v3716, %v3724
  %v3737 = vadd.f32 %v3717, %v3724
  %v3738 = vadd.f32 %v3718, %v3725
  %v3739 = vadd.f32 %v3719, %v3725
  %v3740 = vadd.f32 %v3720, %v3725
  %v3741 = vmax.f32 %v3726, 0.0
  %v3742 = vmax.f32 %v3727, 0.0
  %v3743 = vmax.f32 %v3728, 0.0
  %v3744 = vmax.f32 %v3729, 0.0
  %v3745 = vmax.f32 %v3730, 0.0
  %v3746 = vmax.f32 %v3731, 0.0
  %v3747 = vmax.f32 %v3732, 0.0
  %v3748 = vmax.f32 %v3733, 0.0
  %v3749 = vmax.f32 %v3734, 0.0
  %v3750 = vmax.f32 %v3735, 0.0
  %v3751 = vmax.f32 %v3736, 0.0
  %v3752 = vmax.f32 %v3737, 0.0
  %v3753 = vmax.f32 %v3738, 0.0
  %v3754 = vmax.f32 %v3739, 0.0
  %v3755 = vmax.f32 %v3740, 0.0
  %v3756 = vand.u32 2147483647, %v3726
  %v3757 = vand.u32 2147483647, %v3727
  %v3758 = vand.u32 2147483647, %v3728
  %v3759 = vand.u32 2147483647, %v3729
  %v3760 = vand.u32 2147483647, %v3730
  %v3761 = vand.u32 2147483647, %v3731
  %v3762 = vand.u32 2147483647, %v3732
  %v3763 = vand.u32 2147483647, %v3733
  %v3764 = vand.u32 2147483647, %v3734
  %v3765 = vand.u32 2147483647, %v3735
  %v3766 = vand.u32 2147483647, %v3736
  %v3767 = vand.u32 2147483647, %v3737
  %v3768 = vand.u32 2147483647, %v3738
  %v3769 = vand.u32 2147483647, %v3739
  %v3770 = vand.u32 2147483647, %v3740
  %v3771 = vsub.f32 0.0, %v3756
  %v3772 = vsub.f32 0.0, %v3757
  %v3773 = vsub.f32 0.0, %v3758
  %v3774 = vsub.f32 0.0, %v3759
  %v3775 = vsub.f32 0.0, %v3760
  %v3776 = vsub.f32 0.0, %v3761
  %v3777 = vsub.f32 0.0, %v3762
  %v3778 = vsub.f32 0.0, %v3763
  %v3779 = vsub.f32 0.0, %v3764
  %v3780 = vsub.f32 0.0, %v3765
  %v3781 = vsub.f32 0.0, %v3766
  %v3782 = vsub.f32 0.0, %v3767
  %v3783 = vsub.f32 0.0, %v3768
  %v3784 = vsub.f32 0.0, %v3769
  %v3785 = vsub.f32 0.0, %v3770
  %v3786 = vmul.f32 %v3771, 1.442695
  %v3787 = vpow.pop %v3786
  %v3788 = vmul.f32 %v3772, 1.442695
  %v3789 = vpow.pop %v3788
  %v3790 = vmul.f32 %v3773, 1.442695
  %v3791 = vpow.pop %v3790
  %v3792 = vmul.f32 %v3774, 1.442695
  %v3793 = vpow.pop %v3792
  %v3794 = vmul.f32 %v3775, 1.442695
  %v3795 = vpow.pop %v3794
  %v3796 = vmul.f32 %v3776, 1.442695
  %v3797 = vpow.pop %v3796
  %v3798 = vmul.f32 %v3777, 1.442695
  %v3799 = vpow.pop %v3798
  %v3800 = vmul.f32 %v3778, 1.442695
  %v3801 = vpow.pop %v3800
  %v3802 = vmul.f32 %v3779, 1.442695
  %v3803 = vpow.pop %v3802
  %v3804 = vmul.f32 %v3780, 1.442695
  %v3805 = vpow.pop %v3804
  %v3806 = vmul.f32 %v3781, 1.442695
  %v3807 = vpow.pop %v3806
  %v3808 = vmul.f32 %v3782, 1.442695
  %v3809 = vpow.pop %v3808
  %v3810 = vmul.f32 %v3783, 1.442695
  %v3811 = vpow.pop %v3810
  %v3812 = vmul.f32 %v3784, 1.442695
  %v3813 = vpow.pop %v3812
  %v3814 = vmul.f32 %v3785, 1.442695
  %v3815 = vpow.pop %v3814
  %v3816 = vadd.f32 %v3787, 1.0
  %v3817 = vadd.f32 %v3789, 1.0
  %v3818 = vadd.f32 %v3791, 1.0
  %v3819 = vadd.f32 %v3793, 1.0
  %v3820 = vadd.f32 %v3795, 1.0
  %v3821 = vadd.f32 %v3797, 1.0
  %v3822 = vadd.f32 %v3799, 1.0
  %v3823 = vadd.f32 %v3801, 1.0
  %v3824 = vadd.f32 %v3803, 1.0
  %v3825 = vadd.f32 %v3805, 1.0
  %v3826 = vadd.f32 %v3807, 1.0
  %v3827 = vadd.f32 %v3809, 1.0
  %v3828 = vadd.f32 %v3811, 1.0
  %v3829 = vadd.f32 %v3813, 1.0
  %v3830 = vadd.f32 %v3815, 1.0
  %v3831 = vlog2.pop %v3816
  %v3832 = vmul.f32 %v3831, 0.6931472
  %v3833 = vlog2.pop %v3817
  %v3834 = vmul.f32 %v3833, 0.6931472
  %v3835 = vlog2.pop %v3818
  %v3836 = vmul.f32 %v3835, 0.6931472
  %v3837 = vlog2.pop %v3819
  %v3838 = vmul.f32 %v3837, 0.6931472
  %v3839 = vlog2.pop %v3820
  %v3840 = vmul.f32 %v3839, 0.6931472
  %v3841 = vlog2.pop %v3821
  %v3842 = vmul.f32 %v3841, 0.6931472
  %v3843 = vlog2.pop %v3822
  %v3844 = vmul.f32 %v3843, 0.6931472
  %v3845 = vlog2.pop %v3823
  %v3846 = vmul.f32 %v3845, 0.6931472
  %v3847 = vlog2.pop %v3824
  %v3848 = vmul.f32 %v3847, 0.6931472
  %v3849 = vlog2.pop %v3825
  %v3850 = vmul.f32 %v3849, 0.6931472
  %v3851 = vlog2.pop %v3826
  %v3852 = vmul.f32 %v3851, 0.6931472
  %v3853 = vlog2.pop %v3827
  %v3854 = vmul.f32 %v3853, 0.6931472
  %v3855 = vlog2.pop %v3828
  %v3856 = vmul.f32 %v3855, 0.6931472
  %v3857 = vlog2.pop %v3829
  %v3858 = vmul.f32 %v3857, 0.6931472
  %v3859 = vlog2.pop %v3830
  %v3860 = vmul.f32 %v3859, 0.6931472
  %v3861 = vadd.f32 %v3741, %v3832
  %v3862 = vadd.f32 %v3742, %v3834
  %v3863 = vadd.f32 %v3743, %v3836
  %v3864 = vadd.f32 %v3744, %v3838
  %v3865 = vadd.f32 %v3745, %v3840
  %v3866 = vadd.f32 %v3746, %v3842
  %v3867 = vadd.f32 %v3747, %v3844
  %v3868 = vadd.f32 %v3748, %v3846
  %v3869 = vadd.f32 %v3749, %v3848
  %v3870 = vadd.f32 %v3750, %v3850
  %v3871 = vadd.f32 %v3751, %v3852
  %v3872 = vadd.f32 %v3752, %v3854
  %v3873 = vadd.f32 %v3753, %v3856
  %v3874 = vadd.f32 %v3754, %v3858
  %v3875 = vadd.f32 %v3755, %v3860
  %v3876 = vadd.f32 %v3861, %v3862
  %v3877 = vsel %vm767, %v3863, 0.0
  %v3878 = vadd.f32 %v3876, %v3877
  %v3879 = vrot.slane %v3878, 4
  %v3880 = vadd.f32 %v3878, %v3879
  %v3881 = vrot.slane %v3880, 2
  %v3882 = vadd.f32 %v3880, %v3881
  %v3883 = vrot.slane %v3882, 1
  %v3884 = vadd.f32 %v3882, %v3883
  %v3885 = vadd.f32 %v3864, %v3865
  %v3886 = vsel %vm767, %v3866, 0.0
  %v3887 = vadd.f32 %v3885, %v3886
  %v3888 = vrot.slane %v3887, 4
  %v3889 = vadd.f32 %v3887, %v3888
  %v3890 = vrot.slane %v3889, 2
  %v3891 = vadd.f32 %v3889, %v3890
  %v3892 = vrot.slane %v3891, 1
  %v3893 = vadd.f32 %v3891, %v3892
  %v3894 = vadd.f32 %v3867, %v3868
  %v3895 = vsel %vm767, %v3869, 0.0
  %v3896 = vadd.f32 %v3894, %v3895
  %v3897 = vrot.slane %v3896, 4
  %v3898 = vadd.f32 %v3896, %v3897
  %v3899 = vrot.slane %v3898, 2
  %v3900 = vadd.f32 %v3898, %v3899
  %v3901 = vrot.slane %v3900, 1
  %v3902 = vadd.f32 %v3900, %v3901
  %v3903 = vadd.f32 %v3870, %v3871
  %v3904 = vsel %vm767, %v3872, 0.0
  %v3905 = vadd.f32 %v3903, %v3904
  %v3906 = vrot.slane %v3905, 4
  %v3907 = vadd.f32 %v3905, %v3906
  %v3908 = vrot.slane %v3907, 2
  %v3909 = vadd.f32 %v3907, %v3908
  %v3910 = vrot.slane %v3909, 1
  %v3911 = vadd.f32 %v3909, %v3910
  %v3912 = vadd.f32 %v3873, %v3874
  %v3913 = vsel %vm767, %v3875, 0.0
  %v3914 = vadd.f32 %v3912, %v3913
  %v3915 = vrot.slane %v3914, 4
  %v3916 = vadd.f32 %v3914, %v3915
  %v3917 = vrot.slane %v3916, 2
  %v3918 = vadd.f32 %v3916, %v3917
  %v3919 = vrot.slane %v3918, 1
  %v3920 = vadd.f32 %v3918, %v3919
  %v3921 = vadd.f32 %v3610, %v3884
  %v3922 = vadd.f32 %v3611, %v3893
  %v3923 = vadd.f32 %v3612, %v3902
  %v3924 = vadd.f32 %v3613, %v3911
  %v3925 = vadd.f32 %v3614, %v3920
  %s3926 = scalar_lea.vmem %s6, 1200
  %v3927 = vld [vmem:[%s3926] sm:$0xff]
  %v3928 = vld [vmem:[%s3926 + $0x8] sm:$0xff]
  %v3929 = vld [vmem:[%s3926 + $0x10] sm:$0xf]
  %v3930 = vld [vmem:[%s3926 + $0x18] sm:$0xff]
  %v3931 = vld [vmem:[%s3926 + $0x20] sm:$0xff]
  %v3932 = vld [vmem:[%s3926 + $0x28] sm:$0xf]
  %v3933 = vld [vmem:[%s3926 + $0x30] sm:$0xff]
  %v3934 = vld [vmem:[%s3926 + $0x38] sm:$0xff]
  %v3935 = vld [vmem:[%s3926 + $0x40] sm:$0xf]
  %v3936 = vld [vmem:[%s3926 + $0x48] sm:$0xff]
  %v3937 = vld [vmem:[%s3926 + $0x50] sm:$0xff]
  %v3938 = vld [vmem:[%s3926 + $0x58] sm:$0xf]
  %v3939 = vld [vmem:[%s3926 + $0x60] sm:$0xff]
  %v3940 = vld [vmem:[%s3926 + $0x68] sm:$0xff]
  %v3941 = vld [vmem:[%s3926 + $0x70] sm:$0xf]
  %3943 = vset.pattern.permute.xlu0 0
  %3944 = vperm.xlu0 %3943, %v3927
  %v3945 = vpop.permute.xlu0 %3944
  %3948 = vset.pattern.permute.xlu0 0
  %3949 = vperm.xlu0 %3948, %v3928
  %v3950 = vpop.permute.xlu0 %3949
  %3953 = vset.pattern.permute.xlu0 0
  %3954 = vperm.xlu0 %3953, %v3929
  %v3955 = vpop.permute.xlu0 %3954
  %3958 = vset.pattern.permute.xlu0 0
  %3959 = vperm.xlu0 %3958, %v3930
  %v3960 = vpop.permute.xlu0 %3959
  %3963 = vset.pattern.permute.xlu0 0
  %3964 = vperm.xlu0 %3963, %v3931
  %v3965 = vpop.permute.xlu0 %3964
  %3968 = vset.pattern.permute.xlu0 0
  %3969 = vperm.xlu0 %3968, %v3932
  %v3970 = vpop.permute.xlu0 %3969
  %3973 = vset.pattern.permute.xlu0 0
  %3974 = vperm.xlu0 %3973, %v3933
  %v3975 = vpop.permute.xlu0 %3974
  %3978 = vset.pattern.permute.xlu0 0
  %3979 = vperm.xlu0 %3978, %v3934
  %v3980 = vpop.permute.xlu0 %3979
  %3983 = vset.pattern.permute.xlu0 0
  %3984 = vperm.xlu0 %3983, %v3935
  %v3985 = vpop.permute.xlu0 %3984
  %3988 = vset.pattern.permute.xlu0 0
  %3989 = vperm.xlu0 %3988, %v3936
  %v3990 = vpop.permute.xlu0 %3989
  %3993 = vset.pattern.permute.xlu0 0
  %3994 = vperm.xlu0 %3993, %v3937
  %v3995 = vpop.permute.xlu0 %3994
  %3998 = vset.pattern.permute.xlu0 0
  %3999 = vperm.xlu0 %3998, %v3938
  %v4000 = vpop.permute.xlu0 %3999
  %4003 = vset.pattern.permute.xlu0 0
  %4004 = vperm.xlu0 %4003, %v3939
  %v4005 = vpop.permute.xlu0 %4004
  %4008 = vset.pattern.permute.xlu0 0
  %4009 = vperm.xlu0 %4008, %v3940
  %v4010 = vpop.permute.xlu0 %4009
  %4013 = vset.pattern.permute.xlu0 0
  %4014 = vperm.xlu0 %4013, %v3941
  %v4015 = vpop.permute.xlu0 %4014
  %v4017 = vadd.f32 %v3945, %v751
  %v4018 = vadd.f32 %v3950, %v752
  %v4019 = vadd.f32 %v3955, %v753
  %v4020 = vadd.f32 %v3960, %v754
  %v4021 = vadd.f32 %v3965, %v755
  %v4022 = vadd.f32 %v3970, %v756
  %v4023 = vadd.f32 %v3975, %v757
  %v4024 = vadd.f32 %v3980, %v758
  %v4025 = vadd.f32 %v3985, %v759
  %v4026 = vadd.f32 %v3990, %v760
  %v4027 = vadd.f32 %v3995, %v761
  %v4028 = vadd.f32 %v4000, %v762
  %v4029 = vadd.f32 %v4005, %v763
  %v4030 = vadd.f32 %v4010, %v764
  %v4031 = vadd.f32 %v4015, %v765
  %v4032 = vperm.slane %v752, 2
  %v4033 = vperm.slane %v755, 2
  %v4034 = vperm.slane %v758, 2
  %v4035 = vperm.slane %v761, 2
  %v4036 = vperm.slane %v764, 2
  %v4037 = vadd.f32 %v4017, %v4032
  %v4038 = vadd.f32 %v4018, %v4032
  %v4039 = vadd.f32 %v4019, %v4032
  %v4040 = vadd.f32 %v4020, %v4033
  %v4041 = vadd.f32 %v4021, %v4033
  %v4042 = vadd.f32 %v4022, %v4033
  %v4043 = vadd.f32 %v4023, %v4034
  %v4044 = vadd.f32 %v4024, %v4034
  %v4045 = vadd.f32 %v4025, %v4034
  %v4046 = vadd.f32 %v4026, %v4035
  %v4047 = vadd.f32 %v4027, %v4035
  %v4048 = vadd.f32 %v4028, %v4035
  %v4049 = vadd.f32 %v4029, %v4036
  %v4050 = vadd.f32 %v4030, %v4036
  %v4051 = vadd.f32 %v4031, %v4036
  %v4052 = vmax.f32 %v4037, 0.0
  %v4053 = vmax.f32 %v4038, 0.0
  %v4054 = vmax.f32 %v4039, 0.0
  %v4055 = vmax.f32 %v4040, 0.0
  %v4056 = vmax.f32 %v4041, 0.0
  %v4057 = vmax.f32 %v4042, 0.0
  %v4058 = vmax.f32 %v4043, 0.0
  %v4059 = vmax.f32 %v4044, 0.0
  %v4060 = vmax.f32 %v4045, 0.0
  %v4061 = vmax.f32 %v4046, 0.0
  %v4062 = vmax.f32 %v4047, 0.0
  %v4063 = vmax.f32 %v4048, 0.0
  %v4064 = vmax.f32 %v4049, 0.0
  %v4065 = vmax.f32 %v4050, 0.0
  %v4066 = vmax.f32 %v4051, 0.0
  %v4067 = vand.u32 2147483647, %v4037
  %v4068 = vand.u32 2147483647, %v4038
  %v4069 = vand.u32 2147483647, %v4039
  %v4070 = vand.u32 2147483647, %v4040
  %v4071 = vand.u32 2147483647, %v4041
  %v4072 = vand.u32 2147483647, %v4042
  %v4073 = vand.u32 2147483647, %v4043
  %v4074 = vand.u32 2147483647, %v4044
  %v4075 = vand.u32 2147483647, %v4045
  %v4076 = vand.u32 2147483647, %v4046
  %v4077 = vand.u32 2147483647, %v4047
  %v4078 = vand.u32 2147483647, %v4048
  %v4079 = vand.u32 2147483647, %v4049
  %v4080 = vand.u32 2147483647, %v4050
  %v4081 = vand.u32 2147483647, %v4051
  %v4082 = vsub.f32 0.0, %v4067
  %v4083 = vsub.f32 0.0, %v4068
  %v4084 = vsub.f32 0.0, %v4069
  %v4085 = vsub.f32 0.0, %v4070
  %v4086 = vsub.f32 0.0, %v4071
  %v4087 = vsub.f32 0.0, %v4072
  %v4088 = vsub.f32 0.0, %v4073
  %v4089 = vsub.f32 0.0, %v4074
  %v4090 = vsub.f32 0.0, %v4075
  %v4091 = vsub.f32 0.0, %v4076
  %v4092 = vsub.f32 0.0, %v4077
  %v4093 = vsub.f32 0.0, %v4078
  %v4094 = vsub.f32 0.0, %v4079
  %v4095 = vsub.f32 0.0, %v4080
  %v4096 = vsub.f32 0.0, %v4081
  %v4097 = vmul.f32 %v4082, 1.442695
  %v4098 = vpow.pop %v4097
  %v4099 = vmul.f32 %v4083, 1.442695
  %v4100 = vpow.pop %v4099
  %v4101 = vmul.f32 %v4084, 1.442695
  %v4102 = vpow.pop %v4101
  %v4103 = vmul.f32 %v4085, 1.442695
  %v4104 = vpow.pop %v4103
  %v4105 = vmul.f32 %v4086, 1.442695
  %v4106 = vpow.pop %v4105
  %v4107 = vmul.f32 %v4087, 1.442695
  %v4108 = vpow.pop %v4107
  %v4109 = vmul.f32 %v4088, 1.442695
  %v4110 = vpow.pop %v4109
  %v4111 = vmul.f32 %v4089, 1.442695
  %v4112 = vpow.pop %v4111
  %v4113 = vmul.f32 %v4090, 1.442695
  %v4114 = vpow.pop %v4113
  %v4115 = vmul.f32 %v4091, 1.442695
  %v4116 = vpow.pop %v4115
  %v4117 = vmul.f32 %v4092, 1.442695
  %v4118 = vpow.pop %v4117
  %v4119 = vmul.f32 %v4093, 1.442695
  %v4120 = vpow.pop %v4119
  %v4121 = vmul.f32 %v4094, 1.442695
  %v4122 = vpow.pop %v4121
  %v4123 = vmul.f32 %v4095, 1.442695
  %v4124 = vpow.pop %v4123
  %v4125 = vmul.f32 %v4096, 1.442695
  %v4126 = vpow.pop %v4125
  %v4127 = vadd.f32 %v4098, 1.0
  %v4128 = vadd.f32 %v4100, 1.0
  %v4129 = vadd.f32 %v4102, 1.0
  %v4130 = vadd.f32 %v4104, 1.0
  %v4131 = vadd.f32 %v4106, 1.0
  %v4132 = vadd.f32 %v4108, 1.0
  %v4133 = vadd.f32 %v4110, 1.0
  %v4134 = vadd.f32 %v4112, 1.0
  %v4135 = vadd.f32 %v4114, 1.0
  %v4136 = vadd.f32 %v4116, 1.0
  %v4137 = vadd.f32 %v4118, 1.0
  %v4138 = vadd.f32 %v4120, 1.0
  %v4139 = vadd.f32 %v4122, 1.0
  %v4140 = vadd.f32 %v4124, 1.0
  %v4141 = vadd.f32 %v4126, 1.0
  %v4142 = vlog2.pop %v4127
  %v4143 = vmul.f32 %v4142, 0.6931472
  %v4144 = vlog2.pop %v4128
  %v4145 = vmul.f32 %v4144, 0.6931472
  %v4146 = vlog2.pop %v4129
  %v4147 = vmul.f32 %v4146, 0.6931472
  %v4148 = vlog2.pop %v4130
  %v4149 = vmul.f32 %v4148, 0.6931472
  %v4150 = vlog2.pop %v4131
  %v4151 = vmul.f32 %v4150, 0.6931472
  %v4152 = vlog2.pop %v4132
  %v4153 = vmul.f32 %v4152, 0.6931472
  %v4154 = vlog2.pop %v4133
  %v4155 = vmul.f32 %v4154, 0.6931472
  %v4156 = vlog2.pop %v4134
  %v4157 = vmul.f32 %v4156, 0.6931472
  %v4158 = vlog2.pop %v4135
  %v4159 = vmul.f32 %v4158, 0.6931472
  %v4160 = vlog2.pop %v4136
  %v4161 = vmul.f32 %v4160, 0.6931472
  %v4162 = vlog2.pop %v4137
  %v4163 = vmul.f32 %v4162, 0.6931472
  %v4164 = vlog2.pop %v4138
  %v4165 = vmul.f32 %v4164, 0.6931472
  %v4166 = vlog2.pop %v4139
  %v4167 = vmul.f32 %v4166, 0.6931472
  %v4168 = vlog2.pop %v4140
  %v4169 = vmul.f32 %v4168, 0.6931472
  %v4170 = vlog2.pop %v4141
  %v4171 = vmul.f32 %v4170, 0.6931472
  %v4172 = vadd.f32 %v4052, %v4143
  %v4173 = vadd.f32 %v4053, %v4145
  %v4174 = vadd.f32 %v4054, %v4147
  %v4175 = vadd.f32 %v4055, %v4149
  %v4176 = vadd.f32 %v4056, %v4151
  %v4177 = vadd.f32 %v4057, %v4153
  %v4178 = vadd.f32 %v4058, %v4155
  %v4179 = vadd.f32 %v4059, %v4157
  %v4180 = vadd.f32 %v4060, %v4159
  %v4181 = vadd.f32 %v4061, %v4161
  %v4182 = vadd.f32 %v4062, %v4163
  %v4183 = vadd.f32 %v4063, %v4165
  %v4184 = vadd.f32 %v4064, %v4167
  %v4185 = vadd.f32 %v4065, %v4169
  %v4186 = vadd.f32 %v4066, %v4171
  %v4187 = vadd.f32 %v4172, %v4173
  %v4188 = vsel %vm767, %v4174, 0.0
  %v4189 = vadd.f32 %v4187, %v4188
  %v4190 = vrot.slane %v4189, 4
  %v4191 = vadd.f32 %v4189, %v4190
  %v4192 = vrot.slane %v4191, 2
  %v4193 = vadd.f32 %v4191, %v4192
  %v4194 = vrot.slane %v4193, 1
  %v4195 = vadd.f32 %v4193, %v4194
  %v4196 = vadd.f32 %v4175, %v4176
  %v4197 = vsel %vm767, %v4177, 0.0
  %v4198 = vadd.f32 %v4196, %v4197
  %v4199 = vrot.slane %v4198, 4
  %v4200 = vadd.f32 %v4198, %v4199
  %v4201 = vrot.slane %v4200, 2
  %v4202 = vadd.f32 %v4200, %v4201
  %v4203 = vrot.slane %v4202, 1
  %v4204 = vadd.f32 %v4202, %v4203
  %v4205 = vadd.f32 %v4178, %v4179
  %v4206 = vsel %vm767, %v4180, 0.0
  %v4207 = vadd.f32 %v4205, %v4206
  %v4208 = vrot.slane %v4207, 4
  %v4209 = vadd.f32 %v4207, %v4208
  %v4210 = vrot.slane %v4209, 2
  %v4211 = vadd.f32 %v4209, %v4210
  %v4212 = vrot.slane %v4211, 1
  %v4213 = vadd.f32 %v4211, %v4212
  %v4214 = vadd.f32 %v4181, %v4182
  %v4215 = vsel %vm767, %v4183, 0.0
  %v4216 = vadd.f32 %v4214, %v4215
  %v4217 = vrot.slane %v4216, 4
  %v4218 = vadd.f32 %v4216, %v4217
  %v4219 = vrot.slane %v4218, 2
  %v4220 = vadd.f32 %v4218, %v4219
  %v4221 = vrot.slane %v4220, 1
  %v4222 = vadd.f32 %v4220, %v4221
  %v4223 = vadd.f32 %v4184, %v4185
  %v4224 = vsel %vm767, %v4186, 0.0
  %v4225 = vadd.f32 %v4223, %v4224
  %v4226 = vrot.slane %v4225, 4
  %v4227 = vadd.f32 %v4225, %v4226
  %v4228 = vrot.slane %v4227, 2
  %v4229 = vadd.f32 %v4227, %v4228
  %v4230 = vrot.slane %v4229, 1
  %v4231 = vadd.f32 %v4229, %v4230
  %v4232 = vadd.f32 %v3921, %v4195
  %v4233 = vadd.f32 %v3922, %v4204
  %v4234 = vadd.f32 %v3923, %v4213
  %v4235 = vadd.f32 %v3924, %v4222
  %v4236 = vadd.f32 %v3925, %v4231
  %s4237 = scalar_lea.vmem %s6, 1320
  %v4238 = vld [vmem:[%s4237] sm:$0xff]
  %v4239 = vld [vmem:[%s4237 + $0x8] sm:$0xff]
  %v4240 = vld [vmem:[%s4237 + $0x10] sm:$0xf]
  %v4241 = vld [vmem:[%s4237 + $0x18] sm:$0xff]
  %v4242 = vld [vmem:[%s4237 + $0x20] sm:$0xff]
  %v4243 = vld [vmem:[%s4237 + $0x28] sm:$0xf]
  %v4244 = vld [vmem:[%s4237 + $0x30] sm:$0xff]
  %v4245 = vld [vmem:[%s4237 + $0x38] sm:$0xff]
  %v4246 = vld [vmem:[%s4237 + $0x40] sm:$0xf]
  %v4247 = vld [vmem:[%s4237 + $0x48] sm:$0xff]
  %v4248 = vld [vmem:[%s4237 + $0x50] sm:$0xff]
  %v4249 = vld [vmem:[%s4237 + $0x58] sm:$0xf]
  %v4250 = vld [vmem:[%s4237 + $0x60] sm:$0xff]
  %v4251 = vld [vmem:[%s4237 + $0x68] sm:$0xff]
  %v4252 = vld [vmem:[%s4237 + $0x70] sm:$0xf]
  %4254 = vset.pattern.permute.xlu0 0
  %4255 = vperm.xlu0 %4254, %v4238
  %v4256 = vpop.permute.xlu0 %4255
  %4259 = vset.pattern.permute.xlu0 0
  %4260 = vperm.xlu0 %4259, %v4239
  %v4261 = vpop.permute.xlu0 %4260
  %4264 = vset.pattern.permute.xlu0 0
  %4265 = vperm.xlu0 %4264, %v4240
  %v4266 = vpop.permute.xlu0 %4265
  %4269 = vset.pattern.permute.xlu0 0
  %4270 = vperm.xlu0 %4269, %v4241
  %v4271 = vpop.permute.xlu0 %4270
  %4274 = vset.pattern.permute.xlu0 0
  %4275 = vperm.xlu0 %4274, %v4242
  %v4276 = vpop.permute.xlu0 %4275
  %4279 = vset.pattern.permute.xlu0 0
  %4280 = vperm.xlu0 %4279, %v4243
  %v4281 = vpop.permute.xlu0 %4280
  %4284 = vset.pattern.permute.xlu0 0
  %4285 = vperm.xlu0 %4284, %v4244
  %v4286 = vpop.permute.xlu0 %4285
  %4289 = vset.pattern.permute.xlu0 0
  %4290 = vperm.xlu0 %4289, %v4245
  %v4291 = vpop.permute.xlu0 %4290
  %4294 = vset.pattern.permute.xlu0 0
  %4295 = vperm.xlu0 %4294, %v4246
  %v4296 = vpop.permute.xlu0 %4295
  %4299 = vset.pattern.permute.xlu0 0
  %4300 = vperm.xlu0 %4299, %v4247
  %v4301 = vpop.permute.xlu0 %4300
  %4304 = vset.pattern.permute.xlu0 0
  %4305 = vperm.xlu0 %4304, %v4248
  %v4306 = vpop.permute.xlu0 %4305
  %4309 = vset.pattern.permute.xlu0 0
  %4310 = vperm.xlu0 %4309, %v4249
  %v4311 = vpop.permute.xlu0 %4310
  %4314 = vset.pattern.permute.xlu0 0
  %4315 = vperm.xlu0 %4314, %v4250
  %v4316 = vpop.permute.xlu0 %4315
  %4319 = vset.pattern.permute.xlu0 0
  %4320 = vperm.xlu0 %4319, %v4251
  %v4321 = vpop.permute.xlu0 %4320
  %4324 = vset.pattern.permute.xlu0 0
  %4325 = vperm.xlu0 %4324, %v4252
  %v4326 = vpop.permute.xlu0 %4325
  %v4328 = vadd.f32 %v4256, %v751
  %v4329 = vadd.f32 %v4261, %v752
  %v4330 = vadd.f32 %v4266, %v753
  %v4331 = vadd.f32 %v4271, %v754
  %v4332 = vadd.f32 %v4276, %v755
  %v4333 = vadd.f32 %v4281, %v756
  %v4334 = vadd.f32 %v4286, %v757
  %v4335 = vadd.f32 %v4291, %v758
  %v4336 = vadd.f32 %v4296, %v759
  %v4337 = vadd.f32 %v4301, %v760
  %v4338 = vadd.f32 %v4306, %v761
  %v4339 = vadd.f32 %v4311, %v762
  %v4340 = vadd.f32 %v4316, %v763
  %v4341 = vadd.f32 %v4321, %v764
  %v4342 = vadd.f32 %v4326, %v765
  %v4343 = vperm.slane %v752, 3
  %v4344 = vperm.slane %v755, 3
  %v4345 = vperm.slane %v758, 3
  %v4346 = vperm.slane %v761, 3
  %v4347 = vperm.slane %v764, 3
  %v4348 = vadd.f32 %v4328, %v4343
  %v4349 = vadd.f32 %v4329, %v4343
  %v4350 = vadd.f32 %v4330, %v4343
  %v4351 = vadd.f32 %v4331, %v4344
  %v4352 = vadd.f32 %v4332, %v4344
  %v4353 = vadd.f32 %v4333, %v4344
  %v4354 = vadd.f32 %v4334, %v4345
  %v4355 = vadd.f32 %v4335, %v4345
  %v4356 = vadd.f32 %v4336, %v4345
  %v4357 = vadd.f32 %v4337, %v4346
  %v4358 = vadd.f32 %v4338, %v4346
  %v4359 = vadd.f32 %v4339, %v4346
  %v4360 = vadd.f32 %v4340, %v4347
  %v4361 = vadd.f32 %v4341, %v4347
  %v4362 = vadd.f32 %v4342, %v4347
  %v4363 = vmax.f32 %v4348, 0.0
  %v4364 = vmax.f32 %v4349, 0.0
  %v4365 = vmax.f32 %v4350, 0.0
  %v4366 = vmax.f32 %v4351, 0.0
  %v4367 = vmax.f32 %v4352, 0.0
  %v4368 = vmax.f32 %v4353, 0.0
  %v4369 = vmax.f32 %v4354, 0.0
  %v4370 = vmax.f32 %v4355, 0.0
  %v4371 = vmax.f32 %v4356, 0.0
  %v4372 = vmax.f32 %v4357, 0.0
  %v4373 = vmax.f32 %v4358, 0.0
  %v4374 = vmax.f32 %v4359, 0.0
  %v4375 = vmax.f32 %v4360, 0.0
  %v4376 = vmax.f32 %v4361, 0.0
  %v4377 = vmax.f32 %v4362, 0.0
  %v4378 = vand.u32 2147483647, %v4348
  %v4379 = vand.u32 2147483647, %v4349
  %v4380 = vand.u32 2147483647, %v4350
  %v4381 = vand.u32 2147483647, %v4351
  %v4382 = vand.u32 2147483647, %v4352
  %v4383 = vand.u32 2147483647, %v4353
  %v4384 = vand.u32 2147483647, %v4354
  %v4385 = vand.u32 2147483647, %v4355
  %v4386 = vand.u32 2147483647, %v4356
  %v4387 = vand.u32 2147483647, %v4357
  %v4388 = vand.u32 2147483647, %v4358
  %v4389 = vand.u32 2147483647, %v4359
  %v4390 = vand.u32 2147483647, %v4360
  %v4391 = vand.u32 2147483647, %v4361
  %v4392 = vand.u32 2147483647, %v4362
  %v4393 = vsub.f32 0.0, %v4378
  %v4394 = vsub.f32 0.0, %v4379
  %v4395 = vsub.f32 0.0, %v4380
  %v4396 = vsub.f32 0.0, %v4381
  %v4397 = vsub.f32 0.0, %v4382
  %v4398 = vsub.f32 0.0, %v4383
  %v4399 = vsub.f32 0.0, %v4384
  %v4400 = vsub.f32 0.0, %v4385
  %v4401 = vsub.f32 0.0, %v4386
  %v4402 = vsub.f32 0.0, %v4387
  %v4403 = vsub.f32 0.0, %v4388
  %v4404 = vsub.f32 0.0, %v4389
  %v4405 = vsub.f32 0.0, %v4390
  %v4406 = vsub.f32 0.0, %v4391
  %v4407 = vsub.f32 0.0, %v4392
  %v4408 = vmul.f32 %v4393, 1.442695
  %v4409 = vpow.pop %v4408
  %v4410 = vmul.f32 %v4394, 1.442695
  %v4411 = vpow.pop %v4410
  %v4412 = vmul.f32 %v4395, 1.442695
  %v4413 = vpow.pop %v4412
  %v4414 = vmul.f32 %v4396, 1.442695
  %v4415 = vpow.pop %v4414
  %v4416 = vmul.f32 %v4397, 1.442695
  %v4417 = vpow.pop %v4416
  %v4418 = vmul.f32 %v4398, 1.442695
  %v4419 = vpow.pop %v4418
  %v4420 = vmul.f32 %v4399, 1.442695
  %v4421 = vpow.pop %v4420
  %v4422 = vmul.f32 %v4400, 1.442695
  %v4423 = vpow.pop %v4422
  %v4424 = vmul.f32 %v4401, 1.442695
  %v4425 = vpow.pop %v4424
  %v4426 = vmul.f32 %v4402, 1.442695
  %v4427 = vpow.pop %v4426
  %v4428 = vmul.f32 %v4403, 1.442695
  %v4429 = vpow.pop %v4428
  %v4430 = vmul.f32 %v4404, 1.442695
  %v4431 = vpow.pop %v4430
  %v4432 = vmul.f32 %v4405, 1.442695
  %v4433 = vpow.pop %v4432
  %v4434 = vmul.f32 %v4406, 1.442695
  %v4435 = vpow.pop %v4434
  %v4436 = vmul.f32 %v4407, 1.442695
  %v4437 = vpow.pop %v4436
  %v4438 = vadd.f32 %v4409, 1.0
  %v4439 = vadd.f32 %v4411, 1.0
  %v4440 = vadd.f32 %v4413, 1.0
  %v4441 = vadd.f32 %v4415, 1.0
  %v4442 = vadd.f32 %v4417, 1.0
  %v4443 = vadd.f32 %v4419, 1.0
  %v4444 = vadd.f32 %v4421, 1.0
  %v4445 = vadd.f32 %v4423, 1.0
  %v4446 = vadd.f32 %v4425, 1.0
  %v4447 = vadd.f32 %v4427, 1.0
  %v4448 = vadd.f32 %v4429, 1.0
  %v4449 = vadd.f32 %v4431, 1.0
  %v4450 = vadd.f32 %v4433, 1.0
  %v4451 = vadd.f32 %v4435, 1.0
  %v4452 = vadd.f32 %v4437, 1.0
  %v4453 = vlog2.pop %v4438
  %v4454 = vmul.f32 %v4453, 0.6931472
  %v4455 = vlog2.pop %v4439
  %v4456 = vmul.f32 %v4455, 0.6931472
  %v4457 = vlog2.pop %v4440
  %v4458 = vmul.f32 %v4457, 0.6931472
  %v4459 = vlog2.pop %v4441
  %v4460 = vmul.f32 %v4459, 0.6931472
  %v4461 = vlog2.pop %v4442
  %v4462 = vmul.f32 %v4461, 0.6931472
  %v4463 = vlog2.pop %v4443
  %v4464 = vmul.f32 %v4463, 0.6931472
  %v4465 = vlog2.pop %v4444
  %v4466 = vmul.f32 %v4465, 0.6931472
  %v4467 = vlog2.pop %v4445
  %v4468 = vmul.f32 %v4467, 0.6931472
  %v4469 = vlog2.pop %v4446
  %v4470 = vmul.f32 %v4469, 0.6931472
  %v4471 = vlog2.pop %v4447
  %v4472 = vmul.f32 %v4471, 0.6931472
  %v4473 = vlog2.pop %v4448
  %v4474 = vmul.f32 %v4473, 0.6931472
  %v4475 = vlog2.pop %v4449
  %v4476 = vmul.f32 %v4475, 0.6931472
  %v4477 = vlog2.pop %v4450
  %v4478 = vmul.f32 %v4477, 0.6931472
  %v4479 = vlog2.pop %v4451
  %v4480 = vmul.f32 %v4479, 0.6931472
  %v4481 = vlog2.pop %v4452
  %v4482 = vmul.f32 %v4481, 0.6931472
  %v4483 = vadd.f32 %v4363, %v4454
  %v4484 = vadd.f32 %v4364, %v4456
  %v4485 = vadd.f32 %v4365, %v4458
  %v4486 = vadd.f32 %v4366, %v4460
  %v4487 = vadd.f32 %v4367, %v4462
  %v4488 = vadd.f32 %v4368, %v4464
  %v4489 = vadd.f32 %v4369, %v4466
  %v4490 = vadd.f32 %v4370, %v4468
  %v4491 = vadd.f32 %v4371, %v4470
  %v4492 = vadd.f32 %v4372, %v4472
  %v4493 = vadd.f32 %v4373, %v4474
  %v4494 = vadd.f32 %v4374, %v4476
  %v4495 = vadd.f32 %v4375, %v4478
  %v4496 = vadd.f32 %v4376, %v4480
  %v4497 = vadd.f32 %v4377, %v4482
  %v4498 = vadd.f32 %v4483, %v4484
  %v4499 = vsel %vm767, %v4485, 0.0
  %v4500 = vadd.f32 %v4498, %v4499
  %v4501 = vrot.slane %v4500, 4
  %v4502 = vadd.f32 %v4500, %v4501
  %v4503 = vrot.slane %v4502, 2
  %v4504 = vadd.f32 %v4502, %v4503
  %v4505 = vrot.slane %v4504, 1
  %v4506 = vadd.f32 %v4504, %v4505
  %v4507 = vadd.f32 %v4486, %v4487
  %v4508 = vsel %vm767, %v4488, 0.0
  %v4509 = vadd.f32 %v4507, %v4508
  %v4510 = vrot.slane %v4509, 4
  %v4511 = vadd.f32 %v4509, %v4510
  %v4512 = vrot.slane %v4511, 2
  %v4513 = vadd.f32 %v4511, %v4512
  %v4514 = vrot.slane %v4513, 1
  %v4515 = vadd.f32 %v4513, %v4514
  %v4516 = vadd.f32 %v4489, %v4490
  %v4517 = vsel %vm767, %v4491, 0.0
  %v4518 = vadd.f32 %v4516, %v4517
  %v4519 = vrot.slane %v4518, 4
  %v4520 = vadd.f32 %v4518, %v4519
  %v4521 = vrot.slane %v4520, 2
  %v4522 = vadd.f32 %v4520, %v4521
  %v4523 = vrot.slane %v4522, 1
  %v4524 = vadd.f32 %v4522, %v4523
  %v4525 = vadd.f32 %v4492, %v4493
  %v4526 = vsel %vm767, %v4494, 0.0
  %v4527 = vadd.f32 %v4525, %v4526
  %v4528 = vrot.slane %v4527, 4
  %v4529 = vadd.f32 %v4527, %v4528
  %v4530 = vrot.slane %v4529, 2
  %v4531 = vadd.f32 %v4529, %v4530
  %v4532 = vrot.slane %v4531, 1
  %v4533 = vadd.f32 %v4531, %v4532
  %v4534 = vadd.f32 %v4495, %v4496
  %v4535 = vsel %vm767, %v4497, 0.0
  %v4536 = vadd.f32 %v4534, %v4535
  %v4537 = vrot.slane %v4536, 4
  %v4538 = vadd.f32 %v4536, %v4537
  %v4539 = vrot.slane %v4538, 2
  %v4540 = vadd.f32 %v4538, %v4539
  %v4541 = vrot.slane %v4540, 1
  %v4542 = vadd.f32 %v4540, %v4541
  %v4543 = vadd.f32 %v4232, %v4506
  %v4544 = vadd.f32 %v4233, %v4515
  %v4545 = vadd.f32 %v4234, %v4524
  %v4546 = vadd.f32 %v4235, %v4533
  %v4547 = vadd.f32 %v4236, %v4542
  %s4548 = scalar_lea.vmem %s6, 1440
  %v4549 = vld [vmem:[%s4548] sm:$0xff]
  %v4550 = vld [vmem:[%s4548 + $0x8] sm:$0xff]
  %v4551 = vld [vmem:[%s4548 + $0x10] sm:$0xf]
  %v4552 = vld [vmem:[%s4548 + $0x18] sm:$0xff]
  %v4553 = vld [vmem:[%s4548 + $0x20] sm:$0xff]
  %v4554 = vld [vmem:[%s4548 + $0x28] sm:$0xf]
  %v4555 = vld [vmem:[%s4548 + $0x30] sm:$0xff]
  %v4556 = vld [vmem:[%s4548 + $0x38] sm:$0xff]
  %v4557 = vld [vmem:[%s4548 + $0x40] sm:$0xf]
  %v4558 = vld [vmem:[%s4548 + $0x48] sm:$0xff]
  %v4559 = vld [vmem:[%s4548 + $0x50] sm:$0xff]
  %v4560 = vld [vmem:[%s4548 + $0x58] sm:$0xf]
  %v4561 = vld [vmem:[%s4548 + $0x60] sm:$0xff]
  %v4562 = vld [vmem:[%s4548 + $0x68] sm:$0xff]
  %v4563 = vld [vmem:[%s4548 + $0x70] sm:$0xf]
  %4565 = vset.pattern.permute.xlu0 0
  %4566 = vperm.xlu0 %4565, %v4549
  %v4567 = vpop.permute.xlu0 %4566
  %4570 = vset.pattern.permute.xlu0 0
  %4571 = vperm.xlu0 %4570, %v4550
  %v4572 = vpop.permute.xlu0 %4571
  %4575 = vset.pattern.permute.xlu0 0
  %4576 = vperm.xlu0 %4575, %v4551
  %v4577 = vpop.permute.xlu0 %4576
  %4580 = vset.pattern.permute.xlu0 0
  %4581 = vperm.xlu0 %4580, %v4552
  %v4582 = vpop.permute.xlu0 %4581
  %4585 = vset.pattern.permute.xlu0 0
  %4586 = vperm.xlu0 %4585, %v4553
  %v4587 = vpop.permute.xlu0 %4586
  %4590 = vset.pattern.permute.xlu0 0
  %4591 = vperm.xlu0 %4590, %v4554
  %v4592 = vpop.permute.xlu0 %4591
  %4595 = vset.pattern.permute.xlu0 0
  %4596 = vperm.xlu0 %4595, %v4555
  %v4597 = vpop.permute.xlu0 %4596
  %4600 = vset.pattern.permute.xlu0 0
  %4601 = vperm.xlu0 %4600, %v4556
  %v4602 = vpop.permute.xlu0 %4601
  %4605 = vset.pattern.permute.xlu0 0
  %4606 = vperm.xlu0 %4605, %v4557
  %v4607 = vpop.permute.xlu0 %4606
  %4610 = vset.pattern.permute.xlu0 0
  %4611 = vperm.xlu0 %4610, %v4558
  %v4612 = vpop.permute.xlu0 %4611
  %4615 = vset.pattern.permute.xlu0 0
  %4616 = vperm.xlu0 %4615, %v4559
  %v4617 = vpop.permute.xlu0 %4616
  %4620 = vset.pattern.permute.xlu0 0
  %4621 = vperm.xlu0 %4620, %v4560
  %v4622 = vpop.permute.xlu0 %4621
  %4625 = vset.pattern.permute.xlu0 0
  %4626 = vperm.xlu0 %4625, %v4561
  %v4627 = vpop.permute.xlu0 %4626
  %4630 = vset.pattern.permute.xlu0 0
  %4631 = vperm.xlu0 %4630, %v4562
  %v4632 = vpop.permute.xlu0 %4631
  %4635 = vset.pattern.permute.xlu0 0
  %4636 = vperm.xlu0 %4635, %v4563
  %v4637 = vpop.permute.xlu0 %4636
  %v4639 = vadd.f32 %v4567, %v751
  %v4640 = vadd.f32 %v4572, %v752
  %v4641 = vadd.f32 %v4577, %v753
  %v4642 = vadd.f32 %v4582, %v754
  %v4643 = vadd.f32 %v4587, %v755
  %v4644 = vadd.f32 %v4592, %v756
  %v4645 = vadd.f32 %v4597, %v757
  %v4646 = vadd.f32 %v4602, %v758
  %v4647 = vadd.f32 %v4607, %v759
  %v4648 = vadd.f32 %v4612, %v760
  %v4649 = vadd.f32 %v4617, %v761
  %v4650 = vadd.f32 %v4622, %v762
  %v4651 = vadd.f32 %v4627, %v763
  %v4652 = vadd.f32 %v4632, %v764
  %v4653 = vadd.f32 %v4637, %v765
  %v4654 = vperm.slane %v752, 4
  %v4655 = vperm.slane %v755, 4
  %v4656 = vperm.slane %v758, 4
  %v4657 = vperm.slane %v761, 4
  %v4658 = vperm.slane %v764, 4
  %v4659 = vadd.f32 %v4639, %v4654
  %v4660 = vadd.f32 %v4640, %v4654
  %v4661 = vadd.f32 %v4641, %v4654
  %v4662 = vadd.f32 %v4642, %v4655
  %v4663 = vadd.f32 %v4643, %v4655
  %v4664 = vadd.f32 %v4644, %v4655
  %v4665 = vadd.f32 %v4645, %v4656
  %v4666 = vadd.f32 %v4646, %v4656
  %v4667 = vadd.f32 %v4647, %v4656
  %v4668 = vadd.f32 %v4648, %v4657
  %v4669 = vadd.f32 %v4649, %v4657
  %v4670 = vadd.f32 %v4650, %v4657
  %v4671 = vadd.f32 %v4651, %v4658
  %v4672 = vadd.f32 %v4652, %v4658
  %v4673 = vadd.f32 %v4653, %v4658
  %v4674 = vmax.f32 %v4659, 0.0
  %v4675 = vmax.f32 %v4660, 0.0
  %v4676 = vmax.f32 %v4661, 0.0
  %v4677 = vmax.f32 %v4662, 0.0
  %v4678 = vmax.f32 %v4663, 0.0
  %v4679 = vmax.f32 %v4664, 0.0
  %v4680 = vmax.f32 %v4665, 0.0
  %v4681 = vmax.f32 %v4666, 0.0
  %v4682 = vmax.f32 %v4667, 0.0
  %v4683 = vmax.f32 %v4668, 0.0
  %v4684 = vmax.f32 %v4669, 0.0
  %v4685 = vmax.f32 %v4670, 0.0
  %v4686 = vmax.f32 %v4671, 0.0
  %v4687 = vmax.f32 %v4672, 0.0
  %v4688 = vmax.f32 %v4673, 0.0
  %v4689 = vand.u32 2147483647, %v4659
  %v4690 = vand.u32 2147483647, %v4660
  %v4691 = vand.u32 2147483647, %v4661
  %v4692 = vand.u32 2147483647, %v4662
  %v4693 = vand.u32 2147483647, %v4663
  %v4694 = vand.u32 2147483647, %v4664
  %v4695 = vand.u32 2147483647, %v4665
  %v4696 = vand.u32 2147483647, %v4666
  %v4697 = vand.u32 2147483647, %v4667
  %v4698 = vand.u32 2147483647, %v4668
  %v4699 = vand.u32 2147483647, %v4669
  %v4700 = vand.u32 2147483647, %v4670
  %v4701 = vand.u32 2147483647, %v4671
  %v4702 = vand.u32 2147483647, %v4672
  %v4703 = vand.u32 2147483647, %v4673
  %v4704 = vsub.f32 0.0, %v4689
  %v4705 = vsub.f32 0.0, %v4690
  %v4706 = vsub.f32 0.0, %v4691
  %v4707 = vsub.f32 0.0, %v4692
  %v4708 = vsub.f32 0.0, %v4693
  %v4709 = vsub.f32 0.0, %v4694
  %v4710 = vsub.f32 0.0, %v4695
  %v4711 = vsub.f32 0.0, %v4696
  %v4712 = vsub.f32 0.0, %v4697
  %v4713 = vsub.f32 0.0, %v4698
  %v4714 = vsub.f32 0.0, %v4699
  %v4715 = vsub.f32 0.0, %v4700
  %v4716 = vsub.f32 0.0, %v4701
  %v4717 = vsub.f32 0.0, %v4702
  %v4718 = vsub.f32 0.0, %v4703
  %v4719 = vmul.f32 %v4704, 1.442695
  %v4720 = vpow.pop %v4719
  %v4721 = vmul.f32 %v4705, 1.442695
  %v4722 = vpow.pop %v4721
  %v4723 = vmul.f32 %v4706, 1.442695
  %v4724 = vpow.pop %v4723
  %v4725 = vmul.f32 %v4707, 1.442695
  %v4726 = vpow.pop %v4725
  %v4727 = vmul.f32 %v4708, 1.442695
  %v4728 = vpow.pop %v4727
  %v4729 = vmul.f32 %v4709, 1.442695
  %v4730 = vpow.pop %v4729
  %v4731 = vmul.f32 %v4710, 1.442695
  %v4732 = vpow.pop %v4731
  %v4733 = vmul.f32 %v4711, 1.442695
  %v4734 = vpow.pop %v4733
  %v4735 = vmul.f32 %v4712, 1.442695
  %v4736 = vpow.pop %v4735
  %v4737 = vmul.f32 %v4713, 1.442695
  %v4738 = vpow.pop %v4737
  %v4739 = vmul.f32 %v4714, 1.442695
  %v4740 = vpow.pop %v4739
  %v4741 = vmul.f32 %v4715, 1.442695
  %v4742 = vpow.pop %v4741
  %v4743 = vmul.f32 %v4716, 1.442695
  %v4744 = vpow.pop %v4743
  %v4745 = vmul.f32 %v4717, 1.442695
  %v4746 = vpow.pop %v4745
  %v4747 = vmul.f32 %v4718, 1.442695
  %v4748 = vpow.pop %v4747
  %v4749 = vadd.f32 %v4720, 1.0
  %v4750 = vadd.f32 %v4722, 1.0
  %v4751 = vadd.f32 %v4724, 1.0
  %v4752 = vadd.f32 %v4726, 1.0
  %v4753 = vadd.f32 %v4728, 1.0
  %v4754 = vadd.f32 %v4730, 1.0
  %v4755 = vadd.f32 %v4732, 1.0
  %v4756 = vadd.f32 %v4734, 1.0
  %v4757 = vadd.f32 %v4736, 1.0
  %v4758 = vadd.f32 %v4738, 1.0
  %v4759 = vadd.f32 %v4740, 1.0
  %v4760 = vadd.f32 %v4742, 1.0
  %v4761 = vadd.f32 %v4744, 1.0
  %v4762 = vadd.f32 %v4746, 1.0
  %v4763 = vadd.f32 %v4748, 1.0
  %v4764 = vlog2.pop %v4749
  %v4765 = vmul.f32 %v4764, 0.6931472
  %v4766 = vlog2.pop %v4750
  %v4767 = vmul.f32 %v4766, 0.6931472
  %v4768 = vlog2.pop %v4751
  %v4769 = vmul.f32 %v4768, 0.6931472
  %v4770 = vlog2.pop %v4752
  %v4771 = vmul.f32 %v4770, 0.6931472
  %v4772 = vlog2.pop %v4753
  %v4773 = vmul.f32 %v4772, 0.6931472
  %v4774 = vlog2.pop %v4754
  %v4775 = vmul.f32 %v4774, 0.6931472
  %v4776 = vlog2.pop %v4755
  %v4777 = vmul.f32 %v4776, 0.6931472
  %v4778 = vlog2.pop %v4756
  %v4779 = vmul.f32 %v4778, 0.6931472
  %v4780 = vlog2.pop %v4757
  %v4781 = vmul.f32 %v4780, 0.6931472
  %v4782 = vlog2.pop %v4758
  %v4783 = vmul.f32 %v4782, 0.6931472
  %v4784 = vlog2.pop %v4759
  %v4785 = vmul.f32 %v4784, 0.6931472
  %v4786 = vlog2.pop %v4760
  %v4787 = vmul.f32 %v4786, 0.6931472
  %v4788 = vlog2.pop %v4761
  %v4789 = vmul.f32 %v4788, 0.6931472
  %v4790 = vlog2.pop %v4762
  %v4791 = vmul.f32 %v4790, 0.6931472
  %v4792 = vlog2.pop %v4763
  %v4793 = vmul.f32 %v4792, 0.6931472
  %v4794 = vadd.f32 %v4674, %v4765
  %v4795 = vadd.f32 %v4675, %v4767
  %v4796 = vadd.f32 %v4676, %v4769
  %v4797 = vadd.f32 %v4677, %v4771
  %v4798 = vadd.f32 %v4678, %v4773
  %v4799 = vadd.f32 %v4679, %v4775
  %v4800 = vadd.f32 %v4680, %v4777
  %v4801 = vadd.f32 %v4681, %v4779
  %v4802 = vadd.f32 %v4682, %v4781
  %v4803 = vadd.f32 %v4683, %v4783
  %v4804 = vadd.f32 %v4684, %v4785
  %v4805 = vadd.f32 %v4685, %v4787
  %v4806 = vadd.f32 %v4686, %v4789
  %v4807 = vadd.f32 %v4687, %v4791
  %v4808 = vadd.f32 %v4688, %v4793
  %v4809 = vadd.f32 %v4794, %v4795
  %v4810 = vsel %vm767, %v4796, 0.0
  %v4811 = vadd.f32 %v4809, %v4810
  %v4812 = vrot.slane %v4811, 4
  %v4813 = vadd.f32 %v4811, %v4812
  %v4814 = vrot.slane %v4813, 2
  %v4815 = vadd.f32 %v4813, %v4814
  %v4816 = vrot.slane %v4815, 1
  %v4817 = vadd.f32 %v4815, %v4816
  %v4818 = vadd.f32 %v4797, %v4798
  %v4819 = vsel %vm767, %v4799, 0.0
  %v4820 = vadd.f32 %v4818, %v4819
  %v4821 = vrot.slane %v4820, 4
  %v4822 = vadd.f32 %v4820, %v4821
  %v4823 = vrot.slane %v4822, 2
  %v4824 = vadd.f32 %v4822, %v4823
  %v4825 = vrot.slane %v4824, 1
  %v4826 = vadd.f32 %v4824, %v4825
  %v4827 = vadd.f32 %v4800, %v4801
  %v4828 = vsel %vm767, %v4802, 0.0
  %v4829 = vadd.f32 %v4827, %v4828
  %v4830 = vrot.slane %v4829, 4
  %v4831 = vadd.f32 %v4829, %v4830
  %v4832 = vrot.slane %v4831, 2
  %v4833 = vadd.f32 %v4831, %v4832
  %v4834 = vrot.slane %v4833, 1
  %v4835 = vadd.f32 %v4833, %v4834
  %v4836 = vadd.f32 %v4803, %v4804
  %v4837 = vsel %vm767, %v4805, 0.0
  %v4838 = vadd.f32 %v4836, %v4837
  %v4839 = vrot.slane %v4838, 4
  %v4840 = vadd.f32 %v4838, %v4839
  %v4841 = vrot.slane %v4840, 2
  %v4842 = vadd.f32 %v4840, %v4841
  %v4843 = vrot.slane %v4842, 1
  %v4844 = vadd.f32 %v4842, %v4843
  %v4845 = vadd.f32 %v4806, %v4807
  %v4846 = vsel %vm767, %v4808, 0.0
  %v4847 = vadd.f32 %v4845, %v4846
  %v4848 = vrot.slane %v4847, 4
  %v4849 = vadd.f32 %v4847, %v4848
  %v4850 = vrot.slane %v4849, 2
  %v4851 = vadd.f32 %v4849, %v4850
  %v4852 = vrot.slane %v4851, 1
  %v4853 = vadd.f32 %v4851, %v4852
  %v4854 = vadd.f32 %v4543, %v4817
  %v4855 = vadd.f32 %v4544, %v4826
  %v4856 = vadd.f32 %v4545, %v4835
  %v4857 = vadd.f32 %v4546, %v4844
  %v4858 = vadd.f32 %v4547, %v4853
  %s4859 = scalar_lea.vmem %s6, 1560
  %v4860 = vld [vmem:[%s4859] sm:$0xff]
  %v4861 = vld [vmem:[%s4859 + $0x8] sm:$0xff]
  %v4862 = vld [vmem:[%s4859 + $0x10] sm:$0xf]
  %v4863 = vld [vmem:[%s4859 + $0x18] sm:$0xff]
  %v4864 = vld [vmem:[%s4859 + $0x20] sm:$0xff]
  %v4865 = vld [vmem:[%s4859 + $0x28] sm:$0xf]
  %v4866 = vld [vmem:[%s4859 + $0x30] sm:$0xff]
  %v4867 = vld [vmem:[%s4859 + $0x38] sm:$0xff]
  %v4868 = vld [vmem:[%s4859 + $0x40] sm:$0xf]
  %v4869 = vld [vmem:[%s4859 + $0x48] sm:$0xff]
  %v4870 = vld [vmem:[%s4859 + $0x50] sm:$0xff]
  %v4871 = vld [vmem:[%s4859 + $0x58] sm:$0xf]
  %v4872 = vld [vmem:[%s4859 + $0x60] sm:$0xff]
  %v4873 = vld [vmem:[%s4859 + $0x68] sm:$0xff]
  %v4874 = vld [vmem:[%s4859 + $0x70] sm:$0xf]
  %4876 = vset.pattern.permute.xlu0 0
  %4877 = vperm.xlu0 %4876, %v4860
  %v4878 = vpop.permute.xlu0 %4877
  %4881 = vset.pattern.permute.xlu0 0
  %4882 = vperm.xlu0 %4881, %v4861
  %v4883 = vpop.permute.xlu0 %4882
  %4886 = vset.pattern.permute.xlu0 0
  %4887 = vperm.xlu0 %4886, %v4862
  %v4888 = vpop.permute.xlu0 %4887
  %4891 = vset.pattern.permute.xlu0 0
  %4892 = vperm.xlu0 %4891, %v4863
  %v4893 = vpop.permute.xlu0 %4892
  %4896 = vset.pattern.permute.xlu0 0
  %4897 = vperm.xlu0 %4896, %v4864
  %v4898 = vpop.permute.xlu0 %4897
  %4901 = vset.pattern.permute.xlu0 0
  %4902 = vperm.xlu0 %4901, %v4865
  %v4903 = vpop.permute.xlu0 %4902
  %4906 = vset.pattern.permute.xlu0 0
  %4907 = vperm.xlu0 %4906, %v4866
  %v4908 = vpop.permute.xlu0 %4907
  %4911 = vset.pattern.permute.xlu0 0
  %4912 = vperm.xlu0 %4911, %v4867
  %v4913 = vpop.permute.xlu0 %4912
  %4916 = vset.pattern.permute.xlu0 0
  %4917 = vperm.xlu0 %4916, %v4868
  %v4918 = vpop.permute.xlu0 %4917
  %4921 = vset.pattern.permute.xlu0 0
  %4922 = vperm.xlu0 %4921, %v4869
  %v4923 = vpop.permute.xlu0 %4922
  %4926 = vset.pattern.permute.xlu0 0
  %4927 = vperm.xlu0 %4926, %v4870
  %v4928 = vpop.permute.xlu0 %4927
  %4931 = vset.pattern.permute.xlu0 0
  %4932 = vperm.xlu0 %4931, %v4871
  %v4933 = vpop.permute.xlu0 %4932
  %4936 = vset.pattern.permute.xlu0 0
  %4937 = vperm.xlu0 %4936, %v4872
  %v4938 = vpop.permute.xlu0 %4937
  %4941 = vset.pattern.permute.xlu0 0
  %4942 = vperm.xlu0 %4941, %v4873
  %v4943 = vpop.permute.xlu0 %4942
  %4946 = vset.pattern.permute.xlu0 0
  %4947 = vperm.xlu0 %4946, %v4874
  %v4948 = vpop.permute.xlu0 %4947
  %v4950 = vadd.f32 %v4878, %v751
  %v4951 = vadd.f32 %v4883, %v752
  %v4952 = vadd.f32 %v4888, %v753
  %v4953 = vadd.f32 %v4893, %v754
  %v4954 = vadd.f32 %v4898, %v755
  %v4955 = vadd.f32 %v4903, %v756
  %v4956 = vadd.f32 %v4908, %v757
  %v4957 = vadd.f32 %v4913, %v758
  %v4958 = vadd.f32 %v4918, %v759
  %v4959 = vadd.f32 %v4923, %v760
  %v4960 = vadd.f32 %v4928, %v761
  %v4961 = vadd.f32 %v4933, %v762
  %v4962 = vadd.f32 %v4938, %v763
  %v4963 = vadd.f32 %v4943, %v764
  %v4964 = vadd.f32 %v4948, %v765
  %v4965 = vperm.slane %v752, 5
  %v4966 = vperm.slane %v755, 5
  %v4967 = vperm.slane %v758, 5
  %v4968 = vperm.slane %v761, 5
  %v4969 = vperm.slane %v764, 5
  %v4970 = vadd.f32 %v4950, %v4965
  %v4971 = vadd.f32 %v4951, %v4965
  %v4972 = vadd.f32 %v4952, %v4965
  %v4973 = vadd.f32 %v4953, %v4966
  %v4974 = vadd.f32 %v4954, %v4966
  %v4975 = vadd.f32 %v4955, %v4966
  %v4976 = vadd.f32 %v4956, %v4967
  %v4977 = vadd.f32 %v4957, %v4967
  %v4978 = vadd.f32 %v4958, %v4967
  %v4979 = vadd.f32 %v4959, %v4968
  %v4980 = vadd.f32 %v4960, %v4968
  %v4981 = vadd.f32 %v4961, %v4968
  %v4982 = vadd.f32 %v4962, %v4969
  %v4983 = vadd.f32 %v4963, %v4969
  %v4984 = vadd.f32 %v4964, %v4969
  %v4985 = vmax.f32 %v4970, 0.0
  %v4986 = vmax.f32 %v4971, 0.0
  %v4987 = vmax.f32 %v4972, 0.0
  %v4988 = vmax.f32 %v4973, 0.0
  %v4989 = vmax.f32 %v4974, 0.0
  %v4990 = vmax.f32 %v4975, 0.0
  %v4991 = vmax.f32 %v4976, 0.0
  %v4992 = vmax.f32 %v4977, 0.0
  %v4993 = vmax.f32 %v4978, 0.0
  %v4994 = vmax.f32 %v4979, 0.0
  %v4995 = vmax.f32 %v4980, 0.0
  %v4996 = vmax.f32 %v4981, 0.0
  %v4997 = vmax.f32 %v4982, 0.0
  %v4998 = vmax.f32 %v4983, 0.0
  %v4999 = vmax.f32 %v4984, 0.0
  %v5000 = vand.u32 2147483647, %v4970
  %v5001 = vand.u32 2147483647, %v4971
  %v5002 = vand.u32 2147483647, %v4972
  %v5003 = vand.u32 2147483647, %v4973
  %v5004 = vand.u32 2147483647, %v4974
  %v5005 = vand.u32 2147483647, %v4975
  %v5006 = vand.u32 2147483647, %v4976
  %v5007 = vand.u32 2147483647, %v4977
  %v5008 = vand.u32 2147483647, %v4978
  %v5009 = vand.u32 2147483647, %v4979
  %v5010 = vand.u32 2147483647, %v4980
  %v5011 = vand.u32 2147483647, %v4981
  %v5012 = vand.u32 2147483647, %v4982
  %v5013 = vand.u32 2147483647, %v4983
  %v5014 = vand.u32 2147483647, %v4984
  %v5015 = vsub.f32 0.0, %v5000
  %v5016 = vsub.f32 0.0, %v5001
  %v5017 = vsub.f32 0.0, %v5002
  %v5018 = vsub.f32 0.0, %v5003
  %v5019 = vsub.f32 0.0, %v5004
  %v5020 = vsub.f32 0.0, %v5005
  %v5021 = vsub.f32 0.0, %v5006
  %v5022 = vsub.f32 0.0, %v5007
  %v5023 = vsub.f32 0.0, %v5008
  %v5024 = vsub.f32 0.0, %v5009
  %v5025 = vsub.f32 0.0, %v5010
  %v5026 = vsub.f32 0.0, %v5011
  %v5027 = vsub.f32 0.0, %v5012
  %v5028 = vsub.f32 0.0, %v5013
  %v5029 = vsub.f32 0.0, %v5014
  %v5030 = vmul.f32 %v5015, 1.442695
  %v5031 = vpow.pop %v5030
  %v5032 = vmul.f32 %v5016, 1.442695
  %v5033 = vpow.pop %v5032
  %v5034 = vmul.f32 %v5017, 1.442695
  %v5035 = vpow.pop %v5034
  %v5036 = vmul.f32 %v5018, 1.442695
  %v5037 = vpow.pop %v5036
  %v5038 = vmul.f32 %v5019, 1.442695
  %v5039 = vpow.pop %v5038
  %v5040 = vmul.f32 %v5020, 1.442695
  %v5041 = vpow.pop %v5040
  %v5042 = vmul.f32 %v5021, 1.442695
  %v5043 = vpow.pop %v5042
  %v5044 = vmul.f32 %v5022, 1.442695
  %v5045 = vpow.pop %v5044
  %v5046 = vmul.f32 %v5023, 1.442695
  %v5047 = vpow.pop %v5046
  %v5048 = vmul.f32 %v5024, 1.442695
  %v5049 = vpow.pop %v5048
  %v5050 = vmul.f32 %v5025, 1.442695
  %v5051 = vpow.pop %v5050
  %v5052 = vmul.f32 %v5026, 1.442695
  %v5053 = vpow.pop %v5052
  %v5054 = vmul.f32 %v5027, 1.442695
  %v5055 = vpow.pop %v5054
  %v5056 = vmul.f32 %v5028, 1.442695
  %v5057 = vpow.pop %v5056
  %v5058 = vmul.f32 %v5029, 1.442695
  %v5059 = vpow.pop %v5058
  %v5060 = vadd.f32 %v5031, 1.0
  %v5061 = vadd.f32 %v5033, 1.0
  %v5062 = vadd.f32 %v5035, 1.0
  %v5063 = vadd.f32 %v5037, 1.0
  %v5064 = vadd.f32 %v5039, 1.0
  %v5065 = vadd.f32 %v5041, 1.0
  %v5066 = vadd.f32 %v5043, 1.0
  %v5067 = vadd.f32 %v5045, 1.0
  %v5068 = vadd.f32 %v5047, 1.0
  %v5069 = vadd.f32 %v5049, 1.0
  %v5070 = vadd.f32 %v5051, 1.0
  %v5071 = vadd.f32 %v5053, 1.0
  %v5072 = vadd.f32 %v5055, 1.0
  %v5073 = vadd.f32 %v5057, 1.0
  %v5074 = vadd.f32 %v5059, 1.0
  %v5075 = vlog2.pop %v5060
  %v5076 = vmul.f32 %v5075, 0.6931472
  %v5077 = vlog2.pop %v5061
  %v5078 = vmul.f32 %v5077, 0.6931472
  %v5079 = vlog2.pop %v5062
  %v5080 = vmul.f32 %v5079, 0.6931472
  %v5081 = vlog2.pop %v5063
  %v5082 = vmul.f32 %v5081, 0.6931472
  %v5083 = vlog2.pop %v5064
  %v5084 = vmul.f32 %v5083, 0.6931472
  %v5085 = vlog2.pop %v5065
  %v5086 = vmul.f32 %v5085, 0.6931472
  %v5087 = vlog2.pop %v5066
  %v5088 = vmul.f32 %v5087, 0.6931472
  %v5089 = vlog2.pop %v5067
  %v5090 = vmul.f32 %v5089, 0.6931472
  %v5091 = vlog2.pop %v5068
  %v5092 = vmul.f32 %v5091, 0.6931472
  %v5093 = vlog2.pop %v5069
  %v5094 = vmul.f32 %v5093, 0.6931472
  %v5095 = vlog2.pop %v5070
  %v5096 = vmul.f32 %v5095, 0.6931472
  %v5097 = vlog2.pop %v5071
  %v5098 = vmul.f32 %v5097, 0.6931472
  %v5099 = vlog2.pop %v5072
  %v5100 = vmul.f32 %v5099, 0.6931472
  %v5101 = vlog2.pop %v5073
  %v5102 = vmul.f32 %v5101, 0.6931472
  %v5103 = vlog2.pop %v5074
  %v5104 = vmul.f32 %v5103, 0.6931472
  %v5105 = vadd.f32 %v4985, %v5076
  %v5106 = vadd.f32 %v4986, %v5078
  %v5107 = vadd.f32 %v4987, %v5080
  %v5108 = vadd.f32 %v4988, %v5082
  %v5109 = vadd.f32 %v4989, %v5084
  %v5110 = vadd.f32 %v4990, %v5086
  %v5111 = vadd.f32 %v4991, %v5088
  %v5112 = vadd.f32 %v4992, %v5090
  %v5113 = vadd.f32 %v4993, %v5092
  %v5114 = vadd.f32 %v4994, %v5094
  %v5115 = vadd.f32 %v4995, %v5096
  %v5116 = vadd.f32 %v4996, %v5098
  %v5117 = vadd.f32 %v4997, %v5100
  %v5118 = vadd.f32 %v4998, %v5102
  %v5119 = vadd.f32 %v4999, %v5104
  %v5120 = vadd.f32 %v5105, %v5106
  %v5121 = vsel %vm767, %v5107, 0.0
  %v5122 = vadd.f32 %v5120, %v5121
  %v5123 = vrot.slane %v5122, 4
  %v5124 = vadd.f32 %v5122, %v5123
  %v5125 = vrot.slane %v5124, 2
  %v5126 = vadd.f32 %v5124, %v5125
  %v5127 = vrot.slane %v5126, 1
  %v5128 = vadd.f32 %v5126, %v5127
  %v5129 = vadd.f32 %v5108, %v5109
  %v5130 = vsel %vm767, %v5110, 0.0
  %v5131 = vadd.f32 %v5129, %v5130
  %v5132 = vrot.slane %v5131, 4
  %v5133 = vadd.f32 %v5131, %v5132
  %v5134 = vrot.slane %v5133, 2
  %v5135 = vadd.f32 %v5133, %v5134
  %v5136 = vrot.slane %v5135, 1
  %v5137 = vadd.f32 %v5135, %v5136
  %v5138 = vadd.f32 %v5111, %v5112
  %v5139 = vsel %vm767, %v5113, 0.0
  %v5140 = vadd.f32 %v5138, %v5139
  %v5141 = vrot.slane %v5140, 4
  %v5142 = vadd.f32 %v5140, %v5141
  %v5143 = vrot.slane %v5142, 2
  %v5144 = vadd.f32 %v5142, %v5143
  %v5145 = vrot.slane %v5144, 1
  %v5146 = vadd.f32 %v5144, %v5145
  %v5147 = vadd.f32 %v5114, %v5115
  %v5148 = vsel %vm767, %v5116, 0.0
  %v5149 = vadd.f32 %v5147, %v5148
  %v5150 = vrot.slane %v5149, 4
  %v5151 = vadd.f32 %v5149, %v5150
  %v5152 = vrot.slane %v5151, 2
  %v5153 = vadd.f32 %v5151, %v5152
  %v5154 = vrot.slane %v5153, 1
  %v5155 = vadd.f32 %v5153, %v5154
  %v5156 = vadd.f32 %v5117, %v5118
  %v5157 = vsel %vm767, %v5119, 0.0
  %v5158 = vadd.f32 %v5156, %v5157
  %v5159 = vrot.slane %v5158, 4
  %v5160 = vadd.f32 %v5158, %v5159
  %v5161 = vrot.slane %v5160, 2
  %v5162 = vadd.f32 %v5160, %v5161
  %v5163 = vrot.slane %v5162, 1
  %v5164 = vadd.f32 %v5162, %v5163
  %v5165 = vadd.f32 %v4854, %v5128
  %v5166 = vadd.f32 %v4855, %v5137
  %v5167 = vadd.f32 %v4856, %v5146
  %v5168 = vadd.f32 %v4857, %v5155
  %v5169 = vadd.f32 %v4858, %v5164
  %s5170 = scalar_lea.vmem %s6, 1680
  %v5171 = vld [vmem:[%s5170] sm:$0xff]
  %v5172 = vld [vmem:[%s5170 + $0x8] sm:$0xff]
  %v5173 = vld [vmem:[%s5170 + $0x10] sm:$0xf]
  %v5174 = vld [vmem:[%s5170 + $0x18] sm:$0xff]
  %v5175 = vld [vmem:[%s5170 + $0x20] sm:$0xff]
  %v5176 = vld [vmem:[%s5170 + $0x28] sm:$0xf]
  %v5177 = vld [vmem:[%s5170 + $0x30] sm:$0xff]
  %v5178 = vld [vmem:[%s5170 + $0x38] sm:$0xff]
  %v5179 = vld [vmem:[%s5170 + $0x40] sm:$0xf]
  %v5180 = vld [vmem:[%s5170 + $0x48] sm:$0xff]
  %v5181 = vld [vmem:[%s5170 + $0x50] sm:$0xff]
  %v5182 = vld [vmem:[%s5170 + $0x58] sm:$0xf]
  %v5183 = vld [vmem:[%s5170 + $0x60] sm:$0xff]
  %v5184 = vld [vmem:[%s5170 + $0x68] sm:$0xff]
  %v5185 = vld [vmem:[%s5170 + $0x70] sm:$0xf]
  %5187 = vset.pattern.permute.xlu0 0
  %5188 = vperm.xlu0 %5187, %v5171
  %v5189 = vpop.permute.xlu0 %5188
  %5192 = vset.pattern.permute.xlu0 0
  %5193 = vperm.xlu0 %5192, %v5172
  %v5194 = vpop.permute.xlu0 %5193
  %5197 = vset.pattern.permute.xlu0 0
  %5198 = vperm.xlu0 %5197, %v5173
  %v5199 = vpop.permute.xlu0 %5198
  %5202 = vset.pattern.permute.xlu0 0
  %5203 = vperm.xlu0 %5202, %v5174
  %v5204 = vpop.permute.xlu0 %5203
  %5207 = vset.pattern.permute.xlu0 0
  %5208 = vperm.xlu0 %5207, %v5175
  %v5209 = vpop.permute.xlu0 %5208
  %5212 = vset.pattern.permute.xlu0 0
  %5213 = vperm.xlu0 %5212, %v5176
  %v5214 = vpop.permute.xlu0 %5213
  %5217 = vset.pattern.permute.xlu0 0
  %5218 = vperm.xlu0 %5217, %v5177
  %v5219 = vpop.permute.xlu0 %5218
  %5222 = vset.pattern.permute.xlu0 0
  %5223 = vperm.xlu0 %5222, %v5178
  %v5224 = vpop.permute.xlu0 %5223
  %5227 = vset.pattern.permute.xlu0 0
  %5228 = vperm.xlu0 %5227, %v5179
  %v5229 = vpop.permute.xlu0 %5228
  %5232 = vset.pattern.permute.xlu0 0
  %5233 = vperm.xlu0 %5232, %v5180
  %v5234 = vpop.permute.xlu0 %5233
  %5237 = vset.pattern.permute.xlu0 0
  %5238 = vperm.xlu0 %5237, %v5181
  %v5239 = vpop.permute.xlu0 %5238
  %5242 = vset.pattern.permute.xlu0 0
  %5243 = vperm.xlu0 %5242, %v5182
  %v5244 = vpop.permute.xlu0 %5243
  %5247 = vset.pattern.permute.xlu0 0
  %5248 = vperm.xlu0 %5247, %v5183
  %v5249 = vpop.permute.xlu0 %5248
  %5252 = vset.pattern.permute.xlu0 0
  %5253 = vperm.xlu0 %5252, %v5184
  %v5254 = vpop.permute.xlu0 %5253
  %5257 = vset.pattern.permute.xlu0 0
  %5258 = vperm.xlu0 %5257, %v5185
  %v5259 = vpop.permute.xlu0 %5258
  %v5261 = vadd.f32 %v5189, %v751
  %v5262 = vadd.f32 %v5194, %v752
  %v5263 = vadd.f32 %v5199, %v753
  %v5264 = vadd.f32 %v5204, %v754
  %v5265 = vadd.f32 %v5209, %v755
  %v5266 = vadd.f32 %v5214, %v756
  %v5267 = vadd.f32 %v5219, %v757
  %v5268 = vadd.f32 %v5224, %v758
  %v5269 = vadd.f32 %v5229, %v759
  %v5270 = vadd.f32 %v5234, %v760
  %v5271 = vadd.f32 %v5239, %v761
  %v5272 = vadd.f32 %v5244, %v762
  %v5273 = vadd.f32 %v5249, %v763
  %v5274 = vadd.f32 %v5254, %v764
  %v5275 = vadd.f32 %v5259, %v765
  %v5276 = vperm.slane %v752, 6
  %v5277 = vperm.slane %v755, 6
  %v5278 = vperm.slane %v758, 6
  %v5279 = vperm.slane %v761, 6
  %v5280 = vperm.slane %v764, 6
  %v5281 = vadd.f32 %v5261, %v5276
  %v5282 = vadd.f32 %v5262, %v5276
  %v5283 = vadd.f32 %v5263, %v5276
  %v5284 = vadd.f32 %v5264, %v5277
  %v5285 = vadd.f32 %v5265, %v5277
  %v5286 = vadd.f32 %v5266, %v5277
  %v5287 = vadd.f32 %v5267, %v5278
  %v5288 = vadd.f32 %v5268, %v5278
  %v5289 = vadd.f32 %v5269, %v5278
  %v5290 = vadd.f32 %v5270, %v5279
  %v5291 = vadd.f32 %v5271, %v5279
  %v5292 = vadd.f32 %v5272, %v5279
  %v5293 = vadd.f32 %v5273, %v5280
  %v5294 = vadd.f32 %v5274, %v5280
  %v5295 = vadd.f32 %v5275, %v5280
  %v5296 = vmax.f32 %v5281, 0.0
  %v5297 = vmax.f32 %v5282, 0.0
  %v5298 = vmax.f32 %v5283, 0.0
  %v5299 = vmax.f32 %v5284, 0.0
  %v5300 = vmax.f32 %v5285, 0.0
  %v5301 = vmax.f32 %v5286, 0.0
  %v5302 = vmax.f32 %v5287, 0.0
  %v5303 = vmax.f32 %v5288, 0.0
  %v5304 = vmax.f32 %v5289, 0.0
  %v5305 = vmax.f32 %v5290, 0.0
  %v5306 = vmax.f32 %v5291, 0.0
  %v5307 = vmax.f32 %v5292, 0.0
  %v5308 = vmax.f32 %v5293, 0.0
  %v5309 = vmax.f32 %v5294, 0.0
  %v5310 = vmax.f32 %v5295, 0.0
  %v5311 = vand.u32 2147483647, %v5281
  %v5312 = vand.u32 2147483647, %v5282
  %v5313 = vand.u32 2147483647, %v5283
  %v5314 = vand.u32 2147483647, %v5284
  %v5315 = vand.u32 2147483647, %v5285
  %v5316 = vand.u32 2147483647, %v5286
  %v5317 = vand.u32 2147483647, %v5287
  %v5318 = vand.u32 2147483647, %v5288
  %v5319 = vand.u32 2147483647, %v5289
  %v5320 = vand.u32 2147483647, %v5290
  %v5321 = vand.u32 2147483647, %v5291
  %v5322 = vand.u32 2147483647, %v5292
  %v5323 = vand.u32 2147483647, %v5293
  %v5324 = vand.u32 2147483647, %v5294
  %v5325 = vand.u32 2147483647, %v5295
  %v5326 = vsub.f32 0.0, %v5311
  %v5327 = vsub.f32 0.0, %v5312
  %v5328 = vsub.f32 0.0, %v5313
  %v5329 = vsub.f32 0.0, %v5314
  %v5330 = vsub.f32 0.0, %v5315
  %v5331 = vsub.f32 0.0, %v5316
  %v5332 = vsub.f32 0.0, %v5317
  %v5333 = vsub.f32 0.0, %v5318
  %v5334 = vsub.f32 0.0, %v5319
  %v5335 = vsub.f32 0.0, %v5320
  %v5336 = vsub.f32 0.0, %v5321
  %v5337 = vsub.f32 0.0, %v5322
  %v5338 = vsub.f32 0.0, %v5323
  %v5339 = vsub.f32 0.0, %v5324
  %v5340 = vsub.f32 0.0, %v5325
  %v5341 = vmul.f32 %v5326, 1.442695
  %v5342 = vpow.pop %v5341
  %v5343 = vmul.f32 %v5327, 1.442695
  %v5344 = vpow.pop %v5343
  %v5345 = vmul.f32 %v5328, 1.442695
  %v5346 = vpow.pop %v5345
  %v5347 = vmul.f32 %v5329, 1.442695
  %v5348 = vpow.pop %v5347
  %v5349 = vmul.f32 %v5330, 1.442695
  %v5350 = vpow.pop %v5349
  %v5351 = vmul.f32 %v5331, 1.442695
  %v5352 = vpow.pop %v5351
  %v5353 = vmul.f32 %v5332, 1.442695
  %v5354 = vpow.pop %v5353
  %v5355 = vmul.f32 %v5333, 1.442695
  %v5356 = vpow.pop %v5355
  %v5357 = vmul.f32 %v5334, 1.442695
  %v5358 = vpow.pop %v5357
  %v5359 = vmul.f32 %v5335, 1.442695
  %v5360 = vpow.pop %v5359
  %v5361 = vmul.f32 %v5336, 1.442695
  %v5362 = vpow.pop %v5361
  %v5363 = vmul.f32 %v5337, 1.442695
  %v5364 = vpow.pop %v5363
  %v5365 = vmul.f32 %v5338, 1.442695
  %v5366 = vpow.pop %v5365
  %v5367 = vmul.f32 %v5339, 1.442695
  %v5368 = vpow.pop %v5367
  %v5369 = vmul.f32 %v5340, 1.442695
  %v5370 = vpow.pop %v5369
  %v5371 = vadd.f32 %v5342, 1.0
  %v5372 = vadd.f32 %v5344, 1.0
  %v5373 = vadd.f32 %v5346, 1.0
  %v5374 = vadd.f32 %v5348, 1.0
  %v5375 = vadd.f32 %v5350, 1.0
  %v5376 = vadd.f32 %v5352, 1.0
  %v5377 = vadd.f32 %v5354, 1.0
  %v5378 = vadd.f32 %v5356, 1.0
  %v5379 = vadd.f32 %v5358, 1.0
  %v5380 = vadd.f32 %v5360, 1.0
  %v5381 = vadd.f32 %v5362, 1.0
  %v5382 = vadd.f32 %v5364, 1.0
  %v5383 = vadd.f32 %v5366, 1.0
  %v5384 = vadd.f32 %v5368, 1.0
  %v5385 = vadd.f32 %v5370, 1.0
  %v5386 = vlog2.pop %v5371
  %v5387 = vmul.f32 %v5386, 0.6931472
  %v5388 = vlog2.pop %v5372
  %v5389 = vmul.f32 %v5388, 0.6931472
  %v5390 = vlog2.pop %v5373
  %v5391 = vmul.f32 %v5390, 0.6931472
  %v5392 = vlog2.pop %v5374
  %v5393 = vmul.f32 %v5392, 0.6931472
  %v5394 = vlog2.pop %v5375
  %v5395 = vmul.f32 %v5394, 0.6931472
  %v5396 = vlog2.pop %v5376
  %v5397 = vmul.f32 %v5396, 0.6931472
  %v5398 = vlog2.pop %v5377
  %v5399 = vmul.f32 %v5398, 0.6931472
  %v5400 = vlog2.pop %v5378
  %v5401 = vmul.f32 %v5400, 0.6931472
  %v5402 = vlog2.pop %v5379
  %v5403 = vmul.f32 %v5402, 0.6931472
  %v5404 = vlog2.pop %v5380
  %v5405 = vmul.f32 %v5404, 0.6931472
  %v5406 = vlog2.pop %v5381
  %v5407 = vmul.f32 %v5406, 0.6931472
  %v5408 = vlog2.pop %v5382
  %v5409 = vmul.f32 %v5408, 0.6931472
  %v5410 = vlog2.pop %v5383
  %v5411 = vmul.f32 %v5410, 0.6931472
  %v5412 = vlog2.pop %v5384
  %v5413 = vmul.f32 %v5412, 0.6931472
  %v5414 = vlog2.pop %v5385
  %v5415 = vmul.f32 %v5414, 0.6931472
  %v5416 = vadd.f32 %v5296, %v5387
  %v5417 = vadd.f32 %v5297, %v5389
  %v5418 = vadd.f32 %v5298, %v5391
  %v5419 = vadd.f32 %v5299, %v5393
  %v5420 = vadd.f32 %v5300, %v5395
  %v5421 = vadd.f32 %v5301, %v5397
  %v5422 = vadd.f32 %v5302, %v5399
  %v5423 = vadd.f32 %v5303, %v5401
  %v5424 = vadd.f32 %v5304, %v5403
  %v5425 = vadd.f32 %v5305, %v5405
  %v5426 = vadd.f32 %v5306, %v5407
  %v5427 = vadd.f32 %v5307, %v5409
  %v5428 = vadd.f32 %v5308, %v5411
  %v5429 = vadd.f32 %v5309, %v5413
  %v5430 = vadd.f32 %v5310, %v5415
  %v5431 = vadd.f32 %v5416, %v5417
  %v5432 = vsel %vm767, %v5418, 0.0
  %v5433 = vadd.f32 %v5431, %v5432
  %v5434 = vrot.slane %v5433, 4
  %v5435 = vadd.f32 %v5433, %v5434
  %v5436 = vrot.slane %v5435, 2
  %v5437 = vadd.f32 %v5435, %v5436
  %v5438 = vrot.slane %v5437, 1
  %v5439 = vadd.f32 %v5437, %v5438
  %v5440 = vadd.f32 %v5419, %v5420
  %v5441 = vsel %vm767, %v5421, 0.0
  %v5442 = vadd.f32 %v5440, %v5441
  %v5443 = vrot.slane %v5442, 4
  %v5444 = vadd.f32 %v5442, %v5443
  %v5445 = vrot.slane %v5444, 2
  %v5446 = vadd.f32 %v5444, %v5445
  %v5447 = vrot.slane %v5446, 1
  %v5448 = vadd.f32 %v5446, %v5447
  %v5449 = vadd.f32 %v5422, %v5423
  %v5450 = vsel %vm767, %v5424, 0.0
  %v5451 = vadd.f32 %v5449, %v5450
  %v5452 = vrot.slane %v5451, 4
  %v5453 = vadd.f32 %v5451, %v5452
  %v5454 = vrot.slane %v5453, 2
  %v5455 = vadd.f32 %v5453, %v5454
  %v5456 = vrot.slane %v5455, 1
  %v5457 = vadd.f32 %v5455, %v5456
  %v5458 = vadd.f32 %v5425, %v5426
  %v5459 = vsel %vm767, %v5427, 0.0
  %v5460 = vadd.f32 %v5458, %v5459
  %v5461 = vrot.slane %v5460, 4
  %v5462 = vadd.f32 %v5460, %v5461
  %v5463 = vrot.slane %v5462, 2
  %v5464 = vadd.f32 %v5462, %v5463
  %v5465 = vrot.slane %v5464, 1
  %v5466 = vadd.f32 %v5464, %v5465
  %v5467 = vadd.f32 %v5428, %v5429
  %v5468 = vsel %vm767, %v5430, 0.0
  %v5469 = vadd.f32 %v5467, %v5468
  %v5470 = vrot.slane %v5469, 4
  %v5471 = vadd.f32 %v5469, %v5470
  %v5472 = vrot.slane %v5471, 2
  %v5473 = vadd.f32 %v5471, %v5472
  %v5474 = vrot.slane %v5473, 1
  %v5475 = vadd.f32 %v5473, %v5474
  %v5476 = vadd.f32 %v5165, %v5439
  %v5477 = vadd.f32 %v5166, %v5448
  %v5478 = vadd.f32 %v5167, %v5457
  %v5479 = vadd.f32 %v5168, %v5466
  %v5480 = vadd.f32 %v5169, %v5475
  %s5481 = scalar_lea.vmem %s6, 1800
  %v5482 = vld [vmem:[%s5481] sm:$0xff]
  %v5483 = vld [vmem:[%s5481 + $0x8] sm:$0xff]
  %v5484 = vld [vmem:[%s5481 + $0x10] sm:$0xf]
  %v5485 = vld [vmem:[%s5481 + $0x18] sm:$0xff]
  %v5486 = vld [vmem:[%s5481 + $0x20] sm:$0xff]
  %v5487 = vld [vmem:[%s5481 + $0x28] sm:$0xf]
  %v5488 = vld [vmem:[%s5481 + $0x30] sm:$0xff]
  %v5489 = vld [vmem:[%s5481 + $0x38] sm:$0xff]
  %v5490 = vld [vmem:[%s5481 + $0x40] sm:$0xf]
  %v5491 = vld [vmem:[%s5481 + $0x48] sm:$0xff]
  %v5492 = vld [vmem:[%s5481 + $0x50] sm:$0xff]
  %v5493 = vld [vmem:[%s5481 + $0x58] sm:$0xf]
  %v5494 = vld [vmem:[%s5481 + $0x60] sm:$0xff]
  %v5495 = vld [vmem:[%s5481 + $0x68] sm:$0xff]
  %v5496 = vld [vmem:[%s5481 + $0x70] sm:$0xf]
  %5498 = vset.pattern.permute.xlu0 0
  %5499 = vperm.xlu0 %5498, %v5482
  %v5500 = vpop.permute.xlu0 %5499
  %5503 = vset.pattern.permute.xlu0 0
  %5504 = vperm.xlu0 %5503, %v5483
  %v5505 = vpop.permute.xlu0 %5504
  %5508 = vset.pattern.permute.xlu0 0
  %5509 = vperm.xlu0 %5508, %v5484
  %v5510 = vpop.permute.xlu0 %5509
  %5513 = vset.pattern.permute.xlu0 0
  %5514 = vperm.xlu0 %5513, %v5485
  %v5515 = vpop.permute.xlu0 %5514
  %5518 = vset.pattern.permute.xlu0 0
  %5519 = vperm.xlu0 %5518, %v5486
  %v5520 = vpop.permute.xlu0 %5519
  %5523 = vset.pattern.permute.xlu0 0
  %5524 = vperm.xlu0 %5523, %v5487
  %v5525 = vpop.permute.xlu0 %5524
  %5528 = vset.pattern.permute.xlu0 0
  %5529 = vperm.xlu0 %5528, %v5488
  %v5530 = vpop.permute.xlu0 %5529
  %5533 = vset.pattern.permute.xlu0 0
  %5534 = vperm.xlu0 %5533, %v5489
  %v5535 = vpop.permute.xlu0 %5534
  %5538 = vset.pattern.permute.xlu0 0
  %5539 = vperm.xlu0 %5538, %v5490
  %v5540 = vpop.permute.xlu0 %5539
  %5543 = vset.pattern.permute.xlu0 0
  %5544 = vperm.xlu0 %5543, %v5491
  %v5545 = vpop.permute.xlu0 %5544
  %5548 = vset.pattern.permute.xlu0 0
  %5549 = vperm.xlu0 %5548, %v5492
  %v5550 = vpop.permute.xlu0 %5549
  %5553 = vset.pattern.permute.xlu0 0
  %5554 = vperm.xlu0 %5553, %v5493
  %v5555 = vpop.permute.xlu0 %5554
  %5558 = vset.pattern.permute.xlu0 0
  %5559 = vperm.xlu0 %5558, %v5494
  %v5560 = vpop.permute.xlu0 %5559
  %5563 = vset.pattern.permute.xlu0 0
  %5564 = vperm.xlu0 %5563, %v5495
  %v5565 = vpop.permute.xlu0 %5564
  %5568 = vset.pattern.permute.xlu0 0
  %5569 = vperm.xlu0 %5568, %v5496
  %v5570 = vpop.permute.xlu0 %5569
  %v5572 = vadd.f32 %v5500, %v751
  %v5573 = vadd.f32 %v5505, %v752
  %v5574 = vadd.f32 %v5510, %v753
  %v5575 = vadd.f32 %v5515, %v754
  %v5576 = vadd.f32 %v5520, %v755
  %v5577 = vadd.f32 %v5525, %v756
  %v5578 = vadd.f32 %v5530, %v757
  %v5579 = vadd.f32 %v5535, %v758
  %v5580 = vadd.f32 %v5540, %v759
  %v5581 = vadd.f32 %v5545, %v760
  %v5582 = vadd.f32 %v5550, %v761
  %v5583 = vadd.f32 %v5555, %v762
  %v5584 = vadd.f32 %v5560, %v763
  %v5585 = vadd.f32 %v5565, %v764
  %v5586 = vadd.f32 %v5570, %v765
  %v5587 = vperm.slane %v752, 7
  %v5588 = vperm.slane %v755, 7
  %v5589 = vperm.slane %v758, 7
  %v5590 = vperm.slane %v761, 7
  %v5591 = vperm.slane %v764, 7
  %v5592 = vadd.f32 %v5572, %v5587
  %v5593 = vadd.f32 %v5573, %v5587
  %v5594 = vadd.f32 %v5574, %v5587
  %v5595 = vadd.f32 %v5575, %v5588
  %v5596 = vadd.f32 %v5576, %v5588
  %v5597 = vadd.f32 %v5577, %v5588
  %v5598 = vadd.f32 %v5578, %v5589
  %v5599 = vadd.f32 %v5579, %v5589
  %v5600 = vadd.f32 %v5580, %v5589
  %v5601 = vadd.f32 %v5581, %v5590
  %v5602 = vadd.f32 %v5582, %v5590
  %v5603 = vadd.f32 %v5583, %v5590
  %v5604 = vadd.f32 %v5584, %v5591
  %v5605 = vadd.f32 %v5585, %v5591
  %v5606 = vadd.f32 %v5586, %v5591
  %v5607 = vmax.f32 %v5592, 0.0
  %v5608 = vmax.f32 %v5593, 0.0
  %v5609 = vmax.f32 %v5594, 0.0
  %v5610 = vmax.f32 %v5595, 0.0
  %v5611 = vmax.f32 %v5596, 0.0
  %v5612 = vmax.f32 %v5597, 0.0
  %v5613 = vmax.f32 %v5598, 0.0
  %v5614 = vmax.f32 %v5599, 0.0
  %v5615 = vmax.f32 %v5600, 0.0
  %v5616 = vmax.f32 %v5601, 0.0
  %v5617 = vmax.f32 %v5602, 0.0
  %v5618 = vmax.f32 %v5603, 0.0
  %v5619 = vmax.f32 %v5604, 0.0
  %v5620 = vmax.f32 %v5605, 0.0
  %v5621 = vmax.f32 %v5606, 0.0
  %v5622 = vand.u32 2147483647, %v5592
  %v5623 = vand.u32 2147483647, %v5593
  %v5624 = vand.u32 2147483647, %v5594
  %v5625 = vand.u32 2147483647, %v5595
  %v5626 = vand.u32 2147483647, %v5596
  %v5627 = vand.u32 2147483647, %v5597
  %v5628 = vand.u32 2147483647, %v5598
  %v5629 = vand.u32 2147483647, %v5599
  %v5630 = vand.u32 2147483647, %v5600
  %v5631 = vand.u32 2147483647, %v5601
  %v5632 = vand.u32 2147483647, %v5602
  %v5633 = vand.u32 2147483647, %v5603
  %v5634 = vand.u32 2147483647, %v5604
  %v5635 = vand.u32 2147483647, %v5605
  %v5636 = vand.u32 2147483647, %v5606
  %v5637 = vsub.f32 0.0, %v5622
  %v5638 = vsub.f32 0.0, %v5623
  %v5639 = vsub.f32 0.0, %v5624
  %v5640 = vsub.f32 0.0, %v5625
  %v5641 = vsub.f32 0.0, %v5626
  %v5642 = vsub.f32 0.0, %v5627
  %v5643 = vsub.f32 0.0, %v5628
  %v5644 = vsub.f32 0.0, %v5629
  %v5645 = vsub.f32 0.0, %v5630
  %v5646 = vsub.f32 0.0, %v5631
  %v5647 = vsub.f32 0.0, %v5632
  %v5648 = vsub.f32 0.0, %v5633
  %v5649 = vsub.f32 0.0, %v5634
  %v5650 = vsub.f32 0.0, %v5635
  %v5651 = vsub.f32 0.0, %v5636
  %v5652 = vmul.f32 %v5637, 1.442695
  %v5653 = vpow.pop %v5652
  %v5654 = vmul.f32 %v5638, 1.442695
  %v5655 = vpow.pop %v5654
  %v5656 = vmul.f32 %v5639, 1.442695
  %v5657 = vpow.pop %v5656
  %v5658 = vmul.f32 %v5640, 1.442695
  %v5659 = vpow.pop %v5658
  %v5660 = vmul.f32 %v5641, 1.442695
  %v5661 = vpow.pop %v5660
  %v5662 = vmul.f32 %v5642, 1.442695
  %v5663 = vpow.pop %v5662
  %v5664 = vmul.f32 %v5643, 1.442695
  %v5665 = vpow.pop %v5664
  %v5666 = vmul.f32 %v5644, 1.442695
  %v5667 = vpow.pop %v5666
  %v5668 = vmul.f32 %v5645, 1.442695
  %v5669 = vpow.pop %v5668
  %v5670 = vmul.f32 %v5646, 1.442695
  %v5671 = vpow.pop %v5670
  %v5672 = vmul.f32 %v5647, 1.442695
  %v5673 = vpow.pop %v5672
  %v5674 = vmul.f32 %v5648, 1.442695
  %v5675 = vpow.pop %v5674
  %v5676 = vmul.f32 %v5649, 1.442695
  %v5677 = vpow.pop %v5676
  %v5678 = vmul.f32 %v5650, 1.442695
  %v5679 = vpow.pop %v5678
  %v5680 = vmul.f32 %v5651, 1.442695
  %v5681 = vpow.pop %v5680
  %v5682 = vadd.f32 %v5653, 1.0
  %v5683 = vadd.f32 %v5655, 1.0
  %v5684 = vadd.f32 %v5657, 1.0
  %v5685 = vadd.f32 %v5659, 1.0
  %v5686 = vadd.f32 %v5661, 1.0
  %v5687 = vadd.f32 %v5663, 1.0
  %v5688 = vadd.f32 %v5665, 1.0
  %v5689 = vadd.f32 %v5667, 1.0
  %v5690 = vadd.f32 %v5669, 1.0
  %v5691 = vadd.f32 %v5671, 1.0
  %v5692 = vadd.f32 %v5673, 1.0
  %v5693 = vadd.f32 %v5675, 1.0
  %v5694 = vadd.f32 %v5677, 1.0
  %v5695 = vadd.f32 %v5679, 1.0
  %v5696 = vadd.f32 %v5681, 1.0
  %v5697 = vlog2.pop %v5682
  %v5698 = vmul.f32 %v5697, 0.6931472
  %v5699 = vlog2.pop %v5683
  %v5700 = vmul.f32 %v5699, 0.6931472
  %v5701 = vlog2.pop %v5684
  %v5702 = vmul.f32 %v5701, 0.6931472
  %v5703 = vlog2.pop %v5685
  %v5704 = vmul.f32 %v5703, 0.6931472
  %v5705 = vlog2.pop %v5686
  %v5706 = vmul.f32 %v5705, 0.6931472
  %v5707 = vlog2.pop %v5687
  %v5708 = vmul.f32 %v5707, 0.6931472
  %v5709 = vlog2.pop %v5688
  %v5710 = vmul.f32 %v5709, 0.6931472
  %v5711 = vlog2.pop %v5689
  %v5712 = vmul.f32 %v5711, 0.6931472
  %v5713 = vlog2.pop %v5690
  %v5714 = vmul.f32 %v5713, 0.6931472
  %v5715 = vlog2.pop %v5691
  %v5716 = vmul.f32 %v5715, 0.6931472
  %v5717 = vlog2.pop %v5692
  %v5718 = vmul.f32 %v5717, 0.6931472
  %v5719 = vlog2.pop %v5693
  %v5720 = vmul.f32 %v5719, 0.6931472
  %v5721 = vlog2.pop %v5694
  %v5722 = vmul.f32 %v5721, 0.6931472
  %v5723 = vlog2.pop %v5695
  %v5724 = vmul.f32 %v5723, 0.6931472
  %v5725 = vlog2.pop %v5696
  %v5726 = vmul.f32 %v5725, 0.6931472
  %v5727 = vadd.f32 %v5607, %v5698
  %v5728 = vadd.f32 %v5608, %v5700
  %v5729 = vadd.f32 %v5609, %v5702
  %v5730 = vadd.f32 %v5610, %v5704
  %v5731 = vadd.f32 %v5611, %v5706
  %v5732 = vadd.f32 %v5612, %v5708
  %v5733 = vadd.f32 %v5613, %v5710
  %v5734 = vadd.f32 %v5614, %v5712
  %v5735 = vadd.f32 %v5615, %v5714
  %v5736 = vadd.f32 %v5616, %v5716
  %v5737 = vadd.f32 %v5617, %v5718
  %v5738 = vadd.f32 %v5618, %v5720
  %v5739 = vadd.f32 %v5619, %v5722
  %v5740 = vadd.f32 %v5620, %v5724
  %v5741 = vadd.f32 %v5621, %v5726
  %v5742 = vadd.f32 %v5727, %v5728
  %v5743 = vsel %vm767, %v5729, 0.0
  %v5744 = vadd.f32 %v5742, %v5743
  %v5745 = vrot.slane %v5744, 4
  %v5746 = vadd.f32 %v5744, %v5745
  %v5747 = vrot.slane %v5746, 2
  %v5748 = vadd.f32 %v5746, %v5747
  %v5749 = vrot.slane %v5748, 1
  %v5750 = vadd.f32 %v5748, %v5749
  %v5751 = vadd.f32 %v5730, %v5731
  %v5752 = vsel %vm767, %v5732, 0.0
  %v5753 = vadd.f32 %v5751, %v5752
  %v5754 = vrot.slane %v5753, 4
  %v5755 = vadd.f32 %v5753, %v5754
  %v5756 = vrot.slane %v5755, 2
  %v5757 = vadd.f32 %v5755, %v5756
  %v5758 = vrot.slane %v5757, 1
  %v5759 = vadd.f32 %v5757, %v5758
  %v5760 = vadd.f32 %v5733, %v5734
  %v5761 = vsel %vm767, %v5735, 0.0
  %v5762 = vadd.f32 %v5760, %v5761
  %v5763 = vrot.slane %v5762, 4
  %v5764 = vadd.f32 %v5762, %v5763
  %v5765 = vrot.slane %v5764, 2
  %v5766 = vadd.f32 %v5764, %v5765
  %v5767 = vrot.slane %v5766, 1
  %v5768 = vadd.f32 %v5766, %v5767
  %v5769 = vadd.f32 %v5736, %v5737
  %v5770 = vsel %vm767, %v5738, 0.0
  %v5771 = vadd.f32 %v5769, %v5770
  %v5772 = vrot.slane %v5771, 4
  %v5773 = vadd.f32 %v5771, %v5772
  %v5774 = vrot.slane %v5773, 2
  %v5775 = vadd.f32 %v5773, %v5774
  %v5776 = vrot.slane %v5775, 1
  %v5777 = vadd.f32 %v5775, %v5776
  %v5778 = vadd.f32 %v5739, %v5740
  %v5779 = vsel %vm767, %v5741, 0.0
  %v5780 = vadd.f32 %v5778, %v5779
  %v5781 = vrot.slane %v5780, 4
  %v5782 = vadd.f32 %v5780, %v5781
  %v5783 = vrot.slane %v5782, 2
  %v5784 = vadd.f32 %v5782, %v5783
  %v5785 = vrot.slane %v5784, 1
  %v5786 = vadd.f32 %v5784, %v5785
  %v5787 = vadd.f32 %v5476, %v5750
  %v5788 = vadd.f32 %v5477, %v5759
  %v5789 = vadd.f32 %v5478, %v5768
  %v5790 = vadd.f32 %v5479, %v5777
  %v5791 = vadd.f32 %v5480, %v5786
  %s5792 = scalar_lea.vmem %s6, 1920
  %v5793 = vld [vmem:[%s5792] sm:$0xff]
  %v5794 = vld [vmem:[%s5792 + $0x8] sm:$0xff]
  %v5795 = vld [vmem:[%s5792 + $0x10] sm:$0xf]
  %v5796 = vld [vmem:[%s5792 + $0x18] sm:$0xff]
  %v5797 = vld [vmem:[%s5792 + $0x20] sm:$0xff]
  %v5798 = vld [vmem:[%s5792 + $0x28] sm:$0xf]
  %v5799 = vld [vmem:[%s5792 + $0x30] sm:$0xff]
  %v5800 = vld [vmem:[%s5792 + $0x38] sm:$0xff]
  %v5801 = vld [vmem:[%s5792 + $0x40] sm:$0xf]
  %v5802 = vld [vmem:[%s5792 + $0x48] sm:$0xff]
  %v5803 = vld [vmem:[%s5792 + $0x50] sm:$0xff]
  %v5804 = vld [vmem:[%s5792 + $0x58] sm:$0xf]
  %v5805 = vld [vmem:[%s5792 + $0x60] sm:$0xff]
  %v5806 = vld [vmem:[%s5792 + $0x68] sm:$0xff]
  %v5807 = vld [vmem:[%s5792 + $0x70] sm:$0xf]
  %5809 = vset.pattern.permute.xlu0 0
  %5810 = vperm.xlu0 %5809, %v5793
  %v5811 = vpop.permute.xlu0 %5810
  %5814 = vset.pattern.permute.xlu0 0
  %5815 = vperm.xlu0 %5814, %v5794
  %v5816 = vpop.permute.xlu0 %5815
  %5819 = vset.pattern.permute.xlu0 0
  %5820 = vperm.xlu0 %5819, %v5795
  %v5821 = vpop.permute.xlu0 %5820
  %5824 = vset.pattern.permute.xlu0 0
  %5825 = vperm.xlu0 %5824, %v5796
  %v5826 = vpop.permute.xlu0 %5825
  %5829 = vset.pattern.permute.xlu0 0
  %5830 = vperm.xlu0 %5829, %v5797
  %v5831 = vpop.permute.xlu0 %5830
  %5834 = vset.pattern.permute.xlu0 0
  %5835 = vperm.xlu0 %5834, %v5798
  %v5836 = vpop.permute.xlu0 %5835
  %5839 = vset.pattern.permute.xlu0 0
  %5840 = vperm.xlu0 %5839, %v5799
  %v5841 = vpop.permute.xlu0 %5840
  %5844 = vset.pattern.permute.xlu0 0
  %5845 = vperm.xlu0 %5844, %v5800
  %v5846 = vpop.permute.xlu0 %5845
  %5849 = vset.pattern.permute.xlu0 0
  %5850 = vperm.xlu0 %5849, %v5801
  %v5851 = vpop.permute.xlu0 %5850
  %5854 = vset.pattern.permute.xlu0 0
  %5855 = vperm.xlu0 %5854, %v5802
  %v5856 = vpop.permute.xlu0 %5855
  %5859 = vset.pattern.permute.xlu0 0
  %5860 = vperm.xlu0 %5859, %v5803
  %v5861 = vpop.permute.xlu0 %5860
  %5864 = vset.pattern.permute.xlu0 0
  %5865 = vperm.xlu0 %5864, %v5804
  %v5866 = vpop.permute.xlu0 %5865
  %5869 = vset.pattern.permute.xlu0 0
  %5870 = vperm.xlu0 %5869, %v5805
  %v5871 = vpop.permute.xlu0 %5870
  %5874 = vset.pattern.permute.xlu0 0
  %5875 = vperm.xlu0 %5874, %v5806
  %v5876 = vpop.permute.xlu0 %5875
  %5879 = vset.pattern.permute.xlu0 0
  %5880 = vperm.xlu0 %5879, %v5807
  %v5881 = vpop.permute.xlu0 %5880
  %v5883 = vadd.f32 %v5811, %v751
  %v5884 = vadd.f32 %v5816, %v752
  %v5885 = vadd.f32 %v5821, %v753
  %v5886 = vadd.f32 %v5826, %v754
  %v5887 = vadd.f32 %v5831, %v755
  %v5888 = vadd.f32 %v5836, %v756
  %v5889 = vadd.f32 %v5841, %v757
  %v5890 = vadd.f32 %v5846, %v758
  %v5891 = vadd.f32 %v5851, %v759
  %v5892 = vadd.f32 %v5856, %v760
  %v5893 = vadd.f32 %v5861, %v761
  %v5894 = vadd.f32 %v5866, %v762
  %v5895 = vadd.f32 %v5871, %v763
  %v5896 = vadd.f32 %v5876, %v764
  %v5897 = vadd.f32 %v5881, %v765
  %v5898 = vperm.slane %v753, 0
  %v5899 = vperm.slane %v756, 0
  %v5900 = vperm.slane %v759, 0
  %v5901 = vperm.slane %v762, 0
  %v5902 = vperm.slane %v765, 0
  %v5903 = vadd.f32 %v5883, %v5898
  %v5904 = vadd.f32 %v5884, %v5898
  %v5905 = vadd.f32 %v5885, %v5898
  %v5906 = vadd.f32 %v5886, %v5899
  %v5907 = vadd.f32 %v5887, %v5899
  %v5908 = vadd.f32 %v5888, %v5899
  %v5909 = vadd.f32 %v5889, %v5900
  %v5910 = vadd.f32 %v5890, %v5900
  %v5911 = vadd.f32 %v5891, %v5900
  %v5912 = vadd.f32 %v5892, %v5901
  %v5913 = vadd.f32 %v5893, %v5901
  %v5914 = vadd.f32 %v5894, %v5901
  %v5915 = vadd.f32 %v5895, %v5902
  %v5916 = vadd.f32 %v5896, %v5902
  %v5917 = vadd.f32 %v5897, %v5902
  %v5918 = vmax.f32 %v5903, 0.0
  %v5919 = vmax.f32 %v5904, 0.0
  %v5920 = vmax.f32 %v5905, 0.0
  %v5921 = vmax.f32 %v5906, 0.0
  %v5922 = vmax.f32 %v5907, 0.0
  %v5923 = vmax.f32 %v5908, 0.0
  %v5924 = vmax.f32 %v5909, 0.0
  %v5925 = vmax.f32 %v5910, 0.0
  %v5926 = vmax.f32 %v5911, 0.0
  %v5927 = vmax.f32 %v5912, 0.0
  %v5928 = vmax.f32 %v5913, 0.0
  %v5929 = vmax.f32 %v5914, 0.0
  %v5930 = vmax.f32 %v5915, 0.0
  %v5931 = vmax.f32 %v5916, 0.0
  %v5932 = vmax.f32 %v5917, 0.0
  %v5933 = vand.u32 2147483647, %v5903
  %v5934 = vand.u32 2147483647, %v5904
  %v5935 = vand.u32 2147483647, %v5905
  %v5936 = vand.u32 2147483647, %v5906
  %v5937 = vand.u32 2147483647, %v5907
  %v5938 = vand.u32 2147483647, %v5908
  %v5939 = vand.u32 2147483647, %v5909
  %v5940 = vand.u32 2147483647, %v5910
  %v5941 = vand.u32 2147483647, %v5911
  %v5942 = vand.u32 2147483647, %v5912
  %v5943 = vand.u32 2147483647, %v5913
  %v5944 = vand.u32 2147483647, %v5914
  %v5945 = vand.u32 2147483647, %v5915
  %v5946 = vand.u32 2147483647, %v5916
  %v5947 = vand.u32 2147483647, %v5917
  %v5948 = vsub.f32 0.0, %v5933
  %v5949 = vsub.f32 0.0, %v5934
  %v5950 = vsub.f32 0.0, %v5935
  %v5951 = vsub.f32 0.0, %v5936
  %v5952 = vsub.f32 0.0, %v5937
  %v5953 = vsub.f32 0.0, %v5938
  %v5954 = vsub.f32 0.0, %v5939
  %v5955 = vsub.f32 0.0, %v5940
  %v5956 = vsub.f32 0.0, %v5941
  %v5957 = vsub.f32 0.0, %v5942
  %v5958 = vsub.f32 0.0, %v5943
  %v5959 = vsub.f32 0.0, %v5944
  %v5960 = vsub.f32 0.0, %v5945
  %v5961 = vsub.f32 0.0, %v5946
  %v5962 = vsub.f32 0.0, %v5947
  %v5963 = vmul.f32 %v5948, 1.442695
  %v5964 = vpow.pop %v5963
  %v5965 = vmul.f32 %v5949, 1.442695
  %v5966 = vpow.pop %v5965
  %v5967 = vmul.f32 %v5950, 1.442695
  %v5968 = vpow.pop %v5967
  %v5969 = vmul.f32 %v5951, 1.442695
  %v5970 = vpow.pop %v5969
  %v5971 = vmul.f32 %v5952, 1.442695
  %v5972 = vpow.pop %v5971
  %v5973 = vmul.f32 %v5953, 1.442695
  %v5974 = vpow.pop %v5973
  %v5975 = vmul.f32 %v5954, 1.442695
  %v5976 = vpow.pop %v5975
  %v5977 = vmul.f32 %v5955, 1.442695
  %v5978 = vpow.pop %v5977
  %v5979 = vmul.f32 %v5956, 1.442695
  %v5980 = vpow.pop %v5979
  %v5981 = vmul.f32 %v5957, 1.442695
  %v5982 = vpow.pop %v5981
  %v5983 = vmul.f32 %v5958, 1.442695
  %v5984 = vpow.pop %v5983
  %v5985 = vmul.f32 %v5959, 1.442695
  %v5986 = vpow.pop %v5985
  %v5987 = vmul.f32 %v5960, 1.442695
  %v5988 = vpow.pop %v5987
  %v5989 = vmul.f32 %v5961, 1.442695
  %v5990 = vpow.pop %v5989
  %v5991 = vmul.f32 %v5962, 1.442695
  %v5992 = vpow.pop %v5991
  %v5993 = vadd.f32 %v5964, 1.0
  %v5994 = vadd.f32 %v5966, 1.0
  %v5995 = vadd.f32 %v5968, 1.0
  %v5996 = vadd.f32 %v5970, 1.0
  %v5997 = vadd.f32 %v5972, 1.0
  %v5998 = vadd.f32 %v5974, 1.0
  %v5999 = vadd.f32 %v5976, 1.0
  %v6000 = vadd.f32 %v5978, 1.0
  %v6001 = vadd.f32 %v5980, 1.0
  %v6002 = vadd.f32 %v5982, 1.0
  %v6003 = vadd.f32 %v5984, 1.0
  %v6004 = vadd.f32 %v5986, 1.0
  %v6005 = vadd.f32 %v5988, 1.0
  %v6006 = vadd.f32 %v5990, 1.0
  %v6007 = vadd.f32 %v5992, 1.0
  %v6008 = vlog2.pop %v5993
  %v6009 = vmul.f32 %v6008, 0.6931472
  %v6010 = vlog2.pop %v5994
  %v6011 = vmul.f32 %v6010, 0.6931472
  %v6012 = vlog2.pop %v5995
  %v6013 = vmul.f32 %v6012, 0.6931472
  %v6014 = vlog2.pop %v5996
  %v6015 = vmul.f32 %v6014, 0.6931472
  %v6016 = vlog2.pop %v5997
  %v6017 = vmul.f32 %v6016, 0.6931472
  %v6018 = vlog2.pop %v5998
  %v6019 = vmul.f32 %v6018, 0.6931472
  %v6020 = vlog2.pop %v5999
  %v6021 = vmul.f32 %v6020, 0.6931472
  %v6022 = vlog2.pop %v6000
  %v6023 = vmul.f32 %v6022, 0.6931472
  %v6024 = vlog2.pop %v6001
  %v6025 = vmul.f32 %v6024, 0.6931472
  %v6026 = vlog2.pop %v6002
  %v6027 = vmul.f32 %v6026, 0.6931472
  %v6028 = vlog2.pop %v6003
  %v6029 = vmul.f32 %v6028, 0.6931472
  %v6030 = vlog2.pop %v6004
  %v6031 = vmul.f32 %v6030, 0.6931472
  %v6032 = vlog2.pop %v6005
  %v6033 = vmul.f32 %v6032, 0.6931472
  %v6034 = vlog2.pop %v6006
  %v6035 = vmul.f32 %v6034, 0.6931472
  %v6036 = vlog2.pop %v6007
  %v6037 = vmul.f32 %v6036, 0.6931472
  %v6038 = vadd.f32 %v5918, %v6009
  %v6039 = vadd.f32 %v5919, %v6011
  %v6040 = vadd.f32 %v5920, %v6013
  %v6041 = vadd.f32 %v5921, %v6015
  %v6042 = vadd.f32 %v5922, %v6017
  %v6043 = vadd.f32 %v5923, %v6019
  %v6044 = vadd.f32 %v5924, %v6021
  %v6045 = vadd.f32 %v5925, %v6023
  %v6046 = vadd.f32 %v5926, %v6025
  %v6047 = vadd.f32 %v5927, %v6027
  %v6048 = vadd.f32 %v5928, %v6029
  %v6049 = vadd.f32 %v5929, %v6031
  %v6050 = vadd.f32 %v5930, %v6033
  %v6051 = vadd.f32 %v5931, %v6035
  %v6052 = vadd.f32 %v5932, %v6037
  %v6053 = vadd.f32 %v6038, %v6039
  %v6054 = vsel %vm767, %v6040, 0.0
  %v6055 = vadd.f32 %v6053, %v6054
  %v6056 = vrot.slane %v6055, 4
  %v6057 = vadd.f32 %v6055, %v6056
  %v6058 = vrot.slane %v6057, 2
  %v6059 = vadd.f32 %v6057, %v6058
  %v6060 = vrot.slane %v6059, 1
  %v6061 = vadd.f32 %v6059, %v6060
  %v6062 = vadd.f32 %v6041, %v6042
  %v6063 = vsel %vm767, %v6043, 0.0
  %v6064 = vadd.f32 %v6062, %v6063
  %v6065 = vrot.slane %v6064, 4
  %v6066 = vadd.f32 %v6064, %v6065
  %v6067 = vrot.slane %v6066, 2
  %v6068 = vadd.f32 %v6066, %v6067
  %v6069 = vrot.slane %v6068, 1
  %v6070 = vadd.f32 %v6068, %v6069
  %v6071 = vadd.f32 %v6044, %v6045
  %v6072 = vsel %vm767, %v6046, 0.0
  %v6073 = vadd.f32 %v6071, %v6072
  %v6074 = vrot.slane %v6073, 4
  %v6075 = vadd.f32 %v6073, %v6074
  %v6076 = vrot.slane %v6075, 2
  %v6077 = vadd.f32 %v6075, %v6076
  %v6078 = vrot.slane %v6077, 1
  %v6079 = vadd.f32 %v6077, %v6078
  %v6080 = vadd.f32 %v6047, %v6048
  %v6081 = vsel %vm767, %v6049, 0.0
  %v6082 = vadd.f32 %v6080, %v6081
  %v6083 = vrot.slane %v6082, 4
  %v6084 = vadd.f32 %v6082, %v6083
  %v6085 = vrot.slane %v6084, 2
  %v6086 = vadd.f32 %v6084, %v6085
  %v6087 = vrot.slane %v6086, 1
  %v6088 = vadd.f32 %v6086, %v6087
  %v6089 = vadd.f32 %v6050, %v6051
  %v6090 = vsel %vm767, %v6052, 0.0
  %v6091 = vadd.f32 %v6089, %v6090
  %v6092 = vrot.slane %v6091, 4
  %v6093 = vadd.f32 %v6091, %v6092
  %v6094 = vrot.slane %v6093, 2
  %v6095 = vadd.f32 %v6093, %v6094
  %v6096 = vrot.slane %v6095, 1
  %v6097 = vadd.f32 %v6095, %v6096
  %v6098 = vadd.f32 %v5787, %v6061
  %v6099 = vadd.f32 %v5788, %v6070
  %v6100 = vadd.f32 %v5789, %v6079
  %v6101 = vadd.f32 %v5790, %v6088
  %v6102 = vadd.f32 %v5791, %v6097
  %s6103 = scalar_lea.vmem %s6, 2040
  %v6104 = vld [vmem:[%s6103] sm:$0xff]
  %v6105 = vld [vmem:[%s6103 + $0x8] sm:$0xff]
  %v6106 = vld [vmem:[%s6103 + $0x10] sm:$0xf]
  %v6107 = vld [vmem:[%s6103 + $0x18] sm:$0xff]
  %v6108 = vld [vmem:[%s6103 + $0x20] sm:$0xff]
  %v6109 = vld [vmem:[%s6103 + $0x28] sm:$0xf]
  %v6110 = vld [vmem:[%s6103 + $0x30] sm:$0xff]
  %v6111 = vld [vmem:[%s6103 + $0x38] sm:$0xff]
  %v6112 = vld [vmem:[%s6103 + $0x40] sm:$0xf]
  %v6113 = vld [vmem:[%s6103 + $0x48] sm:$0xff]
  %v6114 = vld [vmem:[%s6103 + $0x50] sm:$0xff]
  %v6115 = vld [vmem:[%s6103 + $0x58] sm:$0xf]
  %v6116 = vld [vmem:[%s6103 + $0x60] sm:$0xff]
  %v6117 = vld [vmem:[%s6103 + $0x68] sm:$0xff]
  %v6118 = vld [vmem:[%s6103 + $0x70] sm:$0xf]
  %6120 = vset.pattern.permute.xlu0 0
  %6121 = vperm.xlu0 %6120, %v6104
  %v6122 = vpop.permute.xlu0 %6121
  %6125 = vset.pattern.permute.xlu0 0
  %6126 = vperm.xlu0 %6125, %v6105
  %v6127 = vpop.permute.xlu0 %6126
  %6130 = vset.pattern.permute.xlu0 0
  %6131 = vperm.xlu0 %6130, %v6106
  %v6132 = vpop.permute.xlu0 %6131
  %6135 = vset.pattern.permute.xlu0 0
  %6136 = vperm.xlu0 %6135, %v6107
  %v6137 = vpop.permute.xlu0 %6136
  %6140 = vset.pattern.permute.xlu0 0
  %6141 = vperm.xlu0 %6140, %v6108
  %v6142 = vpop.permute.xlu0 %6141
  %6145 = vset.pattern.permute.xlu0 0
  %6146 = vperm.xlu0 %6145, %v6109
  %v6147 = vpop.permute.xlu0 %6146
  %6150 = vset.pattern.permute.xlu0 0
  %6151 = vperm.xlu0 %6150, %v6110
  %v6152 = vpop.permute.xlu0 %6151
  %6155 = vset.pattern.permute.xlu0 0
  %6156 = vperm.xlu0 %6155, %v6111
  %v6157 = vpop.permute.xlu0 %6156
  %6160 = vset.pattern.permute.xlu0 0
  %6161 = vperm.xlu0 %6160, %v6112
  %v6162 = vpop.permute.xlu0 %6161
  %6165 = vset.pattern.permute.xlu0 0
  %6166 = vperm.xlu0 %6165, %v6113
  %v6167 = vpop.permute.xlu0 %6166
  %6170 = vset.pattern.permute.xlu0 0
  %6171 = vperm.xlu0 %6170, %v6114
  %v6172 = vpop.permute.xlu0 %6171
  %6175 = vset.pattern.permute.xlu0 0
  %6176 = vperm.xlu0 %6175, %v6115
  %v6177 = vpop.permute.xlu0 %6176
  %6180 = vset.pattern.permute.xlu0 0
  %6181 = vperm.xlu0 %6180, %v6116
  %v6182 = vpop.permute.xlu0 %6181
  %6185 = vset.pattern.permute.xlu0 0
  %6186 = vperm.xlu0 %6185, %v6117
  %v6187 = vpop.permute.xlu0 %6186
  %6190 = vset.pattern.permute.xlu0 0
  %6191 = vperm.xlu0 %6190, %v6118
  %v6192 = vpop.permute.xlu0 %6191
  %v6194 = vadd.f32 %v6122, %v751
  %v6195 = vadd.f32 %v6127, %v752
  %v6196 = vadd.f32 %v6132, %v753
  %v6197 = vadd.f32 %v6137, %v754
  %v6198 = vadd.f32 %v6142, %v755
  %v6199 = vadd.f32 %v6147, %v756
  %v6200 = vadd.f32 %v6152, %v757
  %v6201 = vadd.f32 %v6157, %v758
  %v6202 = vadd.f32 %v6162, %v759
  %v6203 = vadd.f32 %v6167, %v760
  %v6204 = vadd.f32 %v6172, %v761
  %v6205 = vadd.f32 %v6177, %v762
  %v6206 = vadd.f32 %v6182, %v763
  %v6207 = vadd.f32 %v6187, %v764
  %v6208 = vadd.f32 %v6192, %v765
  %v6209 = vperm.slane %v753, 1
  %v6210 = vperm.slane %v756, 1
  %v6211 = vperm.slane %v759, 1
  %v6212 = vperm.slane %v762, 1
  %v6213 = vperm.slane %v765, 1
  %v6214 = vadd.f32 %v6194, %v6209
  %v6215 = vadd.f32 %v6195, %v6209
  %v6216 = vadd.f32 %v6196, %v6209
  %v6217 = vadd.f32 %v6197, %v6210
  %v6218 = vadd.f32 %v6198, %v6210
  %v6219 = vadd.f32 %v6199, %v6210
  %v6220 = vadd.f32 %v6200, %v6211
  %v6221 = vadd.f32 %v6201, %v6211
  %v6222 = vadd.f32 %v6202, %v6211
  %v6223 = vadd.f32 %v6203, %v6212
  %v6224 = vadd.f32 %v6204, %v6212
  %v6225 = vadd.f32 %v6205, %v6212
  %v6226 = vadd.f32 %v6206, %v6213
  %v6227 = vadd.f32 %v6207, %v6213
  %v6228 = vadd.f32 %v6208, %v6213
  %v6229 = vmax.f32 %v6214, 0.0
  %v6230 = vmax.f32 %v6215, 0.0
  %v6231 = vmax.f32 %v6216, 0.0
  %v6232 = vmax.f32 %v6217, 0.0
  %v6233 = vmax.f32 %v6218, 0.0
  %v6234 = vmax.f32 %v6219, 0.0
  %v6235 = vmax.f32 %v6220, 0.0
  %v6236 = vmax.f32 %v6221, 0.0
  %v6237 = vmax.f32 %v6222, 0.0
  %v6238 = vmax.f32 %v6223, 0.0
  %v6239 = vmax.f32 %v6224, 0.0
  %v6240 = vmax.f32 %v6225, 0.0
  %v6241 = vmax.f32 %v6226, 0.0
  %v6242 = vmax.f32 %v6227, 0.0
  %v6243 = vmax.f32 %v6228, 0.0
  %v6244 = vand.u32 2147483647, %v6214
  %v6245 = vand.u32 2147483647, %v6215
  %v6246 = vand.u32 2147483647, %v6216
  %v6247 = vand.u32 2147483647, %v6217
  %v6248 = vand.u32 2147483647, %v6218
  %v6249 = vand.u32 2147483647, %v6219
  %v6250 = vand.u32 2147483647, %v6220
  %v6251 = vand.u32 2147483647, %v6221
  %v6252 = vand.u32 2147483647, %v6222
  %v6253 = vand.u32 2147483647, %v6223
  %v6254 = vand.u32 2147483647, %v6224
  %v6255 = vand.u32 2147483647, %v6225
  %v6256 = vand.u32 2147483647, %v6226
  %v6257 = vand.u32 2147483647, %v6227
  %v6258 = vand.u32 2147483647, %v6228
  %v6259 = vsub.f32 0.0, %v6244
  %v6260 = vsub.f32 0.0, %v6245
  %v6261 = vsub.f32 0.0, %v6246
  %v6262 = vsub.f32 0.0, %v6247
  %v6263 = vsub.f32 0.0, %v6248
  %v6264 = vsub.f32 0.0, %v6249
  %v6265 = vsub.f32 0.0, %v6250
  %v6266 = vsub.f32 0.0, %v6251
  %v6267 = vsub.f32 0.0, %v6252
  %v6268 = vsub.f32 0.0, %v6253
  %v6269 = vsub.f32 0.0, %v6254
  %v6270 = vsub.f32 0.0, %v6255
  %v6271 = vsub.f32 0.0, %v6256
  %v6272 = vsub.f32 0.0, %v6257
  %v6273 = vsub.f32 0.0, %v6258
  %v6274 = vmul.f32 %v6259, 1.442695
  %v6275 = vpow.pop %v6274
  %v6276 = vmul.f32 %v6260, 1.442695
  %v6277 = vpow.pop %v6276
  %v6278 = vmul.f32 %v6261, 1.442695
  %v6279 = vpow.pop %v6278
  %v6280 = vmul.f32 %v6262, 1.442695
  %v6281 = vpow.pop %v6280
  %v6282 = vmul.f32 %v6263, 1.442695
  %v6283 = vpow.pop %v6282
  %v6284 = vmul.f32 %v6264, 1.442695
  %v6285 = vpow.pop %v6284
  %v6286 = vmul.f32 %v6265, 1.442695
  %v6287 = vpow.pop %v6286
  %v6288 = vmul.f32 %v6266, 1.442695
  %v6289 = vpow.pop %v6288
  %v6290 = vmul.f32 %v6267, 1.442695
  %v6291 = vpow.pop %v6290
  %v6292 = vmul.f32 %v6268, 1.442695
  %v6293 = vpow.pop %v6292
  %v6294 = vmul.f32 %v6269, 1.442695
  %v6295 = vpow.pop %v6294
  %v6296 = vmul.f32 %v6270, 1.442695
  %v6297 = vpow.pop %v6296
  %v6298 = vmul.f32 %v6271, 1.442695
  %v6299 = vpow.pop %v6298
  %v6300 = vmul.f32 %v6272, 1.442695
  %v6301 = vpow.pop %v6300
  %v6302 = vmul.f32 %v6273, 1.442695
  %v6303 = vpow.pop %v6302
  %v6304 = vadd.f32 %v6275, 1.0
  %v6305 = vadd.f32 %v6277, 1.0
  %v6306 = vadd.f32 %v6279, 1.0
  %v6307 = vadd.f32 %v6281, 1.0
  %v6308 = vadd.f32 %v6283, 1.0
  %v6309 = vadd.f32 %v6285, 1.0
  %v6310 = vadd.f32 %v6287, 1.0
  %v6311 = vadd.f32 %v6289, 1.0
  %v6312 = vadd.f32 %v6291, 1.0
  %v6313 = vadd.f32 %v6293, 1.0
  %v6314 = vadd.f32 %v6295, 1.0
  %v6315 = vadd.f32 %v6297, 1.0
  %v6316 = vadd.f32 %v6299, 1.0
  %v6317 = vadd.f32 %v6301, 1.0
  %v6318 = vadd.f32 %v6303, 1.0
  %v6319 = vlog2.pop %v6304
  %v6320 = vmul.f32 %v6319, 0.6931472
  %v6321 = vlog2.pop %v6305
  %v6322 = vmul.f32 %v6321, 0.6931472
  %v6323 = vlog2.pop %v6306
  %v6324 = vmul.f32 %v6323, 0.6931472
  %v6325 = vlog2.pop %v6307
  %v6326 = vmul.f32 %v6325, 0.6931472
  %v6327 = vlog2.pop %v6308
  %v6328 = vmul.f32 %v6327, 0.6931472
  %v6329 = vlog2.pop %v6309
  %v6330 = vmul.f32 %v6329, 0.6931472
  %v6331 = vlog2.pop %v6310
  %v6332 = vmul.f32 %v6331, 0.6931472
  %v6333 = vlog2.pop %v6311
  %v6334 = vmul.f32 %v6333, 0.6931472
  %v6335 = vlog2.pop %v6312
  %v6336 = vmul.f32 %v6335, 0.6931472
  %v6337 = vlog2.pop %v6313
  %v6338 = vmul.f32 %v6337, 0.6931472
  %v6339 = vlog2.pop %v6314
  %v6340 = vmul.f32 %v6339, 0.6931472
  %v6341 = vlog2.pop %v6315
  %v6342 = vmul.f32 %v6341, 0.6931472
  %v6343 = vlog2.pop %v6316
  %v6344 = vmul.f32 %v6343, 0.6931472
  %v6345 = vlog2.pop %v6317
  %v6346 = vmul.f32 %v6345, 0.6931472
  %v6347 = vlog2.pop %v6318
  %v6348 = vmul.f32 %v6347, 0.6931472
  %v6349 = vadd.f32 %v6229, %v6320
  %v6350 = vadd.f32 %v6230, %v6322
  %v6351 = vadd.f32 %v6231, %v6324
  %v6352 = vadd.f32 %v6232, %v6326
  %v6353 = vadd.f32 %v6233, %v6328
  %v6354 = vadd.f32 %v6234, %v6330
  %v6355 = vadd.f32 %v6235, %v6332
  %v6356 = vadd.f32 %v6236, %v6334
  %v6357 = vadd.f32 %v6237, %v6336
  %v6358 = vadd.f32 %v6238, %v6338
  %v6359 = vadd.f32 %v6239, %v6340
  %v6360 = vadd.f32 %v6240, %v6342
  %v6361 = vadd.f32 %v6241, %v6344
  %v6362 = vadd.f32 %v6242, %v6346
  %v6363 = vadd.f32 %v6243, %v6348
  %v6364 = vadd.f32 %v6349, %v6350
  %v6365 = vsel %vm767, %v6351, 0.0
  %v6366 = vadd.f32 %v6364, %v6365
  %v6367 = vrot.slane %v6366, 4
  %v6368 = vadd.f32 %v6366, %v6367
  %v6369 = vrot.slane %v6368, 2
  %v6370 = vadd.f32 %v6368, %v6369
  %v6371 = vrot.slane %v6370, 1
  %v6372 = vadd.f32 %v6370, %v6371
  %v6373 = vadd.f32 %v6352, %v6353
  %v6374 = vsel %vm767, %v6354, 0.0
  %v6375 = vadd.f32 %v6373, %v6374
  %v6376 = vrot.slane %v6375, 4
  %v6377 = vadd.f32 %v6375, %v6376
  %v6378 = vrot.slane %v6377, 2
  %v6379 = vadd.f32 %v6377, %v6378
  %v6380 = vrot.slane %v6379, 1
  %v6381 = vadd.f32 %v6379, %v6380
  %v6382 = vadd.f32 %v6355, %v6356
  %v6383 = vsel %vm767, %v6357, 0.0
  %v6384 = vadd.f32 %v6382, %v6383
  %v6385 = vrot.slane %v6384, 4
  %v6386 = vadd.f32 %v6384, %v6385
  %v6387 = vrot.slane %v6386, 2
  %v6388 = vadd.f32 %v6386, %v6387
  %v6389 = vrot.slane %v6388, 1
  %v6390 = vadd.f32 %v6388, %v6389
  %v6391 = vadd.f32 %v6358, %v6359
  %v6392 = vsel %vm767, %v6360, 0.0
  %v6393 = vadd.f32 %v6391, %v6392
  %v6394 = vrot.slane %v6393, 4
  %v6395 = vadd.f32 %v6393, %v6394
  %v6396 = vrot.slane %v6395, 2
  %v6397 = vadd.f32 %v6395, %v6396
  %v6398 = vrot.slane %v6397, 1
  %v6399 = vadd.f32 %v6397, %v6398
  %v6400 = vadd.f32 %v6361, %v6362
  %v6401 = vsel %vm767, %v6363, 0.0
  %v6402 = vadd.f32 %v6400, %v6401
  %v6403 = vrot.slane %v6402, 4
  %v6404 = vadd.f32 %v6402, %v6403
  %v6405 = vrot.slane %v6404, 2
  %v6406 = vadd.f32 %v6404, %v6405
  %v6407 = vrot.slane %v6406, 1
  %v6408 = vadd.f32 %v6406, %v6407
  %v6409 = vadd.f32 %v6098, %v6372
  %v6410 = vadd.f32 %v6099, %v6381
  %v6411 = vadd.f32 %v6100, %v6390
  %v6412 = vadd.f32 %v6101, %v6399
  %v6413 = vadd.f32 %v6102, %v6408
  %s6414 = scalar_lea.vmem %s6, 2160
  %v6415 = vld [vmem:[%s6414] sm:$0xff]
  %v6416 = vld [vmem:[%s6414 + $0x8] sm:$0xff]
  %v6417 = vld [vmem:[%s6414 + $0x10] sm:$0xf]
  %v6418 = vld [vmem:[%s6414 + $0x18] sm:$0xff]
  %v6419 = vld [vmem:[%s6414 + $0x20] sm:$0xff]
  %v6420 = vld [vmem:[%s6414 + $0x28] sm:$0xf]
  %v6421 = vld [vmem:[%s6414 + $0x30] sm:$0xff]
  %v6422 = vld [vmem:[%s6414 + $0x38] sm:$0xff]
  %v6423 = vld [vmem:[%s6414 + $0x40] sm:$0xf]
  %v6424 = vld [vmem:[%s6414 + $0x48] sm:$0xff]
  %v6425 = vld [vmem:[%s6414 + $0x50] sm:$0xff]
  %v6426 = vld [vmem:[%s6414 + $0x58] sm:$0xf]
  %v6427 = vld [vmem:[%s6414 + $0x60] sm:$0xff]
  %v6428 = vld [vmem:[%s6414 + $0x68] sm:$0xff]
  %v6429 = vld [vmem:[%s6414 + $0x70] sm:$0xf]
  %6431 = vset.pattern.permute.xlu0 0
  %6432 = vperm.xlu0 %6431, %v6415
  %v6433 = vpop.permute.xlu0 %6432
  %6436 = vset.pattern.permute.xlu0 0
  %6437 = vperm.xlu0 %6436, %v6416
  %v6438 = vpop.permute.xlu0 %6437
  %6441 = vset.pattern.permute.xlu0 0
  %6442 = vperm.xlu0 %6441, %v6417
  %v6443 = vpop.permute.xlu0 %6442
  %6446 = vset.pattern.permute.xlu0 0
  %6447 = vperm.xlu0 %6446, %v6418
  %v6448 = vpop.permute.xlu0 %6447
  %6451 = vset.pattern.permute.xlu0 0
  %6452 = vperm.xlu0 %6451, %v6419
  %v6453 = vpop.permute.xlu0 %6452
  %6456 = vset.pattern.permute.xlu0 0
  %6457 = vperm.xlu0 %6456, %v6420
  %v6458 = vpop.permute.xlu0 %6457
  %6461 = vset.pattern.permute.xlu0 0
  %6462 = vperm.xlu0 %6461, %v6421
  %v6463 = vpop.permute.xlu0 %6462
  %6466 = vset.pattern.permute.xlu0 0
  %6467 = vperm.xlu0 %6466, %v6422
  %v6468 = vpop.permute.xlu0 %6467
  %6471 = vset.pattern.permute.xlu0 0
  %6472 = vperm.xlu0 %6471, %v6423
  %v6473 = vpop.permute.xlu0 %6472
  %6476 = vset.pattern.permute.xlu0 0
  %6477 = vperm.xlu0 %6476, %v6424
  %v6478 = vpop.permute.xlu0 %6477
  %6481 = vset.pattern.permute.xlu0 0
  %6482 = vperm.xlu0 %6481, %v6425
  %v6483 = vpop.permute.xlu0 %6482
  %6486 = vset.pattern.permute.xlu0 0
  %6487 = vperm.xlu0 %6486, %v6426
  %v6488 = vpop.permute.xlu0 %6487
  %6491 = vset.pattern.permute.xlu0 0
  %6492 = vperm.xlu0 %6491, %v6427
  %v6493 = vpop.permute.xlu0 %6492
  %6496 = vset.pattern.permute.xlu0 0
  %6497 = vperm.xlu0 %6496, %v6428
  %v6498 = vpop.permute.xlu0 %6497
  %6501 = vset.pattern.permute.xlu0 0
  %6502 = vperm.xlu0 %6501, %v6429
  %v6503 = vpop.permute.xlu0 %6502
  %v6505 = vadd.f32 %v6433, %v751
  %v6506 = vadd.f32 %v6438, %v752
  %v6507 = vadd.f32 %v6443, %v753
  %v6508 = vadd.f32 %v6448, %v754
  %v6509 = vadd.f32 %v6453, %v755
  %v6510 = vadd.f32 %v6458, %v756
  %v6511 = vadd.f32 %v6463, %v757
  %v6512 = vadd.f32 %v6468, %v758
  %v6513 = vadd.f32 %v6473, %v759
  %v6514 = vadd.f32 %v6478, %v760
  %v6515 = vadd.f32 %v6483, %v761
  %v6516 = vadd.f32 %v6488, %v762
  %v6517 = vadd.f32 %v6493, %v763
  %v6518 = vadd.f32 %v6498, %v764
  %v6519 = vadd.f32 %v6503, %v765
  %v6520 = vperm.slane %v753, 2
  %v6521 = vperm.slane %v756, 2
  %v6522 = vperm.slane %v759, 2
  %v6523 = vperm.slane %v762, 2
  %v6524 = vperm.slane %v765, 2
  %v6525 = vadd.f32 %v6505, %v6520
  %v6526 = vadd.f32 %v6506, %v6520
  %v6527 = vadd.f32 %v6507, %v6520
  %v6528 = vadd.f32 %v6508, %v6521
  %v6529 = vadd.f32 %v6509, %v6521
  %v6530 = vadd.f32 %v6510, %v6521
  %v6531 = vadd.f32 %v6511, %v6522
  %v6532 = vadd.f32 %v6512, %v6522
  %v6533 = vadd.f32 %v6513, %v6522
  %v6534 = vadd.f32 %v6514, %v6523
  %v6535 = vadd.f32 %v6515, %v6523
  %v6536 = vadd.f32 %v6516, %v6523
  %v6537 = vadd.f32 %v6517, %v6524
  %v6538 = vadd.f32 %v6518, %v6524
  %v6539 = vadd.f32 %v6519, %v6524
  %v6540 = vmax.f32 %v6525, 0.0
  %v6541 = vmax.f32 %v6526, 0.0
  %v6542 = vmax.f32 %v6527, 0.0
  %v6543 = vmax.f32 %v6528, 0.0
  %v6544 = vmax.f32 %v6529, 0.0
  %v6545 = vmax.f32 %v6530, 0.0
  %v6546 = vmax.f32 %v6531, 0.0
  %v6547 = vmax.f32 %v6532, 0.0
  %v6548 = vmax.f32 %v6533, 0.0
  %v6549 = vmax.f32 %v6534, 0.0
  %v6550 = vmax.f32 %v6535, 0.0
  %v6551 = vmax.f32 %v6536, 0.0
  %v6552 = vmax.f32 %v6537, 0.0
  %v6553 = vmax.f32 %v6538, 0.0
  %v6554 = vmax.f32 %v6539, 0.0
  %v6555 = vand.u32 2147483647, %v6525
  %v6556 = vand.u32 2147483647, %v6526
  %v6557 = vand.u32 2147483647, %v6527
  %v6558 = vand.u32 2147483647, %v6528
  %v6559 = vand.u32 2147483647, %v6529
  %v6560 = vand.u32 2147483647, %v6530
  %v6561 = vand.u32 2147483647, %v6531
  %v6562 = vand.u32 2147483647, %v6532
  %v6563 = vand.u32 2147483647, %v6533
  %v6564 = vand.u32 2147483647, %v6534
  %v6565 = vand.u32 2147483647, %v6535
  %v6566 = vand.u32 2147483647, %v6536
  %v6567 = vand.u32 2147483647, %v6537
  %v6568 = vand.u32 2147483647, %v6538
  %v6569 = vand.u32 2147483647, %v6539
  %v6570 = vsub.f32 0.0, %v6555
  %v6571 = vsub.f32 0.0, %v6556
  %v6572 = vsub.f32 0.0, %v6557
  %v6573 = vsub.f32 0.0, %v6558
  %v6574 = vsub.f32 0.0, %v6559
  %v6575 = vsub.f32 0.0, %v6560
  %v6576 = vsub.f32 0.0, %v6561
  %v6577 = vsub.f32 0.0, %v6562
  %v6578 = vsub.f32 0.0, %v6563
  %v6579 = vsub.f32 0.0, %v6564
  %v6580 = vsub.f32 0.0, %v6565
  %v6581 = vsub.f32 0.0, %v6566
  %v6582 = vsub.f32 0.0, %v6567
  %v6583 = vsub.f32 0.0, %v6568
  %v6584 = vsub.f32 0.0, %v6569
  %v6585 = vmul.f32 %v6570, 1.442695
  %v6586 = vpow.pop %v6585
  %v6587 = vmul.f32 %v6571, 1.442695
  %v6588 = vpow.pop %v6587
  %v6589 = vmul.f32 %v6572, 1.442695
  %v6590 = vpow.pop %v6589
  %v6591 = vmul.f32 %v6573, 1.442695
  %v6592 = vpow.pop %v6591
  %v6593 = vmul.f32 %v6574, 1.442695
  %v6594 = vpow.pop %v6593
  %v6595 = vmul.f32 %v6575, 1.442695
  %v6596 = vpow.pop %v6595
  %v6597 = vmul.f32 %v6576, 1.442695
  %v6598 = vpow.pop %v6597
  %v6599 = vmul.f32 %v6577, 1.442695
  %v6600 = vpow.pop %v6599
  %v6601 = vmul.f32 %v6578, 1.442695
  %v6602 = vpow.pop %v6601
  %v6603 = vmul.f32 %v6579, 1.442695
  %v6604 = vpow.pop %v6603
  %v6605 = vmul.f32 %v6580, 1.442695
  %v6606 = vpow.pop %v6605
  %v6607 = vmul.f32 %v6581, 1.442695
  %v6608 = vpow.pop %v6607
  %v6609 = vmul.f32 %v6582, 1.442695
  %v6610 = vpow.pop %v6609
  %v6611 = vmul.f32 %v6583, 1.442695
  %v6612 = vpow.pop %v6611
  %v6613 = vmul.f32 %v6584, 1.442695
  %v6614 = vpow.pop %v6613
  %v6615 = vadd.f32 %v6586, 1.0
  %v6616 = vadd.f32 %v6588, 1.0
  %v6617 = vadd.f32 %v6590, 1.0
  %v6618 = vadd.f32 %v6592, 1.0
  %v6619 = vadd.f32 %v6594, 1.0
  %v6620 = vadd.f32 %v6596, 1.0
  %v6621 = vadd.f32 %v6598, 1.0
  %v6622 = vadd.f32 %v6600, 1.0
  %v6623 = vadd.f32 %v6602, 1.0
  %v6624 = vadd.f32 %v6604, 1.0
  %v6625 = vadd.f32 %v6606, 1.0
  %v6626 = vadd.f32 %v6608, 1.0
  %v6627 = vadd.f32 %v6610, 1.0
  %v6628 = vadd.f32 %v6612, 1.0
  %v6629 = vadd.f32 %v6614, 1.0
  %v6630 = vlog2.pop %v6615
  %v6631 = vmul.f32 %v6630, 0.6931472
  %v6632 = vlog2.pop %v6616
  %v6633 = vmul.f32 %v6632, 0.6931472
  %v6634 = vlog2.pop %v6617
  %v6635 = vmul.f32 %v6634, 0.6931472
  %v6636 = vlog2.pop %v6618
  %v6637 = vmul.f32 %v6636, 0.6931472
  %v6638 = vlog2.pop %v6619
  %v6639 = vmul.f32 %v6638, 0.6931472
  %v6640 = vlog2.pop %v6620
  %v6641 = vmul.f32 %v6640, 0.6931472
  %v6642 = vlog2.pop %v6621
  %v6643 = vmul.f32 %v6642, 0.6931472
  %v6644 = vlog2.pop %v6622
  %v6645 = vmul.f32 %v6644, 0.6931472
  %v6646 = vlog2.pop %v6623
  %v6647 = vmul.f32 %v6646, 0.6931472
  %v6648 = vlog2.pop %v6624
  %v6649 = vmul.f32 %v6648, 0.6931472
  %v6650 = vlog2.pop %v6625
  %v6651 = vmul.f32 %v6650, 0.6931472
  %v6652 = vlog2.pop %v6626
  %v6653 = vmul.f32 %v6652, 0.6931472
  %v6654 = vlog2.pop %v6627
  %v6655 = vmul.f32 %v6654, 0.6931472
  %v6656 = vlog2.pop %v6628
  %v6657 = vmul.f32 %v6656, 0.6931472
  %v6658 = vlog2.pop %v6629
  %v6659 = vmul.f32 %v6658, 0.6931472
  %v6660 = vadd.f32 %v6540, %v6631
  %v6661 = vadd.f32 %v6541, %v6633
  %v6662 = vadd.f32 %v6542, %v6635
  %v6663 = vadd.f32 %v6543, %v6637
  %v6664 = vadd.f32 %v6544, %v6639
  %v6665 = vadd.f32 %v6545, %v6641
  %v6666 = vadd.f32 %v6546, %v6643
  %v6667 = vadd.f32 %v6547, %v6645
  %v6668 = vadd.f32 %v6548, %v6647
  %v6669 = vadd.f32 %v6549, %v6649
  %v6670 = vadd.f32 %v6550, %v6651
  %v6671 = vadd.f32 %v6551, %v6653
  %v6672 = vadd.f32 %v6552, %v6655
  %v6673 = vadd.f32 %v6553, %v6657
  %v6674 = vadd.f32 %v6554, %v6659
  %v6675 = vadd.f32 %v6660, %v6661
  %v6676 = vsel %vm767, %v6662, 0.0
  %v6677 = vadd.f32 %v6675, %v6676
  %v6678 = vrot.slane %v6677, 4
  %v6679 = vadd.f32 %v6677, %v6678
  %v6680 = vrot.slane %v6679, 2
  %v6681 = vadd.f32 %v6679, %v6680
  %v6682 = vrot.slane %v6681, 1
  %v6683 = vadd.f32 %v6681, %v6682
  %v6684 = vadd.f32 %v6663, %v6664
  %v6685 = vsel %vm767, %v6665, 0.0
  %v6686 = vadd.f32 %v6684, %v6685
  %v6687 = vrot.slane %v6686, 4
  %v6688 = vadd.f32 %v6686, %v6687
  %v6689 = vrot.slane %v6688, 2
  %v6690 = vadd.f32 %v6688, %v6689
  %v6691 = vrot.slane %v6690, 1
  %v6692 = vadd.f32 %v6690, %v6691
  %v6693 = vadd.f32 %v6666, %v6667
  %v6694 = vsel %vm767, %v6668, 0.0
  %v6695 = vadd.f32 %v6693, %v6694
  %v6696 = vrot.slane %v6695, 4
  %v6697 = vadd.f32 %v6695, %v6696
  %v6698 = vrot.slane %v6697, 2
  %v6699 = vadd.f32 %v6697, %v6698
  %v6700 = vrot.slane %v6699, 1
  %v6701 = vadd.f32 %v6699, %v6700
  %v6702 = vadd.f32 %v6669, %v6670
  %v6703 = vsel %vm767, %v6671, 0.0
  %v6704 = vadd.f32 %v6702, %v6703
  %v6705 = vrot.slane %v6704, 4
  %v6706 = vadd.f32 %v6704, %v6705
  %v6707 = vrot.slane %v6706, 2
  %v6708 = vadd.f32 %v6706, %v6707
  %v6709 = vrot.slane %v6708, 1
  %v6710 = vadd.f32 %v6708, %v6709
  %v6711 = vadd.f32 %v6672, %v6673
  %v6712 = vsel %vm767, %v6674, 0.0
  %v6713 = vadd.f32 %v6711, %v6712
  %v6714 = vrot.slane %v6713, 4
  %v6715 = vadd.f32 %v6713, %v6714
  %v6716 = vrot.slane %v6715, 2
  %v6717 = vadd.f32 %v6715, %v6716
  %v6718 = vrot.slane %v6717, 1
  %v6719 = vadd.f32 %v6717, %v6718
  %v6720 = vadd.f32 %v6409, %v6683
  %v6721 = vadd.f32 %v6410, %v6692
  %v6722 = vadd.f32 %v6411, %v6701
  %v6723 = vadd.f32 %v6412, %v6710
  %v6724 = vadd.f32 %v6413, %v6719
  %s6725 = scalar_lea.vmem %s6, 2280
  %v6726 = vld [vmem:[%s6725] sm:$0xff]
  %v6727 = vld [vmem:[%s6725 + $0x8] sm:$0xff]
  %v6728 = vld [vmem:[%s6725 + $0x10] sm:$0xf]
  %v6729 = vld [vmem:[%s6725 + $0x18] sm:$0xff]
  %v6730 = vld [vmem:[%s6725 + $0x20] sm:$0xff]
  %v6731 = vld [vmem:[%s6725 + $0x28] sm:$0xf]
  %v6732 = vld [vmem:[%s6725 + $0x30] sm:$0xff]
  %v6733 = vld [vmem:[%s6725 + $0x38] sm:$0xff]
  %v6734 = vld [vmem:[%s6725 + $0x40] sm:$0xf]
  %v6735 = vld [vmem:[%s6725 + $0x48] sm:$0xff]
  %v6736 = vld [vmem:[%s6725 + $0x50] sm:$0xff]
  %v6737 = vld [vmem:[%s6725 + $0x58] sm:$0xf]
  %v6738 = vld [vmem:[%s6725 + $0x60] sm:$0xff]
  %v6739 = vld [vmem:[%s6725 + $0x68] sm:$0xff]
  %v6740 = vld [vmem:[%s6725 + $0x70] sm:$0xf]
  %6742 = vset.pattern.permute.xlu0 0
  %6743 = vperm.xlu0 %6742, %v6726
  %v6744 = vpop.permute.xlu0 %6743
  %6747 = vset.pattern.permute.xlu0 0
  %6748 = vperm.xlu0 %6747, %v6727
  %v6749 = vpop.permute.xlu0 %6748
  %6752 = vset.pattern.permute.xlu0 0
  %6753 = vperm.xlu0 %6752, %v6728
  %v6754 = vpop.permute.xlu0 %6753
  %6757 = vset.pattern.permute.xlu0 0
  %6758 = vperm.xlu0 %6757, %v6729
  %v6759 = vpop.permute.xlu0 %6758
  %6762 = vset.pattern.permute.xlu0 0
  %6763 = vperm.xlu0 %6762, %v6730
  %v6764 = vpop.permute.xlu0 %6763
  %6767 = vset.pattern.permute.xlu0 0
  %6768 = vperm.xlu0 %6767, %v6731
  %v6769 = vpop.permute.xlu0 %6768
  %6772 = vset.pattern.permute.xlu0 0
  %6773 = vperm.xlu0 %6772, %v6732
  %v6774 = vpop.permute.xlu0 %6773
  %6777 = vset.pattern.permute.xlu0 0
  %6778 = vperm.xlu0 %6777, %v6733
  %v6779 = vpop.permute.xlu0 %6778
  %6782 = vset.pattern.permute.xlu0 0
  %6783 = vperm.xlu0 %6782, %v6734
  %v6784 = vpop.permute.xlu0 %6783
  %6787 = vset.pattern.permute.xlu0 0
  %6788 = vperm.xlu0 %6787, %v6735
  %v6789 = vpop.permute.xlu0 %6788
  %6792 = vset.pattern.permute.xlu0 0
  %6793 = vperm.xlu0 %6792, %v6736
  %v6794 = vpop.permute.xlu0 %6793
  %6797 = vset.pattern.permute.xlu0 0
  %6798 = vperm.xlu0 %6797, %v6737
  %v6799 = vpop.permute.xlu0 %6798
  %6802 = vset.pattern.permute.xlu0 0
  %6803 = vperm.xlu0 %6802, %v6738
  %v6804 = vpop.permute.xlu0 %6803
  %6807 = vset.pattern.permute.xlu0 0
  %6808 = vperm.xlu0 %6807, %v6739
  %v6809 = vpop.permute.xlu0 %6808
  %6812 = vset.pattern.permute.xlu0 0
  %6813 = vperm.xlu0 %6812, %v6740
  %v6814 = vpop.permute.xlu0 %6813
  %v6816 = vadd.f32 %v6744, %v751
  %v6817 = vadd.f32 %v6749, %v752
  %v6818 = vadd.f32 %v6754, %v753
  %v6819 = vadd.f32 %v6759, %v754
  %v6820 = vadd.f32 %v6764, %v755
  %v6821 = vadd.f32 %v6769, %v756
  %v6822 = vadd.f32 %v6774, %v757
  %v6823 = vadd.f32 %v6779, %v758
  %v6824 = vadd.f32 %v6784, %v759
  %v6825 = vadd.f32 %v6789, %v760
  %v6826 = vadd.f32 %v6794, %v761
  %v6827 = vadd.f32 %v6799, %v762
  %v6828 = vadd.f32 %v6804, %v763
  %v6829 = vadd.f32 %v6809, %v764
  %v6830 = vadd.f32 %v6814, %v765
  %v6831 = vperm.slane %v753, 3
  %v6832 = vperm.slane %v756, 3
  %v6833 = vperm.slane %v759, 3
  %v6834 = vperm.slane %v762, 3
  %v6835 = vperm.slane %v765, 3
  %v6836 = vadd.f32 %v6816, %v6831
  %v6837 = vadd.f32 %v6817, %v6831
  %v6838 = vadd.f32 %v6818, %v6831
  %v6839 = vadd.f32 %v6819, %v6832
  %v6840 = vadd.f32 %v6820, %v6832
  %v6841 = vadd.f32 %v6821, %v6832
  %v6842 = vadd.f32 %v6822, %v6833
  %v6843 = vadd.f32 %v6823, %v6833
  %v6844 = vadd.f32 %v6824, %v6833
  %v6845 = vadd.f32 %v6825, %v6834
  %v6846 = vadd.f32 %v6826, %v6834
  %v6847 = vadd.f32 %v6827, %v6834
  %v6848 = vadd.f32 %v6828, %v6835
  %v6849 = vadd.f32 %v6829, %v6835
  %v6850 = vadd.f32 %v6830, %v6835
  %v6851 = vmax.f32 %v6836, 0.0
  %v6852 = vmax.f32 %v6837, 0.0
  %v6853 = vmax.f32 %v6838, 0.0
  %v6854 = vmax.f32 %v6839, 0.0
  %v6855 = vmax.f32 %v6840, 0.0
  %v6856 = vmax.f32 %v6841, 0.0
  %v6857 = vmax.f32 %v6842, 0.0
  %v6858 = vmax.f32 %v6843, 0.0
  %v6859 = vmax.f32 %v6844, 0.0
  %v6860 = vmax.f32 %v6845, 0.0
  %v6861 = vmax.f32 %v6846, 0.0
  %v6862 = vmax.f32 %v6847, 0.0
  %v6863 = vmax.f32 %v6848, 0.0
  %v6864 = vmax.f32 %v6849, 0.0
  %v6865 = vmax.f32 %v6850, 0.0
  %v6866 = vand.u32 2147483647, %v6836
  %v6867 = vand.u32 2147483647, %v6837
  %v6868 = vand.u32 2147483647, %v6838
  %v6869 = vand.u32 2147483647, %v6839
  %v6870 = vand.u32 2147483647, %v6840
  %v6871 = vand.u32 2147483647, %v6841
  %v6872 = vand.u32 2147483647, %v6842
  %v6873 = vand.u32 2147483647, %v6843
  %v6874 = vand.u32 2147483647, %v6844
  %v6875 = vand.u32 2147483647, %v6845
  %v6876 = vand.u32 2147483647, %v6846
  %v6877 = vand.u32 2147483647, %v6847
  %v6878 = vand.u32 2147483647, %v6848
  %v6879 = vand.u32 2147483647, %v6849
  %v6880 = vand.u32 2147483647, %v6850
  %v6881 = vsub.f32 0.0, %v6866
  %v6882 = vsub.f32 0.0, %v6867
  %v6883 = vsub.f32 0.0, %v6868
  %v6884 = vsub.f32 0.0, %v6869
  %v6885 = vsub.f32 0.0, %v6870
  %v6886 = vsub.f32 0.0, %v6871
  %v6887 = vsub.f32 0.0, %v6872
  %v6888 = vsub.f32 0.0, %v6873
  %v6889 = vsub.f32 0.0, %v6874
  %v6890 = vsub.f32 0.0, %v6875
  %v6891 = vsub.f32 0.0, %v6876
  %v6892 = vsub.f32 0.0, %v6877
  %v6893 = vsub.f32 0.0, %v6878
  %v6894 = vsub.f32 0.0, %v6879
  %v6895 = vsub.f32 0.0, %v6880
  %v6896 = vmul.f32 %v6881, 1.442695
  %v6897 = vpow.pop %v6896
  %v6898 = vmul.f32 %v6882, 1.442695
  %v6899 = vpow.pop %v6898
  %v6900 = vmul.f32 %v6883, 1.442695
  %v6901 = vpow.pop %v6900
  %v6902 = vmul.f32 %v6884, 1.442695
  %v6903 = vpow.pop %v6902
  %v6904 = vmul.f32 %v6885, 1.442695
  %v6905 = vpow.pop %v6904
  %v6906 = vmul.f32 %v6886, 1.442695
  %v6907 = vpow.pop %v6906
  %v6908 = vmul.f32 %v6887, 1.442695
  %v6909 = vpow.pop %v6908
  %v6910 = vmul.f32 %v6888, 1.442695
  %v6911 = vpow.pop %v6910
  %v6912 = vmul.f32 %v6889, 1.442695
  %v6913 = vpow.pop %v6912
  %v6914 = vmul.f32 %v6890, 1.442695
  %v6915 = vpow.pop %v6914
  %v6916 = vmul.f32 %v6891, 1.442695
  %v6917 = vpow.pop %v6916
  %v6918 = vmul.f32 %v6892, 1.442695
  %v6919 = vpow.pop %v6918
  %v6920 = vmul.f32 %v6893, 1.442695
  %v6921 = vpow.pop %v6920
  %v6922 = vmul.f32 %v6894, 1.442695
  %v6923 = vpow.pop %v6922
  %v6924 = vmul.f32 %v6895, 1.442695
  %v6925 = vpow.pop %v6924
  %v6926 = vadd.f32 %v6897, 1.0
  %v6927 = vadd.f32 %v6899, 1.0
  %v6928 = vadd.f32 %v6901, 1.0
  %v6929 = vadd.f32 %v6903, 1.0
  %v6930 = vadd.f32 %v6905, 1.0
  %v6931 = vadd.f32 %v6907, 1.0
  %v6932 = vadd.f32 %v6909, 1.0
  %v6933 = vadd.f32 %v6911, 1.0
  %v6934 = vadd.f32 %v6913, 1.0
  %v6935 = vadd.f32 %v6915, 1.0
  %v6936 = vadd.f32 %v6917, 1.0
  %v6937 = vadd.f32 %v6919, 1.0
  %v6938 = vadd.f32 %v6921, 1.0
  %v6939 = vadd.f32 %v6923, 1.0
  %v6940 = vadd.f32 %v6925, 1.0
  %v6941 = vlog2.pop %v6926
  %v6942 = vmul.f32 %v6941, 0.6931472
  %v6943 = vlog2.pop %v6927
  %v6944 = vmul.f32 %v6943, 0.6931472
  %v6945 = vlog2.pop %v6928
  %v6946 = vmul.f32 %v6945, 0.6931472
  %v6947 = vlog2.pop %v6929
  %v6948 = vmul.f32 %v6947, 0.6931472
  %v6949 = vlog2.pop %v6930
  %v6950 = vmul.f32 %v6949, 0.6931472
  %v6951 = vlog2.pop %v6931
  %v6952 = vmul.f32 %v6951, 0.6931472
  %v6953 = vlog2.pop %v6932
  %v6954 = vmul.f32 %v6953, 0.6931472
  %v6955 = vlog2.pop %v6933
  %v6956 = vmul.f32 %v6955, 0.6931472
  %v6957 = vlog2.pop %v6934
  %v6958 = vmul.f32 %v6957, 0.6931472
  %v6959 = vlog2.pop %v6935
  %v6960 = vmul.f32 %v6959, 0.6931472
  %v6961 = vlog2.pop %v6936
  %v6962 = vmul.f32 %v6961, 0.6931472
  %v6963 = vlog2.pop %v6937
  %v6964 = vmul.f32 %v6963, 0.6931472
  %v6965 = vlog2.pop %v6938
  %v6966 = vmul.f32 %v6965, 0.6931472
  %v6967 = vlog2.pop %v6939
  %v6968 = vmul.f32 %v6967, 0.6931472
  %v6969 = vlog2.pop %v6940
  %v6970 = vmul.f32 %v6969, 0.6931472
  %v6971 = vadd.f32 %v6851, %v6942
  %v6972 = vadd.f32 %v6852, %v6944
  %v6973 = vadd.f32 %v6853, %v6946
  %v6974 = vadd.f32 %v6854, %v6948
  %v6975 = vadd.f32 %v6855, %v6950
  %v6976 = vadd.f32 %v6856, %v6952
  %v6977 = vadd.f32 %v6857, %v6954
  %v6978 = vadd.f32 %v6858, %v6956
  %v6979 = vadd.f32 %v6859, %v6958
  %v6980 = vadd.f32 %v6860, %v6960
  %v6981 = vadd.f32 %v6861, %v6962
  %v6982 = vadd.f32 %v6862, %v6964
  %v6983 = vadd.f32 %v6863, %v6966
  %v6984 = vadd.f32 %v6864, %v6968
  %v6985 = vadd.f32 %v6865, %v6970
  %v6986 = vadd.f32 %v6971, %v6972
  %v6987 = vsel %vm767, %v6973, 0.0
  %v6988 = vadd.f32 %v6986, %v6987
  %v6989 = vrot.slane %v6988, 4
  %v6990 = vadd.f32 %v6988, %v6989
  %v6991 = vrot.slane %v6990, 2
  %v6992 = vadd.f32 %v6990, %v6991
  %v6993 = vrot.slane %v6992, 1
  %v6994 = vadd.f32 %v6992, %v6993
  %v6995 = vadd.f32 %v6974, %v6975
  %v6996 = vsel %vm767, %v6976, 0.0
  %v6997 = vadd.f32 %v6995, %v6996
  %v6998 = vrot.slane %v6997, 4
  %v6999 = vadd.f32 %v6997, %v6998
  %v7000 = vrot.slane %v6999, 2
  %v7001 = vadd.f32 %v6999, %v7000
  %v7002 = vrot.slane %v7001, 1
  %v7003 = vadd.f32 %v7001, %v7002
  %v7004 = vadd.f32 %v6977, %v6978
  %v7005 = vsel %vm767, %v6979, 0.0
  %v7006 = vadd.f32 %v7004, %v7005
  %v7007 = vrot.slane %v7006, 4
  %v7008 = vadd.f32 %v7006, %v7007
  %v7009 = vrot.slane %v7008, 2
  %v7010 = vadd.f32 %v7008, %v7009
  %v7011 = vrot.slane %v7010, 1
  %v7012 = vadd.f32 %v7010, %v7011
  %v7013 = vadd.f32 %v6980, %v6981
  %v7014 = vsel %vm767, %v6982, 0.0
  %v7015 = vadd.f32 %v7013, %v7014
  %v7016 = vrot.slane %v7015, 4
  %v7017 = vadd.f32 %v7015, %v7016
  %v7018 = vrot.slane %v7017, 2
  %v7019 = vadd.f32 %v7017, %v7018
  %v7020 = vrot.slane %v7019, 1
  %v7021 = vadd.f32 %v7019, %v7020
  %v7022 = vadd.f32 %v6983, %v6984
  %v7023 = vsel %vm767, %v6985, 0.0
  %v7024 = vadd.f32 %v7022, %v7023
  %v7025 = vrot.slane %v7024, 4
  %v7026 = vadd.f32 %v7024, %v7025
  %v7027 = vrot.slane %v7026, 2
  %v7028 = vadd.f32 %v7026, %v7027
  %v7029 = vrot.slane %v7028, 1
  %v7030 = vadd.f32 %v7028, %v7029
  %v7031 = vadd.f32 %v6720, %v6994
  %v7032 = vadd.f32 %v6721, %v7003
  %v7033 = vadd.f32 %v6722, %v7012
  %v7034 = vadd.f32 %v6723, %v7021
  %v7035 = vadd.f32 %v6724, %v7030
  %v7036 = vsub.f32 0.0, %v7031
  %v7037 = vsub.f32 0.0, %v7032
  %v7038 = vsub.f32 0.0, %v7033
  %v7039 = vsub.f32 0.0, %v7034
  %v7040 = vsub.f32 0.0, %v7035
  %v7041 = vlog2.pop %v7036
  %v7042 = vmul.f32 %v7041, 0.6931472
  %v7043 = vlog2.pop %v7037
  %v7044 = vmul.f32 %v7043, 0.6931472
  %v7045 = vlog2.pop %v7038
  %v7046 = vmul.f32 %v7045, 0.6931472
  %v7047 = vlog2.pop %v7039
  %v7048 = vmul.f32 %v7047, 0.6931472
  %v7049 = vlog2.pop %v7040
  %v7050 = vmul.f32 %v7049, 0.6931472
  %vm7056 = vcmask 1041409
  %v7057 = vsel %vm7056, %v7044, %v7042
  %vm7058 = vcmask 1042434
  %v7059 = vsel %vm7058, %v7046, %v7057
  %vm7060 = vcmask 1043459
  %v7061 = vsel %vm7060, %v7048, %v7059
  %vm7062 = vcmask 1044484
  %v7063 = vsel %vm7062, %v7050, %v7061
  %7065 = vst [vmem:[%s7] sm:$0x1f] %v7063
  // Predicated region
  $region30: #{spnnet_forward.1} parent=0 // pred_check
    _
  $region31: #{spnnet_forward.1} parent=0 // pred_check_branch
    %7067 = sbr.rel (0) target = $region33
  $region32: #{spnnet_forward.1} parent=0 // pred_region
    _
  $region33: #{spnnet_forward.1} parent=0 // pred_fallthru
    _
  // Predicated region
  $region34: #{spnnet_forward.1} parent=0 // pred_check
    _
  $region35: #{spnnet_forward.1} parent=0 // pred_check_branch
    %7069 = sbr.rel (0) target = $region37
  $region36: #{spnnet_forward.1} parent=0 // pred_region
    _
  $region37: #{spnnet_forward.1} parent=0 // pred_fallthru
    _

</llo_original>
